<compile_context>
chip_gen: v7x
topology: tpu7x:2x2x1
jax: 0.10.0
libtpu: 0.0.40
codegen_flags: <defaults>
</compile_context>

<pallas_src>
import jax
import jax.numpy as jnp
from jax import lax
from jax.experimental import pallas as pl
from jax.experimental.pallas import tpu as pltpu

CPAD = 128  # padded channel count (conv1-out == conv2-in == conv2-out), sublane dim


def _round_up(x, m):
    return (x + m - 1) // m * m


# -----------------------------------------------------------------------------
# Fused kernel: conv1 -> relu -> (halo mask) -> conv2 -> relu -> masked L1
# for BOTH branches (sr | hr packed along the spatial/lane axis) of one image.
# -----------------------------------------------------------------------------
def _make_kernel(wp, n_half, k1):
    """wp: padded image width; n_half: lane-padded flattened spatial size per
    branch; k1: padded conv1 contraction size (9*cin rounded up to 8)."""
    width = 2 * n_half                                   # sr | hr along lanes
    shifts = [(dy - 1) * wp + (dx - 1) for dy in range(3) for dx in range(3)]

    def kernel(x_ref, mask_ref, w1_ref, b1_ref, w2_ref, b2_ref, o_ref, col_ref):
        mask = mask_ref[...]                             # (1, width) f32 {0,1}

        # conv1: one f32 MXU dot (K = k1) covering both branches.
        f1 = jnp.dot(w1_ref[...], x_ref[0],
                     preferred_element_type=jnp.float32)  # (CPAD, width)
        # Bias + ReLU in f32, then zero the halo / tail columns: this provides
        # conv2's SAME zero padding and kills the garbage computed there.
        a1 = jnp.maximum(f1 + b1_ref[...], 0.0) * mask

        # Channel-major im2col of a1 into the bf16 scratch: each 3x3 tap is a
        # static lane roll of the contiguous activation (XLU) + an aligned
        # full-width store.  Wrap-around only touches halo / tail columns,
        # which are masked out of everything downstream.
        for tap, s in enumerate(shifts):
            if s == 0:
                rolled = a1
            else:
                rolled = pltpu.roll(a1, (-s) % width, axis=1)
            col_ref[tap * CPAD:(tap + 1) * CPAD, :] = rolled.astype(jnp.bfloat16)

        # conv2: single big-K bf16 MXU dot (K = 9*CPAD), f32 accumulate.
        f2 = jnp.dot(w2_ref[...], col_ref[...],
                     preferred_element_type=jnp.float32)  # (CPAD, width) f32
        a2 = jnp.maximum(f2 + b2_ref[...], 0.0)

        # Fused masked L1 partial sums (f32): |sr - hr| on interior pixels only
        # (padded channels are exactly zero on both branches -> contribute 0).
        diff = jnp.abs(a2[:, :n_half] - a2[:, n_half:]) * mask[:, :n_half]

        # Reduce (CPAD, n_half) -> (8, 128) per-program partials using only
        # aligned static slices + VPU adds (no XLU reduce, no odd reshapes).
        acc = diff[:, 0:128]
        for j in range(1, n_half // 128):
            acc = acc + diff[:, j * 128:(j + 1) * 128]
        part = acc[0:8, :]
        for i in range(1, CPAD // 8):
            part = part + acc[i * 8:(i + 1) * 8, :]
        o_ref[0] = part

    return kernel


def _content_loss_pallas(x_col, mask, w1t, b1, w2t, b2, wp, n_half):
    n, k1, width = x_col.shape
    kernel = _make_kernel(wp, n_half, k1)
    const2 = lambda b: (0, 0)

    return pl.pallas_call(
        kernel,
        out_shape=jax.ShapeDtypeStruct((n, 8, 128), jnp.float32),
        grid=(n,),
        in_specs=[
            pl.BlockSpec((1, k1, width), lambda b: (b, 0, 0)),  # per-image im2col
            pl.BlockSpec((1, width), const2),                   # interior mask
            pl.BlockSpec((CPAD, k1), const2),                   # w1t (f32)
            pl.BlockSpec((CPAD, 1), const2),                    # b1
            pl.BlockSpec((CPAD, 9 * CPAD), const2),             # w2t (bf16)
            pl.BlockSpec((CPAD, 1), const2),                    # b2
        ],
        out_specs=pl.BlockSpec((1, 8, 128), lambda b: (b, 0, 0)),
        scratch_shapes=[pltpu.VMEM((9 * CPAD, width), jnp.bfloat16)],
        compiler_params=pltpu.CompilerParams(
            # every grid step writes its own output block -> true parallel axis
            # (lets v7x shard the batch across both TensorCores)
            dimension_semantics=("parallel",),
            vmem_limit_bytes=32 * 1024 * 1024,
        ),
    )(x_col, mask, w1t, b1, w2t, b2)


# -----------------------------------------------------------------------------
# Parameters (synthetic VGG-style stand-in) and host-side folding / packing
# -----------------------------------------------------------------------------
def make_params():
    """Deterministic synthetic stand-in for VGG19 features up to the node."""
    c1, c2 = 16, 32
    k1, k2, k3, k4 = jax.random.split(jax.random.PRNGKey(42), 4)
    return {
        "conv1_w": 0.05 * jax.random.normal(k1, (3, 3, 3, c1), jnp.float32),
        "conv1_b": 0.01 * jax.random.normal(k2, (c1,), jnp.float32),
        "conv2_w": 0.05 * jax.random.normal(k3, (3, 3, c1, c2), jnp.float32),
        "conv2_b": 0.01 * jax.random.normal(k4, (c2,), jnp.float32),
    }


def _prepare_params(params, std):
    """Fold 1/std into conv1, make output-channel-major, pad channels to CPAD,
    and flatten conv2's 9 taps along the contraction dim (K = 9*CPAD, bf16)."""
    w1 = params["conv1_w"] / std.reshape(1, 1, -1, 1)        # (3,3,cin,c1)
    cin, c1 = w1.shape[2], w1.shape[3]
    c2 = params["conv2_w"].shape[3]
    k1 = _round_up(9 * cin, 8)

    w1t = jnp.zeros((CPAD, k1), jnp.float32)
    w1t = w1t.at[:c1, :9 * cin].set(w1.reshape(9 * cin, c1).T)
    b1 = jnp.zeros((CPAD, 1), jnp.float32).at[:c1, 0].set(params["conv1_b"])

    w2p = jnp.zeros((3, 3, CPAD, CPAD), jnp.float32)
    w2p = w2p.at[:, :, :c1, :c2].set(params["conv2_w"])
    w2t = w2p.reshape(9 * CPAD, CPAD).T.astype(jnp.bfloat16)  # (CPAD, 9*CPAD)
    b2 = jnp.zeros((CPAD, 1), jnp.float32).at[:c2, 0].set(params["conv2_b"])
    return w1t, b1, w2t, b2, c2


def _prepare_inputs(sr_nchw, hr_nchw, mean, k1):
    """Mean-subtract (std is folded into w1), zero-pad the halo, flatten the
    padded spatial grid, build the tiny 27-row conv1 im2col, and pack sr|hr
    along the lane axis.  Also builds the interior {0,1} mask."""
    n, cin, H, W = sr_nchw.shape
    hp, wp = H + 2, W + 2
    N = hp * wp
    n_half = _round_up(N, 128)
    if n_half - N < wp + 1:          # keep lane-roll wraparound out of interior
        n_half += 128
    shifts = [(dy - 1) * wp + (dx - 1) for dy in range(3) for dx in range(3)]

    def prep(x):
        x = jnp.transpose(x, (0, 2, 3, 1)).astype(jnp.float32)
        x = x - mean.reshape(1, 1, 1, -1)
        xp = jnp.pad(x, ((0, 0), (1, 1), (1, 1), (0, 0)))      # zero halo
        xf = xp.reshape(n, N, cin)
        xe = jnp.pad(xf, ((0, 0), (wp + 1, wp + 1), (0, 0)))
        cols = [lax.slice_in_dim(xe, s + wp + 1, s + wp + 1 + N, axis=1)
                for s in shifts]
        col = jnp.stack(cols, axis=1)                           # (n, 9, N, cin)
        col = jnp.transpose(col, (0, 1, 3, 2)).reshape(n, 9 * cin, N)
        return jnp.pad(col, ((0, 0), (0, k1 - 9 * cin), (0, n_half - N)))

    x_col = jnp.concatenate([prep(sr_nchw), prep(hr_nchw)], axis=-1)

    pos = jnp.arange(N)
    yy, xx = pos // wp, pos % wp
    m = ((yy >= 1) & (yy <= H) & (xx >= 1) & (xx <= W)).astype(jnp.float32)
    m = jnp.pad(m, (0, n_half - N))
    mask = jnp.concatenate([m, m]).reshape(1, 2 * n_half)
    return x_col, mask, wp, n_half


# -----------------------------------------------------------------------------
# ContentLoss forward
# -----------------------------------------------------------------------------
@jax.jit
def content_loss(sr_nchw, hr_nchw, params, mean, std):
    """mean |feats(norm(sr)) - feats(norm(hr))|  (F.l1_loss semantics)."""
    n, _, H, W = sr_nchw.shape
    w1t, b1, w2t, b2, c2 = _prepare_params(params, std)
    x_col, mask, wp, n_half = _prepare_inputs(sr_nchw, hr_nchw, mean,
                                              w1t.shape[1])
    partials = _content_loss_pallas(x_col, mask, w1t, b1, w2t, b2, wp, n_half)
    return jnp.sum(partials) / float(n * H * W * c2)


# -----------------------------------------------------------------------------
# Pure-JAX reference (for self-check)
# -----------------------------------------------------------------------------
@jax.jit
def _reference_loss(sr_nchw, hr_nchw, params, mean, std):
    def feats(x):
        x = jnp.transpose(x, (0, 2, 3, 1)).astype(jnp.float32)
        x = (x - mean.reshape(1, 1, 1, -1)) / std.reshape(1, 1, 1, -1)
        for wk, bk in (("conv1_w", "conv1_b"), ("conv2_w", "conv2_b")):
            x = lax.conv_general_dilated(
                x, params[wk], window_strides=(1, 1), padding="SAME",
                dimension_numbers=("NHWC", "HWIO", "NHWC"),
                precision=lax.Precision.HIGHEST)
            x = jnp.maximum(x + params[bk], 0.0)
        return x
    return jnp.mean(jnp.abs(feats(sr_nchw) - feats(hr_nchw)))


if __name__ == "__main__":
    key = jax.random.PRNGKey(0)
    k_sr, k_hr = jax.random.split(key)

    # Small image-like inputs: batch=2, RGB, 16x16 (PyTorch NCHW convention).
    sr = jax.random.uniform(k_sr, (2, 3, 16, 16), jnp.float32)
    hr = jax.random.uniform(k_hr, (2, 3, 16, 16), jnp.float32)

    # ImageNet normalization constants (feature_model_normalize_mean/std).
    mean = jnp.array([0.485, 0.456, 0.406], jnp.float32)
    std = jnp.array([0.229, 0.224, 0.225], jnp.float32)

    params = make_params()

    loss = content_loss(sr, hr, params, mean, std)
    jax.block_until_ready(loss)
    assert loss.shape == () and bool(jnp.isfinite(loss))

    ref = _reference_loss(sr, hr, params, mean, std)
    # bf16 conv2 operands with f32 accumulate -> slightly looser tolerance.
    assert jnp.allclose(loss, ref, rtol=2e-2, atol=1e-4), (float(loss), float(ref))

    print("KERNEL_OK")
</pallas_src>

<mosaic_0001>
module attributes {stable_mosaic.version = 11 : i64} {
  func.func @kernel(%arg0: i32, %arg1: memref<1x32x768xf32, #tpu.memory_space<vmem>>, %arg2: memref<1x768xf32, #tpu.memory_space<vmem>>, %arg3: memref<128x32xf32, #tpu.memory_space<vmem>>, %arg4: memref<128x1xf32, #tpu.memory_space<vmem>>, %arg5: memref<128x1152xbf16, #tpu.memory_space<vmem>>, %arg6: memref<128x1xf32, #tpu.memory_space<vmem>>, %arg7: memref<1x8x128xf32, #tpu.memory_space<vmem>>, %arg8: memref<1152x768xbf16, #tpu.memory_space<vmem>>) attributes {dimension_semantics = [#tpu.dimension_semantics<parallel>], iteration_bounds = array<i64: 2>, scalar_prefetch = 0 : i64, scratch_operands = 1 : i64, tpu.core_type = #tpu.core_type<tc>, window_params = [{transform_indices = @transform_0, window_bounds = array<i64: 1, 32, 768>}, {pipeline_mode = #tpu.pipeline_mode<synchronous>, transform_indices = @transform_1, window_bounds = array<i64: 1, 768>}, {pipeline_mode = #tpu.pipeline_mode<synchronous>, transform_indices = @transform_2, window_bounds = array<i64: 128, 32>}, {pipeline_mode = #tpu.pipeline_mode<synchronous>, transform_indices = @transform_3, window_bounds = array<i64: 128, 1>}, {pipeline_mode = #tpu.pipeline_mode<synchronous>, transform_indices = @transform_4, window_bounds = array<i64: 128, 1152>}, {pipeline_mode = #tpu.pipeline_mode<synchronous>, transform_indices = @transform_5, window_bounds = array<i64: 128, 1>}, {transform_indices = @transform_6, window_bounds = array<i64: 1, 8, 128>}]} {
    %c0 = arith.constant 0 : index
    %c0_0 = arith.constant 0 : index
    %0 = vector.load %arg2[%c0, %c0_0] : memref<1x768xf32, #tpu.memory_space<vmem>>, vector<1x768xf32>
    %c0_1 = arith.constant 0 : index
    %c0_2 = arith.constant 0 : index
    %1 = vector.load %arg3[%c0_1, %c0_2] : memref<128x32xf32, #tpu.memory_space<vmem>>, vector<128x32xf32>
    %c0_3 = arith.constant 0 : index
    %c0_4 = arith.constant 0 : index
    %c0_5 = arith.constant 0 : index
    %2 = vector.load %arg1[%c0_3, %c0_4, %c0_5] : memref<1x32x768xf32, #tpu.memory_space<vmem>>, vector<1x32x768xf32>
    %3 = vector.shape_cast %2 : vector<1x32x768xf32> to vector<32x768xf32>
    %cst = arith.constant dense<0.000000e+00> : vector<128x768xf32>
    %4 = tpu.matmul %1, %3, %cst {dimension_numbers = #tpu.dot_dimension_numbers<[1], [0], [0], [1], [0, 0, 1, 1], [], []>} : vector<128x32xf32>, vector<32x768xf32>, vector<128x768xf32> -> vector<128x768xf32>
    %c0_6 = arith.constant 0 : index
    %c0_7 = arith.constant 0 : index
    %5 = vector.load %arg4[%c0_6, %c0_7] : memref<128x1xf32, #tpu.memory_space<vmem>>, vector<128x1xf32>
    %6 = vector.broadcast %5 : vector<128x1xf32> to vector<128x768xf32>
    %7 = arith.addf %4, %6 : vector<128x768xf32>
    %cst_8 = arith.constant 0.000000e+00 : f32
    %8 = vector.broadcast %cst_8 : f32 to vector<128x768xf32>
    %9 = arith.maximumf %7, %8 : vector<128x768xf32>
    %10 = vector.broadcast %0 : vector<1x768xf32> to vector<128x768xf32>
    %11 = arith.mulf %9, %10 : vector<128x768xf32>
    %c19_i32 = arith.constant 19 : i32
    %12 = tpu.dynamic_rotate %11 by %c19_i32 dim 1 : vector<128x768xf32>, i32 -> vector<128x768xf32>
    %13 = arith.truncf %12 : vector<128x768xf32> to vector<128x768xbf16>
    %c0_9 = arith.constant 0 : index
    %c0_10 = arith.constant 0 : index
    %14 = vector.load %arg8[%c0_9, %c0_10] : memref<1152x768xbf16, #tpu.memory_space<vmem>>, vector<128x768xbf16>
    tpu.vector_store %arg8[%c0_9, %c0_10], %13 {strides = array<i32>} : memref<1152x768xbf16, #tpu.memory_space<vmem>>, vector<128x768xbf16>,
    %c18_i32 = arith.constant 18 : i32
    %15 = tpu.dynamic_rotate %11 by %c18_i32 dim 1 : vector<128x768xf32>, i32 -> vector<128x768xf32>
    %16 = arith.truncf %15 : vector<128x768xf32> to vector<128x768xbf16>
    %c128 = arith.constant 128 : index
    %c0_11 = arith.constant 0 : index
    %17 = vector.load %arg8[%c128, %c0_11] : memref<1152x768xbf16, #tpu.memory_space<vmem>>, vector<128x768xbf16>
    tpu.vector_store %arg8[%c128, %c0_11], %16 {strides = array<i32>} : memref<1152x768xbf16, #tpu.memory_space<vmem>>, vector<128x768xbf16>,
    %c17_i32 = arith.constant 17 : i32
    %18 = tpu.dynamic_rotate %11 by %c17_i32 dim 1 : vector<128x768xf32>, i32 -> vector<128x768xf32>
    %19 = arith.truncf %18 : vector<128x768xf32> to vector<128x768xbf16>
    %c256 = arith.constant 256 : index
    %c0_12 = arith.constant 0 : index
    %20 = vector.load %arg8[%c256, %c0_12] : memref<1152x768xbf16, #tpu.memory_space<vmem>>, vector<128x768xbf16>
    tpu.vector_store %arg8[%c256, %c0_12], %19 {strides = array<i32>} : memref<1152x768xbf16, #tpu.memory_space<vmem>>, vector<128x768xbf16>,
    %c1_i32 = arith.constant 1 : i32
    %21 = tpu.dynamic_rotate %11 by %c1_i32 dim 1 : vector<128x768xf32>, i32 -> vector<128x768xf32>
    %22 = arith.truncf %21 : vector<128x768xf32> to vector<128x768xbf16>
    %c384 = arith.constant 384 : index
    %c0_13 = arith.constant 0 : index
    %23 = vector.load %arg8[%c384, %c0_13] : memref<1152x768xbf16, #tpu.memory_space<vmem>>, vector<128x768xbf16>
    tpu.vector_store %arg8[%c384, %c0_13], %22 {strides = array<i32>} : memref<1152x768xbf16, #tpu.memory_space<vmem>>, vector<128x768xbf16>,
    %24 = arith.truncf %11 : vector<128x768xf32> to vector<128x768xbf16>
    %c512 = arith.constant 512 : index
    %c0_14 = arith.constant 0 : index
    %25 = vector.load %arg8[%c512, %c0_14] : memref<1152x768xbf16, #tpu.memory_space<vmem>>, vector<128x768xbf16>
    tpu.vector_store %arg8[%c512, %c0_14], %24 {strides = array<i32>} : memref<1152x768xbf16, #tpu.memory_space<vmem>>, vector<128x768xbf16>,
    %c767_i32 = arith.constant 767 : i32
    %26 = tpu.dynamic_rotate %11 by %c767_i32 dim 1 : vector<128x768xf32>, i32 -> vector<128x768xf32>
    %27 = arith.truncf %26 : vector<128x768xf32> to vector<128x768xbf16>
    %c640 = arith.constant 640 : index
    %c0_15 = arith.constant 0 : index
    %28 = vector.load %arg8[%c640, %c0_15] : memref<1152x768xbf16, #tpu.memory_space<vmem>>, vector<128x768xbf16>
    tpu.vector_store %arg8[%c640, %c0_15], %27 {strides = array<i32>} : memref<1152x768xbf16, #tpu.memory_space<vmem>>, vector<128x768xbf16>,
    %c751_i32 = arith.constant 751 : i32
    %29 = tpu.dynamic_rotate %11 by %c751_i32 dim 1 : vector<128x768xf32>, i32 -> vector<128x768xf32>
    %30 = arith.truncf %29 : vector<128x768xf32> to vector<128x768xbf16>
    %c768 = arith.constant 768 : index
    %c0_16 = arith.constant 0 : index
    %31 = vector.load %arg8[%c768, %c0_16] : memref<1152x768xbf16, #tpu.memory_space<vmem>>, vector<128x768xbf16>
    tpu.vector_store %arg8[%c768, %c0_16], %30 {strides = array<i32>} : memref<1152x768xbf16, #tpu.memory_space<vmem>>, vector<128x768xbf16>,
    %c750_i32 = arith.constant 750 : i32
    %32 = tpu.dynamic_rotate %11 by %c750_i32 dim 1 : vector<128x768xf32>, i32 -> vector<128x768xf32>
    %33 = arith.truncf %32 : vector<128x768xf32> to vector<128x768xbf16>
    %c896 = arith.constant 896 : index
    %c0_17 = arith.constant 0 : index
    %34 = vector.load %arg8[%c896, %c0_17] : memref<1152x768xbf16, #tpu.memory_space<vmem>>, vector<128x768xbf16>
    tpu.vector_store %arg8[%c896, %c0_17], %33 {strides = array<i32>} : memref<1152x768xbf16, #tpu.memory_space<vmem>>, vector<128x768xbf16>,
    %c749_i32 = arith.constant 749 : i32
    %35 = tpu.dynamic_rotate %11 by %c749_i32 dim 1 : vector<128x768xf32>, i32 -> vector<128x768xf32>
    %36 = arith.truncf %35 : vector<128x768xf32> to vector<128x768xbf16>
    %c1024 = arith.constant 1024 : index
    %c0_18 = arith.constant 0 : index
    %37 = vector.load %arg8[%c1024, %c0_18] : memref<1152x768xbf16, #tpu.memory_space<vmem>>, vector<128x768xbf16>
    tpu.vector_store %arg8[%c1024, %c0_18], %36 {strides = array<i32>} : memref<1152x768xbf16, #tpu.memory_space<vmem>>, vector<128x768xbf16>,
    %c0_19 = arith.constant 0 : index
    %c0_20 = arith.constant 0 : index
    %38 = vector.load %arg5[%c0_19, %c0_20] : memref<128x1152xbf16, #tpu.memory_space<vmem>>, vector<128x1152xbf16>
    %c0_21 = arith.constant 0 : index
    %c0_22 = arith.constant 0 : index
    %39 = vector.load %arg8[%c0_21, %c0_22] : memref<1152x768xbf16, #tpu.memory_space<vmem>>, vector<1152x768xbf16>
    %cst_23 = arith.constant dense<0.000000e+00> : vector<128x768xf32>
    %40 = tpu.matmul %38, %39, %cst_23 {dimension_numbers = #tpu.dot_dimension_numbers<[1], [0], [0], [1], [0, 0, 1, 1], [], []>} : vector<128x1152xbf16>, vector<1152x768xbf16>, vector<128x768xf32> -> vector<128x768xf32>
    %c0_24 = arith.constant 0 : index
    %c0_25 = arith.constant 0 : index
    %41 = vector.load %arg6[%c0_24, %c0_25] : memref<128x1xf32, #tpu.memory_space<vmem>>, vector<128x1xf32>
    %42 = vector.broadcast %41 : vector<128x1xf32> to vector<128x768xf32>
    %43 = arith.addf %40, %42 : vector<128x768xf32>
    %cst_26 = arith.constant 0.000000e+00 : f32
    %44 = vector.broadcast %cst_26 : f32 to vector<128x768xf32>
    %45 = arith.maximumf %43, %44 : vector<128x768xf32>
    %46 = vector.extract_strided_slice %45 {offsets = [0, 0], sizes = [128, 384], strides = [1, 1]} : vector<128x768xf32> to vector<128x384xf32>
    %47 = vector.extract_strided_slice %45 {offsets = [0, 384], sizes = [128, 384], strides = [1, 1]} : vector<128x768xf32> to vector<128x384xf32>
    %48 = arith.subf %46, %47 : vector<128x384xf32>
    %49 = math.absf %48 : vector<128x384xf32>
    %50 = vector.extract_strided_slice %0 {offsets = [0, 0], sizes = [1, 384], strides = [1, 1]} : vector<1x768xf32> to vector<1x384xf32>
    %51 = vector.broadcast %50 : vector<1x384xf32> to vector<128x384xf32>
    %52 = arith.mulf %49, %51 : vector<128x384xf32>
    %53 = vector.extract_strided_slice %52 {offsets = [0, 0], sizes = [128, 128], strides = [1, 1]} : vector<128x384xf32> to vector<128x128xf32>
    %54 = vector.extract_strided_slice %52 {offsets = [0, 128], sizes = [128, 128], strides = [1, 1]} : vector<128x384xf32> to vector<128x128xf32>
    %55 = arith.addf %53, %54 : vector<128x128xf32>
    %56 = vector.extract_strided_slice %52 {offsets = [0, 256], sizes = [128, 128], strides = [1, 1]} : vector<128x384xf32> to vector<128x128xf32>
    %57 = arith.addf %55, %56 : vector<128x128xf32>
    %58 = vector.extract_strided_slice %57 {offsets = [0, 0], sizes = [8, 128], strides = [1, 1]} : vector<128x128xf32> to vector<8x128xf32>
    %59 = vector.extract_strided_slice %57 {offsets = [8, 0], sizes = [8, 128], strides = [1, 1]} : vector<128x128xf32> to vector<8x128xf32>
    %60 = arith.addf %58, %59 : vector<8x128xf32>
    %61 = vector.extract_strided_slice %57 {offsets = [16, 0], sizes = [8, 128], strides = [1, 1]} : vector<128x128xf32> to vector<8x128xf32>
    %62 = arith.addf %60, %61 : vector<8x128xf32>
    %63 = vector.extract_strided_slice %57 {offsets = [24, 0], sizes = [8, 128], strides = [1, 1]} : vector<128x128xf32> to vector<8x128xf32>
    %64 = arith.addf %62, %63 : vector<8x128xf32>
    %65 = vector.extract_strided_slice %57 {offsets = [32, 0], sizes = [8, 128], strides = [1, 1]} : vector<128x128xf32> to vector<8x128xf32>
    %66 = arith.addf %64, %65 : vector<8x128xf32>
    %67 = vector.extract_strided_slice %57 {offsets = [40, 0], sizes = [8, 128], strides = [1, 1]} : vector<128x128xf32> to vector<8x128xf32>
    %68 = arith.addf %66, %67 : vector<8x128xf32>
    %69 = vector.extract_strided_slice %57 {offsets = [48, 0], sizes = [8, 128], strides = [1, 1]} : vector<128x128xf32> to vector<8x128xf32>
    %70 = arith.addf %68, %69 : vector<8x128xf32>
    %71 = vector.extract_strided_slice %57 {offsets = [56, 0], sizes = [8, 128], strides = [1, 1]} : vector<128x128xf32> to vector<8x128xf32>
    %72 = arith.addf %70, %71 : vector<8x128xf32>
    %73 = vector.extract_strided_slice %57 {offsets = [64, 0], sizes = [8, 128], strides = [1, 1]} : vector<128x128xf32> to vector<8x128xf32>
    %74 = arith.addf %72, %73 : vector<8x128xf32>
    %75 = vector.extract_strided_slice %57 {offsets = [72, 0], sizes = [8, 128], strides = [1, 1]} : vector<128x128xf32> to vector<8x128xf32>
    %76 = arith.addf %74, %75 : vector<8x128xf32>
    %77 = vector.extract_strided_slice %57 {offsets = [80, 0], sizes = [8, 128], strides = [1, 1]} : vector<128x128xf32> to vector<8x128xf32>
    %78 = arith.addf %76, %77 : vector<8x128xf32>
    %79 = vector.extract_strided_slice %57 {offsets = [88, 0], sizes = [8, 128], strides = [1, 1]} : vector<128x128xf32> to vector<8x128xf32>
    %80 = arith.addf %78, %79 : vector<8x128xf32>
    %81 = vector.extract_strided_slice %57 {offsets = [96, 0], sizes = [8, 128], strides = [1, 1]} : vector<128x128xf32> to vector<8x128xf32>
    %82 = arith.addf %80, %81 : vector<8x128xf32>
    %83 = vector.extract_strided_slice %57 {offsets = [104, 0], sizes = [8, 128], strides = [1, 1]} : vector<128x128xf32> to vector<8x128xf32>
    %84 = arith.addf %82, %83 : vector<8x128xf32>
    %85 = vector.extract_strided_slice %57 {offsets = [112, 0], sizes = [8, 128], strides = [1, 1]} : vector<128x128xf32> to vector<8x128xf32>
    %86 = arith.addf %84, %85 : vector<8x128xf32>
    %87 = vector.extract_strided_slice %57 {offsets = [120, 0], sizes = [8, 128], strides = [1, 1]} : vector<128x128xf32> to vector<8x128xf32>
    %88 = arith.addf %86, %87 : vector<8x128xf32>
    %c0_27 = arith.constant 0 : index
    %c0_28 = arith.constant 0 : index
    %c0_29 = arith.constant 0 : index
    %89 = vector.load %arg7[%c0_27, %c0_28, %c0_29] : memref<1x8x128xf32, #tpu.memory_space<vmem>>, vector<1x8x128xf32>
    %90 = vector.shape_cast %89 : vector<1x8x128xf32> to vector<8x128xf32>
    %91 = vector.shape_cast %88 : vector<8x128xf32> to vector<1x8x128xf32>
    tpu.vector_store %arg7[%c0_27, %c0_28, %c0_29], %91 {strides = array<i32>} : memref<1x8x128xf32, #tpu.memory_space<vmem>>, vector<1x8x128xf32>,
    return
  }
  func.func @transform_0(%arg0: i32) -> (i32, i32, i32) {
    %c0_i32 = arith.constant 0 : i32
    %c0_i32_0 = arith.constant 0 : i32
    %c0_i32_1 = arith.constant 0 : i32
    return %arg0, %c0_i32, %c0_i32_0 : i32, i32, i32
  }
  func.func @transform_1(%arg0: i32) -> (i32, i32) {
    %c0_i32 = arith.constant 0 : i32
    %c0_i32_0 = arith.constant 0 : i32
    %c0_i32_1 = arith.constant 0 : i32
    return %c0_i32, %c0_i32_0 : i32, i32
  }
  func.func @transform_2(%arg0: i32) -> (i32, i32) {
    %c0_i32 = arith.constant 0 : i32
    %c0_i32_0 = arith.constant 0 : i32
    %c0_i32_1 = arith.constant 0 : i32
    return %c0_i32, %c0_i32_0 : i32, i32
  }
  func.func @transform_3(%arg0: i32) -> (i32, i32) {
    %c0_i32 = arith.constant 0 : i32
    %c0_i32_0 = arith.constant 0 : i32
    %c0_i32_1 = arith.constant 0 : i32
    return %c0_i32, %c0_i32_0 : i32, i32
  }
  func.func @transform_4(%arg0: i32) -> (i32, i32) {
    %c0_i32 = arith.constant 0 : i32
    %c0_i32_0 = arith.constant 0 : i32
    %c0_i32_1 = arith.constant 0 : i32
    return %c0_i32, %c0_i32_0 : i32, i32
  }
  func.func @transform_5(%arg0: i32) -> (i32, i32) {
    %c0_i32 = arith.constant 0 : i32
    %c0_i32_0 = arith.constant 0 : i32
    %c0_i32_1 = arith.constant 0 : i32
    return %c0_i32, %c0_i32_0 : i32, i32
  }
  func.func @transform_6(%arg0: i32) -> (i32, i32, i32) {
    %c0_i32 = arith.constant 0 : i32
    %c0_i32_0 = arith.constant 0 : i32
    %c0_i32_1 = arith.constant 0 : i32
    return %arg0, %c0_i32, %c0_i32_0 : i32, i32, i32
  }
}

</mosaic_0001>

<llo_original>
// kernel: content_loss.1
$region0: #{content_loss.1}
  #allocation0 [shape = 'u32[]', space=smem, size = 0x4, offset = 0x4, fixed_abs, tag = 'smem constant byte address 0x4 - core index']
  #allocation1 [shape = 'u32[144,128]{1,0:T(1,128)}', space=vmem, size = 0x12000, scoped, tag = 'internal scratch']
  #allocation2 [shape = 'bf16[1152,768]{1,0:T(16,128)(2,1)}', space=vmem, size = 0x1b0000, scoped, tag = 'scratch operand']
  %s0 = inlined_call_operand.vmem [shape: f32[2,32,768], index: 0, kind: input, shape index: {}]
  %s1 = inlined_call_operand.vmem [shape: f32[1,768], index: 1, kind: input, shape index: {}]
  %s2 = inlined_call_operand.vmem [shape: f32[128,32], index: 2, kind: input, shape index: {}]
  %s3 = inlined_call_operand.vmem [shape: f32[128,1], index: 3, kind: input, shape index: {}]
  %s4 = inlined_call_operand.vmem [shape: bf16[128,1152], index: 4, kind: input, shape index: {}]
  %s5 = inlined_call_operand.vmem [shape: f32[128,1], index: 5, kind: input, shape index: {}]
  %s6 = inlined_call_operand.vmem [shape: f32[2,8,128], index: 6, kind: output, shape index: {}]
  %s7 = sld [smem:[#allocation0]]
  $region57: #{content_loss.1} parent=0
    _
  %s9 = ssub.s32 1, %s7
  %s10 = scalar_select 0, %s9, %s7
  loop: start=0, step=1, limit=4
  $region2: #{content_loss.1} parent=0 // loop_pre_header
    _
  $region3: #{content_loss.1} parent=0 // loop_header
    %s12 = sphi 0, %s16
    %p13 = scmp.ge.s32.totalorder %s12, 4
    %s22 = sphi 0, %s24
    %s25 = sphi 0, %s22
    %s26 = sphi 0, %s25
    %s42 = sphi 0, %s26
    %s46 = sphi 0, %s46
    %s48 = sphi 0, %s46
    %s49 = sphi 0, %s48
    %s63 = sphi 0, %s49
    %s67 = sphi 0, %s67
    %s69 = sphi 0, %s67
    %s70 = sphi 0, %s69
    %s84 = sphi 0, %s70
    %s88 = sphi 0, %s88
    %s90 = sphi 0, %s88
    %s91 = sphi 0, %s90
    %s105 = sphi 0, %s91
    %s109 = sphi 0, %s109
    %s111 = sphi 0, %s109
    %s112 = sphi 0, %s111
    %s126 = sphi 0, %s112
    %s130 = sphi 0, %s130
    %s132 = sphi 0, %s130
    %s133 = sphi 0, %s132
    %s147 = sphi 0, %s133
    %s153 = sphi 0, %s155
    %s156 = sphi 0, %s153
    %s157 = sphi 0, %s156
    %s173 = sphi 0, %s157
  $region4: #{content_loss.1} parent=0 // loop_header_branch
    %15 = sbr.rel (%p13) target = $region8
  $region5: #{content_loss.1} parent=0 // loop_body
    %s17 = ssub.s32 %s12, 1
    %s18 = ssub.s32 %s12, 2
    %s19 = sadd.s32 %s12, 1
    %s20 = ssub.s32 %s12, %s19
    %p21 = scmp.eq.s32.totalorder %s20, 0
    %s23 = sadd.s32 %s22, 1
    %s24 = scalar_select %p21, %s22, %s23
    %p27 = pneg %p21
    %p28 = scmp.eq.s32.totalorder %s12, 1
    %p29 = por %p27, %p28
    %p30 = scmp.ne.s32.totalorder %s22, %s25
    %p31 = scmp.eq.s32.totalorder %s12, 0
    %p32 = por %p30, %p31
    %p33 = scmp.ne.s32.totalorder %s22, %s25
    %p34 = scmp.eq.s32.totalorder %s17, 1
    %p35 = por %p33, %p34
    %p36 = scmp.ne.s32.totalorder %s25, %s26
    %p37 = scmp.eq.s32.totalorder %s17, 0
    %p38 = por %p36, %p37
    %p39 = scmp.ne.s32.totalorder %s25, %s26
    %p40 = scmp.eq.s32.totalorder %s18, 1
    %p41 = por %p39, %p40
    %p43 = scmp.ne.s32.totalorder %s26, %s42
    %p44 = scmp.eq.s32.totalorder %s18, 0
    %p45 = por %p43, %p44
    %s47 = sadd.s32 %s46, 1
    %p50 = scmp.eq.s32.totalorder %s12, 1
    %p51 = scmp.ne.s32.totalorder %s46, %s48
    %p52 = scmp.eq.s32.totalorder %s12, 0
    %p53 = por %p51, %p52
    %p54 = scmp.ne.s32.totalorder %s46, %s48
    %p55 = scmp.eq.s32.totalorder %s17, 1
    %p56 = por %p54, %p55
    %p57 = scmp.ne.s32.totalorder %s48, %s49
    %p58 = scmp.eq.s32.totalorder %s17, 0
    %p59 = por %p57, %p58
    %p60 = scmp.ne.s32.totalorder %s48, %s49
    %p61 = scmp.eq.s32.totalorder %s18, 1
    %p62 = por %p60, %p61
    %p64 = scmp.ne.s32.totalorder %s49, %s63
    %p65 = scmp.eq.s32.totalorder %s18, 0
    %p66 = por %p64, %p65
    %s68 = sadd.s32 %s67, 1
    %p71 = scmp.eq.s32.totalorder %s12, 1
    %p72 = scmp.ne.s32.totalorder %s67, %s69
    %p73 = scmp.eq.s32.totalorder %s12, 0
    %p74 = por %p72, %p73
    %p75 = scmp.ne.s32.totalorder %s67, %s69
    %p76 = scmp.eq.s32.totalorder %s17, 1
    %p77 = por %p75, %p76
    %p78 = scmp.ne.s32.totalorder %s69, %s70
    %p79 = scmp.eq.s32.totalorder %s17, 0
    %p80 = por %p78, %p79
    %p81 = scmp.ne.s32.totalorder %s69, %s70
    %p82 = scmp.eq.s32.totalorder %s18, 1
    %p83 = por %p81, %p82
    %p85 = scmp.ne.s32.totalorder %s70, %s84
    %p86 = scmp.eq.s32.totalorder %s18, 0
    %p87 = por %p85, %p86
    %s89 = sadd.s32 %s88, 1
    %p92 = scmp.eq.s32.totalorder %s12, 1
    %p93 = scmp.ne.s32.totalorder %s88, %s90
    %p94 = scmp.eq.s32.totalorder %s12, 0
    %p95 = por %p93, %p94
    %p96 = scmp.ne.s32.totalorder %s88, %s90
    %p97 = scmp.eq.s32.totalorder %s17, 1
    %p98 = por %p96, %p97
    %p99 = scmp.ne.s32.totalorder %s90, %s91
    %p100 = scmp.eq.s32.totalorder %s17, 0
    %p101 = por %p99, %p100
    %p102 = scmp.ne.s32.totalorder %s90, %s91
    %p103 = scmp.eq.s32.totalorder %s18, 1
    %p104 = por %p102, %p103
    %p106 = scmp.ne.s32.totalorder %s91, %s105
    %p107 = scmp.eq.s32.totalorder %s18, 0
    %p108 = por %p106, %p107
    %s110 = sadd.s32 %s109, 1
    %p113 = scmp.eq.s32.totalorder %s12, 1
    %p114 = scmp.ne.s32.totalorder %s109, %s111
    %p115 = scmp.eq.s32.totalorder %s12, 0
    %p116 = por %p114, %p115
    %p117 = scmp.ne.s32.totalorder %s109, %s111
    %p118 = scmp.eq.s32.totalorder %s17, 1
    %p119 = por %p117, %p118
    %p120 = scmp.ne.s32.totalorder %s111, %s112
    %p121 = scmp.eq.s32.totalorder %s17, 0
    %p122 = por %p120, %p121
    %p123 = scmp.ne.s32.totalorder %s111, %s112
    %p124 = scmp.eq.s32.totalorder %s18, 1
    %p125 = por %p123, %p124
    %p127 = scmp.ne.s32.totalorder %s112, %s126
    %p128 = scmp.eq.s32.totalorder %s18, 0
    %p129 = por %p127, %p128
    %s131 = sadd.s32 %s130, 1
    %p134 = scmp.eq.s32.totalorder %s12, 1
    %p135 = scmp.ne.s32.totalorder %s130, %s132
    %p136 = scmp.eq.s32.totalorder %s12, 0
    %p137 = por %p135, %p136
    %p138 = scmp.ne.s32.totalorder %s130, %s132
    %p139 = scmp.eq.s32.totalorder %s17, 1
    %p140 = por %p138, %p139
    %p141 = scmp.ne.s32.totalorder %s132, %s133
    %p142 = scmp.eq.s32.totalorder %s17, 0
    %p143 = por %p141, %p142
    %p144 = scmp.ne.s32.totalorder %s132, %s133
    %p145 = scmp.eq.s32.totalorder %s18, 1
    %p146 = por %p144, %p145
    %p148 = scmp.ne.s32.totalorder %s133, %s147
    %p149 = scmp.eq.s32.totalorder %s18, 0
    %p150 = por %p148, %p149
    %s151 = ssub.s32 %s12, %s19
    %p152 = scmp.eq.s32.totalorder %s151, 0
    %s154 = sadd.s32 %s153, 1
    %s155 = scalar_select %p152, %s153, %s154
    %p158 = pneg %p152
    %p159 = scmp.eq.s32.totalorder %s12, 1
    %p160 = por %p158, %p159
    %p161 = scmp.ne.s32.totalorder %s153, %s156
    %p162 = scmp.eq.s32.totalorder %s12, 0
    %p163 = por %p161, %p162
    %p164 = scmp.ne.s32.totalorder %s153, %s156
    %p165 = scmp.eq.s32.totalorder %s17, 1
    %p166 = por %p164, %p165
    %p167 = scmp.ne.s32.totalorder %s156, %s157
    %p168 = scmp.eq.s32.totalorder %s17, 0
    %p169 = por %p167, %p168
    %p170 = scmp.ne.s32.totalorder %s156, %s157
    %p171 = scmp.eq.s32.totalorder %s18, 1
    %p172 = por %p170, %p171
    %p174 = scmp.ne.s32.totalorder %s157, %s173
    %p175 = scmp.eq.s32.totalorder %s18, 0
    %p176 = por %p174, %p175
    %p177 = scmp.le.s32.totalorder 1, %s12
    %p178 = scmp.lt.s32.totalorder %s12, 3
    %p179 = pnand %p177, %p178
    %p180 = pneg %p179
    // Predicated region
    $region9: #{content_loss.1} parent=5 // pred_check
      _
    $region10: #{content_loss.1} parent=5 // pred_check_branch
      %182 = sbr.rel (%p179) target = $region12
    $region11: #{content_loss.1} parent=5 // pred_region
      %s183 = ssub.s32 %s12, 1
      // Predicated region
      $region13: #{content_loss.1} parent=11 // pred_check
        %p184 = pneg %p59
      $region14: #{content_loss.1} parent=11 // pred_check_branch
        %186 = sbr.rel (%p184) target = $region16
      $region15: #{content_loss.1} parent=11 // pred_region
        _
      $region16: #{content_loss.1} parent=11 // pred_fallthru
        _
      // Predicated region
      $region17: #{content_loss.1} parent=11 // pred_check
        %p187 = pneg %p80
      $region18: #{content_loss.1} parent=11 // pred_check_branch
        %189 = sbr.rel (%p187) target = $region20
      $region19: #{content_loss.1} parent=11 // pred_region
        _
      $region20: #{content_loss.1} parent=11 // pred_fallthru
        _
      // Predicated region
      $region21: #{content_loss.1} parent=11 // pred_check
        %p190 = pneg %p101
      $region22: #{content_loss.1} parent=11 // pred_check_branch
        %192 = sbr.rel (%p190) target = $region24
      $region23: #{content_loss.1} parent=11 // pred_region
        _
      $region24: #{content_loss.1} parent=11 // pred_fallthru
        _
      // Predicated region
      $region25: #{content_loss.1} parent=11 // pred_check
        %p193 = pneg %p122
      $region26: #{content_loss.1} parent=11 // pred_check_branch
        %195 = sbr.rel (%p193) target = $region28
      $region27: #{content_loss.1} parent=11 // pred_region
        _
      $region28: #{content_loss.1} parent=11 // pred_fallthru
        _
      // Predicated region
      $region29: #{content_loss.1} parent=11 // pred_check
        %p196 = pneg %p143
      $region30: #{content_loss.1} parent=11 // pred_check_branch
        %198 = sbr.rel (%p196) target = $region32
      $region31: #{content_loss.1} parent=11 // pred_region
        _
      $region32: #{content_loss.1} parent=11 // pred_fallthru
        _
    $region12: #{content_loss.1} parent=5 // pred_fallthru
      _
    %p199 = scmp.lt.s32.totalorder %s12, 2
    // Predicated region
    $region33: #{content_loss.1} parent=5 // pred_check
      %p200 = pneg %p199
    $region34: #{content_loss.1} parent=5 // pred_check_branch
      %202 = sbr.rel (%p200) target = $region36
    $region35: #{content_loss.1} parent=5 // pred_region
      // Predicated region
      $region37: #{content_loss.1} parent=35 // pred_check
        %p203 = pneg %p32
      $region38: #{content_loss.1} parent=35 // pred_check_branch
        %205 = sbr.rel (%p203) target = $region40
      $region39: #{content_loss.1} parent=35 // pred_region
        %p206 = scmp.lt.s32.totalorder %s12, 1
        %s207 = scalar_select %p206, %s12, 1
        %s208 = smul.addr %s207, 24
        %s209 = smul.addr %s208, 8
        %s210 = scalar_lea.vmem %s0, %s209
      $region40: #{content_loss.1} parent=35 // pred_fallthru
        _
    $region36: #{content_loss.1} parent=5 // pred_fallthru
      _
    %p211 = scmp.le.s32.totalorder 1, %s12
    %p212 = scmp.lt.s32.totalorder %s12, 3
    %p213 = pnand %p211, %p212
    %p214 = pneg %p213
    // Predicated region
    $region41: #{content_loss.1} parent=5 // pred_check
      _
    $region42: #{content_loss.1} parent=5 // pred_check_branch
      %216 = sbr.rel (%p213) target = $region44
    $region43: #{content_loss.1} parent=5 // pred_region
      %s217 = ssub.s32 %s12, 1
      %p218 = scmp.lt.s32.totalorder %s17, 1
      %s219 = scalar_select %p218, %s17, 1
      %s220 = smul.addr %s219, 24
      %s221 = smul.addr %s220, 8
      %s222 = scalar_lea.vmem %s0, %s221
      %p223 = pneg %p38
      %p224 = pneg %p35
      %p225 = pneg %p59
      %p226 = pneg %p56
      %p227 = pneg %p80
      %p228 = pneg %p77
      %p229 = pneg %p101
      %p230 = pneg %p98
      %p231 = pneg %p122
      %p232 = pneg %p119
      %p233 = pneg %p143
      %p234 = pneg %p140
      %p235 = pneg %p169
      %p236 = pneg %p166
      %p237 = scmp.lt.s32.totalorder %s17, 1
      %s238 = scalar_select %p237, %s17, 1
      %s239 = smul.addr %s238, 8
      %s240 = scalar_lea.vmem %s6, %s239
      %p241 = scmp.lt.s32.totalorder %s17, 1
      %s242 = scalar_select %p241, %s17, 1
      %s243 = smul.addr %s242, 24
      %s244 = smul.addr %s243, 8
      %s245 = scalar_lea.vmem %s0, %s244
      %p246 = scmp.lt.s32.totalorder %s17, 1
      %s247 = scalar_select %p246, %s17, 1
      %s248 = smul.addr %s247, 8
      %s249 = scalar_lea.vmem %s6, %s248
      %v251 = vld [vmem:[%s1] sm:$0x3f]
      %v252 = vld [vmem:[%s2] sm:$0xff]
      %v253 = vld [vmem:[%s2 + $0x8] sm:$0xff]
      %v254 = vld [vmem:[%s2 + $0x10] sm:$0xff]
      %v255 = vld [vmem:[%s2 + $0x18] sm:$0xff]
      %v256 = vld [vmem:[%s2 + $0x20] sm:$0xff]
      %v257 = vld [vmem:[%s2 + $0x28] sm:$0xff]
      %v258 = vld [vmem:[%s2 + $0x30] sm:$0xff]
      %v259 = vld [vmem:[%s2 + $0x38] sm:$0xff]
      %v260 = vld [vmem:[%s2 + $0x40] sm:$0xff]
      %v261 = vld [vmem:[%s2 + $0x48] sm:$0xff]
      %v262 = vld [vmem:[%s2 + $0x50] sm:$0xff]
      %v263 = vld [vmem:[%s2 + $0x58] sm:$0xff]
      %v264 = vld [vmem:[%s2 + $0x60] sm:$0xff]
      %v265 = vld [vmem:[%s2 + $0x68] sm:$0xff]
      %v266 = vld [vmem:[%s2 + $0x70] sm:$0xff]
      %v267 = vld [vmem:[%s2 + $0x78] sm:$0xff]
      %v268 = vld [vmem:[%s245] sm:$0xff]
      %v269 = vld [vmem:[%s245 + $0x8] sm:$0xff]
      %v270 = vld [vmem:[%s245 + $0x10] sm:$0xff]
      %v271 = vld [vmem:[%s245 + $0x18] sm:$0xff]
      %v272 = vld [vmem:[%s245 + $0x20] sm:$0xff]
      %v273 = vld [vmem:[%s245 + $0x28] sm:$0xff]
      %v274 = vld [vmem:[%s245 + $0x30] sm:$0xff]
      %v275 = vld [vmem:[%s245 + $0x38] sm:$0xff]
      %v276 = vld [vmem:[%s245 + $0x40] sm:$0xff]
      %v277 = vld [vmem:[%s245 + $0x48] sm:$0xff]
      %v278 = vld [vmem:[%s245 + $0x50] sm:$0xff]
      %v279 = vld [vmem:[%s245 + $0x58] sm:$0xff]
      %v280 = vld [vmem:[%s245 + $0x60] sm:$0xff]
      %v281 = vld [vmem:[%s245 + $0x68] sm:$0xff]
      %v282 = vld [vmem:[%s245 + $0x70] sm:$0xff]
      %v283 = vld [vmem:[%s245 + $0x78] sm:$0xff]
      %v284 = vld [vmem:[%s245 + $0x80] sm:$0xff]
      %v285 = vld [vmem:[%s245 + $0x88] sm:$0xff]
      %v286 = vld [vmem:[%s245 + $0x90] sm:$0xff]
      %v287 = vld [vmem:[%s245 + $0x98] sm:$0xff]
      %v288 = vld [vmem:[%s245 + $0xa0] sm:$0xff]
      %v289 = vld [vmem:[%s245 + $0xa8] sm:$0xff]
      %v290 = vld [vmem:[%s245 + $0xb0] sm:$0xff]
      %v291 = vld [vmem:[%s245 + $0xb8] sm:$0xff]
      %v292 = vld [vmem:[%s3] sm:$0xff]
      %v293 = vld [vmem:[%s3 + $0x8] sm:$0xff]
      %v294 = vld [vmem:[%s3 + $0x10] sm:$0xff]
      %v295 = vld [vmem:[%s3 + $0x18] sm:$0xff]
      %v296 = vld [vmem:[%s3 + $0x20] sm:$0xff]
      %v297 = vld [vmem:[%s3 + $0x28] sm:$0xff]
      %v298 = vld [vmem:[%s3 + $0x30] sm:$0xff]
      %v299 = vld [vmem:[%s3 + $0x38] sm:$0xff]
      %v300 = vld [vmem:[%s3 + $0x40] sm:$0xff]
      %v301 = vld [vmem:[%s3 + $0x48] sm:$0xff]
      %v302 = vld [vmem:[%s3 + $0x50] sm:$0xff]
      %v303 = vld [vmem:[%s3 + $0x58] sm:$0xff]
      %v304 = vld [vmem:[%s3 + $0x60] sm:$0xff]
      %v305 = vld [vmem:[%s3 + $0x68] sm:$0xff]
      %v306 = vld [vmem:[%s3 + $0x70] sm:$0xff]
      %v307 = vld [vmem:[%s3 + $0x78] sm:$0xff]
      %309 = vset.pattern.permute.xlu0 0
      %310 = vperm.xlu0 %309, %v292
      %v311 = vpop.permute.xlu0 %310
      %314 = vset.pattern.permute.xlu0 0
      %315 = vperm.xlu0 %314, %v293
      %v316 = vpop.permute.xlu0 %315
      %319 = vset.pattern.permute.xlu0 0
      %320 = vperm.xlu0 %319, %v294
      %v321 = vpop.permute.xlu0 %320
      %324 = vset.pattern.permute.xlu0 0
      %325 = vperm.xlu0 %324, %v295
      %v326 = vpop.permute.xlu0 %325
      %329 = vset.pattern.permute.xlu0 0
      %330 = vperm.xlu0 %329, %v296
      %v331 = vpop.permute.xlu0 %330
      %334 = vset.pattern.permute.xlu0 0
      %335 = vperm.xlu0 %334, %v297
      %v336 = vpop.permute.xlu0 %335
      %339 = vset.pattern.permute.xlu0 0
      %340 = vperm.xlu0 %339, %v298
      %v341 = vpop.permute.xlu0 %340
      %344 = vset.pattern.permute.xlu0 0
      %345 = vperm.xlu0 %344, %v299
      %v346 = vpop.permute.xlu0 %345
      %349 = vset.pattern.permute.xlu0 0
      %350 = vperm.xlu0 %349, %v300
      %v351 = vpop.permute.xlu0 %350
      %354 = vset.pattern.permute.xlu0 0
      %355 = vperm.xlu0 %354, %v301
      %v356 = vpop.permute.xlu0 %355
      %359 = vset.pattern.permute.xlu0 0
      %360 = vperm.xlu0 %359, %v302
      %v361 = vpop.permute.xlu0 %360
      %364 = vset.pattern.permute.xlu0 0
      %365 = vperm.xlu0 %364, %v303
      %v366 = vpop.permute.xlu0 %365
      %369 = vset.pattern.permute.xlu0 0
      %370 = vperm.xlu0 %369, %v304
      %v371 = vpop.permute.xlu0 %370
      %374 = vset.pattern.permute.xlu0 0
      %375 = vperm.xlu0 %374, %v305
      %v376 = vpop.permute.xlu0 %375
      %379 = vset.pattern.permute.xlu0 0
      %380 = vperm.xlu0 %379, %v306
      %v381 = vpop.permute.xlu0 %380
      %384 = vset.pattern.permute.xlu0 0
      %385 = vperm.xlu0 %384, %v307
      %v386 = vpop.permute.xlu0 %385
      %vm388 = vcmask 261120
      %v390 = vsel %vm388, %v252, 0
      %v393 = vsel %vm388, %v253, 0
      %v396 = vsel %vm388, %v254, 0
      %v399 = vsel %vm388, %v255, 0
      %v402 = vsel %vm388, %v256, 0
      %v405 = vsel %vm388, %v257, 0
      %v408 = vsel %vm388, %v258, 0
      %v411 = vsel %vm388, %v259, 0
      %v414 = vsel %vm388, %v260, 0
      %v417 = vsel %vm388, %v261, 0
      %v420 = vsel %vm388, %v262, 0
      %v423 = vsel %vm388, %v263, 0
      %v426 = vsel %vm388, %v264, 0
      %v429 = vsel %vm388, %v265, 0
      %v432 = vsel %vm388, %v266, 0
      %v435 = vsel %vm388, %v267, 0
      %437 = vmatprep.subr.mxu0 %v269
      %438 = vmatpush1.msra.mxu0 %v268
      %439 = vmatprep.subr.mxu0 %v275
      %440 = vmatpush1.msra.mxu0 %v274
      %441 = vmatprep.subr.mxu0 %v281
      %442 = vmatpush1.msra.mxu0 %v280
      %443 = vmatprep.subr.mxu0 %v287
      %444 = vmatpush1.msra.mxu0 %v286
      %445 = vmatprep.subr.mxu0 0.0
      %446 = vmatpush1.msra.mxu0 0.0
      %447 = vmatprep.subr.mxu0 0.0
      %448 = vmatpush1.msra.mxu0 0.0
      %449 = vmatprep.subr.mxu0 0.0
      %450 = vmatpush1.msra.mxu0 0.0
      %451 = vmatprep.subr.mxu0 0.0
      %452 = vmatpush1.msra.mxu0 0.0
      %453 = vmatprep.subr.mxu0 0.0
      %454 = vmatpush1.msra.mxu0 0.0
      %455 = vmatprep.subr.mxu0 0.0
      %456 = vmatpush1.msra.mxu0 0.0
      %457 = vmatprep.subr.mxu0 0.0
      %458 = vmatpush1.msra.mxu0 0.0
      %459 = vmatprep.subr.mxu0 0.0
      %460 = vmatpush1.msra.mxu0 0.0
      %461 = vmatprep.subr.mxu0 0.0
      %462 = vmatpush1.msra.mxu0 0.0
      %463 = vmatprep.subr.mxu0 0.0
      %464 = vmatpush1.msra.mxu0 0.0
      %465 = vmatprep.subr.mxu0 0.0
      %466 = vmatpush1.msra.mxu0 0.0
      %467 = vmatprep.subr.mxu0 0.0
      %468 = vmatpush1.msra.mxu0 0.0
      %469 = vmatprep.subr.mxu0 0.0
      %470 = vmatpush1.msra.mxu0 0.0
      %471 = vmatprep.subr.mxu0 0.0
      %472 = vmatpush1.msra.mxu0 0.0
      %473 = vmatprep.subr.mxu0 0.0
      %474 = vmatpush1.msra.mxu0 0.0
      %475 = vmatprep.subr.mxu0 0.0
      %476 = vmatpush1.msra.mxu0 0.0
      %477 = vmatprep.subr.mxu0 0.0
      %478 = vmatpush1.msra.mxu0 0.0
      %479 = vmatprep.subr.mxu0 0.0
      %480 = vmatpush1.msra.mxu0 0.0
      %481 = vmatprep.subr.mxu0 0.0
      %482 = vmatpush1.msra.mxu0 0.0
      %483 = vmatprep.subr.mxu0 0.0
      %484 = vmatpush1.msra.mxu0 0.0
      %485 = vmatprep.subr.mxu0 0.0
      %486 = vmatpush1.msra.mxu0 0.0
      %487 = vmatprep.subr.mxu0 0.0
      %488 = vmatpush1.msra.mxu0 0.0
      %489 = vmatprep.subr.mxu0 0.0
      %490 = vmatpush1.msra.mxu0 0.0
      %491 = vmatprep.subr.mxu0 0.0
      %492 = vmatpush1.msra.mxu0 0.0
      %493 = vmatprep.subr.mxu0 0.0
      %494 = vmatpush1.msra.mxu0 0.0
      %495 = vmatprep.subr.mxu0 0.0
      %496 = vmatpush1.msra.mxu0 0.0
      %497 = vmatprep.subr.mxu0 0.0
      %498 = vmatpush1.msra.mxu0 0.0
      %499 = vmatprep.subr.mxu0 0.0
      %500 = vmatpush1.msra.mxu0 0.0
      %501 = vmatprep.mubr.f32.mxu0 0.0
      %502 = vmatmul.mubr.f32.gmra.mrb[0].mxu0 %v390
      %v503 = vpop.f32.mrb[0].mxu0
      %v504 = vadd.f32 %v311, %v503
      %v505 = vpop.f32.mrb[0].mxu0
      %v506 = vadd.f32 %v311, %v505
      %507 = vmatprep.mubr.f32.mxu0 0.0
      %508 = vmatmul.mubr.f32.gmra.mrb[0].mxu0 %v393
      %v509 = vpop.f32.mrb[0].mxu0
      %v510 = vadd.f32 %v316, %v509
      %v511 = vpop.f32.mrb[0].mxu0
      %v512 = vadd.f32 %v316, %v511
      %513 = vmatprep.mubr.f32.mxu0 0.0
      %514 = vmatmul.mubr.f32.gmra.mrb[0].mxu0 %v396
      %v515 = vpop.f32.mrb[0].mxu0
      %v516 = vadd.f32 %v321, %v515
      %v517 = vpop.f32.mrb[0].mxu0
      %v518 = vadd.f32 %v321, %v517
      %519 = vmatprep.mubr.f32.mxu0 0.0
      %520 = vmatmul.mubr.f32.gmra.mrb[0].mxu0 %v399
      %v521 = vpop.f32.mrb[0].mxu0
      %v522 = vadd.f32 %v326, %v521
      %v523 = vpop.f32.mrb[0].mxu0
      %v524 = vadd.f32 %v326, %v523
      %525 = vmatprep.mubr.f32.mxu0 0.0
      %526 = vmatmul.mubr.f32.gmra.mrb[0].mxu0 %v402
      %v527 = vpop.f32.mrb[0].mxu0
      %v528 = vadd.f32 %v331, %v527
      %v529 = vpop.f32.mrb[0].mxu0
      %v530 = vadd.f32 %v331, %v529
      %531 = vmatprep.mubr.f32.mxu0 0.0
      %532 = vmatmul.mubr.f32.gmra.mrb[0].mxu0 %v405
      %v533 = vpop.f32.mrb[0].mxu0
      %v534 = vadd.f32 %v336, %v533
      %v535 = vpop.f32.mrb[0].mxu0
      %v536 = vadd.f32 %v336, %v535
      %537 = vmatprep.mubr.f32.mxu0 0.0
      %538 = vmatmul.mubr.f32.gmra.mrb[0].mxu0 %v408
      %v539 = vpop.f32.mrb[0].mxu0
      %v540 = vadd.f32 %v341, %v539
      %v541 = vpop.f32.mrb[0].mxu0
      %v542 = vadd.f32 %v341, %v541
      %543 = vmatprep.mubr.f32.mxu0 0.0
      %544 = vmatmul.mubr.f32.gmra.mrb[0].mxu0 %v411
      %v545 = vpop.f32.mrb[0].mxu0
      %v546 = vadd.f32 %v346, %v545
      %v547 = vpop.f32.mrb[0].mxu0
      %v548 = vadd.f32 %v346, %v547
      %549 = vmatprep.mubr.f32.mxu0 0.0
      %550 = vmatmul.mubr.f32.gmra.mrb[0].mxu0 %v414
      %v551 = vpop.f32.mrb[0].mxu0
      %v552 = vadd.f32 %v351, %v551
      %v553 = vpop.f32.mrb[0].mxu0
      %v554 = vadd.f32 %v351, %v553
      %555 = vmatprep.mubr.f32.mxu0 0.0
      %556 = vmatmul.mubr.f32.gmra.mrb[0].mxu0 %v417
      %v557 = vpop.f32.mrb[0].mxu0
      %v558 = vadd.f32 %v356, %v557
      %v559 = vpop.f32.mrb[0].mxu0
      %v560 = vadd.f32 %v356, %v559
      %561 = vmatprep.mubr.f32.mxu0 0.0
      %562 = vmatmul.mubr.f32.gmra.mrb[0].mxu0 %v420
      %v563 = vpop.f32.mrb[0].mxu0
      %v564 = vadd.f32 %v361, %v563
      %v565 = vpop.f32.mrb[0].mxu0
      %v566 = vadd.f32 %v361, %v565
      %567 = vmatprep.mubr.f32.mxu0 0.0
      %568 = vmatmul.mubr.f32.gmra.mrb[0].mxu0 %v423
      %v569 = vpop.f32.mrb[0].mxu0
      %v570 = vadd.f32 %v366, %v569
      %v571 = vpop.f32.mrb[0].mxu0
      %v572 = vadd.f32 %v366, %v571
      %573 = vmatprep.mubr.f32.mxu0 0.0
      %574 = vmatmul.mubr.f32.gmra.mrb[0].mxu0 %v426
      %v575 = vpop.f32.mrb[0].mxu0
      %v576 = vadd.f32 %v371, %v575
      %v577 = vpop.f32.mrb[0].mxu0
      %v578 = vadd.f32 %v371, %v577
      %579 = vmatprep.mubr.f32.mxu0 0.0
      %580 = vmatmul.mubr.f32.gmra.mrb[0].mxu0 %v429
      %v581 = vpop.f32.mrb[0].mxu0
      %v582 = vadd.f32 %v376, %v581
      %v583 = vpop.f32.mrb[0].mxu0
      %v584 = vadd.f32 %v376, %v583
      %585 = vmatprep.mubr.f32.mxu0 0.0
      %586 = vmatmul.mubr.f32.gmra.mrb[0].mxu0 %v432
      %v587 = vpop.f32.mrb[0].mxu0
      %v588 = vadd.f32 %v381, %v587
      %v589 = vpop.f32.mrb[0].mxu0
      %v590 = vadd.f32 %v381, %v589
      %591 = vmatprep.mubr.f32.mxu0 0.0
      %592 = vmatmul.mubr.f32.gmra.mrb[0].mxu0 %v435
      %v593 = vpop.f32.mrb[0].mxu0
      %v594 = vadd.f32 %v386, %v593
      %v595 = vpop.f32.mrb[0].mxu0
      %v596 = vadd.f32 %v386, %v595
      %597 = vdwg.mxu0
      %598 = vmatprep.subr.mxu0 %v271
      %599 = vmatpush1.msra.mxu0 %v270
      %600 = vmatprep.subr.mxu0 %v277
      %601 = vmatpush1.msra.mxu0 %v276
      %602 = vmatprep.subr.mxu0 %v283
      %603 = vmatpush1.msra.mxu0 %v282
      %604 = vmatprep.subr.mxu0 %v289
      %605 = vmatpush1.msra.mxu0 %v288
      %606 = vmatprep.subr.mxu0 0.0
      %607 = vmatpush1.msra.mxu0 0.0
      %608 = vmatprep.subr.mxu0 0.0
      %609 = vmatpush1.msra.mxu0 0.0
      %610 = vmatprep.subr.mxu0 0.0
      %611 = vmatpush1.msra.mxu0 0.0
      %612 = vmatprep.subr.mxu0 0.0
      %613 = vmatpush1.msra.mxu0 0.0
      %614 = vmatprep.subr.mxu0 0.0
      %615 = vmatpush1.msra.mxu0 0.0
      %616 = vmatprep.subr.mxu0 0.0
      %617 = vmatpush1.msra.mxu0 0.0
      %618 = vmatprep.subr.mxu0 0.0
      %619 = vmatpush1.msra.mxu0 0.0
      %620 = vmatprep.subr.mxu0 0.0
      %621 = vmatpush1.msra.mxu0 0.0
      %622 = vmatprep.subr.mxu0 0.0
      %623 = vmatpush1.msra.mxu0 0.0
      %624 = vmatprep.subr.mxu0 0.0
      %625 = vmatpush1.msra.mxu0 0.0
      %626 = vmatprep.subr.mxu0 0.0
      %627 = vmatpush1.msra.mxu0 0.0
      %628 = vmatprep.subr.mxu0 0.0
      %629 = vmatpush1.msra.mxu0 0.0
      %630 = vmatprep.subr.mxu0 0.0
      %631 = vmatpush1.msra.mxu0 0.0
      %632 = vmatprep.subr.mxu0 0.0
      %633 = vmatpush1.msra.mxu0 0.0
      %634 = vmatprep.subr.mxu0 0.0
      %635 = vmatpush1.msra.mxu0 0.0
      %636 = vmatprep.subr.mxu0 0.0
      %637 = vmatpush1.msra.mxu0 0.0
      %638 = vmatprep.subr.mxu0 0.0
      %639 = vmatpush1.msra.mxu0 0.0
      %640 = vmatprep.subr.mxu0 0.0
      %641 = vmatpush1.msra.mxu0 0.0
      %642 = vmatprep.subr.mxu0 0.0
      %643 = vmatpush1.msra.mxu0 0.0
      %644 = vmatprep.subr.mxu0 0.0
      %645 = vmatpush1.msra.mxu0 0.0
      %646 = vmatprep.subr.mxu0 0.0
      %647 = vmatpush1.msra.mxu0 0.0
      %648 = vmatprep.subr.mxu0 0.0
      %649 = vmatpush1.msra.mxu0 0.0
      %650 = vmatprep.subr.mxu0 0.0
      %651 = vmatpush1.msra.mxu0 0.0
      %652 = vmatprep.subr.mxu0 0.0
      %653 = vmatpush1.msra.mxu0 0.0
      %654 = vmatprep.subr.mxu0 0.0
      %655 = vmatpush1.msra.mxu0 0.0
      %656 = vmatprep.subr.mxu0 0.0
      %657 = vmatpush1.msra.mxu0 0.0
      %658 = vmatprep.subr.mxu0 0.0
      %659 = vmatpush1.msra.mxu0 0.0
      %660 = vmatprep.subr.mxu0 0.0
      %661 = vmatpush1.msra.mxu0 0.0
      %662 = vmatprep.mubr.f32.mxu0 0.0
      %663 = vmatmul.mubr.f32.gmra.mrb[0].mxu0 %v390
      %v664 = vpop.f32.mrb[0].mxu0
      %v665 = vadd.f32 %v311, %v664
      %v666 = vpop.f32.mrb[0].mxu0
      %v667 = vadd.f32 %v311, %v666
      %668 = vmatprep.mubr.f32.mxu0 0.0
      %669 = vmatmul.mubr.f32.gmra.mrb[0].mxu0 %v393
      %v670 = vpop.f32.mrb[0].mxu0
      %v671 = vadd.f32 %v316, %v670
      %v672 = vpop.f32.mrb[0].mxu0
      %v673 = vadd.f32 %v316, %v672
      %674 = vmatprep.mubr.f32.mxu0 0.0
      %675 = vmatmul.mubr.f32.gmra.mrb[0].mxu0 %v396
      %v676 = vpop.f32.mrb[0].mxu0
      %v677 = vadd.f32 %v321, %v676
      %v678 = vpop.f32.mrb[0].mxu0
      %v679 = vadd.f32 %v321, %v678
      %680 = vmatprep.mubr.f32.mxu0 0.0
      %681 = vmatmul.mubr.f32.gmra.mrb[0].mxu0 %v399
      %v682 = vpop.f32.mrb[0].mxu0
      %v683 = vadd.f32 %v326, %v682
      %v684 = vpop.f32.mrb[0].mxu0
      %v685 = vadd.f32 %v326, %v684
      %686 = vmatprep.mubr.f32.mxu0 0.0
      %687 = vmatmul.mubr.f32.gmra.mrb[0].mxu0 %v402
      %v688 = vpop.f32.mrb[0].mxu0
      %v689 = vadd.f32 %v331, %v688
      %v690 = vpop.f32.mrb[0].mxu0
      %v691 = vadd.f32 %v331, %v690
      %692 = vmatprep.mubr.f32.mxu0 0.0
      %693 = vmatmul.mubr.f32.gmra.mrb[0].mxu0 %v405
      %v694 = vpop.f32.mrb[0].mxu0
      %v695 = vadd.f32 %v336, %v694
      %v696 = vpop.f32.mrb[0].mxu0
      %v697 = vadd.f32 %v336, %v696
      %698 = vmatprep.mubr.f32.mxu0 0.0
      %699 = vmatmul.mubr.f32.gmra.mrb[0].mxu0 %v408
      %v700 = vpop.f32.mrb[0].mxu0
      %v701 = vadd.f32 %v341, %v700
      %v702 = vpop.f32.mrb[0].mxu0
      %v703 = vadd.f32 %v341, %v702
      %704 = vmatprep.mubr.f32.mxu0 0.0
      %705 = vmatmul.mubr.f32.gmra.mrb[0].mxu0 %v411
      %v706 = vpop.f32.mrb[0].mxu0
      %v707 = vadd.f32 %v346, %v706
      %v708 = vpop.f32.mrb[0].mxu0
      %v709 = vadd.f32 %v346, %v708
      %710 = vmatprep.mubr.f32.mxu0 0.0
      %711 = vmatmul.mubr.f32.gmra.mrb[0].mxu0 %v414
      %v712 = vpop.f32.mrb[0].mxu0
      %v713 = vadd.f32 %v351, %v712
      %v714 = vpop.f32.mrb[0].mxu0
      %v715 = vadd.f32 %v351, %v714
      %716 = vmatprep.mubr.f32.mxu0 0.0
      %717 = vmatmul.mubr.f32.gmra.mrb[0].mxu0 %v417
      %v718 = vpop.f32.mrb[0].mxu0
      %v719 = vadd.f32 %v356, %v718
      %v720 = vpop.f32.mrb[0].mxu0
      %v721 = vadd.f32 %v356, %v720
      %722 = vmatprep.mubr.f32.mxu0 0.0
      %723 = vmatmul.mubr.f32.gmra.mrb[0].mxu0 %v420
      %v724 = vpop.f32.mrb[0].mxu0
      %v725 = vadd.f32 %v361, %v724
      %v726 = vpop.f32.mrb[0].mxu0
      %v727 = vadd.f32 %v361, %v726
      %728 = vmatprep.mubr.f32.mxu0 0.0
      %729 = vmatmul.mubr.f32.gmra.mrb[0].mxu0 %v423
      %v730 = vpop.f32.mrb[0].mxu0
      %v731 = vadd.f32 %v366, %v730
      %v732 = vpop.f32.mrb[0].mxu0
      %v733 = vadd.f32 %v366, %v732
      %734 = vmatprep.mubr.f32.mxu0 0.0
      %735 = vmatmul.mubr.f32.gmra.mrb[0].mxu0 %v426
      %v736 = vpop.f32.mrb[0].mxu0
      %v737 = vadd.f32 %v371, %v736
      %v738 = vpop.f32.mrb[0].mxu0
      %v739 = vadd.f32 %v371, %v738
      %740 = vmatprep.mubr.f32.mxu0 0.0
      %741 = vmatmul.mubr.f32.gmra.mrb[0].mxu0 %v429
      %v742 = vpop.f32.mrb[0].mxu0
      %v743 = vadd.f32 %v376, %v742
      %v744 = vpop.f32.mrb[0].mxu0
      %v745 = vadd.f32 %v376, %v744
      %746 = vmatprep.mubr.f32.mxu0 0.0
      %747 = vmatmul.mubr.f32.gmra.mrb[0].mxu0 %v432
      %v748 = vpop.f32.mrb[0].mxu0
      %v749 = vadd.f32 %v381, %v748
      %v750 = vpop.f32.mrb[0].mxu0
      %v751 = vadd.f32 %v381, %v750
      %752 = vmatprep.mubr.f32.mxu0 0.0
      %753 = vmatmul.mubr.f32.gmra.mrb[0].mxu0 %v435
      %v754 = vpop.f32.mrb[0].mxu0
      %v755 = vadd.f32 %v386, %v754
      %v756 = vpop.f32.mrb[0].mxu0
      %v757 = vadd.f32 %v386, %v756
      %758 = vdwg.mxu0
      %759 = vmatprep.subr.mxu0 %v273
      %760 = vmatpush1.msra.mxu0 %v272
      %761 = vmatprep.subr.mxu0 %v279
      %762 = vmatpush1.msra.mxu0 %v278
      %763 = vmatprep.subr.mxu0 %v285
      %764 = vmatpush1.msra.mxu0 %v284
      %765 = vmatprep.subr.mxu0 %v291
      %766 = vmatpush1.msra.mxu0 %v290
      %767 = vmatprep.subr.mxu0 0.0
      %768 = vmatpush1.msra.mxu0 0.0
      %769 = vmatprep.subr.mxu0 0.0
      %770 = vmatpush1.msra.mxu0 0.0
      %771 = vmatprep.subr.mxu0 0.0
      %772 = vmatpush1.msra.mxu0 0.0
      %773 = vmatprep.subr.mxu0 0.0
      %774 = vmatpush1.msra.mxu0 0.0
      %775 = vmatprep.subr.mxu0 0.0
      %776 = vmatpush1.msra.mxu0 0.0
      %777 = vmatprep.subr.mxu0 0.0
      %778 = vmatpush1.msra.mxu0 0.0
      %779 = vmatprep.subr.mxu0 0.0
      %780 = vmatpush1.msra.mxu0 0.0
      %781 = vmatprep.subr.mxu0 0.0
      %782 = vmatpush1.msra.mxu0 0.0
      %783 = vmatprep.subr.mxu0 0.0
      %784 = vmatpush1.msra.mxu0 0.0
      %785 = vmatprep.subr.mxu0 0.0
      %786 = vmatpush1.msra.mxu0 0.0
      %787 = vmatprep.subr.mxu0 0.0
      %788 = vmatpush1.msra.mxu0 0.0
      %789 = vmatprep.subr.mxu0 0.0
      %790 = vmatpush1.msra.mxu0 0.0
      %791 = vmatprep.subr.mxu0 0.0
      %792 = vmatpush1.msra.mxu0 0.0
      %793 = vmatprep.subr.mxu0 0.0
      %794 = vmatpush1.msra.mxu0 0.0
      %795 = vmatprep.subr.mxu0 0.0
      %796 = vmatpush1.msra.mxu0 0.0
      %797 = vmatprep.subr.mxu0 0.0
      %798 = vmatpush1.msra.mxu0 0.0
      %799 = vmatprep.subr.mxu0 0.0
      %800 = vmatpush1.msra.mxu0 0.0
      %801 = vmatprep.subr.mxu0 0.0
      %802 = vmatpush1.msra.mxu0 0.0
      %803 = vmatprep.subr.mxu0 0.0
      %804 = vmatpush1.msra.mxu0 0.0
      %805 = vmatprep.subr.mxu0 0.0
      %806 = vmatpush1.msra.mxu0 0.0
      %807 = vmatprep.subr.mxu0 0.0
      %808 = vmatpush1.msra.mxu0 0.0
      %809 = vmatprep.subr.mxu0 0.0
      %810 = vmatpush1.msra.mxu0 0.0
      %811 = vmatprep.subr.mxu0 0.0
      %812 = vmatpush1.msra.mxu0 0.0
      %813 = vmatprep.subr.mxu0 0.0
      %814 = vmatpush1.msra.mxu0 0.0
      %815 = vmatprep.subr.mxu0 0.0
      %816 = vmatpush1.msra.mxu0 0.0
      %817 = vmatprep.subr.mxu0 0.0
      %818 = vmatpush1.msra.mxu0 0.0
      %819 = vmatprep.subr.mxu0 0.0
      %820 = vmatpush1.msra.mxu0 0.0
      %821 = vmatprep.subr.mxu0 0.0
      %822 = vmatpush1.msra.mxu0 0.0
      %823 = vmatprep.mubr.f32.mxu0 0.0
      %824 = vmatmul.mubr.f32.gmra.mrb[0].mxu0 %v390
      %v825 = vpop.f32.mrb[0].mxu0
      %v826 = vadd.f32 %v311, %v825
      %v827 = vpop.f32.mrb[0].mxu0
      %v828 = vadd.f32 %v311, %v827
      %829 = vmatprep.mubr.f32.mxu0 0.0
      %830 = vmatmul.mubr.f32.gmra.mrb[0].mxu0 %v393
      %v831 = vpop.f32.mrb[0].mxu0
      %v832 = vadd.f32 %v316, %v831
      %v833 = vpop.f32.mrb[0].mxu0
      %v834 = vadd.f32 %v316, %v833
      %835 = vmatprep.mubr.f32.mxu0 0.0
      %836 = vmatmul.mubr.f32.gmra.mrb[0].mxu0 %v396
      %v837 = vpop.f32.mrb[0].mxu0
      %v838 = vadd.f32 %v321, %v837
      %v839 = vpop.f32.mrb[0].mxu0
      %v840 = vadd.f32 %v321, %v839
      %841 = vmatprep.mubr.f32.mxu0 0.0
      %842 = vmatmul.mubr.f32.gmra.mrb[0].mxu0 %v399
      %v843 = vpop.f32.mrb[0].mxu0
      %v844 = vadd.f32 %v326, %v843
      %v845 = vpop.f32.mrb[0].mxu0
      %v846 = vadd.f32 %v326, %v845
      %847 = vmatprep.mubr.f32.mxu0 0.0
      %848 = vmatmul.mubr.f32.gmra.mrb[0].mxu0 %v402
      %v849 = vpop.f32.mrb[0].mxu0
      %v850 = vadd.f32 %v331, %v849
      %v851 = vpop.f32.mrb[0].mxu0
      %v852 = vadd.f32 %v331, %v851
      %853 = vmatprep.mubr.f32.mxu0 0.0
      %854 = vmatmul.mubr.f32.gmra.mrb[0].mxu0 %v405
      %v855 = vpop.f32.mrb[0].mxu0
      %v856 = vadd.f32 %v336, %v855
      %v857 = vpop.f32.mrb[0].mxu0
      %v858 = vadd.f32 %v336, %v857
      %859 = vmatprep.mubr.f32.mxu0 0.0
      %860 = vmatmul.mubr.f32.gmra.mrb[0].mxu0 %v408
      %v861 = vpop.f32.mrb[0].mxu0
      %v862 = vadd.f32 %v341, %v861
      %v863 = vpop.f32.mrb[0].mxu0
      %v864 = vadd.f32 %v341, %v863
      %865 = vmatprep.mubr.f32.mxu0 0.0
      %866 = vmatmul.mubr.f32.gmra.mrb[0].mxu0 %v411
      %v867 = vpop.f32.mrb[0].mxu0
      %v868 = vadd.f32 %v346, %v867
      %v869 = vpop.f32.mrb[0].mxu0
      %v870 = vadd.f32 %v346, %v869
      %871 = vmatprep.mubr.f32.mxu0 0.0
      %872 = vmatmul.mubr.f32.gmra.mrb[0].mxu0 %v414
      %v873 = vpop.f32.mrb[0].mxu0
      %v874 = vadd.f32 %v351, %v873
      %v875 = vpop.f32.mrb[0].mxu0
      %v876 = vadd.f32 %v351, %v875
      %877 = vmatprep.mubr.f32.mxu0 0.0
      %878 = vmatmul.mubr.f32.gmra.mrb[0].mxu0 %v417
      %v879 = vpop.f32.mrb[0].mxu0
      %v880 = vadd.f32 %v356, %v879
      %v881 = vpop.f32.mrb[0].mxu0
      %v882 = vadd.f32 %v356, %v881
      %883 = vmatprep.mubr.f32.mxu0 0.0
      %884 = vmatmul.mubr.f32.gmra.mrb[0].mxu0 %v420
      %v885 = vpop.f32.mrb[0].mxu0
      %v886 = vadd.f32 %v361, %v885
      %v887 = vpop.f32.mrb[0].mxu0
      %v888 = vadd.f32 %v361, %v887
      %889 = vmatprep.mubr.f32.mxu0 0.0
      %890 = vmatmul.mubr.f32.gmra.mrb[0].mxu0 %v423
      %v891 = vpop.f32.mrb[0].mxu0
      %v892 = vadd.f32 %v366, %v891
      %v893 = vpop.f32.mrb[0].mxu0
      %v894 = vadd.f32 %v366, %v893
      %895 = vmatprep.mubr.f32.mxu0 0.0
      %896 = vmatmul.mubr.f32.gmra.mrb[0].mxu0 %v426
      %v897 = vpop.f32.mrb[0].mxu0
      %v898 = vadd.f32 %v371, %v897
      %v899 = vpop.f32.mrb[0].mxu0
      %v900 = vadd.f32 %v371, %v899
      %901 = vmatprep.mubr.f32.mxu0 0.0
      %902 = vmatmul.mubr.f32.gmra.mrb[0].mxu0 %v429
      %v903 = vpop.f32.mrb[0].mxu0
      %v904 = vadd.f32 %v376, %v903
      %v905 = vpop.f32.mrb[0].mxu0
      %v906 = vadd.f32 %v376, %v905
      %907 = vmatprep.mubr.f32.mxu0 0.0
      %908 = vmatmul.mubr.f32.gmra.mrb[0].mxu0 %v432
      %v909 = vpop.f32.mrb[0].mxu0
      %v910 = vadd.f32 %v381, %v909
      %v911 = vpop.f32.mrb[0].mxu0
      %v912 = vadd.f32 %v381, %v911
      %913 = vmatprep.mubr.f32.mxu0 0.0
      %914 = vmatmul.mubr.f32.gmra.mrb[0].mxu0 %v435
      %v915 = vpop.f32.mrb[0].mxu0
      %v916 = vadd.f32 %v386, %v915
      %v917 = vpop.f32.mrb[0].mxu0
      %v918 = vadd.f32 %v386, %v917
      %919 = vdwg.mxu0
      %v920 = vmax.f32 %v504, 0.0
      %v921 = vmax.f32 %v506, 0.0
      %v922 = vmax.f32 %v665, 0.0
      %v923 = vmax.f32 %v667, 0.0
      %v924 = vmax.f32 %v826, 0.0
      %v925 = vmax.f32 %v828, 0.0
      %v926 = vmax.f32 %v510, 0.0
      %v927 = vmax.f32 %v512, 0.0
      %v928 = vmax.f32 %v671, 0.0
      %v929 = vmax.f32 %v673, 0.0
      %v930 = vmax.f32 %v832, 0.0
      %v931 = vmax.f32 %v834, 0.0
      %v932 = vmax.f32 %v516, 0.0
      %v933 = vmax.f32 %v518, 0.0
      %v934 = vmax.f32 %v677, 0.0
      %v935 = vmax.f32 %v679, 0.0
      %v936 = vmax.f32 %v838, 0.0
      %v937 = vmax.f32 %v840, 0.0
      %v938 = vmax.f32 %v522, 0.0
      %v939 = vmax.f32 %v524, 0.0
      %v940 = vmax.f32 %v683, 0.0
      %v941 = vmax.f32 %v685, 0.0
      %v942 = vmax.f32 %v844, 0.0
      %v943 = vmax.f32 %v846, 0.0
      %v944 = vmax.f32 %v528, 0.0
      %v945 = vmax.f32 %v530, 0.0
      %v946 = vmax.f32 %v689, 0.0
      %v947 = vmax.f32 %v691, 0.0
      %v948 = vmax.f32 %v850, 0.0
      %v949 = vmax.f32 %v852, 0.0
      %v950 = vmax.f32 %v534, 0.0
      %v951 = vmax.f32 %v536, 0.0
      %v952 = vmax.f32 %v695, 0.0
      %v953 = vmax.f32 %v697, 0.0
      %v954 = vmax.f32 %v856, 0.0
      %v955 = vmax.f32 %v858, 0.0
      %v956 = vmax.f32 %v540, 0.0
      %v957 = vmax.f32 %v542, 0.0
      %v958 = vmax.f32 %v701, 0.0
      %v959 = vmax.f32 %v703, 0.0
      %v960 = vmax.f32 %v862, 0.0
      %v961 = vmax.f32 %v864, 0.0
      %v962 = vmax.f32 %v546, 0.0
      %v963 = vmax.f32 %v548, 0.0
      %v964 = vmax.f32 %v707, 0.0
      %v965 = vmax.f32 %v709, 0.0
      %v966 = vmax.f32 %v868, 0.0
      %v967 = vmax.f32 %v870, 0.0
      %v968 = vmax.f32 %v552, 0.0
      %v969 = vmax.f32 %v554, 0.0
      %v970 = vmax.f32 %v713, 0.0
      %v971 = vmax.f32 %v715, 0.0
      %v972 = vmax.f32 %v874, 0.0
      %v973 = vmax.f32 %v876, 0.0
      %v974 = vmax.f32 %v558, 0.0
      %v975 = vmax.f32 %v560, 0.0
      %v976 = vmax.f32 %v719, 0.0
      %v977 = vmax.f32 %v721, 0.0
      %v978 = vmax.f32 %v880, 0.0
      %v979 = vmax.f32 %v882, 0.0
      %v980 = vmax.f32 %v564, 0.0
      %v981 = vmax.f32 %v566, 0.0
      %v982 = vmax.f32 %v725, 0.0
      %v983 = vmax.f32 %v727, 0.0
      %v984 = vmax.f32 %v886, 0.0
      %v985 = vmax.f32 %v888, 0.0
      %v986 = vmax.f32 %v570, 0.0
      %v987 = vmax.f32 %v572, 0.0
      %v988 = vmax.f32 %v731, 0.0
      %v989 = vmax.f32 %v733, 0.0
      %v990 = vmax.f32 %v892, 0.0
      %v991 = vmax.f32 %v894, 0.0
      %v992 = vmax.f32 %v576, 0.0
      %v993 = vmax.f32 %v578, 0.0
      %v994 = vmax.f32 %v737, 0.0
      %v995 = vmax.f32 %v739, 0.0
      %v996 = vmax.f32 %v898, 0.0
      %v997 = vmax.f32 %v900, 0.0
      %v998 = vmax.f32 %v582, 0.0
      %v999 = vmax.f32 %v584, 0.0
      %v1000 = vmax.f32 %v743, 0.0
      %v1001 = vmax.f32 %v745, 0.0
      %v1002 = vmax.f32 %v904, 0.0
      %v1003 = vmax.f32 %v906, 0.0
      %v1004 = vmax.f32 %v588, 0.0
      %v1005 = vmax.f32 %v590, 0.0
      %v1006 = vmax.f32 %v749, 0.0
      %v1007 = vmax.f32 %v751, 0.0
      %v1008 = vmax.f32 %v910, 0.0
      %v1009 = vmax.f32 %v912, 0.0
      %v1010 = vmax.f32 %v594, 0.0
      %v1011 = vmax.f32 %v596, 0.0
      %v1012 = vmax.f32 %v755, 0.0
      %v1013 = vmax.f32 %v757, 0.0
      %v1014 = vmax.f32 %v916, 0.0
      %v1015 = vmax.f32 %v918, 0.0
      %v1017 = vlaneseq
      %v1018 = vshrl.u32 %v1017, 7
      %v1019 = vsub.s32 0, %v1018
      %v1020 = vrot.slane %v251, %v1019
      %v1021 = vlaneseq
      %v1022 = vshrl.u32 %v1021, 7
      %v1023 = vsub.s32 1, %v1022
      %v1024 = vrot.slane %v251, %v1023
      %v1025 = vlaneseq
      %v1026 = vshrl.u32 %v1025, 7
      %v1027 = vsub.s32 2, %v1026
      %v1028 = vrot.slane %v251, %v1027
      %v1029 = vlaneseq
      %v1030 = vshrl.u32 %v1029, 7
      %v1031 = vsub.s32 3, %v1030
      %v1032 = vrot.slane %v251, %v1031
      %v1033 = vlaneseq
      %v1034 = vshrl.u32 %v1033, 7
      %v1035 = vsub.s32 4, %v1034
      %v1036 = vrot.slane %v251, %v1035
      %v1037 = vlaneseq
      %v1038 = vshrl.u32 %v1037, 7
      %v1039 = vsub.s32 5, %v1038
      %v1040 = vrot.slane %v251, %v1039
      %v1047 = vmul.f32 %v920, %v1020
      %v1048 = vmul.f32 %v921, %v1024
      %v1049 = vmul.f32 %v922, %v1028
      %v1050 = vmul.f32 %v923, %v1032
      %v1051 = vmul.f32 %v924, %v1036
      %v1052 = vmul.f32 %v925, %v1040
      %v1053 = vmul.f32 %v926, %v1020
      %v1054 = vmul.f32 %v927, %v1024
      %v1055 = vmul.f32 %v928, %v1028
      %v1056 = vmul.f32 %v929, %v1032
      %v1057 = vmul.f32 %v930, %v1036
      %v1058 = vmul.f32 %v931, %v1040
      %v1059 = vmul.f32 %v932, %v1020
      %v1060 = vmul.f32 %v933, %v1024
      %v1061 = vmul.f32 %v934, %v1028
      %v1062 = vmul.f32 %v935, %v1032
      %v1063 = vmul.f32 %v936, %v1036
      %v1064 = vmul.f32 %v937, %v1040
      %v1065 = vmul.f32 %v938, %v1020
      %v1066 = vmul.f32 %v939, %v1024
      %v1067 = vmul.f32 %v940, %v1028
      %v1068 = vmul.f32 %v941, %v1032
      %v1069 = vmul.f32 %v942, %v1036
      %v1070 = vmul.f32 %v943, %v1040
      %v1071 = vmul.f32 %v944, %v1020
      %v1072 = vmul.f32 %v945, %v1024
      %v1073 = vmul.f32 %v946, %v1028
      %v1074 = vmul.f32 %v947, %v1032
      %v1075 = vmul.f32 %v948, %v1036
      %v1076 = vmul.f32 %v949, %v1040
      %v1077 = vmul.f32 %v950, %v1020
      %v1078 = vmul.f32 %v951, %v1024
      %v1079 = vmul.f32 %v952, %v1028
      %v1080 = vmul.f32 %v953, %v1032
      %v1081 = vmul.f32 %v954, %v1036
      %v1082 = vmul.f32 %v955, %v1040
      %v1083 = vmul.f32 %v956, %v1020
      %v1084 = vmul.f32 %v957, %v1024
      %v1085 = vmul.f32 %v958, %v1028
      %v1086 = vmul.f32 %v959, %v1032
      %v1087 = vmul.f32 %v960, %v1036
      %v1088 = vmul.f32 %v961, %v1040
      %v1089 = vmul.f32 %v962, %v1020
      %v1090 = vmul.f32 %v963, %v1024
      %v1091 = vmul.f32 %v964, %v1028
      %v1092 = vmul.f32 %v965, %v1032
      %v1093 = vmul.f32 %v966, %v1036
      %v1094 = vmul.f32 %v967, %v1040
      %v1095 = vmul.f32 %v968, %v1020
      %v1096 = vmul.f32 %v969, %v1024
      %v1097 = vmul.f32 %v970, %v1028
      %v1098 = vmul.f32 %v971, %v1032
      %v1099 = vmul.f32 %v972, %v1036
      %v1100 = vmul.f32 %v973, %v1040
      %v1101 = vmul.f32 %v974, %v1020
      %v1102 = vmul.f32 %v975, %v1024
      %v1103 = vmul.f32 %v976, %v1028
      %v1104 = vmul.f32 %v977, %v1032
      %v1105 = vmul.f32 %v978, %v1036
      %v1106 = vmul.f32 %v979, %v1040
      %v1107 = vmul.f32 %v980, %v1020
      %v1108 = vmul.f32 %v981, %v1024
      %v1109 = vmul.f32 %v982, %v1028
      %v1110 = vmul.f32 %v983, %v1032
      %v1111 = vmul.f32 %v984, %v1036
      %v1112 = vmul.f32 %v985, %v1040
      %v1113 = vmul.f32 %v986, %v1020
      %v1114 = vmul.f32 %v987, %v1024
      %v1115 = vmul.f32 %v988, %v1028
      %v1116 = vmul.f32 %v989, %v1032
      %v1117 = vmul.f32 %v990, %v1036
      %v1118 = vmul.f32 %v991, %v1040
      %v1119 = vmul.f32 %v992, %v1020
      %v1120 = vmul.f32 %v993, %v1024
      %v1121 = vmul.f32 %v994, %v1028
      %v1122 = vmul.f32 %v995, %v1032
      %v1123 = vmul.f32 %v996, %v1036
      %v1124 = vmul.f32 %v997, %v1040
      %v1125 = vmul.f32 %v998, %v1020
      %v1126 = vmul.f32 %v999, %v1024
      %v1127 = vmul.f32 %v1000, %v1028
      %v1128 = vmul.f32 %v1001, %v1032
      %v1129 = vmul.f32 %v1002, %v1036
      %v1130 = vmul.f32 %v1003, %v1040
      %v1131 = vmul.f32 %v1004, %v1020
      %v1132 = vmul.f32 %v1005, %v1024
      %v1133 = vmul.f32 %v1006, %v1028
      %v1134 = vmul.f32 %v1007, %v1032
      %v1135 = vmul.f32 %v1008, %v1036
      %v1136 = vmul.f32 %v1009, %v1040
      %v1137 = vmul.f32 %v1010, %v1020
      %v1138 = vmul.f32 %v1011, %v1024
      %v1139 = vmul.f32 %v1012, %v1028
      %v1140 = vmul.f32 %v1013, %v1032
      %v1141 = vmul.f32 %v1014, %v1036
      %v1142 = vmul.f32 %v1015, %v1040
      %1143 = vrot.lane.b32.xlu0 %v1047, 19
      %v1144 = vpop.permute.xlu0 %1143
      %1145 = vrot.lane.b32.xlu0 %v1053, 19
      %v1146 = vpop.permute.xlu0 %1145
      %1147 = vrot.lane.b32.xlu0 %v1059, 19
      %v1148 = vpop.permute.xlu0 %1147
      %1149 = vrot.lane.b32.xlu0 %v1065, 19
      %v1150 = vpop.permute.xlu0 %1149
      %1151 = vrot.lane.b32.xlu0 %v1071, 19
      %v1152 = vpop.permute.xlu0 %1151
      %1153 = vrot.lane.b32.xlu0 %v1077, 19
      %v1154 = vpop.permute.xlu0 %1153
      %1155 = vrot.lane.b32.xlu0 %v1083, 19
      %v1156 = vpop.permute.xlu0 %1155
      %1157 = vrot.lane.b32.xlu0 %v1089, 19
      %v1158 = vpop.permute.xlu0 %1157
      %1159 = vrot.lane.b32.xlu0 %v1095, 19
      %v1160 = vpop.permute.xlu0 %1159
      %1161 = vrot.lane.b32.xlu0 %v1101, 19
      %v1162 = vpop.permute.xlu0 %1161
      %1163 = vrot.lane.b32.xlu0 %v1107, 19
      %v1164 = vpop.permute.xlu0 %1163
      %1165 = vrot.lane.b32.xlu0 %v1113, 19
      %v1166 = vpop.permute.xlu0 %1165
      %1167 = vrot.lane.b32.xlu0 %v1119, 19
      %v1168 = vpop.permute.xlu0 %1167
      %1169 = vrot.lane.b32.xlu0 %v1125, 19
      %v1170 = vpop.permute.xlu0 %1169
      %1171 = vrot.lane.b32.xlu0 %v1131, 19
      %v1172 = vpop.permute.xlu0 %1171
      %1173 = vrot.lane.b32.xlu0 %v1137, 19
      %v1174 = vpop.permute.xlu0 %1173
      %1175 = vrot.lane.b32.xlu0 %v1048, 19
      %v1176 = vpop.permute.xlu0 %1175
      %1177 = vrot.lane.b32.xlu0 %v1054, 19
      %v1178 = vpop.permute.xlu0 %1177
      %1179 = vrot.lane.b32.xlu0 %v1060, 19
      %v1180 = vpop.permute.xlu0 %1179
      %1181 = vrot.lane.b32.xlu0 %v1066, 19
      %v1182 = vpop.permute.xlu0 %1181
      %1183 = vrot.lane.b32.xlu0 %v1072, 19
      %v1184 = vpop.permute.xlu0 %1183
      %1185 = vrot.lane.b32.xlu0 %v1078, 19
      %v1186 = vpop.permute.xlu0 %1185
      %1187 = vrot.lane.b32.xlu0 %v1084, 19
      %v1188 = vpop.permute.xlu0 %1187
      %1189 = vrot.lane.b32.xlu0 %v1090, 19
      %v1190 = vpop.permute.xlu0 %1189
      %1191 = vrot.lane.b32.xlu0 %v1096, 19
      %v1192 = vpop.permute.xlu0 %1191
      %1193 = vrot.lane.b32.xlu0 %v1102, 19
      %v1194 = vpop.permute.xlu0 %1193
      %1195 = vrot.lane.b32.xlu0 %v1108, 19
      %v1196 = vpop.permute.xlu0 %1195
      %1197 = vrot.lane.b32.xlu0 %v1114, 19
      %v1198 = vpop.permute.xlu0 %1197
      %1199 = vrot.lane.b32.xlu0 %v1120, 19
      %v1200 = vpop.permute.xlu0 %1199
      %1201 = vrot.lane.b32.xlu0 %v1126, 19
      %v1202 = vpop.permute.xlu0 %1201
      %1203 = vrot.lane.b32.xlu0 %v1132, 19
      %v1204 = vpop.permute.xlu0 %1203
      %1205 = vrot.lane.b32.xlu0 %v1138, 19
      %v1206 = vpop.permute.xlu0 %1205
      %1207 = vrot.lane.b32.xlu0 %v1049, 19
      %v1208 = vpop.permute.xlu0 %1207
      %1209 = vrot.lane.b32.xlu0 %v1055, 19
      %v1210 = vpop.permute.xlu0 %1209
      %1211 = vrot.lane.b32.xlu0 %v1061, 19
      %v1212 = vpop.permute.xlu0 %1211
      %1213 = vrot.lane.b32.xlu0 %v1067, 19
      %v1214 = vpop.permute.xlu0 %1213
      %1215 = vrot.lane.b32.xlu0 %v1073, 19
      %v1216 = vpop.permute.xlu0 %1215
      %1217 = vrot.lane.b32.xlu0 %v1079, 19
      %v1218 = vpop.permute.xlu0 %1217
      %1219 = vrot.lane.b32.xlu0 %v1085, 19
      %v1220 = vpop.permute.xlu0 %1219
      %1221 = vrot.lane.b32.xlu0 %v1091, 19
      %v1222 = vpop.permute.xlu0 %1221
      %1223 = vrot.lane.b32.xlu0 %v1097, 19
      %v1224 = vpop.permute.xlu0 %1223
      %1225 = vrot.lane.b32.xlu0 %v1103, 19
      %v1226 = vpop.permute.xlu0 %1225
      %1227 = vrot.lane.b32.xlu0 %v1109, 19
      %v1228 = vpop.permute.xlu0 %1227
      %1229 = vrot.lane.b32.xlu0 %v1115, 19
      %v1230 = vpop.permute.xlu0 %1229
      %1231 = vrot.lane.b32.xlu0 %v1121, 19
      %v1232 = vpop.permute.xlu0 %1231
      %1233 = vrot.lane.b32.xlu0 %v1127, 19
      %v1234 = vpop.permute.xlu0 %1233
      %1235 = vrot.lane.b32.xlu0 %v1133, 19
      %v1236 = vpop.permute.xlu0 %1235
      %1237 = vrot.lane.b32.xlu0 %v1139, 19
      %v1238 = vpop.permute.xlu0 %1237
      %1239 = vrot.lane.b32.xlu0 %v1050, 19
      %v1240 = vpop.permute.xlu0 %1239
      %1241 = vrot.lane.b32.xlu0 %v1056, 19
      %v1242 = vpop.permute.xlu0 %1241
      %1243 = vrot.lane.b32.xlu0 %v1062, 19
      %v1244 = vpop.permute.xlu0 %1243
      %1245 = vrot.lane.b32.xlu0 %v1068, 19
      %v1246 = vpop.permute.xlu0 %1245
      %1247 = vrot.lane.b32.xlu0 %v1074, 19
      %v1248 = vpop.permute.xlu0 %1247
      %1249 = vrot.lane.b32.xlu0 %v1080, 19
      %v1250 = vpop.permute.xlu0 %1249
      %1251 = vrot.lane.b32.xlu0 %v1086, 19
      %v1252 = vpop.permute.xlu0 %1251
      %1253 = vrot.lane.b32.xlu0 %v1092, 19
      %v1254 = vpop.permute.xlu0 %1253
      %1255 = vrot.lane.b32.xlu0 %v1098, 19
      %v1256 = vpop.permute.xlu0 %1255
      %1257 = vrot.lane.b32.xlu0 %v1104, 19
      %v1258 = vpop.permute.xlu0 %1257
      %1259 = vrot.lane.b32.xlu0 %v1110, 19
      %v1260 = vpop.permute.xlu0 %1259
      %1261 = vrot.lane.b32.xlu0 %v1116, 19
      %v1262 = vpop.permute.xlu0 %1261
      %1263 = vrot.lane.b32.xlu0 %v1122, 19
      %v1264 = vpop.permute.xlu0 %1263
      %1265 = vrot.lane.b32.xlu0 %v1128, 19
      %v1266 = vpop.permute.xlu0 %1265
      %1267 = vrot.lane.b32.xlu0 %v1134, 19
      %v1268 = vpop.permute.xlu0 %1267
      %1269 = vrot.lane.b32.xlu0 %v1140, 19
      %v1270 = vpop.permute.xlu0 %1269
      %1271 = vrot.lane.b32.xlu0 %v1051, 19
      %v1272 = vpop.permute.xlu0 %1271
      %1273 = vrot.lane.b32.xlu0 %v1057, 19
      %v1274 = vpop.permute.xlu0 %1273
      %1275 = vrot.lane.b32.xlu0 %v1063, 19
      %v1276 = vpop.permute.xlu0 %1275
      %1277 = vrot.lane.b32.xlu0 %v1069, 19
      %v1278 = vpop.permute.xlu0 %1277
      %1279 = vrot.lane.b32.xlu0 %v1075, 19
      %v1280 = vpop.permute.xlu0 %1279
      %1281 = vrot.lane.b32.xlu0 %v1081, 19
      %v1282 = vpop.permute.xlu0 %1281
      %1283 = vrot.lane.b32.xlu0 %v1087, 19
      %v1284 = vpop.permute.xlu0 %1283
      %1285 = vrot.lane.b32.xlu0 %v1093, 19
      %v1286 = vpop.permute.xlu0 %1285
      %1287 = vrot.lane.b32.xlu0 %v1099, 19
      %v1288 = vpop.permute.xlu0 %1287
      %1289 = vrot.lane.b32.xlu0 %v1105, 19
      %v1290 = vpop.permute.xlu0 %1289
      %1291 = vrot.lane.b32.xlu0 %v1111, 19
      %v1292 = vpop.permute.xlu0 %1291
      %1293 = vrot.lane.b32.xlu0 %v1117, 19
      %v1294 = vpop.permute.xlu0 %1293
      %1295 = vrot.lane.b32.xlu0 %v1123, 19
      %v1296 = vpop.permute.xlu0 %1295
      %1297 = vrot.lane.b32.xlu0 %v1129, 19
      %v1298 = vpop.permute.xlu0 %1297
      %1299 = vrot.lane.b32.xlu0 %v1135, 19
      %v1300 = vpop.permute.xlu0 %1299
      %1301 = vrot.lane.b32.xlu0 %v1141, 19
      %v1302 = vpop.permute.xlu0 %1301
      %1303 = vrot.lane.b32.xlu0 %v1052, 19
      %v1304 = vpop.permute.xlu0 %1303
      %1305 = vrot.lane.b32.xlu0 %v1058, 19
      %v1306 = vpop.permute.xlu0 %1305
      %1307 = vrot.lane.b32.xlu0 %v1064, 19
      %v1308 = vpop.permute.xlu0 %1307
      %1309 = vrot.lane.b32.xlu0 %v1070, 19
      %v1310 = vpop.permute.xlu0 %1309
      %1311 = vrot.lane.b32.xlu0 %v1076, 19
      %v1312 = vpop.permute.xlu0 %1311
      %1313 = vrot.lane.b32.xlu0 %v1082, 19
      %v1314 = vpop.permute.xlu0 %1313
      %1315 = vrot.lane.b32.xlu0 %v1088, 19
      %v1316 = vpop.permute.xlu0 %1315
      %1317 = vrot.lane.b32.xlu0 %v1094, 19
      %v1318 = vpop.permute.xlu0 %1317
      %1319 = vrot.lane.b32.xlu0 %v1100, 19
      %v1320 = vpop.permute.xlu0 %1319
      %1321 = vrot.lane.b32.xlu0 %v1106, 19
      %v1322 = vpop.permute.xlu0 %1321
      %1323 = vrot.lane.b32.xlu0 %v1112, 19
      %v1324 = vpop.permute.xlu0 %1323
      %1325 = vrot.lane.b32.xlu0 %v1118, 19
      %v1326 = vpop.permute.xlu0 %1325
      %1327 = vrot.lane.b32.xlu0 %v1124, 19
      %v1328 = vpop.permute.xlu0 %1327
      %1329 = vrot.lane.b32.xlu0 %v1130, 19
      %v1330 = vpop.permute.xlu0 %1329
      %1331 = vrot.lane.b32.xlu0 %v1136, 19
      %v1332 = vpop.permute.xlu0 %1331
      %1333 = vrot.lane.b32.xlu0 %v1142, 19
      %v1334 = vpop.permute.xlu0 %1333
      %v1335 = vlaneseq
      %v1336 = vand.u32 %v1335, 127
      %vm1337 = vcmp.lt.s32.totalorder %v1336, 19
      %v1338 = vsel %vm1337, %v1272, %v1304
      %v1339 = vsel %vm1337, %v1274, %v1306
      %v1340 = vsel %vm1337, %v1276, %v1308
      %v1341 = vsel %vm1337, %v1278, %v1310
      %v1342 = vsel %vm1337, %v1280, %v1312
      %v1343 = vsel %vm1337, %v1282, %v1314
      %v1344 = vsel %vm1337, %v1284, %v1316
      %v1345 = vsel %vm1337, %v1286, %v1318
      %v1346 = vsel %vm1337, %v1288, %v1320
      %v1347 = vsel %vm1337, %v1290, %v1322
      %v1348 = vsel %vm1337, %v1292, %v1324
      %v1349 = vsel %vm1337, %v1294, %v1326
      %v1350 = vsel %vm1337, %v1296, %v1328
      %v1351 = vsel %vm1337, %v1298, %v1330
      %v1352 = vsel %vm1337, %v1300, %v1332
      %v1353 = vsel %vm1337, %v1302, %v1334
      %v1354 = vsel %vm1337, %v1240, %v1272
      %v1355 = vsel %vm1337, %v1242, %v1274
      %v1356 = vsel %vm1337, %v1244, %v1276
      %v1357 = vsel %vm1337, %v1246, %v1278
      %v1358 = vsel %vm1337, %v1248, %v1280
      %v1359 = vsel %vm1337, %v1250, %v1282
      %v1360 = vsel %vm1337, %v1252, %v1284
      %v1361 = vsel %vm1337, %v1254, %v1286
      %v1362 = vsel %vm1337, %v1256, %v1288
      %v1363 = vsel %vm1337, %v1258, %v1290
      %v1364 = vsel %vm1337, %v1260, %v1292
      %v1365 = vsel %vm1337, %v1262, %v1294
      %v1366 = vsel %vm1337, %v1264, %v1296
      %v1367 = vsel %vm1337, %v1266, %v1298
      %v1368 = vsel %vm1337, %v1268, %v1300
      %v1369 = vsel %vm1337, %v1270, %v1302
      %v1370 = vsel %vm1337, %v1208, %v1240
      %v1371 = vsel %vm1337, %v1210, %v1242
      %v1372 = vsel %vm1337, %v1212, %v1244
      %v1373 = vsel %vm1337, %v1214, %v1246
      %v1374 = vsel %vm1337, %v1216, %v1248
      %v1375 = vsel %vm1337, %v1218, %v1250
      %v1376 = vsel %vm1337, %v1220, %v1252
      %v1377 = vsel %vm1337, %v1222, %v1254
      %v1378 = vsel %vm1337, %v1224, %v1256
      %v1379 = vsel %vm1337, %v1226, %v1258
      %v1380 = vsel %vm1337, %v1228, %v1260
      %v1381 = vsel %vm1337, %v1230, %v1262
      %v1382 = vsel %vm1337, %v1232, %v1264
      %v1383 = vsel %vm1337, %v1234, %v1266
      %v1384 = vsel %vm1337, %v1236, %v1268
      %v1385 = vsel %vm1337, %v1238, %v1270
      %v1386 = vsel %vm1337, %v1176, %v1208
      %v1387 = vsel %vm1337, %v1178, %v1210
      %v1388 = vsel %vm1337, %v1180, %v1212
      %v1389 = vsel %vm1337, %v1182, %v1214
      %v1390 = vsel %vm1337, %v1184, %v1216
      %v1391 = vsel %vm1337, %v1186, %v1218
      %v1392 = vsel %vm1337, %v1188, %v1220
      %v1393 = vsel %vm1337, %v1190, %v1222
      %v1394 = vsel %vm1337, %v1192, %v1224
      %v1395 = vsel %vm1337, %v1194, %v1226
      %v1396 = vsel %vm1337, %v1196, %v1228
      %v1397 = vsel %vm1337, %v1198, %v1230
      %v1398 = vsel %vm1337, %v1200, %v1232
      %v1399 = vsel %vm1337, %v1202, %v1234
      %v1400 = vsel %vm1337, %v1204, %v1236
      %v1401 = vsel %vm1337, %v1206, %v1238
      %v1402 = vsel %vm1337, %v1144, %v1176
      %v1403 = vsel %vm1337, %v1146, %v1178
      %v1404 = vsel %vm1337, %v1148, %v1180
      %v1405 = vsel %vm1337, %v1150, %v1182
      %v1406 = vsel %vm1337, %v1152, %v1184
      %v1407 = vsel %vm1337, %v1154, %v1186
      %v1408 = vsel %vm1337, %v1156, %v1188
      %v1409 = vsel %vm1337, %v1158, %v1190
      %v1410 = vsel %vm1337, %v1160, %v1192
      %v1411 = vsel %vm1337, %v1162, %v1194
      %v1412 = vsel %vm1337, %v1164, %v1196
      %v1413 = vsel %vm1337, %v1166, %v1198
      %v1414 = vsel %vm1337, %v1168, %v1200
      %v1415 = vsel %vm1337, %v1170, %v1202
      %v1416 = vsel %vm1337, %v1172, %v1204
      %v1417 = vsel %vm1337, %v1174, %v1206
      %v1418 = vsel %vm1337, %v1304, %v1144
      %v1419 = vsel %vm1337, %v1306, %v1146
      %v1420 = vsel %vm1337, %v1308, %v1148
      %v1421 = vsel %vm1337, %v1310, %v1150
      %v1422 = vsel %vm1337, %v1312, %v1152
      %v1423 = vsel %vm1337, %v1314, %v1154
      %v1424 = vsel %vm1337, %v1316, %v1156
      %v1425 = vsel %vm1337, %v1318, %v1158
      %v1426 = vsel %vm1337, %v1320, %v1160
      %v1427 = vsel %vm1337, %v1322, %v1162
      %v1428 = vsel %vm1337, %v1324, %v1164
      %v1429 = vsel %vm1337, %v1326, %v1166
      %v1430 = vsel %vm1337, %v1328, %v1168
      %v1431 = vsel %vm1337, %v1330, %v1170
      %v1432 = vsel %vm1337, %v1332, %v1172
      %v1433 = vsel %vm1337, %v1334, %v1174
      %v1434 = vpack.c.bf16 %v1419, %v1418
      %v1435 = vpack.c.bf16 %v1403, %v1402
      %v1436 = vpack.c.bf16 %v1387, %v1386
      %v1437 = vpack.c.bf16 %v1371, %v1370
      %v1438 = vpack.c.bf16 %v1355, %v1354
      %v1439 = vpack.c.bf16 %v1339, %v1338
      %v1440 = vpack.c.bf16 %v1421, %v1420
      %v1441 = vpack.c.bf16 %v1405, %v1404
      %v1442 = vpack.c.bf16 %v1389, %v1388
      %v1443 = vpack.c.bf16 %v1373, %v1372
      %v1444 = vpack.c.bf16 %v1357, %v1356
      %v1445 = vpack.c.bf16 %v1341, %v1340
      %v1446 = vpack.c.bf16 %v1423, %v1422
      %v1447 = vpack.c.bf16 %v1407, %v1406
      %v1448 = vpack.c.bf16 %v1391, %v1390
      %v1449 = vpack.c.bf16 %v1375, %v1374
      %v1450 = vpack.c.bf16 %v1359, %v1358
      %v1451 = vpack.c.bf16 %v1343, %v1342
      %v1452 = vpack.c.bf16 %v1425, %v1424
      %v1453 = vpack.c.bf16 %v1409, %v1408
      %v1454 = vpack.c.bf16 %v1393, %v1392
      %v1455 = vpack.c.bf16 %v1377, %v1376
      %v1456 = vpack.c.bf16 %v1361, %v1360
      %v1457 = vpack.c.bf16 %v1345, %v1344
      %v1458 = vpack.c.bf16 %v1427, %v1426
      %v1459 = vpack.c.bf16 %v1411, %v1410
      %v1460 = vpack.c.bf16 %v1395, %v1394
      %v1461 = vpack.c.bf16 %v1379, %v1378
      %v1462 = vpack.c.bf16 %v1363, %v1362
      %v1463 = vpack.c.bf16 %v1347, %v1346
      %v1464 = vpack.c.bf16 %v1429, %v1428
      %v1465 = vpack.c.bf16 %v1413, %v1412
      %v1466 = vpack.c.bf16 %v1397, %v1396
      %v1467 = vpack.c.bf16 %v1381, %v1380
      %v1468 = vpack.c.bf16 %v1365, %v1364
      %v1469 = vpack.c.bf16 %v1349, %v1348
      %v1470 = vpack.c.bf16 %v1431, %v1430
      %v1471 = vpack.c.bf16 %v1415, %v1414
      %v1472 = vpack.c.bf16 %v1399, %v1398
      %v1473 = vpack.c.bf16 %v1383, %v1382
      %v1474 = vpack.c.bf16 %v1367, %v1366
      %v1475 = vpack.c.bf16 %v1351, %v1350
      %v1476 = vpack.c.bf16 %v1433, %v1432
      %v1477 = vpack.c.bf16 %v1417, %v1416
      %v1478 = vpack.c.bf16 %v1401, %v1400
      %v1479 = vpack.c.bf16 %v1385, %v1384
      %v1480 = vpack.c.bf16 %v1369, %v1368
      %v1481 = vpack.c.bf16 %v1353, %v1352
      %1482 = vst [vmem:[#allocation2] sm:$0xff] %v1434
      %1483 = vst [vmem:[#allocation2 + $0x8] sm:$0xff] %v1435
      %1484 = vst [vmem:[#allocation2 + $0x10] sm:$0xff] %v1436
      %1485 = vst [vmem:[#allocation2 + $0x18] sm:$0xff] %v1437
      %1486 = vst [vmem:[#allocation2 + $0x20] sm:$0xff] %v1438
      %1487 = vst [vmem:[#allocation2 + $0x28] sm:$0xff] %v1439
      %1488 = vst [vmem:[#allocation2 + $0x30] sm:$0xff] %v1440
      %1489 = vst [vmem:[#allocation2 + $0x38] sm:$0xff] %v1441
      %1490 = vst [vmem:[#allocation2 + $0x40] sm:$0xff] %v1442
      %1491 = vst [vmem:[#allocation2 + $0x48] sm:$0xff] %v1443
      %1492 = vst [vmem:[#allocation2 + $0x50] sm:$0xff] %v1444
      %1493 = vst [vmem:[#allocation2 + $0x58] sm:$0xff] %v1445
      %1494 = vst [vmem:[#allocation2 + $0x60] sm:$0xff] %v1446
      %1495 = vst [vmem:[#allocation2 + $0x68] sm:$0xff] %v1447
      %1496 = vst [vmem:[#allocation2 + $0x70] sm:$0xff] %v1448
      %1497 = vst [vmem:[#allocation2 + $0x78] sm:$0xff] %v1449
      %1498 = vst [vmem:[#allocation2 + $0x80] sm:$0xff] %v1450
      %1499 = vst [vmem:[#allocation2 + $0x88] sm:$0xff] %v1451
      %1500 = vst [vmem:[#allocation2 + $0x90] sm:$0xff] %v1452
      %1501 = vst [vmem:[#allocation2 + $0x98] sm:$0xff] %v1453
      %1502 = vst [vmem:[#allocation2 + $0xa0] sm:$0xff] %v1454
      %1503 = vst [vmem:[#allocation2 + $0xa8] sm:$0xff] %v1455
      %1504 = vst [vmem:[#allocation2 + $0xb0] sm:$0xff] %v1456
      %1505 = vst [vmem:[#allocation2 + $0xb8] sm:$0xff] %v1457
      %1506 = vst [vmem:[#allocation2 + $0xc0] sm:$0xff] %v1458
      %1507 = vst [vmem:[#allocation2 + $0xc8] sm:$0xff] %v1459
      %1508 = vst [vmem:[#allocation2 + $0xd0] sm:$0xff] %v1460
      %1509 = vst [vmem:[#allocation2 + $0xd8] sm:$0xff] %v1461
      %1510 = vst [vmem:[#allocation2 + $0xe0] sm:$0xff] %v1462
      %1511 = vst [vmem:[#allocation2 + $0xe8] sm:$0xff] %v1463
      %1512 = vst [vmem:[#allocation2 + $0xf0] sm:$0xff] %v1464
      %1513 = vst [vmem:[#allocation2 + $0xf8] sm:$0xff] %v1465
      %1514 = vst [vmem:[#allocation2 + $0x100] sm:$0xff] %v1466
      %1515 = vst [vmem:[#allocation2 + $0x108] sm:$0xff] %v1467
      %1516 = vst [vmem:[#allocation2 + $0x110] sm:$0xff] %v1468
      %1517 = vst [vmem:[#allocation2 + $0x118] sm:$0xff] %v1469
      %1518 = vst [vmem:[#allocation2 + $0x120] sm:$0xff] %v1470
      %1519 = vst [vmem:[#allocation2 + $0x128] sm:$0xff] %v1471
      %1520 = vst [vmem:[#allocation2 + $0x130] sm:$0xff] %v1472
      %1521 = vst [vmem:[#allocation2 + $0x138] sm:$0xff] %v1473
      %1522 = vst [vmem:[#allocation2 + $0x140] sm:$0xff] %v1474
      %1523 = vst [vmem:[#allocation2 + $0x148] sm:$0xff] %v1475
      %1524 = vst [vmem:[#allocation2 + $0x150] sm:$0xff] %v1476
      %1525 = vst [vmem:[#allocation2 + $0x158] sm:$0xff] %v1477
      %1526 = vst [vmem:[#allocation2 + $0x160] sm:$0xff] %v1478
      %1527 = vst [vmem:[#allocation2 + $0x168] sm:$0xff] %v1479
      %1528 = vst [vmem:[#allocation2 + $0x170] sm:$0xff] %v1480
      %1529 = vst [vmem:[#allocation2 + $0x178] sm:$0xff] %v1481
      %1530 = vrot.lane.b32.xlu0 %v1047, 18
      %v1531 = vpop.permute.xlu0 %1530
      %1532 = vrot.lane.b32.xlu0 %v1053, 18
      %v1533 = vpop.permute.xlu0 %1532
      %1534 = vrot.lane.b32.xlu0 %v1059, 18
      %v1535 = vpop.permute.xlu0 %1534
      %1536 = vrot.lane.b32.xlu0 %v1065, 18
      %v1537 = vpop.permute.xlu0 %1536
      %1538 = vrot.lane.b32.xlu0 %v1071, 18
      %v1539 = vpop.permute.xlu0 %1538
      %1540 = vrot.lane.b32.xlu0 %v1077, 18
      %v1541 = vpop.permute.xlu0 %1540
      %1542 = vrot.lane.b32.xlu0 %v1083, 18
      %v1543 = vpop.permute.xlu0 %1542
      %1544 = vrot.lane.b32.xlu0 %v1089, 18
      %v1545 = vpop.permute.xlu0 %1544
      %1546 = vrot.lane.b32.xlu0 %v1095, 18
      %v1547 = vpop.permute.xlu0 %1546
      %1548 = vrot.lane.b32.xlu0 %v1101, 18
      %v1549 = vpop.permute.xlu0 %1548
      %1550 = vrot.lane.b32.xlu0 %v1107, 18
      %v1551 = vpop.permute.xlu0 %1550
      %1552 = vrot.lane.b32.xlu0 %v1113, 18
      %v1553 = vpop.permute.xlu0 %1552
      %1554 = vrot.lane.b32.xlu0 %v1119, 18
      %v1555 = vpop.permute.xlu0 %1554
      %1556 = vrot.lane.b32.xlu0 %v1125, 18
      %v1557 = vpop.permute.xlu0 %1556
      %1558 = vrot.lane.b32.xlu0 %v1131, 18
      %v1559 = vpop.permute.xlu0 %1558
      %1560 = vrot.lane.b32.xlu0 %v1137, 18
      %v1561 = vpop.permute.xlu0 %1560
      %1562 = vrot.lane.b32.xlu0 %v1048, 18
      %v1563 = vpop.permute.xlu0 %1562
      %1564 = vrot.lane.b32.xlu0 %v1054, 18
      %v1565 = vpop.permute.xlu0 %1564
      %1566 = vrot.lane.b32.xlu0 %v1060, 18
      %v1567 = vpop.permute.xlu0 %1566
      %1568 = vrot.lane.b32.xlu0 %v1066, 18
      %v1569 = vpop.permute.xlu0 %1568
      %1570 = vrot.lane.b32.xlu0 %v1072, 18
      %v1571 = vpop.permute.xlu0 %1570
      %1572 = vrot.lane.b32.xlu0 %v1078, 18
      %v1573 = vpop.permute.xlu0 %1572
      %1574 = vrot.lane.b32.xlu0 %v1084, 18
      %v1575 = vpop.permute.xlu0 %1574
      %1576 = vrot.lane.b32.xlu0 %v1090, 18
      %v1577 = vpop.permute.xlu0 %1576
      %1578 = vrot.lane.b32.xlu0 %v1096, 18
      %v1579 = vpop.permute.xlu0 %1578
      %1580 = vrot.lane.b32.xlu0 %v1102, 18
      %v1581 = vpop.permute.xlu0 %1580
      %1582 = vrot.lane.b32.xlu0 %v1108, 18
      %v1583 = vpop.permute.xlu0 %1582
      %1584 = vrot.lane.b32.xlu0 %v1114, 18
      %v1585 = vpop.permute.xlu0 %1584
      %1586 = vrot.lane.b32.xlu0 %v1120, 18
      %v1587 = vpop.permute.xlu0 %1586
      %1588 = vrot.lane.b32.xlu0 %v1126, 18
      %v1589 = vpop.permute.xlu0 %1588
      %1590 = vrot.lane.b32.xlu0 %v1132, 18
      %v1591 = vpop.permute.xlu0 %1590
      %1592 = vrot.lane.b32.xlu0 %v1138, 18
      %v1593 = vpop.permute.xlu0 %1592
      %1594 = vrot.lane.b32.xlu0 %v1049, 18
      %v1595 = vpop.permute.xlu0 %1594
      %1596 = vrot.lane.b32.xlu0 %v1055, 18
      %v1597 = vpop.permute.xlu0 %1596
      %1598 = vrot.lane.b32.xlu0 %v1061, 18
      %v1599 = vpop.permute.xlu0 %1598
      %1600 = vrot.lane.b32.xlu0 %v1067, 18
      %v1601 = vpop.permute.xlu0 %1600
      %1602 = vrot.lane.b32.xlu0 %v1073, 18
      %v1603 = vpop.permute.xlu0 %1602
      %1604 = vrot.lane.b32.xlu0 %v1079, 18
      %v1605 = vpop.permute.xlu0 %1604
      %1606 = vrot.lane.b32.xlu0 %v1085, 18
      %v1607 = vpop.permute.xlu0 %1606
      %1608 = vrot.lane.b32.xlu0 %v1091, 18
      %v1609 = vpop.permute.xlu0 %1608
      %1610 = vrot.lane.b32.xlu0 %v1097, 18
      %v1611 = vpop.permute.xlu0 %1610
      %1612 = vrot.lane.b32.xlu0 %v1103, 18
      %v1613 = vpop.permute.xlu0 %1612
      %1614 = vrot.lane.b32.xlu0 %v1109, 18
      %v1615 = vpop.permute.xlu0 %1614
      %1616 = vrot.lane.b32.xlu0 %v1115, 18
      %v1617 = vpop.permute.xlu0 %1616
      %1618 = vrot.lane.b32.xlu0 %v1121, 18
      %v1619 = vpop.permute.xlu0 %1618
      %1620 = vrot.lane.b32.xlu0 %v1127, 18
      %v1621 = vpop.permute.xlu0 %1620
      %1622 = vrot.lane.b32.xlu0 %v1133, 18
      %v1623 = vpop.permute.xlu0 %1622
      %1624 = vrot.lane.b32.xlu0 %v1139, 18
      %v1625 = vpop.permute.xlu0 %1624
      %1626 = vrot.lane.b32.xlu0 %v1050, 18
      %v1627 = vpop.permute.xlu0 %1626
      %1628 = vrot.lane.b32.xlu0 %v1056, 18
      %v1629 = vpop.permute.xlu0 %1628
      %1630 = vrot.lane.b32.xlu0 %v1062, 18
      %v1631 = vpop.permute.xlu0 %1630
      %1632 = vrot.lane.b32.xlu0 %v1068, 18
      %v1633 = vpop.permute.xlu0 %1632
      %1634 = vrot.lane.b32.xlu0 %v1074, 18
      %v1635 = vpop.permute.xlu0 %1634
      %1636 = vrot.lane.b32.xlu0 %v1080, 18
      %v1637 = vpop.permute.xlu0 %1636
      %1638 = vrot.lane.b32.xlu0 %v1086, 18
      %v1639 = vpop.permute.xlu0 %1638
      %1640 = vrot.lane.b32.xlu0 %v1092, 18
      %v1641 = vpop.permute.xlu0 %1640
      %1642 = vrot.lane.b32.xlu0 %v1098, 18
      %v1643 = vpop.permute.xlu0 %1642
      %1644 = vrot.lane.b32.xlu0 %v1104, 18
      %v1645 = vpop.permute.xlu0 %1644
      %1646 = vrot.lane.b32.xlu0 %v1110, 18
      %v1647 = vpop.permute.xlu0 %1646
      %1648 = vrot.lane.b32.xlu0 %v1116, 18
      %v1649 = vpop.permute.xlu0 %1648
      %1650 = vrot.lane.b32.xlu0 %v1122, 18
      %v1651 = vpop.permute.xlu0 %1650
      %1652 = vrot.lane.b32.xlu0 %v1128, 18
      %v1653 = vpop.permute.xlu0 %1652
      %1654 = vrot.lane.b32.xlu0 %v1134, 18
      %v1655 = vpop.permute.xlu0 %1654
      %1656 = vrot.lane.b32.xlu0 %v1140, 18
      %v1657 = vpop.permute.xlu0 %1656
      %1658 = vrot.lane.b32.xlu0 %v1051, 18
      %v1659 = vpop.permute.xlu0 %1658
      %1660 = vrot.lane.b32.xlu0 %v1057, 18
      %v1661 = vpop.permute.xlu0 %1660
      %1662 = vrot.lane.b32.xlu0 %v1063, 18
      %v1663 = vpop.permute.xlu0 %1662
      %1664 = vrot.lane.b32.xlu0 %v1069, 18
      %v1665 = vpop.permute.xlu0 %1664
      %1666 = vrot.lane.b32.xlu0 %v1075, 18
      %v1667 = vpop.permute.xlu0 %1666
      %1668 = vrot.lane.b32.xlu0 %v1081, 18
      %v1669 = vpop.permute.xlu0 %1668
      %1670 = vrot.lane.b32.xlu0 %v1087, 18
      %v1671 = vpop.permute.xlu0 %1670
      %1672 = vrot.lane.b32.xlu0 %v1093, 18
      %v1673 = vpop.permute.xlu0 %1672
      %1674 = vrot.lane.b32.xlu0 %v1099, 18
      %v1675 = vpop.permute.xlu0 %1674
      %1676 = vrot.lane.b32.xlu0 %v1105, 18
      %v1677 = vpop.permute.xlu0 %1676
      %1678 = vrot.lane.b32.xlu0 %v1111, 18
      %v1679 = vpop.permute.xlu0 %1678
      %1680 = vrot.lane.b32.xlu0 %v1117, 18
      %v1681 = vpop.permute.xlu0 %1680
      %1682 = vrot.lane.b32.xlu0 %v1123, 18
      %v1683 = vpop.permute.xlu0 %1682
      %1684 = vrot.lane.b32.xlu0 %v1129, 18
      %v1685 = vpop.permute.xlu0 %1684
      %1686 = vrot.lane.b32.xlu0 %v1135, 18
      %v1687 = vpop.permute.xlu0 %1686
      %1688 = vrot.lane.b32.xlu0 %v1141, 18
      %v1689 = vpop.permute.xlu0 %1688
      %1690 = vrot.lane.b32.xlu0 %v1052, 18
      %v1691 = vpop.permute.xlu0 %1690
      %1692 = vrot.lane.b32.xlu0 %v1058, 18
      %v1693 = vpop.permute.xlu0 %1692
      %1694 = vrot.lane.b32.xlu0 %v1064, 18
      %v1695 = vpop.permute.xlu0 %1694
      %1696 = vrot.lane.b32.xlu0 %v1070, 18
      %v1697 = vpop.permute.xlu0 %1696
      %1698 = vrot.lane.b32.xlu0 %v1076, 18
      %v1699 = vpop.permute.xlu0 %1698
      %1700 = vrot.lane.b32.xlu0 %v1082, 18
      %v1701 = vpop.permute.xlu0 %1700
      %1702 = vrot.lane.b32.xlu0 %v1088, 18
      %v1703 = vpop.permute.xlu0 %1702
      %1704 = vrot.lane.b32.xlu0 %v1094, 18
      %v1705 = vpop.permute.xlu0 %1704
      %1706 = vrot.lane.b32.xlu0 %v1100, 18
      %v1707 = vpop.permute.xlu0 %1706
      %1708 = vrot.lane.b32.xlu0 %v1106, 18
      %v1709 = vpop.permute.xlu0 %1708
      %1710 = vrot.lane.b32.xlu0 %v1112, 18
      %v1711 = vpop.permute.xlu0 %1710
      %1712 = vrot.lane.b32.xlu0 %v1118, 18
      %v1713 = vpop.permute.xlu0 %1712
      %1714 = vrot.lane.b32.xlu0 %v1124, 18
      %v1715 = vpop.permute.xlu0 %1714
      %1716 = vrot.lane.b32.xlu0 %v1130, 18
      %v1717 = vpop.permute.xlu0 %1716
      %1718 = vrot.lane.b32.xlu0 %v1136, 18
      %v1719 = vpop.permute.xlu0 %1718
      %1720 = vrot.lane.b32.xlu0 %v1142, 18
      %v1721 = vpop.permute.xlu0 %1720
      %vm1722 = vcmp.lt.s32.totalorder %v1336, 18
      %v1723 = vsel %vm1722, %v1659, %v1691
      %v1724 = vsel %vm1722, %v1661, %v1693
      %v1725 = vsel %vm1722, %v1663, %v1695
      %v1726 = vsel %vm1722, %v1665, %v1697
      %v1727 = vsel %vm1722, %v1667, %v1699
      %v1728 = vsel %vm1722, %v1669, %v1701
      %v1729 = vsel %vm1722, %v1671, %v1703
      %v1730 = vsel %vm1722, %v1673, %v1705
      %v1731 = vsel %vm1722, %v1675, %v1707
      %v1732 = vsel %vm1722, %v1677, %v1709
      %v1733 = vsel %vm1722, %v1679, %v1711
      %v1734 = vsel %vm1722, %v1681, %v1713
      %v1735 = vsel %vm1722, %v1683, %v1715
      %v1736 = vsel %vm1722, %v1685, %v1717
      %v1737 = vsel %vm1722, %v1687, %v1719
      %v1738 = vsel %vm1722, %v1689, %v1721
      %v1739 = vsel %vm1722, %v1627, %v1659
      %v1740 = vsel %vm1722, %v1629, %v1661
      %v1741 = vsel %vm1722, %v1631, %v1663
      %v1742 = vsel %vm1722, %v1633, %v1665
      %v1743 = vsel %vm1722, %v1635, %v1667
      %v1744 = vsel %vm1722, %v1637, %v1669
      %v1745 = vsel %vm1722, %v1639, %v1671
      %v1746 = vsel %vm1722, %v1641, %v1673
      %v1747 = vsel %vm1722, %v1643, %v1675
      %v1748 = vsel %vm1722, %v1645, %v1677
      %v1749 = vsel %vm1722, %v1647, %v1679
      %v1750 = vsel %vm1722, %v1649, %v1681
      %v1751 = vsel %vm1722, %v1651, %v1683
      %v1752 = vsel %vm1722, %v1653, %v1685
      %v1753 = vsel %vm1722, %v1655, %v1687
      %v1754 = vsel %vm1722, %v1657, %v1689
      %v1755 = vsel %vm1722, %v1595, %v1627
      %v1756 = vsel %vm1722, %v1597, %v1629
      %v1757 = vsel %vm1722, %v1599, %v1631
      %v1758 = vsel %vm1722, %v1601, %v1633
      %v1759 = vsel %vm1722, %v1603, %v1635
      %v1760 = vsel %vm1722, %v1605, %v1637
      %v1761 = vsel %vm1722, %v1607, %v1639
      %v1762 = vsel %vm1722, %v1609, %v1641
      %v1763 = vsel %vm1722, %v1611, %v1643
      %v1764 = vsel %vm1722, %v1613, %v1645
      %v1765 = vsel %vm1722, %v1615, %v1647
      %v1766 = vsel %vm1722, %v1617, %v1649
      %v1767 = vsel %vm1722, %v1619, %v1651
      %v1768 = vsel %vm1722, %v1621, %v1653
      %v1769 = vsel %vm1722, %v1623, %v1655
      %v1770 = vsel %vm1722, %v1625, %v1657
      %v1771 = vsel %vm1722, %v1563, %v1595
      %v1772 = vsel %vm1722, %v1565, %v1597
      %v1773 = vsel %vm1722, %v1567, %v1599
      %v1774 = vsel %vm1722, %v1569, %v1601
      %v1775 = vsel %vm1722, %v1571, %v1603
      %v1776 = vsel %vm1722, %v1573, %v1605
      %v1777 = vsel %vm1722, %v1575, %v1607
      %v1778 = vsel %vm1722, %v1577, %v1609
      %v1779 = vsel %vm1722, %v1579, %v1611
      %v1780 = vsel %vm1722, %v1581, %v1613
      %v1781 = vsel %vm1722, %v1583, %v1615
      %v1782 = vsel %vm1722, %v1585, %v1617
      %v1783 = vsel %vm1722, %v1587, %v1619
      %v1784 = vsel %vm1722, %v1589, %v1621
      %v1785 = vsel %vm1722, %v1591, %v1623
      %v1786 = vsel %vm1722, %v1593, %v1625
      %v1787 = vsel %vm1722, %v1531, %v1563
      %v1788 = vsel %vm1722, %v1533, %v1565
      %v1789 = vsel %vm1722, %v1535, %v1567
      %v1790 = vsel %vm1722, %v1537, %v1569
      %v1791 = vsel %vm1722, %v1539, %v1571
      %v1792 = vsel %vm1722, %v1541, %v1573
      %v1793 = vsel %vm1722, %v1543, %v1575
      %v1794 = vsel %vm1722, %v1545, %v1577
      %v1795 = vsel %vm1722, %v1547, %v1579
      %v1796 = vsel %vm1722, %v1549, %v1581
      %v1797 = vsel %vm1722, %v1551, %v1583
      %v1798 = vsel %vm1722, %v1553, %v1585
      %v1799 = vsel %vm1722, %v1555, %v1587
      %v1800 = vsel %vm1722, %v1557, %v1589
      %v1801 = vsel %vm1722, %v1559, %v1591
      %v1802 = vsel %vm1722, %v1561, %v1593
      %v1803 = vsel %vm1722, %v1691, %v1531
      %v1804 = vsel %vm1722, %v1693, %v1533
      %v1805 = vsel %vm1722, %v1695, %v1535
      %v1806 = vsel %vm1722, %v1697, %v1537
      %v1807 = vsel %vm1722, %v1699, %v1539
      %v1808 = vsel %vm1722, %v1701, %v1541
      %v1809 = vsel %vm1722, %v1703, %v1543
      %v1810 = vsel %vm1722, %v1705, %v1545
      %v1811 = vsel %vm1722, %v1707, %v1547
      %v1812 = vsel %vm1722, %v1709, %v1549
      %v1813 = vsel %vm1722, %v1711, %v1551
      %v1814 = vsel %vm1722, %v1713, %v1553
      %v1815 = vsel %vm1722, %v1715, %v1555
      %v1816 = vsel %vm1722, %v1717, %v1557
      %v1817 = vsel %vm1722, %v1719, %v1559
      %v1818 = vsel %vm1722, %v1721, %v1561
      %v1819 = vpack.c.bf16 %v1804, %v1803
      %v1820 = vpack.c.bf16 %v1788, %v1787
      %v1821 = vpack.c.bf16 %v1772, %v1771
      %v1822 = vpack.c.bf16 %v1756, %v1755
      %v1823 = vpack.c.bf16 %v1740, %v1739
      %v1824 = vpack.c.bf16 %v1724, %v1723
      %v1825 = vpack.c.bf16 %v1806, %v1805
      %v1826 = vpack.c.bf16 %v1790, %v1789
      %v1827 = vpack.c.bf16 %v1774, %v1773
      %v1828 = vpack.c.bf16 %v1758, %v1757
      %v1829 = vpack.c.bf16 %v1742, %v1741
      %v1830 = vpack.c.bf16 %v1726, %v1725
      %v1831 = vpack.c.bf16 %v1808, %v1807
      %v1832 = vpack.c.bf16 %v1792, %v1791
      %v1833 = vpack.c.bf16 %v1776, %v1775
      %v1834 = vpack.c.bf16 %v1760, %v1759
      %v1835 = vpack.c.bf16 %v1744, %v1743
      %v1836 = vpack.c.bf16 %v1728, %v1727
      %v1837 = vpack.c.bf16 %v1810, %v1809
      %v1838 = vpack.c.bf16 %v1794, %v1793
      %v1839 = vpack.c.bf16 %v1778, %v1777
      %v1840 = vpack.c.bf16 %v1762, %v1761
      %v1841 = vpack.c.bf16 %v1746, %v1745
      %v1842 = vpack.c.bf16 %v1730, %v1729
      %v1843 = vpack.c.bf16 %v1812, %v1811
      %v1844 = vpack.c.bf16 %v1796, %v1795
      %v1845 = vpack.c.bf16 %v1780, %v1779
      %v1846 = vpack.c.bf16 %v1764, %v1763
      %v1847 = vpack.c.bf16 %v1748, %v1747
      %v1848 = vpack.c.bf16 %v1732, %v1731
      %v1849 = vpack.c.bf16 %v1814, %v1813
      %v1850 = vpack.c.bf16 %v1798, %v1797
      %v1851 = vpack.c.bf16 %v1782, %v1781
      %v1852 = vpack.c.bf16 %v1766, %v1765
      %v1853 = vpack.c.bf16 %v1750, %v1749
      %v1854 = vpack.c.bf16 %v1734, %v1733
      %v1855 = vpack.c.bf16 %v1816, %v1815
      %v1856 = vpack.c.bf16 %v1800, %v1799
      %v1857 = vpack.c.bf16 %v1784, %v1783
      %v1858 = vpack.c.bf16 %v1768, %v1767
      %v1859 = vpack.c.bf16 %v1752, %v1751
      %v1860 = vpack.c.bf16 %v1736, %v1735
      %v1861 = vpack.c.bf16 %v1818, %v1817
      %v1862 = vpack.c.bf16 %v1802, %v1801
      %v1863 = vpack.c.bf16 %v1786, %v1785
      %v1864 = vpack.c.bf16 %v1770, %v1769
      %v1865 = vpack.c.bf16 %v1754, %v1753
      %v1866 = vpack.c.bf16 %v1738, %v1737
      %1867 = vst [vmem:[#allocation2 + $0x180] sm:$0xff] %v1819
      %1868 = vst [vmem:[#allocation2 + $0x188] sm:$0xff] %v1820
      %1869 = vst [vmem:[#allocation2 + $0x190] sm:$0xff] %v1821
      %1870 = vst [vmem:[#allocation2 + $0x198] sm:$0xff] %v1822
      %1871 = vst [vmem:[#allocation2 + $0x1a0] sm:$0xff] %v1823
      %1872 = vst [vmem:[#allocation2 + $0x1a8] sm:$0xff] %v1824
      %1873 = vst [vmem:[#allocation2 + $0x1b0] sm:$0xff] %v1825
      %1874 = vst [vmem:[#allocation2 + $0x1b8] sm:$0xff] %v1826
      %1875 = vst [vmem:[#allocation2 + $0x1c0] sm:$0xff] %v1827
      %1876 = vst [vmem:[#allocation2 + $0x1c8] sm:$0xff] %v1828
      %1877 = vst [vmem:[#allocation2 + $0x1d0] sm:$0xff] %v1829
      %1878 = vst [vmem:[#allocation2 + $0x1d8] sm:$0xff] %v1830
      %1879 = vst [vmem:[#allocation2 + $0x1e0] sm:$0xff] %v1831
      %1880 = vst [vmem:[#allocation2 + $0x1e8] sm:$0xff] %v1832
      %1881 = vst [vmem:[#allocation2 + $0x1f0] sm:$0xff] %v1833
      %1882 = vst [vmem:[#allocation2 + $0x1f8] sm:$0xff] %v1834
      %1883 = vst [vmem:[#allocation2 + $0x200] sm:$0xff] %v1835
      %1884 = vst [vmem:[#allocation2 + $0x208] sm:$0xff] %v1836
      %1885 = vst [vmem:[#allocation2 + $0x210] sm:$0xff] %v1837
      %1886 = vst [vmem:[#allocation2 + $0x218] sm:$0xff] %v1838
      %1887 = vst [vmem:[#allocation2 + $0x220] sm:$0xff] %v1839
      %1888 = vst [vmem:[#allocation2 + $0x228] sm:$0xff] %v1840
      %1889 = vst [vmem:[#allocation2 + $0x230] sm:$0xff] %v1841
      %1890 = vst [vmem:[#allocation2 + $0x238] sm:$0xff] %v1842
      %1891 = vst [vmem:[#allocation2 + $0x240] sm:$0xff] %v1843
      %1892 = vst [vmem:[#allocation2 + $0x248] sm:$0xff] %v1844
      %1893 = vst [vmem:[#allocation2 + $0x250] sm:$0xff] %v1845
      %1894 = vst [vmem:[#allocation2 + $0x258] sm:$0xff] %v1846
      %1895 = vst [vmem:[#allocation2 + $0x260] sm:$0xff] %v1847
      %1896 = vst [vmem:[#allocation2 + $0x268] sm:$0xff] %v1848
      %1897 = vst [vmem:[#allocation2 + $0x270] sm:$0xff] %v1849
      %1898 = vst [vmem:[#allocation2 + $0x278] sm:$0xff] %v1850
      %1899 = vst [vmem:[#allocation2 + $0x280] sm:$0xff] %v1851
      %1900 = vst [vmem:[#allocation2 + $0x288] sm:$0xff] %v1852
      %1901 = vst [vmem:[#allocation2 + $0x290] sm:$0xff] %v1853
      %1902 = vst [vmem:[#allocation2 + $0x298] sm:$0xff] %v1854
      %1903 = vst [vmem:[#allocation2 + $0x2a0] sm:$0xff] %v1855
      %1904 = vst [vmem:[#allocation2 + $0x2a8] sm:$0xff] %v1856
      %1905 = vst [vmem:[#allocation2 + $0x2b0] sm:$0xff] %v1857
      %1906 = vst [vmem:[#allocation2 + $0x2b8] sm:$0xff] %v1858
      %1907 = vst [vmem:[#allocation2 + $0x2c0] sm:$0xff] %v1859
      %1908 = vst [vmem:[#allocation2 + $0x2c8] sm:$0xff] %v1860
      %1909 = vst [vmem:[#allocation2 + $0x2d0] sm:$0xff] %v1861
      %1910 = vst [vmem:[#allocation2 + $0x2d8] sm:$0xff] %v1862
      %1911 = vst [vmem:[#allocation2 + $0x2e0] sm:$0xff] %v1863
      %1912 = vst [vmem:[#allocation2 + $0x2e8] sm:$0xff] %v1864
      %1913 = vst [vmem:[#allocation2 + $0x2f0] sm:$0xff] %v1865
      %1914 = vst [vmem:[#allocation2 + $0x2f8] sm:$0xff] %v1866
      %1915 = vrot.lane.b32.xlu0 %v1047, 17
      %v1916 = vpop.permute.xlu0 %1915
      %1917 = vrot.lane.b32.xlu0 %v1053, 17
      %v1918 = vpop.permute.xlu0 %1917
      %1919 = vrot.lane.b32.xlu0 %v1059, 17
      %v1920 = vpop.permute.xlu0 %1919
      %1921 = vrot.lane.b32.xlu0 %v1065, 17
      %v1922 = vpop.permute.xlu0 %1921
      %1923 = vrot.lane.b32.xlu0 %v1071, 17
      %v1924 = vpop.permute.xlu0 %1923
      %1925 = vrot.lane.b32.xlu0 %v1077, 17
      %v1926 = vpop.permute.xlu0 %1925
      %1927 = vrot.lane.b32.xlu0 %v1083, 17
      %v1928 = vpop.permute.xlu0 %1927
      %1929 = vrot.lane.b32.xlu0 %v1089, 17
      %v1930 = vpop.permute.xlu0 %1929
      %1931 = vrot.lane.b32.xlu0 %v1095, 17
      %v1932 = vpop.permute.xlu0 %1931
      %1933 = vrot.lane.b32.xlu0 %v1101, 17
      %v1934 = vpop.permute.xlu0 %1933
      %1935 = vrot.lane.b32.xlu0 %v1107, 17
      %v1936 = vpop.permute.xlu0 %1935
      %1937 = vrot.lane.b32.xlu0 %v1113, 17
      %v1938 = vpop.permute.xlu0 %1937
      %1939 = vrot.lane.b32.xlu0 %v1119, 17
      %v1940 = vpop.permute.xlu0 %1939
      %1941 = vrot.lane.b32.xlu0 %v1125, 17
      %v1942 = vpop.permute.xlu0 %1941
      %1943 = vrot.lane.b32.xlu0 %v1131, 17
      %v1944 = vpop.permute.xlu0 %1943
      %1945 = vrot.lane.b32.xlu0 %v1137, 17
      %v1946 = vpop.permute.xlu0 %1945
      %1947 = vrot.lane.b32.xlu0 %v1048, 17
      %v1948 = vpop.permute.xlu0 %1947
      %1949 = vrot.lane.b32.xlu0 %v1054, 17
      %v1950 = vpop.permute.xlu0 %1949
      %1951 = vrot.lane.b32.xlu0 %v1060, 17
      %v1952 = vpop.permute.xlu0 %1951
      %1953 = vrot.lane.b32.xlu0 %v1066, 17
      %v1954 = vpop.permute.xlu0 %1953
      %1955 = vrot.lane.b32.xlu0 %v1072, 17
      %v1956 = vpop.permute.xlu0 %1955
      %1957 = vrot.lane.b32.xlu0 %v1078, 17
      %v1958 = vpop.permute.xlu0 %1957
      %1959 = vrot.lane.b32.xlu0 %v1084, 17
      %v1960 = vpop.permute.xlu0 %1959
      %1961 = vrot.lane.b32.xlu0 %v1090, 17
      %v1962 = vpop.permute.xlu0 %1961
      %1963 = vrot.lane.b32.xlu0 %v1096, 17
      %v1964 = vpop.permute.xlu0 %1963
      %1965 = vrot.lane.b32.xlu0 %v1102, 17
      %v1966 = vpop.permute.xlu0 %1965
      %1967 = vrot.lane.b32.xlu0 %v1108, 17
      %v1968 = vpop.permute.xlu0 %1967
      %1969 = vrot.lane.b32.xlu0 %v1114, 17
      %v1970 = vpop.permute.xlu0 %1969
      %1971 = vrot.lane.b32.xlu0 %v1120, 17
      %v1972 = vpop.permute.xlu0 %1971
      %1973 = vrot.lane.b32.xlu0 %v1126, 17
      %v1974 = vpop.permute.xlu0 %1973
      %1975 = vrot.lane.b32.xlu0 %v1132, 17
      %v1976 = vpop.permute.xlu0 %1975
      %1977 = vrot.lane.b32.xlu0 %v1138, 17
      %v1978 = vpop.permute.xlu0 %1977
      %1979 = vrot.lane.b32.xlu0 %v1049, 17
      %v1980 = vpop.permute.xlu0 %1979
      %1981 = vrot.lane.b32.xlu0 %v1055, 17
      %v1982 = vpop.permute.xlu0 %1981
      %1983 = vrot.lane.b32.xlu0 %v1061, 17
      %v1984 = vpop.permute.xlu0 %1983
      %1985 = vrot.lane.b32.xlu0 %v1067, 17
      %v1986 = vpop.permute.xlu0 %1985
      %1987 = vrot.lane.b32.xlu0 %v1073, 17
      %v1988 = vpop.permute.xlu0 %1987
      %1989 = vrot.lane.b32.xlu0 %v1079, 17
      %v1990 = vpop.permute.xlu0 %1989
      %1991 = vrot.lane.b32.xlu0 %v1085, 17
      %v1992 = vpop.permute.xlu0 %1991
      %1993 = vrot.lane.b32.xlu0 %v1091, 17
      %v1994 = vpop.permute.xlu0 %1993
      %1995 = vrot.lane.b32.xlu0 %v1097, 17
      %v1996 = vpop.permute.xlu0 %1995
      %1997 = vrot.lane.b32.xlu0 %v1103, 17
      %v1998 = vpop.permute.xlu0 %1997
      %1999 = vrot.lane.b32.xlu0 %v1109, 17
      %v2000 = vpop.permute.xlu0 %1999
      %2001 = vrot.lane.b32.xlu0 %v1115, 17
      %v2002 = vpop.permute.xlu0 %2001
      %2003 = vrot.lane.b32.xlu0 %v1121, 17
      %v2004 = vpop.permute.xlu0 %2003
      %2005 = vrot.lane.b32.xlu0 %v1127, 17
      %v2006 = vpop.permute.xlu0 %2005
      %2007 = vrot.lane.b32.xlu0 %v1133, 17
      %v2008 = vpop.permute.xlu0 %2007
      %2009 = vrot.lane.b32.xlu0 %v1139, 17
      %v2010 = vpop.permute.xlu0 %2009
      %2011 = vrot.lane.b32.xlu0 %v1050, 17
      %v2012 = vpop.permute.xlu0 %2011
      %2013 = vrot.lane.b32.xlu0 %v1056, 17
      %v2014 = vpop.permute.xlu0 %2013
      %2015 = vrot.lane.b32.xlu0 %v1062, 17
      %v2016 = vpop.permute.xlu0 %2015
      %2017 = vrot.lane.b32.xlu0 %v1068, 17
      %v2018 = vpop.permute.xlu0 %2017
      %2019 = vrot.lane.b32.xlu0 %v1074, 17
      %v2020 = vpop.permute.xlu0 %2019
      %2021 = vrot.lane.b32.xlu0 %v1080, 17
      %v2022 = vpop.permute.xlu0 %2021
      %2023 = vrot.lane.b32.xlu0 %v1086, 17
      %v2024 = vpop.permute.xlu0 %2023
      %2025 = vrot.lane.b32.xlu0 %v1092, 17
      %v2026 = vpop.permute.xlu0 %2025
      %2027 = vrot.lane.b32.xlu0 %v1098, 17
      %v2028 = vpop.permute.xlu0 %2027
      %2029 = vrot.lane.b32.xlu0 %v1104, 17
      %v2030 = vpop.permute.xlu0 %2029
      %2031 = vrot.lane.b32.xlu0 %v1110, 17
      %v2032 = vpop.permute.xlu0 %2031
      %2033 = vrot.lane.b32.xlu0 %v1116, 17
      %v2034 = vpop.permute.xlu0 %2033
      %2035 = vrot.lane.b32.xlu0 %v1122, 17
      %v2036 = vpop.permute.xlu0 %2035
      %2037 = vrot.lane.b32.xlu0 %v1128, 17
      %v2038 = vpop.permute.xlu0 %2037
      %2039 = vrot.lane.b32.xlu0 %v1134, 17
      %v2040 = vpop.permute.xlu0 %2039
      %2041 = vrot.lane.b32.xlu0 %v1140, 17
      %v2042 = vpop.permute.xlu0 %2041
      %2043 = vrot.lane.b32.xlu0 %v1051, 17
      %v2044 = vpop.permute.xlu0 %2043
      %2045 = vrot.lane.b32.xlu0 %v1057, 17
      %v2046 = vpop.permute.xlu0 %2045
      %2047 = vrot.lane.b32.xlu0 %v1063, 17
      %v2048 = vpop.permute.xlu0 %2047
      %2049 = vrot.lane.b32.xlu0 %v1069, 17
      %v2050 = vpop.permute.xlu0 %2049
      %2051 = vrot.lane.b32.xlu0 %v1075, 17
      %v2052 = vpop.permute.xlu0 %2051
      %2053 = vrot.lane.b32.xlu0 %v1081, 17
      %v2054 = vpop.permute.xlu0 %2053
      %2055 = vrot.lane.b32.xlu0 %v1087, 17
      %v2056 = vpop.permute.xlu0 %2055
      %2057 = vrot.lane.b32.xlu0 %v1093, 17
      %v2058 = vpop.permute.xlu0 %2057
      %2059 = vrot.lane.b32.xlu0 %v1099, 17
      %v2060 = vpop.permute.xlu0 %2059
      %2061 = vrot.lane.b32.xlu0 %v1105, 17
      %v2062 = vpop.permute.xlu0 %2061
      %2063 = vrot.lane.b32.xlu0 %v1111, 17
      %v2064 = vpop.permute.xlu0 %2063
      %2065 = vrot.lane.b32.xlu0 %v1117, 17
      %v2066 = vpop.permute.xlu0 %2065
      %2067 = vrot.lane.b32.xlu0 %v1123, 17
      %v2068 = vpop.permute.xlu0 %2067
      %2069 = vrot.lane.b32.xlu0 %v1129, 17
      %v2070 = vpop.permute.xlu0 %2069
      %2071 = vrot.lane.b32.xlu0 %v1135, 17
      %v2072 = vpop.permute.xlu0 %2071
      %2073 = vrot.lane.b32.xlu0 %v1141, 17
      %v2074 = vpop.permute.xlu0 %2073
      %2075 = vrot.lane.b32.xlu0 %v1052, 17
      %v2076 = vpop.permute.xlu0 %2075
      %2077 = vrot.lane.b32.xlu0 %v1058, 17
      %v2078 = vpop.permute.xlu0 %2077
      %2079 = vrot.lane.b32.xlu0 %v1064, 17
      %v2080 = vpop.permute.xlu0 %2079
      %2081 = vrot.lane.b32.xlu0 %v1070, 17
      %v2082 = vpop.permute.xlu0 %2081
      %2083 = vrot.lane.b32.xlu0 %v1076, 17
      %v2084 = vpop.permute.xlu0 %2083
      %2085 = vrot.lane.b32.xlu0 %v1082, 17
      %v2086 = vpop.permute.xlu0 %2085
      %2087 = vrot.lane.b32.xlu0 %v1088, 17
      %v2088 = vpop.permute.xlu0 %2087
      %2089 = vrot.lane.b32.xlu0 %v1094, 17
      %v2090 = vpop.permute.xlu0 %2089
      %2091 = vrot.lane.b32.xlu0 %v1100, 17
      %v2092 = vpop.permute.xlu0 %2091
      %2093 = vrot.lane.b32.xlu0 %v1106, 17
      %v2094 = vpop.permute.xlu0 %2093
      %2095 = vrot.lane.b32.xlu0 %v1112, 17
      %v2096 = vpop.permute.xlu0 %2095
      %2097 = vrot.lane.b32.xlu0 %v1118, 17
      %v2098 = vpop.permute.xlu0 %2097
      %2099 = vrot.lane.b32.xlu0 %v1124, 17
      %v2100 = vpop.permute.xlu0 %2099
      %2101 = vrot.lane.b32.xlu0 %v1130, 17
      %v2102 = vpop.permute.xlu0 %2101
      %2103 = vrot.lane.b32.xlu0 %v1136, 17
      %v2104 = vpop.permute.xlu0 %2103
      %2105 = vrot.lane.b32.xlu0 %v1142, 17
      %v2106 = vpop.permute.xlu0 %2105
      %vm2107 = vcmp.lt.s32.totalorder %v1336, 17
      %v2108 = vsel %vm2107, %v2044, %v2076
      %v2109 = vsel %vm2107, %v2046, %v2078
      %v2110 = vsel %vm2107, %v2048, %v2080
      %v2111 = vsel %vm2107, %v2050, %v2082
      %v2112 = vsel %vm2107, %v2052, %v2084
      %v2113 = vsel %vm2107, %v2054, %v2086
      %v2114 = vsel %vm2107, %v2056, %v2088
      %v2115 = vsel %vm2107, %v2058, %v2090
      %v2116 = vsel %vm2107, %v2060, %v2092
      %v2117 = vsel %vm2107, %v2062, %v2094
      %v2118 = vsel %vm2107, %v2064, %v2096
      %v2119 = vsel %vm2107, %v2066, %v2098
      %v2120 = vsel %vm2107, %v2068, %v2100
      %v2121 = vsel %vm2107, %v2070, %v2102
      %v2122 = vsel %vm2107, %v2072, %v2104
      %v2123 = vsel %vm2107, %v2074, %v2106
      %v2124 = vsel %vm2107, %v2012, %v2044
      %v2125 = vsel %vm2107, %v2014, %v2046
      %v2126 = vsel %vm2107, %v2016, %v2048
      %v2127 = vsel %vm2107, %v2018, %v2050
      %v2128 = vsel %vm2107, %v2020, %v2052
      %v2129 = vsel %vm2107, %v2022, %v2054
      %v2130 = vsel %vm2107, %v2024, %v2056
      %v2131 = vsel %vm2107, %v2026, %v2058
      %v2132 = vsel %vm2107, %v2028, %v2060
      %v2133 = vsel %vm2107, %v2030, %v2062
      %v2134 = vsel %vm2107, %v2032, %v2064
      %v2135 = vsel %vm2107, %v2034, %v2066
      %v2136 = vsel %vm2107, %v2036, %v2068
      %v2137 = vsel %vm2107, %v2038, %v2070
      %v2138 = vsel %vm2107, %v2040, %v2072
      %v2139 = vsel %vm2107, %v2042, %v2074
      %v2140 = vsel %vm2107, %v1980, %v2012
      %v2141 = vsel %vm2107, %v1982, %v2014
      %v2142 = vsel %vm2107, %v1984, %v2016
      %v2143 = vsel %vm2107, %v1986, %v2018
      %v2144 = vsel %vm2107, %v1988, %v2020
      %v2145 = vsel %vm2107, %v1990, %v2022
      %v2146 = vsel %vm2107, %v1992, %v2024
      %v2147 = vsel %vm2107, %v1994, %v2026
      %v2148 = vsel %vm2107, %v1996, %v2028
      %v2149 = vsel %vm2107, %v1998, %v2030
      %v2150 = vsel %vm2107, %v2000, %v2032
      %v2151 = vsel %vm2107, %v2002, %v2034
      %v2152 = vsel %vm2107, %v2004, %v2036
      %v2153 = vsel %vm2107, %v2006, %v2038
      %v2154 = vsel %vm2107, %v2008, %v2040
      %v2155 = vsel %vm2107, %v2010, %v2042
      %v2156 = vsel %vm2107, %v1948, %v1980
      %v2157 = vsel %vm2107, %v1950, %v1982
      %v2158 = vsel %vm2107, %v1952, %v1984
      %v2159 = vsel %vm2107, %v1954, %v1986
      %v2160 = vsel %vm2107, %v1956, %v1988
      %v2161 = vsel %vm2107, %v1958, %v1990
      %v2162 = vsel %vm2107, %v1960, %v1992
      %v2163 = vsel %vm2107, %v1962, %v1994
      %v2164 = vsel %vm2107, %v1964, %v1996
      %v2165 = vsel %vm2107, %v1966, %v1998
      %v2166 = vsel %vm2107, %v1968, %v2000
      %v2167 = vsel %vm2107, %v1970, %v2002
      %v2168 = vsel %vm2107, %v1972, %v2004
      %v2169 = vsel %vm2107, %v1974, %v2006
      %v2170 = vsel %vm2107, %v1976, %v2008
      %v2171 = vsel %vm2107, %v1978, %v2010
      %v2172 = vsel %vm2107, %v1916, %v1948
      %v2173 = vsel %vm2107, %v1918, %v1950
      %v2174 = vsel %vm2107, %v1920, %v1952
      %v2175 = vsel %vm2107, %v1922, %v1954
      %v2176 = vsel %vm2107, %v1924, %v1956
      %v2177 = vsel %vm2107, %v1926, %v1958
      %v2178 = vsel %vm2107, %v1928, %v1960
      %v2179 = vsel %vm2107, %v1930, %v1962
      %v2180 = vsel %vm2107, %v1932, %v1964
      %v2181 = vsel %vm2107, %v1934, %v1966
      %v2182 = vsel %vm2107, %v1936, %v1968
      %v2183 = vsel %vm2107, %v1938, %v1970
      %v2184 = vsel %vm2107, %v1940, %v1972
      %v2185 = vsel %vm2107, %v1942, %v1974
      %v2186 = vsel %vm2107, %v1944, %v1976
      %v2187 = vsel %vm2107, %v1946, %v1978
      %v2188 = vsel %vm2107, %v2076, %v1916
      %v2189 = vsel %vm2107, %v2078, %v1918
      %v2190 = vsel %vm2107, %v2080, %v1920
      %v2191 = vsel %vm2107, %v2082, %v1922
      %v2192 = vsel %vm2107, %v2084, %v1924
      %v2193 = vsel %vm2107, %v2086, %v1926
      %v2194 = vsel %vm2107, %v2088, %v1928
      %v2195 = vsel %vm2107, %v2090, %v1930
      %v2196 = vsel %vm2107, %v2092, %v1932
      %v2197 = vsel %vm2107, %v2094, %v1934
      %v2198 = vsel %vm2107, %v2096, %v1936
      %v2199 = vsel %vm2107, %v2098, %v1938
      %v2200 = vsel %vm2107, %v2100, %v1940
      %v2201 = vsel %vm2107, %v2102, %v1942
      %v2202 = vsel %vm2107, %v2104, %v1944
      %v2203 = vsel %vm2107, %v2106, %v1946
      %v2204 = vpack.c.bf16 %v2189, %v2188
      %v2205 = vpack.c.bf16 %v2173, %v2172
      %v2206 = vpack.c.bf16 %v2157, %v2156
      %v2207 = vpack.c.bf16 %v2141, %v2140
      %v2208 = vpack.c.bf16 %v2125, %v2124
      %v2209 = vpack.c.bf16 %v2109, %v2108
      %v2210 = vpack.c.bf16 %v2191, %v2190
      %v2211 = vpack.c.bf16 %v2175, %v2174
      %v2212 = vpack.c.bf16 %v2159, %v2158
      %v2213 = vpack.c.bf16 %v2143, %v2142
      %v2214 = vpack.c.bf16 %v2127, %v2126
      %v2215 = vpack.c.bf16 %v2111, %v2110
      %v2216 = vpack.c.bf16 %v2193, %v2192
      %v2217 = vpack.c.bf16 %v2177, %v2176
      %v2218 = vpack.c.bf16 %v2161, %v2160
      %v2219 = vpack.c.bf16 %v2145, %v2144
      %v2220 = vpack.c.bf16 %v2129, %v2128
      %v2221 = vpack.c.bf16 %v2113, %v2112
      %v2222 = vpack.c.bf16 %v2195, %v2194
      %v2223 = vpack.c.bf16 %v2179, %v2178
      %v2224 = vpack.c.bf16 %v2163, %v2162
      %v2225 = vpack.c.bf16 %v2147, %v2146
      %v2226 = vpack.c.bf16 %v2131, %v2130
      %v2227 = vpack.c.bf16 %v2115, %v2114
      %v2228 = vpack.c.bf16 %v2197, %v2196
      %v2229 = vpack.c.bf16 %v2181, %v2180
      %v2230 = vpack.c.bf16 %v2165, %v2164
      %v2231 = vpack.c.bf16 %v2149, %v2148
      %v2232 = vpack.c.bf16 %v2133, %v2132
      %v2233 = vpack.c.bf16 %v2117, %v2116
      %v2234 = vpack.c.bf16 %v2199, %v2198
      %v2235 = vpack.c.bf16 %v2183, %v2182
      %v2236 = vpack.c.bf16 %v2167, %v2166
      %v2237 = vpack.c.bf16 %v2151, %v2150
      %v2238 = vpack.c.bf16 %v2135, %v2134
      %v2239 = vpack.c.bf16 %v2119, %v2118
      %v2240 = vpack.c.bf16 %v2201, %v2200
      %v2241 = vpack.c.bf16 %v2185, %v2184
      %v2242 = vpack.c.bf16 %v2169, %v2168
      %v2243 = vpack.c.bf16 %v2153, %v2152
      %v2244 = vpack.c.bf16 %v2137, %v2136
      %v2245 = vpack.c.bf16 %v2121, %v2120
      %v2246 = vpack.c.bf16 %v2203, %v2202
      %v2247 = vpack.c.bf16 %v2187, %v2186
      %v2248 = vpack.c.bf16 %v2171, %v2170
      %v2249 = vpack.c.bf16 %v2155, %v2154
      %v2250 = vpack.c.bf16 %v2139, %v2138
      %v2251 = vpack.c.bf16 %v2123, %v2122
      %2252 = vst [vmem:[#allocation2 + $0x300] sm:$0xff] %v2204
      %2253 = vst [vmem:[#allocation2 + $0x308] sm:$0xff] %v2205
      %2254 = vst [vmem:[#allocation2 + $0x310] sm:$0xff] %v2206
      %2255 = vst [vmem:[#allocation2 + $0x318] sm:$0xff] %v2207
      %2256 = vst [vmem:[#allocation2 + $0x320] sm:$0xff] %v2208
      %2257 = vst [vmem:[#allocation2 + $0x328] sm:$0xff] %v2209
      %2258 = vst [vmem:[#allocation2 + $0x330] sm:$0xff] %v2210
      %2259 = vst [vmem:[#allocation2 + $0x338] sm:$0xff] %v2211
      %2260 = vst [vmem:[#allocation2 + $0x340] sm:$0xff] %v2212
      %2261 = vst [vmem:[#allocation2 + $0x348] sm:$0xff] %v2213
      %2262 = vst [vmem:[#allocation2 + $0x350] sm:$0xff] %v2214
      %2263 = vst [vmem:[#allocation2 + $0x358] sm:$0xff] %v2215
      %2264 = vst [vmem:[#allocation2 + $0x360] sm:$0xff] %v2216
      %2265 = vst [vmem:[#allocation2 + $0x368] sm:$0xff] %v2217
      %2266 = vst [vmem:[#allocation2 + $0x370] sm:$0xff] %v2218
      %2267 = vst [vmem:[#allocation2 + $0x378] sm:$0xff] %v2219
      %2268 = vst [vmem:[#allocation2 + $0x380] sm:$0xff] %v2220
      %2269 = vst [vmem:[#allocation2 + $0x388] sm:$0xff] %v2221
      %2270 = vst [vmem:[#allocation2 + $0x390] sm:$0xff] %v2222
      %2271 = vst [vmem:[#allocation2 + $0x398] sm:$0xff] %v2223
      %2272 = vst [vmem:[#allocation2 + $0x3a0] sm:$0xff] %v2224
      %2273 = vst [vmem:[#allocation2 + $0x3a8] sm:$0xff] %v2225
      %2274 = vst [vmem:[#allocation2 + $0x3b0] sm:$0xff] %v2226
      %2275 = vst [vmem:[#allocation2 + $0x3b8] sm:$0xff] %v2227
      %2276 = vst [vmem:[#allocation2 + $0x3c0] sm:$0xff] %v2228
      %2277 = vst [vmem:[#allocation2 + $0x3c8] sm:$0xff] %v2229
      %2278 = vst [vmem:[#allocation2 + $0x3d0] sm:$0xff] %v2230
      %2279 = vst [vmem:[#allocation2 + $0x3d8] sm:$0xff] %v2231
      %2280 = vst [vmem:[#allocation2 + $0x3e0] sm:$0xff] %v2232
      %2281 = vst [vmem:[#allocation2 + $0x3e8] sm:$0xff] %v2233
      %2282 = vst [vmem:[#allocation2 + $0x3f0] sm:$0xff] %v2234
      %2283 = vst [vmem:[#allocation2 + $0x3f8] sm:$0xff] %v2235
      %2284 = vst [vmem:[#allocation2 + $0x400] sm:$0xff] %v2236
      %2285 = vst [vmem:[#allocation2 + $0x408] sm:$0xff] %v2237
      %2286 = vst [vmem:[#allocation2 + $0x410] sm:$0xff] %v2238
      %2287 = vst [vmem:[#allocation2 + $0x418] sm:$0xff] %v2239
      %2288 = vst [vmem:[#allocation2 + $0x420] sm:$0xff] %v2240
      %2289 = vst [vmem:[#allocation2 + $0x428] sm:$0xff] %v2241
      %2290 = vst [vmem:[#allocation2 + $0x430] sm:$0xff] %v2242
      %2291 = vst [vmem:[#allocation2 + $0x438] sm:$0xff] %v2243
      %2292 = vst [vmem:[#allocation2 + $0x440] sm:$0xff] %v2244
      %2293 = vst [vmem:[#allocation2 + $0x448] sm:$0xff] %v2245
      %2294 = vst [vmem:[#allocation2 + $0x450] sm:$0xff] %v2246
      %2295 = vst [vmem:[#allocation2 + $0x458] sm:$0xff] %v2247
      %2296 = vst [vmem:[#allocation2 + $0x460] sm:$0xff] %v2248
      %2297 = vst [vmem:[#allocation2 + $0x468] sm:$0xff] %v2249
      %2298 = vst [vmem:[#allocation2 + $0x470] sm:$0xff] %v2250
      %2299 = vst [vmem:[#allocation2 + $0x478] sm:$0xff] %v2251
      %2300 = vrot.lane.b32.xlu0 %v1047, 1
      %v2301 = vpop.permute.xlu0 %2300
      %2302 = vrot.lane.b32.xlu0 %v1053, 1
      %v2303 = vpop.permute.xlu0 %2302
      %2304 = vrot.lane.b32.xlu0 %v1059, 1
      %v2305 = vpop.permute.xlu0 %2304
      %2306 = vrot.lane.b32.xlu0 %v1065, 1
      %v2307 = vpop.permute.xlu0 %2306
      %2308 = vrot.lane.b32.xlu0 %v1071, 1
      %v2309 = vpop.permute.xlu0 %2308
      %2310 = vrot.lane.b32.xlu0 %v1077, 1
      %v2311 = vpop.permute.xlu0 %2310
      %2312 = vrot.lane.b32.xlu0 %v1083, 1
      %v2313 = vpop.permute.xlu0 %2312
      %2314 = vrot.lane.b32.xlu0 %v1089, 1
      %v2315 = vpop.permute.xlu0 %2314
      %2316 = vrot.lane.b32.xlu0 %v1095, 1
      %v2317 = vpop.permute.xlu0 %2316
      %2318 = vrot.lane.b32.xlu0 %v1101, 1
      %v2319 = vpop.permute.xlu0 %2318
      %2320 = vrot.lane.b32.xlu0 %v1107, 1
      %v2321 = vpop.permute.xlu0 %2320
      %2322 = vrot.lane.b32.xlu0 %v1113, 1
      %v2323 = vpop.permute.xlu0 %2322
      %2324 = vrot.lane.b32.xlu0 %v1119, 1
      %v2325 = vpop.permute.xlu0 %2324
      %2326 = vrot.lane.b32.xlu0 %v1125, 1
      %v2327 = vpop.permute.xlu0 %2326
      %2328 = vrot.lane.b32.xlu0 %v1131, 1
      %v2329 = vpop.permute.xlu0 %2328
      %2330 = vrot.lane.b32.xlu0 %v1137, 1
      %v2331 = vpop.permute.xlu0 %2330
      %2332 = vrot.lane.b32.xlu0 %v1048, 1
      %v2333 = vpop.permute.xlu0 %2332
      %2334 = vrot.lane.b32.xlu0 %v1054, 1
      %v2335 = vpop.permute.xlu0 %2334
      %2336 = vrot.lane.b32.xlu0 %v1060, 1
      %v2337 = vpop.permute.xlu0 %2336
      %2338 = vrot.lane.b32.xlu0 %v1066, 1
      %v2339 = vpop.permute.xlu0 %2338
      %2340 = vrot.lane.b32.xlu0 %v1072, 1
      %v2341 = vpop.permute.xlu0 %2340
      %2342 = vrot.lane.b32.xlu0 %v1078, 1
      %v2343 = vpop.permute.xlu0 %2342
      %2344 = vrot.lane.b32.xlu0 %v1084, 1
      %v2345 = vpop.permute.xlu0 %2344
      %2346 = vrot.lane.b32.xlu0 %v1090, 1
      %v2347 = vpop.permute.xlu0 %2346
      %2348 = vrot.lane.b32.xlu0 %v1096, 1
      %v2349 = vpop.permute.xlu0 %2348
      %2350 = vrot.lane.b32.xlu0 %v1102, 1
      %v2351 = vpop.permute.xlu0 %2350
      %2352 = vrot.lane.b32.xlu0 %v1108, 1
      %v2353 = vpop.permute.xlu0 %2352
      %2354 = vrot.lane.b32.xlu0 %v1114, 1
      %v2355 = vpop.permute.xlu0 %2354
      %2356 = vrot.lane.b32.xlu0 %v1120, 1
      %v2357 = vpop.permute.xlu0 %2356
      %2358 = vrot.lane.b32.xlu0 %v1126, 1
      %v2359 = vpop.permute.xlu0 %2358
      %2360 = vrot.lane.b32.xlu0 %v1132, 1
      %v2361 = vpop.permute.xlu0 %2360
      %2362 = vrot.lane.b32.xlu0 %v1138, 1
      %v2363 = vpop.permute.xlu0 %2362
      %2364 = vrot.lane.b32.xlu0 %v1049, 1
      %v2365 = vpop.permute.xlu0 %2364
      %2366 = vrot.lane.b32.xlu0 %v1055, 1
      %v2367 = vpop.permute.xlu0 %2366
      %2368 = vrot.lane.b32.xlu0 %v1061, 1
      %v2369 = vpop.permute.xlu0 %2368
      %2370 = vrot.lane.b32.xlu0 %v1067, 1
      %v2371 = vpop.permute.xlu0 %2370
      %2372 = vrot.lane.b32.xlu0 %v1073, 1
      %v2373 = vpop.permute.xlu0 %2372
      %2374 = vrot.lane.b32.xlu0 %v1079, 1
      %v2375 = vpop.permute.xlu0 %2374
      %2376 = vrot.lane.b32.xlu0 %v1085, 1
      %v2377 = vpop.permute.xlu0 %2376
      %2378 = vrot.lane.b32.xlu0 %v1091, 1
      %v2379 = vpop.permute.xlu0 %2378
      %2380 = vrot.lane.b32.xlu0 %v1097, 1
      %v2381 = vpop.permute.xlu0 %2380
      %2382 = vrot.lane.b32.xlu0 %v1103, 1
      %v2383 = vpop.permute.xlu0 %2382
      %2384 = vrot.lane.b32.xlu0 %v1109, 1
      %v2385 = vpop.permute.xlu0 %2384
      %2386 = vrot.lane.b32.xlu0 %v1115, 1
      %v2387 = vpop.permute.xlu0 %2386
      %2388 = vrot.lane.b32.xlu0 %v1121, 1
      %v2389 = vpop.permute.xlu0 %2388
      %2390 = vrot.lane.b32.xlu0 %v1127, 1
      %v2391 = vpop.permute.xlu0 %2390
      %2392 = vrot.lane.b32.xlu0 %v1133, 1
      %v2393 = vpop.permute.xlu0 %2392
      %2394 = vrot.lane.b32.xlu0 %v1139, 1
      %v2395 = vpop.permute.xlu0 %2394
      %2396 = vrot.lane.b32.xlu0 %v1050, 1
      %v2397 = vpop.permute.xlu0 %2396
      %2398 = vrot.lane.b32.xlu0 %v1056, 1
      %v2399 = vpop.permute.xlu0 %2398
      %2400 = vrot.lane.b32.xlu0 %v1062, 1
      %v2401 = vpop.permute.xlu0 %2400
      %2402 = vrot.lane.b32.xlu0 %v1068, 1
      %v2403 = vpop.permute.xlu0 %2402
      %2404 = vrot.lane.b32.xlu0 %v1074, 1
      %v2405 = vpop.permute.xlu0 %2404
      %2406 = vrot.lane.b32.xlu0 %v1080, 1
      %v2407 = vpop.permute.xlu0 %2406
      %2408 = vrot.lane.b32.xlu0 %v1086, 1
      %v2409 = vpop.permute.xlu0 %2408
      %2410 = vrot.lane.b32.xlu0 %v1092, 1
      %v2411 = vpop.permute.xlu0 %2410
      %2412 = vrot.lane.b32.xlu0 %v1098, 1
      %v2413 = vpop.permute.xlu0 %2412
      %2414 = vrot.lane.b32.xlu0 %v1104, 1
      %v2415 = vpop.permute.xlu0 %2414
      %2416 = vrot.lane.b32.xlu0 %v1110, 1
      %v2417 = vpop.permute.xlu0 %2416
      %2418 = vrot.lane.b32.xlu0 %v1116, 1
      %v2419 = vpop.permute.xlu0 %2418
      %2420 = vrot.lane.b32.xlu0 %v1122, 1
      %v2421 = vpop.permute.xlu0 %2420
      %2422 = vrot.lane.b32.xlu0 %v1128, 1
      %v2423 = vpop.permute.xlu0 %2422
      %2424 = vrot.lane.b32.xlu0 %v1134, 1
      %v2425 = vpop.permute.xlu0 %2424
      %2426 = vrot.lane.b32.xlu0 %v1140, 1
      %v2427 = vpop.permute.xlu0 %2426
      %2428 = vrot.lane.b32.xlu0 %v1051, 1
      %v2429 = vpop.permute.xlu0 %2428
      %2430 = vrot.lane.b32.xlu0 %v1057, 1
      %v2431 = vpop.permute.xlu0 %2430
      %2432 = vrot.lane.b32.xlu0 %v1063, 1
      %v2433 = vpop.permute.xlu0 %2432
      %2434 = vrot.lane.b32.xlu0 %v1069, 1
      %v2435 = vpop.permute.xlu0 %2434
      %2436 = vrot.lane.b32.xlu0 %v1075, 1
      %v2437 = vpop.permute.xlu0 %2436
      %2438 = vrot.lane.b32.xlu0 %v1081, 1
      %v2439 = vpop.permute.xlu0 %2438
      %2440 = vrot.lane.b32.xlu0 %v1087, 1
      %v2441 = vpop.permute.xlu0 %2440
      %2442 = vrot.lane.b32.xlu0 %v1093, 1
      %v2443 = vpop.permute.xlu0 %2442
      %2444 = vrot.lane.b32.xlu0 %v1099, 1
      %v2445 = vpop.permute.xlu0 %2444
      %2446 = vrot.lane.b32.xlu0 %v1105, 1
      %v2447 = vpop.permute.xlu0 %2446
      %2448 = vrot.lane.b32.xlu0 %v1111, 1
      %v2449 = vpop.permute.xlu0 %2448
      %2450 = vrot.lane.b32.xlu0 %v1117, 1
      %v2451 = vpop.permute.xlu0 %2450
      %2452 = vrot.lane.b32.xlu0 %v1123, 1
      %v2453 = vpop.permute.xlu0 %2452
      %2454 = vrot.lane.b32.xlu0 %v1129, 1
      %v2455 = vpop.permute.xlu0 %2454
      %2456 = vrot.lane.b32.xlu0 %v1135, 1
      %v2457 = vpop.permute.xlu0 %2456
      %2458 = vrot.lane.b32.xlu0 %v1141, 1
      %v2459 = vpop.permute.xlu0 %2458
      %2460 = vrot.lane.b32.xlu0 %v1052, 1
      %v2461 = vpop.permute.xlu0 %2460
      %2462 = vrot.lane.b32.xlu0 %v1058, 1
      %v2463 = vpop.permute.xlu0 %2462
      %2464 = vrot.lane.b32.xlu0 %v1064, 1
      %v2465 = vpop.permute.xlu0 %2464
      %2466 = vrot.lane.b32.xlu0 %v1070, 1
      %v2467 = vpop.permute.xlu0 %2466
      %2468 = vrot.lane.b32.xlu0 %v1076, 1
      %v2469 = vpop.permute.xlu0 %2468
      %2470 = vrot.lane.b32.xlu0 %v1082, 1
      %v2471 = vpop.permute.xlu0 %2470
      %2472 = vrot.lane.b32.xlu0 %v1088, 1
      %v2473 = vpop.permute.xlu0 %2472
      %2474 = vrot.lane.b32.xlu0 %v1094, 1
      %v2475 = vpop.permute.xlu0 %2474
      %2476 = vrot.lane.b32.xlu0 %v1100, 1
      %v2477 = vpop.permute.xlu0 %2476
      %2478 = vrot.lane.b32.xlu0 %v1106, 1
      %v2479 = vpop.permute.xlu0 %2478
      %2480 = vrot.lane.b32.xlu0 %v1112, 1
      %v2481 = vpop.permute.xlu0 %2480
      %2482 = vrot.lane.b32.xlu0 %v1118, 1
      %v2483 = vpop.permute.xlu0 %2482
      %2484 = vrot.lane.b32.xlu0 %v1124, 1
      %v2485 = vpop.permute.xlu0 %2484
      %2486 = vrot.lane.b32.xlu0 %v1130, 1
      %v2487 = vpop.permute.xlu0 %2486
      %2488 = vrot.lane.b32.xlu0 %v1136, 1
      %v2489 = vpop.permute.xlu0 %2488
      %2490 = vrot.lane.b32.xlu0 %v1142, 1
      %v2491 = vpop.permute.xlu0 %2490
      %vm2492 = vcmp.lt.s32.totalorder %v1336, 1
      %v2493 = vsel %vm2492, %v2429, %v2461
      %v2494 = vsel %vm2492, %v2431, %v2463
      %v2495 = vsel %vm2492, %v2433, %v2465
      %v2496 = vsel %vm2492, %v2435, %v2467
      %v2497 = vsel %vm2492, %v2437, %v2469
      %v2498 = vsel %vm2492, %v2439, %v2471
      %v2499 = vsel %vm2492, %v2441, %v2473
      %v2500 = vsel %vm2492, %v2443, %v2475
      %v2501 = vsel %vm2492, %v2445, %v2477
      %v2502 = vsel %vm2492, %v2447, %v2479
      %v2503 = vsel %vm2492, %v2449, %v2481
      %v2504 = vsel %vm2492, %v2451, %v2483
      %v2505 = vsel %vm2492, %v2453, %v2485
      %v2506 = vsel %vm2492, %v2455, %v2487
      %v2507 = vsel %vm2492, %v2457, %v2489
      %v2508 = vsel %vm2492, %v2459, %v2491
      %v2509 = vsel %vm2492, %v2397, %v2429
      %v2510 = vsel %vm2492, %v2399, %v2431
      %v2511 = vsel %vm2492, %v2401, %v2433
      %v2512 = vsel %vm2492, %v2403, %v2435
      %v2513 = vsel %vm2492, %v2405, %v2437
      %v2514 = vsel %vm2492, %v2407, %v2439
      %v2515 = vsel %vm2492, %v2409, %v2441
      %v2516 = vsel %vm2492, %v2411, %v2443
      %v2517 = vsel %vm2492, %v2413, %v2445
      %v2518 = vsel %vm2492, %v2415, %v2447
      %v2519 = vsel %vm2492, %v2417, %v2449
      %v2520 = vsel %vm2492, %v2419, %v2451
      %v2521 = vsel %vm2492, %v2421, %v2453
      %v2522 = vsel %vm2492, %v2423, %v2455
      %v2523 = vsel %vm2492, %v2425, %v2457
      %v2524 = vsel %vm2492, %v2427, %v2459
      %v2525 = vsel %vm2492, %v2365, %v2397
      %v2526 = vsel %vm2492, %v2367, %v2399
      %v2527 = vsel %vm2492, %v2369, %v2401
      %v2528 = vsel %vm2492, %v2371, %v2403
      %v2529 = vsel %vm2492, %v2373, %v2405
      %v2530 = vsel %vm2492, %v2375, %v2407
      %v2531 = vsel %vm2492, %v2377, %v2409
      %v2532 = vsel %vm2492, %v2379, %v2411
      %v2533 = vsel %vm2492, %v2381, %v2413
      %v2534 = vsel %vm2492, %v2383, %v2415
      %v2535 = vsel %vm2492, %v2385, %v2417
      %v2536 = vsel %vm2492, %v2387, %v2419
      %v2537 = vsel %vm2492, %v2389, %v2421
      %v2538 = vsel %vm2492, %v2391, %v2423
      %v2539 = vsel %vm2492, %v2393, %v2425
      %v2540 = vsel %vm2492, %v2395, %v2427
      %v2541 = vsel %vm2492, %v2333, %v2365
      %v2542 = vsel %vm2492, %v2335, %v2367
      %v2543 = vsel %vm2492, %v2337, %v2369
      %v2544 = vsel %vm2492, %v2339, %v2371
      %v2545 = vsel %vm2492, %v2341, %v2373
      %v2546 = vsel %vm2492, %v2343, %v2375
      %v2547 = vsel %vm2492, %v2345, %v2377
      %v2548 = vsel %vm2492, %v2347, %v2379
      %v2549 = vsel %vm2492, %v2349, %v2381
      %v2550 = vsel %vm2492, %v2351, %v2383
      %v2551 = vsel %vm2492, %v2353, %v2385
      %v2552 = vsel %vm2492, %v2355, %v2387
      %v2553 = vsel %vm2492, %v2357, %v2389
      %v2554 = vsel %vm2492, %v2359, %v2391
      %v2555 = vsel %vm2492, %v2361, %v2393
      %v2556 = vsel %vm2492, %v2363, %v2395
      %v2557 = vsel %vm2492, %v2301, %v2333
      %v2558 = vsel %vm2492, %v2303, %v2335
      %v2559 = vsel %vm2492, %v2305, %v2337
      %v2560 = vsel %vm2492, %v2307, %v2339
      %v2561 = vsel %vm2492, %v2309, %v2341
      %v2562 = vsel %vm2492, %v2311, %v2343
      %v2563 = vsel %vm2492, %v2313, %v2345
      %v2564 = vsel %vm2492, %v2315, %v2347
      %v2565 = vsel %vm2492, %v2317, %v2349
      %v2566 = vsel %vm2492, %v2319, %v2351
      %v2567 = vsel %vm2492, %v2321, %v2353
      %v2568 = vsel %vm2492, %v2323, %v2355
      %v2569 = vsel %vm2492, %v2325, %v2357
      %v2570 = vsel %vm2492, %v2327, %v2359
      %v2571 = vsel %vm2492, %v2329, %v2361
      %v2572 = vsel %vm2492, %v2331, %v2363
      %v2573 = vsel %vm2492, %v2461, %v2301
      %v2574 = vsel %vm2492, %v2463, %v2303
      %v2575 = vsel %vm2492, %v2465, %v2305
      %v2576 = vsel %vm2492, %v2467, %v2307
      %v2577 = vsel %vm2492, %v2469, %v2309
      %v2578 = vsel %vm2492, %v2471, %v2311
      %v2579 = vsel %vm2492, %v2473, %v2313
      %v2580 = vsel %vm2492, %v2475, %v2315
      %v2581 = vsel %vm2492, %v2477, %v2317
      %v2582 = vsel %vm2492, %v2479, %v2319
      %v2583 = vsel %vm2492, %v2481, %v2321
      %v2584 = vsel %vm2492, %v2483, %v2323
      %v2585 = vsel %vm2492, %v2485, %v2325
      %v2586 = vsel %vm2492, %v2487, %v2327
      %v2587 = vsel %vm2492, %v2489, %v2329
      %v2588 = vsel %vm2492, %v2491, %v2331
      %v2589 = vpack.c.bf16 %v2574, %v2573
      %v2590 = vpack.c.bf16 %v2558, %v2557
      %v2591 = vpack.c.bf16 %v2542, %v2541
      %v2592 = vpack.c.bf16 %v2526, %v2525
      %v2593 = vpack.c.bf16 %v2510, %v2509
      %v2594 = vpack.c.bf16 %v2494, %v2493
      %v2595 = vpack.c.bf16 %v2576, %v2575
      %v2596 = vpack.c.bf16 %v2560, %v2559
      %v2597 = vpack.c.bf16 %v2544, %v2543
      %v2598 = vpack.c.bf16 %v2528, %v2527
      %v2599 = vpack.c.bf16 %v2512, %v2511
      %v2600 = vpack.c.bf16 %v2496, %v2495
      %v2601 = vpack.c.bf16 %v2578, %v2577
      %v2602 = vpack.c.bf16 %v2562, %v2561
      %v2603 = vpack.c.bf16 %v2546, %v2545
      %v2604 = vpack.c.bf16 %v2530, %v2529
      %v2605 = vpack.c.bf16 %v2514, %v2513
      %v2606 = vpack.c.bf16 %v2498, %v2497
      %v2607 = vpack.c.bf16 %v2580, %v2579
      %v2608 = vpack.c.bf16 %v2564, %v2563
      %v2609 = vpack.c.bf16 %v2548, %v2547
      %v2610 = vpack.c.bf16 %v2532, %v2531
      %v2611 = vpack.c.bf16 %v2516, %v2515
      %v2612 = vpack.c.bf16 %v2500, %v2499
      %v2613 = vpack.c.bf16 %v2582, %v2581
      %v2614 = vpack.c.bf16 %v2566, %v2565
      %v2615 = vpack.c.bf16 %v2550, %v2549
      %v2616 = vpack.c.bf16 %v2534, %v2533
      %v2617 = vpack.c.bf16 %v2518, %v2517
      %v2618 = vpack.c.bf16 %v2502, %v2501
      %v2619 = vpack.c.bf16 %v2584, %v2583
      %v2620 = vpack.c.bf16 %v2568, %v2567
      %v2621 = vpack.c.bf16 %v2552, %v2551
      %v2622 = vpack.c.bf16 %v2536, %v2535
      %v2623 = vpack.c.bf16 %v2520, %v2519
      %v2624 = vpack.c.bf16 %v2504, %v2503
      %v2625 = vpack.c.bf16 %v2586, %v2585
      %v2626 = vpack.c.bf16 %v2570, %v2569
      %v2627 = vpack.c.bf16 %v2554, %v2553
      %v2628 = vpack.c.bf16 %v2538, %v2537
      %v2629 = vpack.c.bf16 %v2522, %v2521
      %v2630 = vpack.c.bf16 %v2506, %v2505
      %v2631 = vpack.c.bf16 %v2588, %v2587
      %v2632 = vpack.c.bf16 %v2572, %v2571
      %v2633 = vpack.c.bf16 %v2556, %v2555
      %v2634 = vpack.c.bf16 %v2540, %v2539
      %v2635 = vpack.c.bf16 %v2524, %v2523
      %v2636 = vpack.c.bf16 %v2508, %v2507
      %2637 = vst [vmem:[#allocation2 + $0x480] sm:$0xff] %v2589
      %2638 = vst [vmem:[#allocation2 + $0x488] sm:$0xff] %v2590
      %2639 = vst [vmem:[#allocation2 + $0x490] sm:$0xff] %v2591
      %2640 = vst [vmem:[#allocation2 + $0x498] sm:$0xff] %v2592
      %2641 = vst [vmem:[#allocation2 + $0x4a0] sm:$0xff] %v2593
      %2642 = vst [vmem:[#allocation2 + $0x4a8] sm:$0xff] %v2594
      %2643 = vst [vmem:[#allocation2 + $0x4b0] sm:$0xff] %v2595
      %2644 = vst [vmem:[#allocation2 + $0x4b8] sm:$0xff] %v2596
      %2645 = vst [vmem:[#allocation2 + $0x4c0] sm:$0xff] %v2597
      %2646 = vst [vmem:[#allocation2 + $0x4c8] sm:$0xff] %v2598
      %2647 = vst [vmem:[#allocation2 + $0x4d0] sm:$0xff] %v2599
      %2648 = vst [vmem:[#allocation2 + $0x4d8] sm:$0xff] %v2600
      %2649 = vst [vmem:[#allocation2 + $0x4e0] sm:$0xff] %v2601
      %2650 = vst [vmem:[#allocation2 + $0x4e8] sm:$0xff] %v2602
      %2651 = vst [vmem:[#allocation2 + $0x4f0] sm:$0xff] %v2603
      %2652 = vst [vmem:[#allocation2 + $0x4f8] sm:$0xff] %v2604
      %2653 = vst [vmem:[#allocation2 + $0x500] sm:$0xff] %v2605
      %2654 = vst [vmem:[#allocation2 + $0x508] sm:$0xff] %v2606
      %2655 = vst [vmem:[#allocation2 + $0x510] sm:$0xff] %v2607
      %2656 = vst [vmem:[#allocation2 + $0x518] sm:$0xff] %v2608
      %2657 = vst [vmem:[#allocation2 + $0x520] sm:$0xff] %v2609
      %2658 = vst [vmem:[#allocation2 + $0x528] sm:$0xff] %v2610
      %2659 = vst [vmem:[#allocation2 + $0x530] sm:$0xff] %v2611
      %2660 = vst [vmem:[#allocation2 + $0x538] sm:$0xff] %v2612
      %2661 = vst [vmem:[#allocation2 + $0x540] sm:$0xff] %v2613
      %2662 = vst [vmem:[#allocation2 + $0x548] sm:$0xff] %v2614
      %2663 = vst [vmem:[#allocation2 + $0x550] sm:$0xff] %v2615
      %2664 = vst [vmem:[#allocation2 + $0x558] sm:$0xff] %v2616
      %2665 = vst [vmem:[#allocation2 + $0x560] sm:$0xff] %v2617
      %2666 = vst [vmem:[#allocation2 + $0x568] sm:$0xff] %v2618
      %2667 = vst [vmem:[#allocation2 + $0x570] sm:$0xff] %v2619
      %2668 = vst [vmem:[#allocation2 + $0x578] sm:$0xff] %v2620
      %2669 = vst [vmem:[#allocation2 + $0x580] sm:$0xff] %v2621
      %2670 = vst [vmem:[#allocation2 + $0x588] sm:$0xff] %v2622
      %2671 = vst [vmem:[#allocation2 + $0x590] sm:$0xff] %v2623
      %2672 = vst [vmem:[#allocation2 + $0x598] sm:$0xff] %v2624
      %2673 = vst [vmem:[#allocation2 + $0x5a0] sm:$0xff] %v2625
      %2674 = vst [vmem:[#allocation2 + $0x5a8] sm:$0xff] %v2626
      %2675 = vst [vmem:[#allocation2 + $0x5b0] sm:$0xff] %v2627
      %2676 = vst [vmem:[#allocation2 + $0x5b8] sm:$0xff] %v2628
      %2677 = vst [vmem:[#allocation2 + $0x5c0] sm:$0xff] %v2629
      %2678 = vst [vmem:[#allocation2 + $0x5c8] sm:$0xff] %v2630
      %2679 = vst [vmem:[#allocation2 + $0x5d0] sm:$0xff] %v2631
      %2680 = vst [vmem:[#allocation2 + $0x5d8] sm:$0xff] %v2632
      %2681 = vst [vmem:[#allocation2 + $0x5e0] sm:$0xff] %v2633
      %2682 = vst [vmem:[#allocation2 + $0x5e8] sm:$0xff] %v2634
      %2683 = vst [vmem:[#allocation2 + $0x5f0] sm:$0xff] %v2635
      %2684 = vst [vmem:[#allocation2 + $0x5f8] sm:$0xff] %v2636
      %v2685 = vpack.c.bf16 %v1053, %v1047
      %v2686 = vpack.c.bf16 %v1054, %v1048
      %v2687 = vpack.c.bf16 %v1055, %v1049
      %v2688 = vpack.c.bf16 %v1056, %v1050
      %v2689 = vpack.c.bf16 %v1057, %v1051
      %v2690 = vpack.c.bf16 %v1058, %v1052
      %v2691 = vpack.c.bf16 %v1065, %v1059
      %v2692 = vpack.c.bf16 %v1066, %v1060
      %v2693 = vpack.c.bf16 %v1067, %v1061
      %v2694 = vpack.c.bf16 %v1068, %v1062
      %v2695 = vpack.c.bf16 %v1069, %v1063
      %v2696 = vpack.c.bf16 %v1070, %v1064
      %v2697 = vpack.c.bf16 %v1077, %v1071
      %v2698 = vpack.c.bf16 %v1078, %v1072
      %v2699 = vpack.c.bf16 %v1079, %v1073
      %v2700 = vpack.c.bf16 %v1080, %v1074
      %v2701 = vpack.c.bf16 %v1081, %v1075
      %v2702 = vpack.c.bf16 %v1082, %v1076
      %v2703 = vpack.c.bf16 %v1089, %v1083
      %v2704 = vpack.c.bf16 %v1090, %v1084
      %v2705 = vpack.c.bf16 %v1091, %v1085
      %v2706 = vpack.c.bf16 %v1092, %v1086
      %v2707 = vpack.c.bf16 %v1093, %v1087
      %v2708 = vpack.c.bf16 %v1094, %v1088
      %v2709 = vpack.c.bf16 %v1101, %v1095
      %v2710 = vpack.c.bf16 %v1102, %v1096
      %v2711 = vpack.c.bf16 %v1103, %v1097
      %v2712 = vpack.c.bf16 %v1104, %v1098
      %v2713 = vpack.c.bf16 %v1105, %v1099
      %v2714 = vpack.c.bf16 %v1106, %v1100
      %v2715 = vpack.c.bf16 %v1113, %v1107
      %v2716 = vpack.c.bf16 %v1114, %v1108
      %v2717 = vpack.c.bf16 %v1115, %v1109
      %v2718 = vpack.c.bf16 %v1116, %v1110
      %v2719 = vpack.c.bf16 %v1117, %v1111
      %v2720 = vpack.c.bf16 %v1118, %v1112
      %v2721 = vpack.c.bf16 %v1125, %v1119
      %v2722 = vpack.c.bf16 %v1126, %v1120
      %v2723 = vpack.c.bf16 %v1127, %v1121
      %v2724 = vpack.c.bf16 %v1128, %v1122
      %v2725 = vpack.c.bf16 %v1129, %v1123
      %v2726 = vpack.c.bf16 %v1130, %v1124
      %v2727 = vpack.c.bf16 %v1137, %v1131
      %v2728 = vpack.c.bf16 %v1138, %v1132
      %v2729 = vpack.c.bf16 %v1139, %v1133
      %v2730 = vpack.c.bf16 %v1140, %v1134
      %v2731 = vpack.c.bf16 %v1141, %v1135
      %v2732 = vpack.c.bf16 %v1142, %v1136
      %2733 = vst [vmem:[#allocation2 + $0x600] sm:$0xff] %v2685
      %2734 = vst [vmem:[#allocation2 + $0x608] sm:$0xff] %v2686
      %2735 = vst [vmem:[#allocation2 + $0x610] sm:$0xff] %v2687
      %2736 = vst [vmem:[#allocation2 + $0x618] sm:$0xff] %v2688
      %2737 = vst [vmem:[#allocation2 + $0x620] sm:$0xff] %v2689
      %2738 = vst [vmem:[#allocation2 + $0x628] sm:$0xff] %v2690
      %2739 = vst [vmem:[#allocation2 + $0x630] sm:$0xff] %v2691
      %2740 = vst [vmem:[#allocation2 + $0x638] sm:$0xff] %v2692
      %2741 = vst [vmem:[#allocation2 + $0x640] sm:$0xff] %v2693
      %2742 = vst [vmem:[#allocation2 + $0x648] sm:$0xff] %v2694
      %2743 = vst [vmem:[#allocation2 + $0x650] sm:$0xff] %v2695
      %2744 = vst [vmem:[#allocation2 + $0x658] sm:$0xff] %v2696
      %2745 = vst [vmem:[#allocation2 + $0x660] sm:$0xff] %v2697
      %2746 = vst [vmem:[#allocation2 + $0x668] sm:$0xff] %v2698
      %2747 = vst [vmem:[#allocation2 + $0x670] sm:$0xff] %v2699
      %2748 = vst [vmem:[#allocation2 + $0x678] sm:$0xff] %v2700
      %2749 = vst [vmem:[#allocation2 + $0x680] sm:$0xff] %v2701
      %2750 = vst [vmem:[#allocation2 + $0x688] sm:$0xff] %v2702
      %2751 = vst [vmem:[#allocation2 + $0x690] sm:$0xff] %v2703
      %2752 = vst [vmem:[#allocation2 + $0x698] sm:$0xff] %v2704
      %2753 = vst [vmem:[#allocation2 + $0x6a0] sm:$0xff] %v2705
      %2754 = vst [vmem:[#allocation2 + $0x6a8] sm:$0xff] %v2706
      %2755 = vst [vmem:[#allocation2 + $0x6b0] sm:$0xff] %v2707
      %2756 = vst [vmem:[#allocation2 + $0x6b8] sm:$0xff] %v2708
      %2757 = vst [vmem:[#allocation2 + $0x6c0] sm:$0xff] %v2709
      %2758 = vst [vmem:[#allocation2 + $0x6c8] sm:$0xff] %v2710
      %2759 = vst [vmem:[#allocation2 + $0x6d0] sm:$0xff] %v2711
      %2760 = vst [vmem:[#allocation2 + $0x6d8] sm:$0xff] %v2712
      %2761 = vst [vmem:[#allocation2 + $0x6e0] sm:$0xff] %v2713
      %2762 = vst [vmem:[#allocation2 + $0x6e8] sm:$0xff] %v2714
      %2763 = vst [vmem:[#allocation2 + $0x6f0] sm:$0xff] %v2715
      %2764 = vst [vmem:[#allocation2 + $0x6f8] sm:$0xff] %v2716
      %2765 = vst [vmem:[#allocation2 + $0x700] sm:$0xff] %v2717
      %2766 = vst [vmem:[#allocation2 + $0x708] sm:$0xff] %v2718
      %2767 = vst [vmem:[#allocation2 + $0x710] sm:$0xff] %v2719
      %2768 = vst [vmem:[#allocation2 + $0x718] sm:$0xff] %v2720
      %2769 = vst [vmem:[#allocation2 + $0x720] sm:$0xff] %v2721
      %2770 = vst [vmem:[#allocation2 + $0x728] sm:$0xff] %v2722
      %2771 = vst [vmem:[#allocation2 + $0x730] sm:$0xff] %v2723
      %2772 = vst [vmem:[#allocation2 + $0x738] sm:$0xff] %v2724
      %2773 = vst [vmem:[#allocation2 + $0x740] sm:$0xff] %v2725
      %2774 = vst [vmem:[#allocation2 + $0x748] sm:$0xff] %v2726
      %2775 = vst [vmem:[#allocation2 + $0x750] sm:$0xff] %v2727
      %2776 = vst [vmem:[#allocation2 + $0x758] sm:$0xff] %v2728
      %2777 = vst [vmem:[#allocation2 + $0x760] sm:$0xff] %v2729
      %2778 = vst [vmem:[#allocation2 + $0x768] sm:$0xff] %v2730
      %2779 = vst [vmem:[#allocation2 + $0x770] sm:$0xff] %v2731
      %2780 = vst [vmem:[#allocation2 + $0x778] sm:$0xff] %v2732
      %2781 = vrot.lane.b32.xlu0 %v1047, 127
      %v2782 = vpop.permute.xlu0 %2781
      %2783 = vrot.lane.b32.xlu0 %v1053, 127
      %v2784 = vpop.permute.xlu0 %2783
      %2785 = vrot.lane.b32.xlu0 %v1059, 127
      %v2786 = vpop.permute.xlu0 %2785
      %2787 = vrot.lane.b32.xlu0 %v1065, 127
      %v2788 = vpop.permute.xlu0 %2787
      %2789 = vrot.lane.b32.xlu0 %v1071, 127
      %v2790 = vpop.permute.xlu0 %2789
      %2791 = vrot.lane.b32.xlu0 %v1077, 127
      %v2792 = vpop.permute.xlu0 %2791
      %2793 = vrot.lane.b32.xlu0 %v1083, 127
      %v2794 = vpop.permute.xlu0 %2793
      %2795 = vrot.lane.b32.xlu0 %v1089, 127
      %v2796 = vpop.permute.xlu0 %2795
      %2797 = vrot.lane.b32.xlu0 %v1095, 127
      %v2798 = vpop.permute.xlu0 %2797
      %2799 = vrot.lane.b32.xlu0 %v1101, 127
      %v2800 = vpop.permute.xlu0 %2799
      %2801 = vrot.lane.b32.xlu0 %v1107, 127
      %v2802 = vpop.permute.xlu0 %2801
      %2803 = vrot.lane.b32.xlu0 %v1113, 127
      %v2804 = vpop.permute.xlu0 %2803
      %2805 = vrot.lane.b32.xlu0 %v1119, 127
      %v2806 = vpop.permute.xlu0 %2805
      %2807 = vrot.lane.b32.xlu0 %v1125, 127
      %v2808 = vpop.permute.xlu0 %2807
      %2809 = vrot.lane.b32.xlu0 %v1131, 127
      %v2810 = vpop.permute.xlu0 %2809
      %2811 = vrot.lane.b32.xlu0 %v1137, 127
      %v2812 = vpop.permute.xlu0 %2811
      %2813 = vrot.lane.b32.xlu0 %v1048, 127
      %v2814 = vpop.permute.xlu0 %2813
      %2815 = vrot.lane.b32.xlu0 %v1054, 127
      %v2816 = vpop.permute.xlu0 %2815
      %2817 = vrot.lane.b32.xlu0 %v1060, 127
      %v2818 = vpop.permute.xlu0 %2817
      %2819 = vrot.lane.b32.xlu0 %v1066, 127
      %v2820 = vpop.permute.xlu0 %2819
      %2821 = vrot.lane.b32.xlu0 %v1072, 127
      %v2822 = vpop.permute.xlu0 %2821
      %2823 = vrot.lane.b32.xlu0 %v1078, 127
      %v2824 = vpop.permute.xlu0 %2823
      %2825 = vrot.lane.b32.xlu0 %v1084, 127
      %v2826 = vpop.permute.xlu0 %2825
      %2827 = vrot.lane.b32.xlu0 %v1090, 127
      %v2828 = vpop.permute.xlu0 %2827
      %2829 = vrot.lane.b32.xlu0 %v1096, 127
      %v2830 = vpop.permute.xlu0 %2829
      %2831 = vrot.lane.b32.xlu0 %v1102, 127
      %v2832 = vpop.permute.xlu0 %2831
      %2833 = vrot.lane.b32.xlu0 %v1108, 127
      %v2834 = vpop.permute.xlu0 %2833
      %2835 = vrot.lane.b32.xlu0 %v1114, 127
      %v2836 = vpop.permute.xlu0 %2835
      %2837 = vrot.lane.b32.xlu0 %v1120, 127
      %v2838 = vpop.permute.xlu0 %2837
      %2839 = vrot.lane.b32.xlu0 %v1126, 127
      %v2840 = vpop.permute.xlu0 %2839
      %2841 = vrot.lane.b32.xlu0 %v1132, 127
      %v2842 = vpop.permute.xlu0 %2841
      %2843 = vrot.lane.b32.xlu0 %v1138, 127
      %v2844 = vpop.permute.xlu0 %2843
      %2845 = vrot.lane.b32.xlu0 %v1049, 127
      %v2846 = vpop.permute.xlu0 %2845
      %2847 = vrot.lane.b32.xlu0 %v1055, 127
      %v2848 = vpop.permute.xlu0 %2847
      %2849 = vrot.lane.b32.xlu0 %v1061, 127
      %v2850 = vpop.permute.xlu0 %2849
      %2851 = vrot.lane.b32.xlu0 %v1067, 127
      %v2852 = vpop.permute.xlu0 %2851
      %2853 = vrot.lane.b32.xlu0 %v1073, 127
      %v2854 = vpop.permute.xlu0 %2853
      %2855 = vrot.lane.b32.xlu0 %v1079, 127
      %v2856 = vpop.permute.xlu0 %2855
      %2857 = vrot.lane.b32.xlu0 %v1085, 127
      %v2858 = vpop.permute.xlu0 %2857
      %2859 = vrot.lane.b32.xlu0 %v1091, 127
      %v2860 = vpop.permute.xlu0 %2859
      %2861 = vrot.lane.b32.xlu0 %v1097, 127
      %v2862 = vpop.permute.xlu0 %2861
      %2863 = vrot.lane.b32.xlu0 %v1103, 127
      %v2864 = vpop.permute.xlu0 %2863
      %2865 = vrot.lane.b32.xlu0 %v1109, 127
      %v2866 = vpop.permute.xlu0 %2865
      %2867 = vrot.lane.b32.xlu0 %v1115, 127
      %v2868 = vpop.permute.xlu0 %2867
      %2869 = vrot.lane.b32.xlu0 %v1121, 127
      %v2870 = vpop.permute.xlu0 %2869
      %2871 = vrot.lane.b32.xlu0 %v1127, 127
      %v2872 = vpop.permute.xlu0 %2871
      %2873 = vrot.lane.b32.xlu0 %v1133, 127
      %v2874 = vpop.permute.xlu0 %2873
      %2875 = vrot.lane.b32.xlu0 %v1139, 127
      %v2876 = vpop.permute.xlu0 %2875
      %2877 = vrot.lane.b32.xlu0 %v1050, 127
      %v2878 = vpop.permute.xlu0 %2877
      %2879 = vrot.lane.b32.xlu0 %v1056, 127
      %v2880 = vpop.permute.xlu0 %2879
      %2881 = vrot.lane.b32.xlu0 %v1062, 127
      %v2882 = vpop.permute.xlu0 %2881
      %2883 = vrot.lane.b32.xlu0 %v1068, 127
      %v2884 = vpop.permute.xlu0 %2883
      %2885 = vrot.lane.b32.xlu0 %v1074, 127
      %v2886 = vpop.permute.xlu0 %2885
      %2887 = vrot.lane.b32.xlu0 %v1080, 127
      %v2888 = vpop.permute.xlu0 %2887
      %2889 = vrot.lane.b32.xlu0 %v1086, 127
      %v2890 = vpop.permute.xlu0 %2889
      %2891 = vrot.lane.b32.xlu0 %v1092, 127
      %v2892 = vpop.permute.xlu0 %2891
      %2893 = vrot.lane.b32.xlu0 %v1098, 127
      %v2894 = vpop.permute.xlu0 %2893
      %2895 = vrot.lane.b32.xlu0 %v1104, 127
      %v2896 = vpop.permute.xlu0 %2895
      %2897 = vrot.lane.b32.xlu0 %v1110, 127
      %v2898 = vpop.permute.xlu0 %2897
      %2899 = vrot.lane.b32.xlu0 %v1116, 127
      %v2900 = vpop.permute.xlu0 %2899
      %2901 = vrot.lane.b32.xlu0 %v1122, 127
      %v2902 = vpop.permute.xlu0 %2901
      %2903 = vrot.lane.b32.xlu0 %v1128, 127
      %v2904 = vpop.permute.xlu0 %2903
      %2905 = vrot.lane.b32.xlu0 %v1134, 127
      %v2906 = vpop.permute.xlu0 %2905
      %2907 = vrot.lane.b32.xlu0 %v1140, 127
      %v2908 = vpop.permute.xlu0 %2907
      %2909 = vrot.lane.b32.xlu0 %v1051, 127
      %v2910 = vpop.permute.xlu0 %2909
      %2911 = vrot.lane.b32.xlu0 %v1057, 127
      %v2912 = vpop.permute.xlu0 %2911
      %2913 = vrot.lane.b32.xlu0 %v1063, 127
      %v2914 = vpop.permute.xlu0 %2913
      %2915 = vrot.lane.b32.xlu0 %v1069, 127
      %v2916 = vpop.permute.xlu0 %2915
      %2917 = vrot.lane.b32.xlu0 %v1075, 127
      %v2918 = vpop.permute.xlu0 %2917
      %2919 = vrot.lane.b32.xlu0 %v1081, 127
      %v2920 = vpop.permute.xlu0 %2919
      %2921 = vrot.lane.b32.xlu0 %v1087, 127
      %v2922 = vpop.permute.xlu0 %2921
      %2923 = vrot.lane.b32.xlu0 %v1093, 127
      %v2924 = vpop.permute.xlu0 %2923
      %2925 = vrot.lane.b32.xlu0 %v1099, 127
      %v2926 = vpop.permute.xlu0 %2925
      %2927 = vrot.lane.b32.xlu0 %v1105, 127
      %v2928 = vpop.permute.xlu0 %2927
      %2929 = vrot.lane.b32.xlu0 %v1111, 127
      %v2930 = vpop.permute.xlu0 %2929
      %2931 = vrot.lane.b32.xlu0 %v1117, 127
      %v2932 = vpop.permute.xlu0 %2931
      %2933 = vrot.lane.b32.xlu0 %v1123, 127
      %v2934 = vpop.permute.xlu0 %2933
      %2935 = vrot.lane.b32.xlu0 %v1129, 127
      %v2936 = vpop.permute.xlu0 %2935
      %2937 = vrot.lane.b32.xlu0 %v1135, 127
      %v2938 = vpop.permute.xlu0 %2937
      %2939 = vrot.lane.b32.xlu0 %v1141, 127
      %v2940 = vpop.permute.xlu0 %2939
      %2941 = vrot.lane.b32.xlu0 %v1052, 127
      %v2942 = vpop.permute.xlu0 %2941
      %2943 = vrot.lane.b32.xlu0 %v1058, 127
      %v2944 = vpop.permute.xlu0 %2943
      %2945 = vrot.lane.b32.xlu0 %v1064, 127
      %v2946 = vpop.permute.xlu0 %2945
      %2947 = vrot.lane.b32.xlu0 %v1070, 127
      %v2948 = vpop.permute.xlu0 %2947
      %2949 = vrot.lane.b32.xlu0 %v1076, 127
      %v2950 = vpop.permute.xlu0 %2949
      %2951 = vrot.lane.b32.xlu0 %v1082, 127
      %v2952 = vpop.permute.xlu0 %2951
      %2953 = vrot.lane.b32.xlu0 %v1088, 127
      %v2954 = vpop.permute.xlu0 %2953
      %2955 = vrot.lane.b32.xlu0 %v1094, 127
      %v2956 = vpop.permute.xlu0 %2955
      %2957 = vrot.lane.b32.xlu0 %v1100, 127
      %v2958 = vpop.permute.xlu0 %2957
      %2959 = vrot.lane.b32.xlu0 %v1106, 127
      %v2960 = vpop.permute.xlu0 %2959
      %2961 = vrot.lane.b32.xlu0 %v1112, 127
      %v2962 = vpop.permute.xlu0 %2961
      %2963 = vrot.lane.b32.xlu0 %v1118, 127
      %v2964 = vpop.permute.xlu0 %2963
      %2965 = vrot.lane.b32.xlu0 %v1124, 127
      %v2966 = vpop.permute.xlu0 %2965
      %2967 = vrot.lane.b32.xlu0 %v1130, 127
      %v2968 = vpop.permute.xlu0 %2967
      %2969 = vrot.lane.b32.xlu0 %v1136, 127
      %v2970 = vpop.permute.xlu0 %2969
      %2971 = vrot.lane.b32.xlu0 %v1142, 127
      %v2972 = vpop.permute.xlu0 %2971
      %vm2973 = vcmp.lt.s32.totalorder %v1336, 127
      %v2974 = vsel %vm2973, %v2910, %v2942
      %v2975 = vsel %vm2973, %v2912, %v2944
      %v2976 = vsel %vm2973, %v2914, %v2946
      %v2977 = vsel %vm2973, %v2916, %v2948
      %v2978 = vsel %vm2973, %v2918, %v2950
      %v2979 = vsel %vm2973, %v2920, %v2952
      %v2980 = vsel %vm2973, %v2922, %v2954
      %v2981 = vsel %vm2973, %v2924, %v2956
      %v2982 = vsel %vm2973, %v2926, %v2958
      %v2983 = vsel %vm2973, %v2928, %v2960
      %v2984 = vsel %vm2973, %v2930, %v2962
      %v2985 = vsel %vm2973, %v2932, %v2964
      %v2986 = vsel %vm2973, %v2934, %v2966
      %v2987 = vsel %vm2973, %v2936, %v2968
      %v2988 = vsel %vm2973, %v2938, %v2970
      %v2989 = vsel %vm2973, %v2940, %v2972
      %v2990 = vsel %vm2973, %v2878, %v2910
      %v2991 = vsel %vm2973, %v2880, %v2912
      %v2992 = vsel %vm2973, %v2882, %v2914
      %v2993 = vsel %vm2973, %v2884, %v2916
      %v2994 = vsel %vm2973, %v2886, %v2918
      %v2995 = vsel %vm2973, %v2888, %v2920
      %v2996 = vsel %vm2973, %v2890, %v2922
      %v2997 = vsel %vm2973, %v2892, %v2924
      %v2998 = vsel %vm2973, %v2894, %v2926
      %v2999 = vsel %vm2973, %v2896, %v2928
      %v3000 = vsel %vm2973, %v2898, %v2930
      %v3001 = vsel %vm2973, %v2900, %v2932
      %v3002 = vsel %vm2973, %v2902, %v2934
      %v3003 = vsel %vm2973, %v2904, %v2936
      %v3004 = vsel %vm2973, %v2906, %v2938
      %v3005 = vsel %vm2973, %v2908, %v2940
      %v3006 = vsel %vm2973, %v2846, %v2878
      %v3007 = vsel %vm2973, %v2848, %v2880
      %v3008 = vsel %vm2973, %v2850, %v2882
      %v3009 = vsel %vm2973, %v2852, %v2884
      %v3010 = vsel %vm2973, %v2854, %v2886
      %v3011 = vsel %vm2973, %v2856, %v2888
      %v3012 = vsel %vm2973, %v2858, %v2890
      %v3013 = vsel %vm2973, %v2860, %v2892
      %v3014 = vsel %vm2973, %v2862, %v2894
      %v3015 = vsel %vm2973, %v2864, %v2896
      %v3016 = vsel %vm2973, %v2866, %v2898
      %v3017 = vsel %vm2973, %v2868, %v2900
      %v3018 = vsel %vm2973, %v2870, %v2902
      %v3019 = vsel %vm2973, %v2872, %v2904
      %v3020 = vsel %vm2973, %v2874, %v2906
      %v3021 = vsel %vm2973, %v2876, %v2908
      %v3022 = vsel %vm2973, %v2814, %v2846
      %v3023 = vsel %vm2973, %v2816, %v2848
      %v3024 = vsel %vm2973, %v2818, %v2850
      %v3025 = vsel %vm2973, %v2820, %v2852
      %v3026 = vsel %vm2973, %v2822, %v2854
      %v3027 = vsel %vm2973, %v2824, %v2856
      %v3028 = vsel %vm2973, %v2826, %v2858
      %v3029 = vsel %vm2973, %v2828, %v2860
      %v3030 = vsel %vm2973, %v2830, %v2862
      %v3031 = vsel %vm2973, %v2832, %v2864
      %v3032 = vsel %vm2973, %v2834, %v2866
      %v3033 = vsel %vm2973, %v2836, %v2868
      %v3034 = vsel %vm2973, %v2838, %v2870
      %v3035 = vsel %vm2973, %v2840, %v2872
      %v3036 = vsel %vm2973, %v2842, %v2874
      %v3037 = vsel %vm2973, %v2844, %v2876
      %v3038 = vsel %vm2973, %v2782, %v2814
      %v3039 = vsel %vm2973, %v2784, %v2816
      %v3040 = vsel %vm2973, %v2786, %v2818
      %v3041 = vsel %vm2973, %v2788, %v2820
      %v3042 = vsel %vm2973, %v2790, %v2822
      %v3043 = vsel %vm2973, %v2792, %v2824
      %v3044 = vsel %vm2973, %v2794, %v2826
      %v3045 = vsel %vm2973, %v2796, %v2828
      %v3046 = vsel %vm2973, %v2798, %v2830
      %v3047 = vsel %vm2973, %v2800, %v2832
      %v3048 = vsel %vm2973, %v2802, %v2834
      %v3049 = vsel %vm2973, %v2804, %v2836
      %v3050 = vsel %vm2973, %v2806, %v2838
      %v3051 = vsel %vm2973, %v2808, %v2840
      %v3052 = vsel %vm2973, %v2810, %v2842
      %v3053 = vsel %vm2973, %v2812, %v2844
      %v3054 = vsel %vm2973, %v2942, %v2782
      %v3055 = vsel %vm2973, %v2944, %v2784
      %v3056 = vsel %vm2973, %v2946, %v2786
      %v3057 = vsel %vm2973, %v2948, %v2788
      %v3058 = vsel %vm2973, %v2950, %v2790
      %v3059 = vsel %vm2973, %v2952, %v2792
      %v3060 = vsel %vm2973, %v2954, %v2794
      %v3061 = vsel %vm2973, %v2956, %v2796
      %v3062 = vsel %vm2973, %v2958, %v2798
      %v3063 = vsel %vm2973, %v2960, %v2800
      %v3064 = vsel %vm2973, %v2962, %v2802
      %v3065 = vsel %vm2973, %v2964, %v2804
      %v3066 = vsel %vm2973, %v2966, %v2806
      %v3067 = vsel %vm2973, %v2968, %v2808
      %v3068 = vsel %vm2973, %v2970, %v2810
      %v3069 = vsel %vm2973, %v2972, %v2812
      %v3070 = vpack.c.bf16 %v3039, %v3038
      %v3071 = vpack.c.bf16 %v3023, %v3022
      %v3072 = vpack.c.bf16 %v3007, %v3006
      %v3073 = vpack.c.bf16 %v2991, %v2990
      %v3074 = vpack.c.bf16 %v2975, %v2974
      %v3075 = vpack.c.bf16 %v3055, %v3054
      %v3076 = vpack.c.bf16 %v3041, %v3040
      %v3077 = vpack.c.bf16 %v3025, %v3024
      %v3078 = vpack.c.bf16 %v3009, %v3008
      %v3079 = vpack.c.bf16 %v2993, %v2992
      %v3080 = vpack.c.bf16 %v2977, %v2976
      %v3081 = vpack.c.bf16 %v3057, %v3056
      %v3082 = vpack.c.bf16 %v3043, %v3042
      %v3083 = vpack.c.bf16 %v3027, %v3026
      %v3084 = vpack.c.bf16 %v3011, %v3010
      %v3085 = vpack.c.bf16 %v2995, %v2994
      %v3086 = vpack.c.bf16 %v2979, %v2978
      %v3087 = vpack.c.bf16 %v3059, %v3058
      %v3088 = vpack.c.bf16 %v3045, %v3044
      %v3089 = vpack.c.bf16 %v3029, %v3028
      %v3090 = vpack.c.bf16 %v3013, %v3012
      %v3091 = vpack.c.bf16 %v2997, %v2996
      %v3092 = vpack.c.bf16 %v2981, %v2980
      %v3093 = vpack.c.bf16 %v3061, %v3060
      %v3094 = vpack.c.bf16 %v3047, %v3046
      %v3095 = vpack.c.bf16 %v3031, %v3030
      %v3096 = vpack.c.bf16 %v3015, %v3014
      %v3097 = vpack.c.bf16 %v2999, %v2998
      %v3098 = vpack.c.bf16 %v2983, %v2982
      %v3099 = vpack.c.bf16 %v3063, %v3062
      %v3100 = vpack.c.bf16 %v3049, %v3048
      %v3101 = vpack.c.bf16 %v3033, %v3032
      %v3102 = vpack.c.bf16 %v3017, %v3016
      %v3103 = vpack.c.bf16 %v3001, %v3000
      %v3104 = vpack.c.bf16 %v2985, %v2984
      %v3105 = vpack.c.bf16 %v3065, %v3064
      %v3106 = vpack.c.bf16 %v3051, %v3050
      %v3107 = vpack.c.bf16 %v3035, %v3034
      %v3108 = vpack.c.bf16 %v3019, %v3018
      %v3109 = vpack.c.bf16 %v3003, %v3002
      %v3110 = vpack.c.bf16 %v2987, %v2986
      %v3111 = vpack.c.bf16 %v3067, %v3066
      %v3112 = vpack.c.bf16 %v3053, %v3052
      %v3113 = vpack.c.bf16 %v3037, %v3036
      %v3114 = vpack.c.bf16 %v3021, %v3020
      %v3115 = vpack.c.bf16 %v3005, %v3004
      %v3116 = vpack.c.bf16 %v2989, %v2988
      %v3117 = vpack.c.bf16 %v3069, %v3068
      %3118 = vst [vmem:[#allocation2 + $0x780] sm:$0xff] %v3070
      %3119 = vst [vmem:[#allocation2 + $0x788] sm:$0xff] %v3071
      %3120 = vst [vmem:[#allocation2 + $0x790] sm:$0xff] %v3072
      %3121 = vst [vmem:[#allocation2 + $0x798] sm:$0xff] %v3073
      %3122 = vst [vmem:[#allocation2 + $0x7a0] sm:$0xff] %v3074
      %3123 = vst [vmem:[#allocation2 + $0x7a8] sm:$0xff] %v3075
      %3124 = vst [vmem:[#allocation2 + $0x7b0] sm:$0xff] %v3076
      %3125 = vst [vmem:[#allocation2 + $0x7b8] sm:$0xff] %v3077
      %3126 = vst [vmem:[#allocation2 + $0x7c0] sm:$0xff] %v3078
      %3127 = vst [vmem:[#allocation2 + $0x7c8] sm:$0xff] %v3079
      %3128 = vst [vmem:[#allocation2 + $0x7d0] sm:$0xff] %v3080
      %3129 = vst [vmem:[#allocation2 + $0x7d8] sm:$0xff] %v3081
      %3130 = vst [vmem:[#allocation2 + $0x7e0] sm:$0xff] %v3082
      %3131 = vst [vmem:[#allocation2 + $0x7e8] sm:$0xff] %v3083
      %3132 = vst [vmem:[#allocation2 + $0x7f0] sm:$0xff] %v3084
      %3133 = vst [vmem:[#allocation2 + $0x7f8] sm:$0xff] %v3085
      %3134 = vst [vmem:[#allocation2 + $0x800] sm:$0xff] %v3086
      %3135 = vst [vmem:[#allocation2 + $0x808] sm:$0xff] %v3087
      %3136 = vst [vmem:[#allocation2 + $0x810] sm:$0xff] %v3088
      %3137 = vst [vmem:[#allocation2 + $0x818] sm:$0xff] %v3089
      %3138 = vst [vmem:[#allocation2 + $0x820] sm:$0xff] %v3090
      %3139 = vst [vmem:[#allocation2 + $0x828] sm:$0xff] %v3091
      %3140 = vst [vmem:[#allocation2 + $0x830] sm:$0xff] %v3092
      %3141 = vst [vmem:[#allocation2 + $0x838] sm:$0xff] %v3093
      %3142 = vst [vmem:[#allocation2 + $0x840] sm:$0xff] %v3094
      %3143 = vst [vmem:[#allocation2 + $0x848] sm:$0xff] %v3095
      %3144 = vst [vmem:[#allocation2 + $0x850] sm:$0xff] %v3096
      %3145 = vst [vmem:[#allocation2 + $0x858] sm:$0xff] %v3097
      %3146 = vst [vmem:[#allocation2 + $0x860] sm:$0xff] %v3098
      %3147 = vst [vmem:[#allocation2 + $0x868] sm:$0xff] %v3099
      %3148 = vst [vmem:[#allocation2 + $0x870] sm:$0xff] %v3100
      %3149 = vst [vmem:[#allocation2 + $0x878] sm:$0xff] %v3101
      %3150 = vst [vmem:[#allocation2 + $0x880] sm:$0xff] %v3102
      %3151 = vst [vmem:[#allocation2 + $0x888] sm:$0xff] %v3103
      %3152 = vst [vmem:[#allocation2 + $0x890] sm:$0xff] %v3104
      %3153 = vst [vmem:[#allocation2 + $0x898] sm:$0xff] %v3105
      %3154 = vst [vmem:[#allocation2 + $0x8a0] sm:$0xff] %v3106
      %3155 = vst [vmem:[#allocation2 + $0x8a8] sm:$0xff] %v3107
      %3156 = vst [vmem:[#allocation2 + $0x8b0] sm:$0xff] %v3108
      %3157 = vst [vmem:[#allocation2 + $0x8b8] sm:$0xff] %v3109
      %3158 = vst [vmem:[#allocation2 + $0x8c0] sm:$0xff] %v3110
      %3159 = vst [vmem:[#allocation2 + $0x8c8] sm:$0xff] %v3111
      %3160 = vst [vmem:[#allocation2 + $0x8d0] sm:$0xff] %v3112
      %3161 = vst [vmem:[#allocation2 + $0x8d8] sm:$0xff] %v3113
      %3162 = vst [vmem:[#allocation2 + $0x8e0] sm:$0xff] %v3114
      %3163 = vst [vmem:[#allocation2 + $0x8e8] sm:$0xff] %v3115
      %3164 = vst [vmem:[#allocation2 + $0x8f0] sm:$0xff] %v3116
      %3165 = vst [vmem:[#allocation2 + $0x8f8] sm:$0xff] %v3117
      %3166 = vrot.lane.b32.xlu0 %v1047, 111
      %v3167 = vpop.permute.xlu0 %3166
      %3168 = vrot.lane.b32.xlu0 %v1053, 111
      %v3169 = vpop.permute.xlu0 %3168
      %3170 = vrot.lane.b32.xlu0 %v1059, 111
      %v3171 = vpop.permute.xlu0 %3170
      %3172 = vrot.lane.b32.xlu0 %v1065, 111
      %v3173 = vpop.permute.xlu0 %3172
      %3174 = vrot.lane.b32.xlu0 %v1071, 111
      %v3175 = vpop.permute.xlu0 %3174
      %3176 = vrot.lane.b32.xlu0 %v1077, 111
      %v3177 = vpop.permute.xlu0 %3176
      %3178 = vrot.lane.b32.xlu0 %v1083, 111
      %v3179 = vpop.permute.xlu0 %3178
      %3180 = vrot.lane.b32.xlu0 %v1089, 111
      %v3181 = vpop.permute.xlu0 %3180
      %3182 = vrot.lane.b32.xlu0 %v1095, 111
      %v3183 = vpop.permute.xlu0 %3182
      %3184 = vrot.lane.b32.xlu0 %v1101, 111
      %v3185 = vpop.permute.xlu0 %3184
      %3186 = vrot.lane.b32.xlu0 %v1107, 111
      %v3187 = vpop.permute.xlu0 %3186
      %3188 = vrot.lane.b32.xlu0 %v1113, 111
      %v3189 = vpop.permute.xlu0 %3188
      %3190 = vrot.lane.b32.xlu0 %v1119, 111
      %v3191 = vpop.permute.xlu0 %3190
      %3192 = vrot.lane.b32.xlu0 %v1125, 111
      %v3193 = vpop.permute.xlu0 %3192
      %3194 = vrot.lane.b32.xlu0 %v1131, 111
      %v3195 = vpop.permute.xlu0 %3194
      %3196 = vrot.lane.b32.xlu0 %v1137, 111
      %v3197 = vpop.permute.xlu0 %3196
      %3198 = vrot.lane.b32.xlu0 %v1048, 111
      %v3199 = vpop.permute.xlu0 %3198
      %3200 = vrot.lane.b32.xlu0 %v1054, 111
      %v3201 = vpop.permute.xlu0 %3200
      %3202 = vrot.lane.b32.xlu0 %v1060, 111
      %v3203 = vpop.permute.xlu0 %3202
      %3204 = vrot.lane.b32.xlu0 %v1066, 111
      %v3205 = vpop.permute.xlu0 %3204
      %3206 = vrot.lane.b32.xlu0 %v1072, 111
      %v3207 = vpop.permute.xlu0 %3206
      %3208 = vrot.lane.b32.xlu0 %v1078, 111
      %v3209 = vpop.permute.xlu0 %3208
      %3210 = vrot.lane.b32.xlu0 %v1084, 111
      %v3211 = vpop.permute.xlu0 %3210
      %3212 = vrot.lane.b32.xlu0 %v1090, 111
      %v3213 = vpop.permute.xlu0 %3212
      %3214 = vrot.lane.b32.xlu0 %v1096, 111
      %v3215 = vpop.permute.xlu0 %3214
      %3216 = vrot.lane.b32.xlu0 %v1102, 111
      %v3217 = vpop.permute.xlu0 %3216
      %3218 = vrot.lane.b32.xlu0 %v1108, 111
      %v3219 = vpop.permute.xlu0 %3218
      %3220 = vrot.lane.b32.xlu0 %v1114, 111
      %v3221 = vpop.permute.xlu0 %3220
      %3222 = vrot.lane.b32.xlu0 %v1120, 111
      %v3223 = vpop.permute.xlu0 %3222
      %3224 = vrot.lane.b32.xlu0 %v1126, 111
      %v3225 = vpop.permute.xlu0 %3224
      %3226 = vrot.lane.b32.xlu0 %v1132, 111
      %v3227 = vpop.permute.xlu0 %3226
      %3228 = vrot.lane.b32.xlu0 %v1138, 111
      %v3229 = vpop.permute.xlu0 %3228
      %3230 = vrot.lane.b32.xlu0 %v1049, 111
      %v3231 = vpop.permute.xlu0 %3230
      %3232 = vrot.lane.b32.xlu0 %v1055, 111
      %v3233 = vpop.permute.xlu0 %3232
      %3234 = vrot.lane.b32.xlu0 %v1061, 111
      %v3235 = vpop.permute.xlu0 %3234
      %3236 = vrot.lane.b32.xlu0 %v1067, 111
      %v3237 = vpop.permute.xlu0 %3236
      %3238 = vrot.lane.b32.xlu0 %v1073, 111
      %v3239 = vpop.permute.xlu0 %3238
      %3240 = vrot.lane.b32.xlu0 %v1079, 111
      %v3241 = vpop.permute.xlu0 %3240
      %3242 = vrot.lane.b32.xlu0 %v1085, 111
      %v3243 = vpop.permute.xlu0 %3242
      %3244 = vrot.lane.b32.xlu0 %v1091, 111
      %v3245 = vpop.permute.xlu0 %3244
      %3246 = vrot.lane.b32.xlu0 %v1097, 111
      %v3247 = vpop.permute.xlu0 %3246
      %3248 = vrot.lane.b32.xlu0 %v1103, 111
      %v3249 = vpop.permute.xlu0 %3248
      %3250 = vrot.lane.b32.xlu0 %v1109, 111
      %v3251 = vpop.permute.xlu0 %3250
      %3252 = vrot.lane.b32.xlu0 %v1115, 111
      %v3253 = vpop.permute.xlu0 %3252
      %3254 = vrot.lane.b32.xlu0 %v1121, 111
      %v3255 = vpop.permute.xlu0 %3254
      %3256 = vrot.lane.b32.xlu0 %v1127, 111
      %v3257 = vpop.permute.xlu0 %3256
      %3258 = vrot.lane.b32.xlu0 %v1133, 111
      %v3259 = vpop.permute.xlu0 %3258
      %3260 = vrot.lane.b32.xlu0 %v1139, 111
      %v3261 = vpop.permute.xlu0 %3260
      %3262 = vrot.lane.b32.xlu0 %v1050, 111
      %v3263 = vpop.permute.xlu0 %3262
      %3264 = vrot.lane.b32.xlu0 %v1056, 111
      %v3265 = vpop.permute.xlu0 %3264
      %3266 = vrot.lane.b32.xlu0 %v1062, 111
      %v3267 = vpop.permute.xlu0 %3266
      %3268 = vrot.lane.b32.xlu0 %v1068, 111
      %v3269 = vpop.permute.xlu0 %3268
      %3270 = vrot.lane.b32.xlu0 %v1074, 111
      %v3271 = vpop.permute.xlu0 %3270
      %3272 = vrot.lane.b32.xlu0 %v1080, 111
      %v3273 = vpop.permute.xlu0 %3272
      %3274 = vrot.lane.b32.xlu0 %v1086, 111
      %v3275 = vpop.permute.xlu0 %3274
      %3276 = vrot.lane.b32.xlu0 %v1092, 111
      %v3277 = vpop.permute.xlu0 %3276
      %3278 = vrot.lane.b32.xlu0 %v1098, 111
      %v3279 = vpop.permute.xlu0 %3278
      %3280 = vrot.lane.b32.xlu0 %v1104, 111
      %v3281 = vpop.permute.xlu0 %3280
      %3282 = vrot.lane.b32.xlu0 %v1110, 111
      %v3283 = vpop.permute.xlu0 %3282
      %3284 = vrot.lane.b32.xlu0 %v1116, 111
      %v3285 = vpop.permute.xlu0 %3284
      %3286 = vrot.lane.b32.xlu0 %v1122, 111
      %v3287 = vpop.permute.xlu0 %3286
      %3288 = vrot.lane.b32.xlu0 %v1128, 111
      %v3289 = vpop.permute.xlu0 %3288
      %3290 = vrot.lane.b32.xlu0 %v1134, 111
      %v3291 = vpop.permute.xlu0 %3290
      %3292 = vrot.lane.b32.xlu0 %v1140, 111
      %v3293 = vpop.permute.xlu0 %3292
      %3294 = vrot.lane.b32.xlu0 %v1051, 111
      %v3295 = vpop.permute.xlu0 %3294
      %3296 = vrot.lane.b32.xlu0 %v1057, 111
      %v3297 = vpop.permute.xlu0 %3296
      %3298 = vrot.lane.b32.xlu0 %v1063, 111
      %v3299 = vpop.permute.xlu0 %3298
      %3300 = vrot.lane.b32.xlu0 %v1069, 111
      %v3301 = vpop.permute.xlu0 %3300
      %3302 = vrot.lane.b32.xlu0 %v1075, 111
      %v3303 = vpop.permute.xlu0 %3302
      %3304 = vrot.lane.b32.xlu0 %v1081, 111
      %v3305 = vpop.permute.xlu0 %3304
      %3306 = vrot.lane.b32.xlu0 %v1087, 111
      %v3307 = vpop.permute.xlu0 %3306
      %3308 = vrot.lane.b32.xlu0 %v1093, 111
      %v3309 = vpop.permute.xlu0 %3308
      %3310 = vrot.lane.b32.xlu0 %v1099, 111
      %v3311 = vpop.permute.xlu0 %3310
      %3312 = vrot.lane.b32.xlu0 %v1105, 111
      %v3313 = vpop.permute.xlu0 %3312
      %3314 = vrot.lane.b32.xlu0 %v1111, 111
      %v3315 = vpop.permute.xlu0 %3314
      %3316 = vrot.lane.b32.xlu0 %v1117, 111
      %v3317 = vpop.permute.xlu0 %3316
      %3318 = vrot.lane.b32.xlu0 %v1123, 111
      %v3319 = vpop.permute.xlu0 %3318
      %3320 = vrot.lane.b32.xlu0 %v1129, 111
      %v3321 = vpop.permute.xlu0 %3320
      %3322 = vrot.lane.b32.xlu0 %v1135, 111
      %v3323 = vpop.permute.xlu0 %3322
      %3324 = vrot.lane.b32.xlu0 %v1141, 111
      %v3325 = vpop.permute.xlu0 %3324
      %3326 = vrot.lane.b32.xlu0 %v1052, 111
      %v3327 = vpop.permute.xlu0 %3326
      %3328 = vrot.lane.b32.xlu0 %v1058, 111
      %v3329 = vpop.permute.xlu0 %3328
      %3330 = vrot.lane.b32.xlu0 %v1064, 111
      %v3331 = vpop.permute.xlu0 %3330
      %3332 = vrot.lane.b32.xlu0 %v1070, 111
      %v3333 = vpop.permute.xlu0 %3332
      %3334 = vrot.lane.b32.xlu0 %v1076, 111
      %v3335 = vpop.permute.xlu0 %3334
      %3336 = vrot.lane.b32.xlu0 %v1082, 111
      %v3337 = vpop.permute.xlu0 %3336
      %3338 = vrot.lane.b32.xlu0 %v1088, 111
      %v3339 = vpop.permute.xlu0 %3338
      %3340 = vrot.lane.b32.xlu0 %v1094, 111
      %v3341 = vpop.permute.xlu0 %3340
      %3342 = vrot.lane.b32.xlu0 %v1100, 111
      %v3343 = vpop.permute.xlu0 %3342
      %3344 = vrot.lane.b32.xlu0 %v1106, 111
      %v3345 = vpop.permute.xlu0 %3344
      %3346 = vrot.lane.b32.xlu0 %v1112, 111
      %v3347 = vpop.permute.xlu0 %3346
      %3348 = vrot.lane.b32.xlu0 %v1118, 111
      %v3349 = vpop.permute.xlu0 %3348
      %3350 = vrot.lane.b32.xlu0 %v1124, 111
      %v3351 = vpop.permute.xlu0 %3350
      %3352 = vrot.lane.b32.xlu0 %v1130, 111
      %v3353 = vpop.permute.xlu0 %3352
      %3354 = vrot.lane.b32.xlu0 %v1136, 111
      %v3355 = vpop.permute.xlu0 %3354
      %3356 = vrot.lane.b32.xlu0 %v1142, 111
      %v3357 = vpop.permute.xlu0 %3356
      %vm3358 = vcmp.lt.s32.totalorder %v1336, 111
      %v3359 = vsel %vm3358, %v3295, %v3327
      %v3360 = vsel %vm3358, %v3297, %v3329
      %v3361 = vsel %vm3358, %v3299, %v3331
      %v3362 = vsel %vm3358, %v3301, %v3333
      %v3363 = vsel %vm3358, %v3303, %v3335
      %v3364 = vsel %vm3358, %v3305, %v3337
      %v3365 = vsel %vm3358, %v3307, %v3339
      %v3366 = vsel %vm3358, %v3309, %v3341
      %v3367 = vsel %vm3358, %v3311, %v3343
      %v3368 = vsel %vm3358, %v3313, %v3345
      %v3369 = vsel %vm3358, %v3315, %v3347
      %v3370 = vsel %vm3358, %v3317, %v3349
      %v3371 = vsel %vm3358, %v3319, %v3351
      %v3372 = vsel %vm3358, %v3321, %v3353
      %v3373 = vsel %vm3358, %v3323, %v3355
      %v3374 = vsel %vm3358, %v3325, %v3357
      %v3375 = vsel %vm3358, %v3263, %v3295
      %v3376 = vsel %vm3358, %v3265, %v3297
      %v3377 = vsel %vm3358, %v3267, %v3299
      %v3378 = vsel %vm3358, %v3269, %v3301
      %v3379 = vsel %vm3358, %v3271, %v3303
      %v3380 = vsel %vm3358, %v3273, %v3305
      %v3381 = vsel %vm3358, %v3275, %v3307
      %v3382 = vsel %vm3358, %v3277, %v3309
      %v3383 = vsel %vm3358, %v3279, %v3311
      %v3384 = vsel %vm3358, %v3281, %v3313
      %v3385 = vsel %vm3358, %v3283, %v3315
      %v3386 = vsel %vm3358, %v3285, %v3317
      %v3387 = vsel %vm3358, %v3287, %v3319
      %v3388 = vsel %vm3358, %v3289, %v3321
      %v3389 = vsel %vm3358, %v3291, %v3323
      %v3390 = vsel %vm3358, %v3293, %v3325
      %v3391 = vsel %vm3358, %v3231, %v3263
      %v3392 = vsel %vm3358, %v3233, %v3265
      %v3393 = vsel %vm3358, %v3235, %v3267
      %v3394 = vsel %vm3358, %v3237, %v3269
      %v3395 = vsel %vm3358, %v3239, %v3271
      %v3396 = vsel %vm3358, %v3241, %v3273
      %v3397 = vsel %vm3358, %v3243, %v3275
      %v3398 = vsel %vm3358, %v3245, %v3277
      %v3399 = vsel %vm3358, %v3247, %v3279
      %v3400 = vsel %vm3358, %v3249, %v3281
      %v3401 = vsel %vm3358, %v3251, %v3283
      %v3402 = vsel %vm3358, %v3253, %v3285
      %v3403 = vsel %vm3358, %v3255, %v3287
      %v3404 = vsel %vm3358, %v3257, %v3289
      %v3405 = vsel %vm3358, %v3259, %v3291
      %v3406 = vsel %vm3358, %v3261, %v3293
      %v3407 = vsel %vm3358, %v3199, %v3231
      %v3408 = vsel %vm3358, %v3201, %v3233
      %v3409 = vsel %vm3358, %v3203, %v3235
      %v3410 = vsel %vm3358, %v3205, %v3237
      %v3411 = vsel %vm3358, %v3207, %v3239
      %v3412 = vsel %vm3358, %v3209, %v3241
      %v3413 = vsel %vm3358, %v3211, %v3243
      %v3414 = vsel %vm3358, %v3213, %v3245
      %v3415 = vsel %vm3358, %v3215, %v3247
      %v3416 = vsel %vm3358, %v3217, %v3249
      %v3417 = vsel %vm3358, %v3219, %v3251
      %v3418 = vsel %vm3358, %v3221, %v3253
      %v3419 = vsel %vm3358, %v3223, %v3255
      %v3420 = vsel %vm3358, %v3225, %v3257
      %v3421 = vsel %vm3358, %v3227, %v3259
      %v3422 = vsel %vm3358, %v3229, %v3261
      %v3423 = vsel %vm3358, %v3167, %v3199
      %v3424 = vsel %vm3358, %v3169, %v3201
      %v3425 = vsel %vm3358, %v3171, %v3203
      %v3426 = vsel %vm3358, %v3173, %v3205
      %v3427 = vsel %vm3358, %v3175, %v3207
      %v3428 = vsel %vm3358, %v3177, %v3209
      %v3429 = vsel %vm3358, %v3179, %v3211
      %v3430 = vsel %vm3358, %v3181, %v3213
      %v3431 = vsel %vm3358, %v3183, %v3215
      %v3432 = vsel %vm3358, %v3185, %v3217
      %v3433 = vsel %vm3358, %v3187, %v3219
      %v3434 = vsel %vm3358, %v3189, %v3221
      %v3435 = vsel %vm3358, %v3191, %v3223
      %v3436 = vsel %vm3358, %v3193, %v3225
      %v3437 = vsel %vm3358, %v3195, %v3227
      %v3438 = vsel %vm3358, %v3197, %v3229
      %v3439 = vsel %vm3358, %v3327, %v3167
      %v3440 = vsel %vm3358, %v3329, %v3169
      %v3441 = vsel %vm3358, %v3331, %v3171
      %v3442 = vsel %vm3358, %v3333, %v3173
      %v3443 = vsel %vm3358, %v3335, %v3175
      %v3444 = vsel %vm3358, %v3337, %v3177
      %v3445 = vsel %vm3358, %v3339, %v3179
      %v3446 = vsel %vm3358, %v3341, %v3181
      %v3447 = vsel %vm3358, %v3343, %v3183
      %v3448 = vsel %vm3358, %v3345, %v3185
      %v3449 = vsel %vm3358, %v3347, %v3187
      %v3450 = vsel %vm3358, %v3349, %v3189
      %v3451 = vsel %vm3358, %v3351, %v3191
      %v3452 = vsel %vm3358, %v3353, %v3193
      %v3453 = vsel %vm3358, %v3355, %v3195
      %v3454 = vsel %vm3358, %v3357, %v3197
      %v3455 = vpack.c.bf16 %v3424, %v3423
      %v3456 = vpack.c.bf16 %v3408, %v3407
      %v3457 = vpack.c.bf16 %v3392, %v3391
      %v3458 = vpack.c.bf16 %v3376, %v3375
      %v3459 = vpack.c.bf16 %v3360, %v3359
      %v3460 = vpack.c.bf16 %v3440, %v3439
      %v3461 = vpack.c.bf16 %v3426, %v3425
      %v3462 = vpack.c.bf16 %v3410, %v3409
      %v3463 = vpack.c.bf16 %v3394, %v3393
      %v3464 = vpack.c.bf16 %v3378, %v3377
      %v3465 = vpack.c.bf16 %v3362, %v3361
      %v3466 = vpack.c.bf16 %v3442, %v3441
      %v3467 = vpack.c.bf16 %v3428, %v3427
      %v3468 = vpack.c.bf16 %v3412, %v3411
      %v3469 = vpack.c.bf16 %v3396, %v3395
      %v3470 = vpack.c.bf16 %v3380, %v3379
      %v3471 = vpack.c.bf16 %v3364, %v3363
      %v3472 = vpack.c.bf16 %v3444, %v3443
      %v3473 = vpack.c.bf16 %v3430, %v3429
      %v3474 = vpack.c.bf16 %v3414, %v3413
      %v3475 = vpack.c.bf16 %v3398, %v3397
      %v3476 = vpack.c.bf16 %v3382, %v3381
      %v3477 = vpack.c.bf16 %v3366, %v3365
      %v3478 = vpack.c.bf16 %v3446, %v3445
      %v3479 = vpack.c.bf16 %v3432, %v3431
      %v3480 = vpack.c.bf16 %v3416, %v3415
      %v3481 = vpack.c.bf16 %v3400, %v3399
      %v3482 = vpack.c.bf16 %v3384, %v3383
      %v3483 = vpack.c.bf16 %v3368, %v3367
      %v3484 = vpack.c.bf16 %v3448, %v3447
      %v3485 = vpack.c.bf16 %v3434, %v3433
      %v3486 = vpack.c.bf16 %v3418, %v3417
      %v3487 = vpack.c.bf16 %v3402, %v3401
      %v3488 = vpack.c.bf16 %v3386, %v3385
      %v3489 = vpack.c.bf16 %v3370, %v3369
      %v3490 = vpack.c.bf16 %v3450, %v3449
      %v3491 = vpack.c.bf16 %v3436, %v3435
      %v3492 = vpack.c.bf16 %v3420, %v3419
      %v3493 = vpack.c.bf16 %v3404, %v3403
      %v3494 = vpack.c.bf16 %v3388, %v3387
      %v3495 = vpack.c.bf16 %v3372, %v3371
      %v3496 = vpack.c.bf16 %v3452, %v3451
      %v3497 = vpack.c.bf16 %v3438, %v3437
      %v3498 = vpack.c.bf16 %v3422, %v3421
      %v3499 = vpack.c.bf16 %v3406, %v3405
      %v3500 = vpack.c.bf16 %v3390, %v3389
      %v3501 = vpack.c.bf16 %v3374, %v3373
      %v3502 = vpack.c.bf16 %v3454, %v3453
      %3503 = vst [vmem:[#allocation2 + $0x900] sm:$0xff] %v3455
      %3504 = vst [vmem:[#allocation2 + $0x908] sm:$0xff] %v3456
      %3505 = vst [vmem:[#allocation2 + $0x910] sm:$0xff] %v3457
      %3506 = vst [vmem:[#allocation2 + $0x918] sm:$0xff] %v3458
      %3507 = vst [vmem:[#allocation2 + $0x920] sm:$0xff] %v3459
      %3508 = vst [vmem:[#allocation2 + $0x928] sm:$0xff] %v3460
      %3509 = vst [vmem:[#allocation2 + $0x930] sm:$0xff] %v3461
      %3510 = vst [vmem:[#allocation2 + $0x938] sm:$0xff] %v3462
      %3511 = vst [vmem:[#allocation2 + $0x940] sm:$0xff] %v3463
      %3512 = vst [vmem:[#allocation2 + $0x948] sm:$0xff] %v3464
      %3513 = vst [vmem:[#allocation2 + $0x950] sm:$0xff] %v3465
      %3514 = vst [vmem:[#allocation2 + $0x958] sm:$0xff] %v3466
      %3515 = vst [vmem:[#allocation2 + $0x960] sm:$0xff] %v3467
      %3516 = vst [vmem:[#allocation2 + $0x968] sm:$0xff] %v3468
      %3517 = vst [vmem:[#allocation2 + $0x970] sm:$0xff] %v3469
      %3518 = vst [vmem:[#allocation2 + $0x978] sm:$0xff] %v3470
      %3519 = vst [vmem:[#allocation2 + $0x980] sm:$0xff] %v3471
      %3520 = vst [vmem:[#allocation2 + $0x988] sm:$0xff] %v3472
      %3521 = vst [vmem:[#allocation2 + $0x990] sm:$0xff] %v3473
      %3522 = vst [vmem:[#allocation2 + $0x998] sm:$0xff] %v3474
      %3523 = vst [vmem:[#allocation2 + $0x9a0] sm:$0xff] %v3475
      %3524 = vst [vmem:[#allocation2 + $0x9a8] sm:$0xff] %v3476
      %3525 = vst [vmem:[#allocation2 + $0x9b0] sm:$0xff] %v3477
      %3526 = vst [vmem:[#allocation2 + $0x9b8] sm:$0xff] %v3478
      %3527 = vst [vmem:[#allocation2 + $0x9c0] sm:$0xff] %v3479
      %3528 = vst [vmem:[#allocation2 + $0x9c8] sm:$0xff] %v3480
      %3529 = vst [vmem:[#allocation2 + $0x9d0] sm:$0xff] %v3481
      %3530 = vst [vmem:[#allocation2 + $0x9d8] sm:$0xff] %v3482
      %3531 = vst [vmem:[#allocation2 + $0x9e0] sm:$0xff] %v3483
      %3532 = vst [vmem:[#allocation2 + $0x9e8] sm:$0xff] %v3484
      %3533 = vst [vmem:[#allocation2 + $0x9f0] sm:$0xff] %v3485
      %3534 = vst [vmem:[#allocation2 + $0x9f8] sm:$0xff] %v3486
      %3535 = vst [vmem:[#allocation2 + $0xa00] sm:$0xff] %v3487
      %3536 = vst [vmem:[#allocation2 + $0xa08] sm:$0xff] %v3488
      %3537 = vst [vmem:[#allocation2 + $0xa10] sm:$0xff] %v3489
      %3538 = vst [vmem:[#allocation2 + $0xa18] sm:$0xff] %v3490
      %3539 = vst [vmem:[#allocation2 + $0xa20] sm:$0xff] %v3491
      %3540 = vst [vmem:[#allocation2 + $0xa28] sm:$0xff] %v3492
      %3541 = vst [vmem:[#allocation2 + $0xa30] sm:$0xff] %v3493
      %3542 = vst [vmem:[#allocation2 + $0xa38] sm:$0xff] %v3494
      %3543 = vst [vmem:[#allocation2 + $0xa40] sm:$0xff] %v3495
      %3544 = vst [vmem:[#allocation2 + $0xa48] sm:$0xff] %v3496
      %3545 = vst [vmem:[#allocation2 + $0xa50] sm:$0xff] %v3497
      %3546 = vst [vmem:[#allocation2 + $0xa58] sm:$0xff] %v3498
      %3547 = vst [vmem:[#allocation2 + $0xa60] sm:$0xff] %v3499
      %3548 = vst [vmem:[#allocation2 + $0xa68] sm:$0xff] %v3500
      %3549 = vst [vmem:[#allocation2 + $0xa70] sm:$0xff] %v3501
      %3550 = vst [vmem:[#allocation2 + $0xa78] sm:$0xff] %v3502
      %3551 = vrot.lane.b32.xlu0 %v1047, 110
      %v3552 = vpop.permute.xlu0 %3551
      %3553 = vrot.lane.b32.xlu0 %v1053, 110
      %v3554 = vpop.permute.xlu0 %3553
      %3555 = vrot.lane.b32.xlu0 %v1059, 110
      %v3556 = vpop.permute.xlu0 %3555
      %3557 = vrot.lane.b32.xlu0 %v1065, 110
      %v3558 = vpop.permute.xlu0 %3557
      %3559 = vrot.lane.b32.xlu0 %v1071, 110
      %v3560 = vpop.permute.xlu0 %3559
      %3561 = vrot.lane.b32.xlu0 %v1077, 110
      %v3562 = vpop.permute.xlu0 %3561
      %3563 = vrot.lane.b32.xlu0 %v1083, 110
      %v3564 = vpop.permute.xlu0 %3563
      %3565 = vrot.lane.b32.xlu0 %v1089, 110
      %v3566 = vpop.permute.xlu0 %3565
      %3567 = vrot.lane.b32.xlu0 %v1095, 110
      %v3568 = vpop.permute.xlu0 %3567
      %3569 = vrot.lane.b32.xlu0 %v1101, 110
      %v3570 = vpop.permute.xlu0 %3569
      %3571 = vrot.lane.b32.xlu0 %v1107, 110
      %v3572 = vpop.permute.xlu0 %3571
      %3573 = vrot.lane.b32.xlu0 %v1113, 110
      %v3574 = vpop.permute.xlu0 %3573
      %3575 = vrot.lane.b32.xlu0 %v1119, 110
      %v3576 = vpop.permute.xlu0 %3575
      %3577 = vrot.lane.b32.xlu0 %v1125, 110
      %v3578 = vpop.permute.xlu0 %3577
      %3579 = vrot.lane.b32.xlu0 %v1131, 110
      %v3580 = vpop.permute.xlu0 %3579
      %3581 = vrot.lane.b32.xlu0 %v1137, 110
      %v3582 = vpop.permute.xlu0 %3581
      %3583 = vrot.lane.b32.xlu0 %v1048, 110
      %v3584 = vpop.permute.xlu0 %3583
      %3585 = vrot.lane.b32.xlu0 %v1054, 110
      %v3586 = vpop.permute.xlu0 %3585
      %3587 = vrot.lane.b32.xlu0 %v1060, 110
      %v3588 = vpop.permute.xlu0 %3587
      %3589 = vrot.lane.b32.xlu0 %v1066, 110
      %v3590 = vpop.permute.xlu0 %3589
      %3591 = vrot.lane.b32.xlu0 %v1072, 110
      %v3592 = vpop.permute.xlu0 %3591
      %3593 = vrot.lane.b32.xlu0 %v1078, 110
      %v3594 = vpop.permute.xlu0 %3593
      %3595 = vrot.lane.b32.xlu0 %v1084, 110
      %v3596 = vpop.permute.xlu0 %3595
      %3597 = vrot.lane.b32.xlu0 %v1090, 110
      %v3598 = vpop.permute.xlu0 %3597
      %3599 = vrot.lane.b32.xlu0 %v1096, 110
      %v3600 = vpop.permute.xlu0 %3599
      %3601 = vrot.lane.b32.xlu0 %v1102, 110
      %v3602 = vpop.permute.xlu0 %3601
      %3603 = vrot.lane.b32.xlu0 %v1108, 110
      %v3604 = vpop.permute.xlu0 %3603
      %3605 = vrot.lane.b32.xlu0 %v1114, 110
      %v3606 = vpop.permute.xlu0 %3605
      %3607 = vrot.lane.b32.xlu0 %v1120, 110
      %v3608 = vpop.permute.xlu0 %3607
      %3609 = vrot.lane.b32.xlu0 %v1126, 110
      %v3610 = vpop.permute.xlu0 %3609
      %3611 = vrot.lane.b32.xlu0 %v1132, 110
      %v3612 = vpop.permute.xlu0 %3611
      %3613 = vrot.lane.b32.xlu0 %v1138, 110
      %v3614 = vpop.permute.xlu0 %3613
      %3615 = vrot.lane.b32.xlu0 %v1049, 110
      %v3616 = vpop.permute.xlu0 %3615
      %3617 = vrot.lane.b32.xlu0 %v1055, 110
      %v3618 = vpop.permute.xlu0 %3617
      %3619 = vrot.lane.b32.xlu0 %v1061, 110
      %v3620 = vpop.permute.xlu0 %3619
      %3621 = vrot.lane.b32.xlu0 %v1067, 110
      %v3622 = vpop.permute.xlu0 %3621
      %3623 = vrot.lane.b32.xlu0 %v1073, 110
      %v3624 = vpop.permute.xlu0 %3623
      %3625 = vrot.lane.b32.xlu0 %v1079, 110
      %v3626 = vpop.permute.xlu0 %3625
      %3627 = vrot.lane.b32.xlu0 %v1085, 110
      %v3628 = vpop.permute.xlu0 %3627
      %3629 = vrot.lane.b32.xlu0 %v1091, 110
      %v3630 = vpop.permute.xlu0 %3629
      %3631 = vrot.lane.b32.xlu0 %v1097, 110
      %v3632 = vpop.permute.xlu0 %3631
      %3633 = vrot.lane.b32.xlu0 %v1103, 110
      %v3634 = vpop.permute.xlu0 %3633
      %3635 = vrot.lane.b32.xlu0 %v1109, 110
      %v3636 = vpop.permute.xlu0 %3635
      %3637 = vrot.lane.b32.xlu0 %v1115, 110
      %v3638 = vpop.permute.xlu0 %3637
      %3639 = vrot.lane.b32.xlu0 %v1121, 110
      %v3640 = vpop.permute.xlu0 %3639
      %3641 = vrot.lane.b32.xlu0 %v1127, 110
      %v3642 = vpop.permute.xlu0 %3641
      %3643 = vrot.lane.b32.xlu0 %v1133, 110
      %v3644 = vpop.permute.xlu0 %3643
      %3645 = vrot.lane.b32.xlu0 %v1139, 110
      %v3646 = vpop.permute.xlu0 %3645
      %3647 = vrot.lane.b32.xlu0 %v1050, 110
      %v3648 = vpop.permute.xlu0 %3647
      %3649 = vrot.lane.b32.xlu0 %v1056, 110
      %v3650 = vpop.permute.xlu0 %3649
      %3651 = vrot.lane.b32.xlu0 %v1062, 110
      %v3652 = vpop.permute.xlu0 %3651
      %3653 = vrot.lane.b32.xlu0 %v1068, 110
      %v3654 = vpop.permute.xlu0 %3653
      %3655 = vrot.lane.b32.xlu0 %v1074, 110
      %v3656 = vpop.permute.xlu0 %3655
      %3657 = vrot.lane.b32.xlu0 %v1080, 110
      %v3658 = vpop.permute.xlu0 %3657
      %3659 = vrot.lane.b32.xlu0 %v1086, 110
      %v3660 = vpop.permute.xlu0 %3659
      %3661 = vrot.lane.b32.xlu0 %v1092, 110
      %v3662 = vpop.permute.xlu0 %3661
      %3663 = vrot.lane.b32.xlu0 %v1098, 110
      %v3664 = vpop.permute.xlu0 %3663
      %3665 = vrot.lane.b32.xlu0 %v1104, 110
      %v3666 = vpop.permute.xlu0 %3665
      %3667 = vrot.lane.b32.xlu0 %v1110, 110
      %v3668 = vpop.permute.xlu0 %3667
      %3669 = vrot.lane.b32.xlu0 %v1116, 110
      %v3670 = vpop.permute.xlu0 %3669
      %3671 = vrot.lane.b32.xlu0 %v1122, 110
      %v3672 = vpop.permute.xlu0 %3671
      %3673 = vrot.lane.b32.xlu0 %v1128, 110
      %v3674 = vpop.permute.xlu0 %3673
      %3675 = vrot.lane.b32.xlu0 %v1134, 110
      %v3676 = vpop.permute.xlu0 %3675
      %3677 = vrot.lane.b32.xlu0 %v1140, 110
      %v3678 = vpop.permute.xlu0 %3677
      %3679 = vrot.lane.b32.xlu0 %v1051, 110
      %v3680 = vpop.permute.xlu0 %3679
      %3681 = vrot.lane.b32.xlu0 %v1057, 110
      %v3682 = vpop.permute.xlu0 %3681
      %3683 = vrot.lane.b32.xlu0 %v1063, 110
      %v3684 = vpop.permute.xlu0 %3683
      %3685 = vrot.lane.b32.xlu0 %v1069, 110
      %v3686 = vpop.permute.xlu0 %3685
      %3687 = vrot.lane.b32.xlu0 %v1075, 110
      %v3688 = vpop.permute.xlu0 %3687
      %3689 = vrot.lane.b32.xlu0 %v1081, 110
      %v3690 = vpop.permute.xlu0 %3689
      %3691 = vrot.lane.b32.xlu0 %v1087, 110
      %v3692 = vpop.permute.xlu0 %3691
      %3693 = vrot.lane.b32.xlu0 %v1093, 110
      %v3694 = vpop.permute.xlu0 %3693
      %3695 = vrot.lane.b32.xlu0 %v1099, 110
      %v3696 = vpop.permute.xlu0 %3695
      %3697 = vrot.lane.b32.xlu0 %v1105, 110
      %v3698 = vpop.permute.xlu0 %3697
      %3699 = vrot.lane.b32.xlu0 %v1111, 110
      %v3700 = vpop.permute.xlu0 %3699
      %3701 = vrot.lane.b32.xlu0 %v1117, 110
      %v3702 = vpop.permute.xlu0 %3701
      %3703 = vrot.lane.b32.xlu0 %v1123, 110
      %v3704 = vpop.permute.xlu0 %3703
      %3705 = vrot.lane.b32.xlu0 %v1129, 110
      %v3706 = vpop.permute.xlu0 %3705
      %3707 = vrot.lane.b32.xlu0 %v1135, 110
      %v3708 = vpop.permute.xlu0 %3707
      %3709 = vrot.lane.b32.xlu0 %v1141, 110
      %v3710 = vpop.permute.xlu0 %3709
      %3711 = vrot.lane.b32.xlu0 %v1052, 110
      %v3712 = vpop.permute.xlu0 %3711
      %3713 = vrot.lane.b32.xlu0 %v1058, 110
      %v3714 = vpop.permute.xlu0 %3713
      %3715 = vrot.lane.b32.xlu0 %v1064, 110
      %v3716 = vpop.permute.xlu0 %3715
      %3717 = vrot.lane.b32.xlu0 %v1070, 110
      %v3718 = vpop.permute.xlu0 %3717
      %3719 = vrot.lane.b32.xlu0 %v1076, 110
      %v3720 = vpop.permute.xlu0 %3719
      %3721 = vrot.lane.b32.xlu0 %v1082, 110
      %v3722 = vpop.permute.xlu0 %3721
      %3723 = vrot.lane.b32.xlu0 %v1088, 110
      %v3724 = vpop.permute.xlu0 %3723
      %3725 = vrot.lane.b32.xlu0 %v1094, 110
      %v3726 = vpop.permute.xlu0 %3725
      %3727 = vrot.lane.b32.xlu0 %v1100, 110
      %v3728 = vpop.permute.xlu0 %3727
      %3729 = vrot.lane.b32.xlu0 %v1106, 110
      %v3730 = vpop.permute.xlu0 %3729
      %3731 = vrot.lane.b32.xlu0 %v1112, 110
      %v3732 = vpop.permute.xlu0 %3731
      %3733 = vrot.lane.b32.xlu0 %v1118, 110
      %v3734 = vpop.permute.xlu0 %3733
      %3735 = vrot.lane.b32.xlu0 %v1124, 110
      %v3736 = vpop.permute.xlu0 %3735
      %3737 = vrot.lane.b32.xlu0 %v1130, 110
      %v3738 = vpop.permute.xlu0 %3737
      %3739 = vrot.lane.b32.xlu0 %v1136, 110
      %v3740 = vpop.permute.xlu0 %3739
      %3741 = vrot.lane.b32.xlu0 %v1142, 110
      %v3742 = vpop.permute.xlu0 %3741
      %vm3743 = vcmp.lt.s32.totalorder %v1336, 110
      %v3744 = vsel %vm3743, %v3680, %v3712
      %v3745 = vsel %vm3743, %v3682, %v3714
      %v3746 = vsel %vm3743, %v3684, %v3716
      %v3747 = vsel %vm3743, %v3686, %v3718
      %v3748 = vsel %vm3743, %v3688, %v3720
      %v3749 = vsel %vm3743, %v3690, %v3722
      %v3750 = vsel %vm3743, %v3692, %v3724
      %v3751 = vsel %vm3743, %v3694, %v3726
      %v3752 = vsel %vm3743, %v3696, %v3728
      %v3753 = vsel %vm3743, %v3698, %v3730
      %v3754 = vsel %vm3743, %v3700, %v3732
      %v3755 = vsel %vm3743, %v3702, %v3734
      %v3756 = vsel %vm3743, %v3704, %v3736
      %v3757 = vsel %vm3743, %v3706, %v3738
      %v3758 = vsel %vm3743, %v3708, %v3740
      %v3759 = vsel %vm3743, %v3710, %v3742
      %v3760 = vsel %vm3743, %v3648, %v3680
      %v3761 = vsel %vm3743, %v3650, %v3682
      %v3762 = vsel %vm3743, %v3652, %v3684
      %v3763 = vsel %vm3743, %v3654, %v3686
      %v3764 = vsel %vm3743, %v3656, %v3688
      %v3765 = vsel %vm3743, %v3658, %v3690
      %v3766 = vsel %vm3743, %v3660, %v3692
      %v3767 = vsel %vm3743, %v3662, %v3694
      %v3768 = vsel %vm3743, %v3664, %v3696
      %v3769 = vsel %vm3743, %v3666, %v3698
      %v3770 = vsel %vm3743, %v3668, %v3700
      %v3771 = vsel %vm3743, %v3670, %v3702
      %v3772 = vsel %vm3743, %v3672, %v3704
      %v3773 = vsel %vm3743, %v3674, %v3706
      %v3774 = vsel %vm3743, %v3676, %v3708
      %v3775 = vsel %vm3743, %v3678, %v3710
      %v3776 = vsel %vm3743, %v3616, %v3648
      %v3777 = vsel %vm3743, %v3618, %v3650
      %v3778 = vsel %vm3743, %v3620, %v3652
      %v3779 = vsel %vm3743, %v3622, %v3654
      %v3780 = vsel %vm3743, %v3624, %v3656
      %v3781 = vsel %vm3743, %v3626, %v3658
      %v3782 = vsel %vm3743, %v3628, %v3660
      %v3783 = vsel %vm3743, %v3630, %v3662
      %v3784 = vsel %vm3743, %v3632, %v3664
      %v3785 = vsel %vm3743, %v3634, %v3666
      %v3786 = vsel %vm3743, %v3636, %v3668
      %v3787 = vsel %vm3743, %v3638, %v3670
      %v3788 = vsel %vm3743, %v3640, %v3672
      %v3789 = vsel %vm3743, %v3642, %v3674
      %v3790 = vsel %vm3743, %v3644, %v3676
      %v3791 = vsel %vm3743, %v3646, %v3678
      %v3792 = vsel %vm3743, %v3584, %v3616
      %v3793 = vsel %vm3743, %v3586, %v3618
      %v3794 = vsel %vm3743, %v3588, %v3620
      %v3795 = vsel %vm3743, %v3590, %v3622
      %v3796 = vsel %vm3743, %v3592, %v3624
      %v3797 = vsel %vm3743, %v3594, %v3626
      %v3798 = vsel %vm3743, %v3596, %v3628
      %v3799 = vsel %vm3743, %v3598, %v3630
      %v3800 = vsel %vm3743, %v3600, %v3632
      %v3801 = vsel %vm3743, %v3602, %v3634
      %v3802 = vsel %vm3743, %v3604, %v3636
      %v3803 = vsel %vm3743, %v3606, %v3638
      %v3804 = vsel %vm3743, %v3608, %v3640
      %v3805 = vsel %vm3743, %v3610, %v3642
      %v3806 = vsel %vm3743, %v3612, %v3644
      %v3807 = vsel %vm3743, %v3614, %v3646
      %v3808 = vsel %vm3743, %v3552, %v3584
      %v3809 = vsel %vm3743, %v3554, %v3586
      %v3810 = vsel %vm3743, %v3556, %v3588
      %v3811 = vsel %vm3743, %v3558, %v3590
      %v3812 = vsel %vm3743, %v3560, %v3592
      %v3813 = vsel %vm3743, %v3562, %v3594
      %v3814 = vsel %vm3743, %v3564, %v3596
      %v3815 = vsel %vm3743, %v3566, %v3598
      %v3816 = vsel %vm3743, %v3568, %v3600
      %v3817 = vsel %vm3743, %v3570, %v3602
      %v3818 = vsel %vm3743, %v3572, %v3604
      %v3819 = vsel %vm3743, %v3574, %v3606
      %v3820 = vsel %vm3743, %v3576, %v3608
      %v3821 = vsel %vm3743, %v3578, %v3610
      %v3822 = vsel %vm3743, %v3580, %v3612
      %v3823 = vsel %vm3743, %v3582, %v3614
      %v3824 = vsel %vm3743, %v3712, %v3552
      %v3825 = vsel %vm3743, %v3714, %v3554
      %v3826 = vsel %vm3743, %v3716, %v3556
      %v3827 = vsel %vm3743, %v3718, %v3558
      %v3828 = vsel %vm3743, %v3720, %v3560
      %v3829 = vsel %vm3743, %v3722, %v3562
      %v3830 = vsel %vm3743, %v3724, %v3564
      %v3831 = vsel %vm3743, %v3726, %v3566
      %v3832 = vsel %vm3743, %v3728, %v3568
      %v3833 = vsel %vm3743, %v3730, %v3570
      %v3834 = vsel %vm3743, %v3732, %v3572
      %v3835 = vsel %vm3743, %v3734, %v3574
      %v3836 = vsel %vm3743, %v3736, %v3576
      %v3837 = vsel %vm3743, %v3738, %v3578
      %v3838 = vsel %vm3743, %v3740, %v3580
      %v3839 = vsel %vm3743, %v3742, %v3582
      %v3840 = vpack.c.bf16 %v3809, %v3808
      %v3841 = vpack.c.bf16 %v3793, %v3792
      %v3842 = vpack.c.bf16 %v3777, %v3776
      %v3843 = vpack.c.bf16 %v3761, %v3760
      %v3844 = vpack.c.bf16 %v3745, %v3744
      %v3845 = vpack.c.bf16 %v3825, %v3824
      %v3846 = vpack.c.bf16 %v3811, %v3810
      %v3847 = vpack.c.bf16 %v3795, %v3794
      %v3848 = vpack.c.bf16 %v3779, %v3778
      %v3849 = vpack.c.bf16 %v3763, %v3762
      %v3850 = vpack.c.bf16 %v3747, %v3746
      %v3851 = vpack.c.bf16 %v3827, %v3826
      %v3852 = vpack.c.bf16 %v3813, %v3812
      %v3853 = vpack.c.bf16 %v3797, %v3796
      %v3854 = vpack.c.bf16 %v3781, %v3780
      %v3855 = vpack.c.bf16 %v3765, %v3764
      %v3856 = vpack.c.bf16 %v3749, %v3748
      %v3857 = vpack.c.bf16 %v3829, %v3828
      %v3858 = vpack.c.bf16 %v3815, %v3814
      %v3859 = vpack.c.bf16 %v3799, %v3798
      %v3860 = vpack.c.bf16 %v3783, %v3782
      %v3861 = vpack.c.bf16 %v3767, %v3766
      %v3862 = vpack.c.bf16 %v3751, %v3750
      %v3863 = vpack.c.bf16 %v3831, %v3830
      %v3864 = vpack.c.bf16 %v3817, %v3816
      %v3865 = vpack.c.bf16 %v3801, %v3800
      %v3866 = vpack.c.bf16 %v3785, %v3784
      %v3867 = vpack.c.bf16 %v3769, %v3768
      %v3868 = vpack.c.bf16 %v3753, %v3752
      %v3869 = vpack.c.bf16 %v3833, %v3832
      %v3870 = vpack.c.bf16 %v3819, %v3818
      %v3871 = vpack.c.bf16 %v3803, %v3802
      %v3872 = vpack.c.bf16 %v3787, %v3786
      %v3873 = vpack.c.bf16 %v3771, %v3770
      %v3874 = vpack.c.bf16 %v3755, %v3754
      %v3875 = vpack.c.bf16 %v3835, %v3834
      %v3876 = vpack.c.bf16 %v3821, %v3820
      %v3877 = vpack.c.bf16 %v3805, %v3804
      %v3878 = vpack.c.bf16 %v3789, %v3788
      %v3879 = vpack.c.bf16 %v3773, %v3772
      %v3880 = vpack.c.bf16 %v3757, %v3756
      %v3881 = vpack.c.bf16 %v3837, %v3836
      %v3882 = vpack.c.bf16 %v3823, %v3822
      %v3883 = vpack.c.bf16 %v3807, %v3806
      %v3884 = vpack.c.bf16 %v3791, %v3790
      %v3885 = vpack.c.bf16 %v3775, %v3774
      %v3886 = vpack.c.bf16 %v3759, %v3758
      %v3887 = vpack.c.bf16 %v3839, %v3838
      %3888 = vst [vmem:[#allocation2 + $0xa80] sm:$0xff] %v3840
      %3889 = vst [vmem:[#allocation2 + $0xa88] sm:$0xff] %v3841
      %3890 = vst [vmem:[#allocation2 + $0xa90] sm:$0xff] %v3842
      %3891 = vst [vmem:[#allocation2 + $0xa98] sm:$0xff] %v3843
      %3892 = vst [vmem:[#allocation2 + $0xaa0] sm:$0xff] %v3844
      %3893 = vst [vmem:[#allocation2 + $0xaa8] sm:$0xff] %v3845
      %3894 = vst [vmem:[#allocation2 + $0xab0] sm:$0xff] %v3846
      %3895 = vst [vmem:[#allocation2 + $0xab8] sm:$0xff] %v3847
      %3896 = vst [vmem:[#allocation2 + $0xac0] sm:$0xff] %v3848
      %3897 = vst [vmem:[#allocation2 + $0xac8] sm:$0xff] %v3849
      %3898 = vst [vmem:[#allocation2 + $0xad0] sm:$0xff] %v3850
      %3899 = vst [vmem:[#allocation2 + $0xad8] sm:$0xff] %v3851
      %3900 = vst [vmem:[#allocation2 + $0xae0] sm:$0xff] %v3852
      %3901 = vst [vmem:[#allocation2 + $0xae8] sm:$0xff] %v3853
      %3902 = vst [vmem:[#allocation2 + $0xaf0] sm:$0xff] %v3854
      %3903 = vst [vmem:[#allocation2 + $0xaf8] sm:$0xff] %v3855
      %3904 = vst [vmem:[#allocation2 + $0xb00] sm:$0xff] %v3856
      %3905 = vst [vmem:[#allocation2 + $0xb08] sm:$0xff] %v3857
      %3906 = vst [vmem:[#allocation2 + $0xb10] sm:$0xff] %v3858
      %3907 = vst [vmem:[#allocation2 + $0xb18] sm:$0xff] %v3859
      %3908 = vst [vmem:[#allocation2 + $0xb20] sm:$0xff] %v3860
      %3909 = vst [vmem:[#allocation2 + $0xb28] sm:$0xff] %v3861
      %3910 = vst [vmem:[#allocation2 + $0xb30] sm:$0xff] %v3862
      %3911 = vst [vmem:[#allocation2 + $0xb38] sm:$0xff] %v3863
      %3912 = vst [vmem:[#allocation2 + $0xb40] sm:$0xff] %v3864
      %3913 = vst [vmem:[#allocation2 + $0xb48] sm:$0xff] %v3865
      %3914 = vst [vmem:[#allocation2 + $0xb50] sm:$0xff] %v3866
      %3915 = vst [vmem:[#allocation2 + $0xb58] sm:$0xff] %v3867
      %3916 = vst [vmem:[#allocation2 + $0xb60] sm:$0xff] %v3868
      %3917 = vst [vmem:[#allocation2 + $0xb68] sm:$0xff] %v3869
      %3918 = vst [vmem:[#allocation2 + $0xb70] sm:$0xff] %v3870
      %3919 = vst [vmem:[#allocation2 + $0xb78] sm:$0xff] %v3871
      %3920 = vst [vmem:[#allocation2 + $0xb80] sm:$0xff] %v3872
      %3921 = vst [vmem:[#allocation2 + $0xb88] sm:$0xff] %v3873
      %3922 = vst [vmem:[#allocation2 + $0xb90] sm:$0xff] %v3874
      %3923 = vst [vmem:[#allocation2 + $0xb98] sm:$0xff] %v3875
      %3924 = vst [vmem:[#allocation2 + $0xba0] sm:$0xff] %v3876
      %3925 = vst [vmem:[#allocation2 + $0xba8] sm:$0xff] %v3877
      %3926 = vst [vmem:[#allocation2 + $0xbb0] sm:$0xff] %v3878
      %3927 = vst [vmem:[#allocation2 + $0xbb8] sm:$0xff] %v3879
      %3928 = vst [vmem:[#allocation2 + $0xbc0] sm:$0xff] %v3880
      %3929 = vst [vmem:[#allocation2 + $0xbc8] sm:$0xff] %v3881
      %3930 = vst [vmem:[#allocation2 + $0xbd0] sm:$0xff] %v3882
      %3931 = vst [vmem:[#allocation2 + $0xbd8] sm:$0xff] %v3883
      %3932 = vst [vmem:[#allocation2 + $0xbe0] sm:$0xff] %v3884
      %3933 = vst [vmem:[#allocation2 + $0xbe8] sm:$0xff] %v3885
      %3934 = vst [vmem:[#allocation2 + $0xbf0] sm:$0xff] %v3886
      %3935 = vst [vmem:[#allocation2 + $0xbf8] sm:$0xff] %v3887
      %3936 = vrot.lane.b32.xlu0 %v1047, 109
      %v3937 = vpop.permute.xlu0 %3936
      %3938 = vrot.lane.b32.xlu0 %v1053, 109
      %v3939 = vpop.permute.xlu0 %3938
      %3940 = vrot.lane.b32.xlu0 %v1059, 109
      %v3941 = vpop.permute.xlu0 %3940
      %3942 = vrot.lane.b32.xlu0 %v1065, 109
      %v3943 = vpop.permute.xlu0 %3942
      %3944 = vrot.lane.b32.xlu0 %v1071, 109
      %v3945 = vpop.permute.xlu0 %3944
      %3946 = vrot.lane.b32.xlu0 %v1077, 109
      %v3947 = vpop.permute.xlu0 %3946
      %3948 = vrot.lane.b32.xlu0 %v1083, 109
      %v3949 = vpop.permute.xlu0 %3948
      %3950 = vrot.lane.b32.xlu0 %v1089, 109
      %v3951 = vpop.permute.xlu0 %3950
      %3952 = vrot.lane.b32.xlu0 %v1095, 109
      %v3953 = vpop.permute.xlu0 %3952
      %3954 = vrot.lane.b32.xlu0 %v1101, 109
      %v3955 = vpop.permute.xlu0 %3954
      %3956 = vrot.lane.b32.xlu0 %v1107, 109
      %v3957 = vpop.permute.xlu0 %3956
      %3958 = vrot.lane.b32.xlu0 %v1113, 109
      %v3959 = vpop.permute.xlu0 %3958
      %3960 = vrot.lane.b32.xlu0 %v1119, 109
      %v3961 = vpop.permute.xlu0 %3960
      %3962 = vrot.lane.b32.xlu0 %v1125, 109
      %v3963 = vpop.permute.xlu0 %3962
      %3964 = vrot.lane.b32.xlu0 %v1131, 109
      %v3965 = vpop.permute.xlu0 %3964
      %3966 = vrot.lane.b32.xlu0 %v1137, 109
      %v3967 = vpop.permute.xlu0 %3966
      %3968 = vrot.lane.b32.xlu0 %v1048, 109
      %v3969 = vpop.permute.xlu0 %3968
      %3970 = vrot.lane.b32.xlu0 %v1054, 109
      %v3971 = vpop.permute.xlu0 %3970
      %3972 = vrot.lane.b32.xlu0 %v1060, 109
      %v3973 = vpop.permute.xlu0 %3972
      %3974 = vrot.lane.b32.xlu0 %v1066, 109
      %v3975 = vpop.permute.xlu0 %3974
      %3976 = vrot.lane.b32.xlu0 %v1072, 109
      %v3977 = vpop.permute.xlu0 %3976
      %3978 = vrot.lane.b32.xlu0 %v1078, 109
      %v3979 = vpop.permute.xlu0 %3978
      %3980 = vrot.lane.b32.xlu0 %v1084, 109
      %v3981 = vpop.permute.xlu0 %3980
      %3982 = vrot.lane.b32.xlu0 %v1090, 109
      %v3983 = vpop.permute.xlu0 %3982
      %3984 = vrot.lane.b32.xlu0 %v1096, 109
      %v3985 = vpop.permute.xlu0 %3984
      %3986 = vrot.lane.b32.xlu0 %v1102, 109
      %v3987 = vpop.permute.xlu0 %3986
      %3988 = vrot.lane.b32.xlu0 %v1108, 109
      %v3989 = vpop.permute.xlu0 %3988
      %3990 = vrot.lane.b32.xlu0 %v1114, 109
      %v3991 = vpop.permute.xlu0 %3990
      %3992 = vrot.lane.b32.xlu0 %v1120, 109
      %v3993 = vpop.permute.xlu0 %3992
      %3994 = vrot.lane.b32.xlu0 %v1126, 109
      %v3995 = vpop.permute.xlu0 %3994
      %3996 = vrot.lane.b32.xlu0 %v1132, 109
      %v3997 = vpop.permute.xlu0 %3996
      %3998 = vrot.lane.b32.xlu0 %v1138, 109
      %v3999 = vpop.permute.xlu0 %3998
      %4000 = vrot.lane.b32.xlu0 %v1049, 109
      %v4001 = vpop.permute.xlu0 %4000
      %4002 = vrot.lane.b32.xlu0 %v1055, 109
      %v4003 = vpop.permute.xlu0 %4002
      %4004 = vrot.lane.b32.xlu0 %v1061, 109
      %v4005 = vpop.permute.xlu0 %4004
      %4006 = vrot.lane.b32.xlu0 %v1067, 109
      %v4007 = vpop.permute.xlu0 %4006
      %4008 = vrot.lane.b32.xlu0 %v1073, 109
      %v4009 = vpop.permute.xlu0 %4008
      %4010 = vrot.lane.b32.xlu0 %v1079, 109
      %v4011 = vpop.permute.xlu0 %4010
      %4012 = vrot.lane.b32.xlu0 %v1085, 109
      %v4013 = vpop.permute.xlu0 %4012
      %4014 = vrot.lane.b32.xlu0 %v1091, 109
      %v4015 = vpop.permute.xlu0 %4014
      %4016 = vrot.lane.b32.xlu0 %v1097, 109
      %v4017 = vpop.permute.xlu0 %4016
      %4018 = vrot.lane.b32.xlu0 %v1103, 109
      %v4019 = vpop.permute.xlu0 %4018
      %4020 = vrot.lane.b32.xlu0 %v1109, 109
      %v4021 = vpop.permute.xlu0 %4020
      %4022 = vrot.lane.b32.xlu0 %v1115, 109
      %v4023 = vpop.permute.xlu0 %4022
      %4024 = vrot.lane.b32.xlu0 %v1121, 109
      %v4025 = vpop.permute.xlu0 %4024
      %4026 = vrot.lane.b32.xlu0 %v1127, 109
      %v4027 = vpop.permute.xlu0 %4026
      %4028 = vrot.lane.b32.xlu0 %v1133, 109
      %v4029 = vpop.permute.xlu0 %4028
      %4030 = vrot.lane.b32.xlu0 %v1139, 109
      %v4031 = vpop.permute.xlu0 %4030
      %4032 = vrot.lane.b32.xlu0 %v1050, 109
      %v4033 = vpop.permute.xlu0 %4032
      %4034 = vrot.lane.b32.xlu0 %v1056, 109
      %v4035 = vpop.permute.xlu0 %4034
      %4036 = vrot.lane.b32.xlu0 %v1062, 109
      %v4037 = vpop.permute.xlu0 %4036
      %4038 = vrot.lane.b32.xlu0 %v1068, 109
      %v4039 = vpop.permute.xlu0 %4038
      %4040 = vrot.lane.b32.xlu0 %v1074, 109
      %v4041 = vpop.permute.xlu0 %4040
      %4042 = vrot.lane.b32.xlu0 %v1080, 109
      %v4043 = vpop.permute.xlu0 %4042
      %4044 = vrot.lane.b32.xlu0 %v1086, 109
      %v4045 = vpop.permute.xlu0 %4044
      %4046 = vrot.lane.b32.xlu0 %v1092, 109
      %v4047 = vpop.permute.xlu0 %4046
      %4048 = vrot.lane.b32.xlu0 %v1098, 109
      %v4049 = vpop.permute.xlu0 %4048
      %4050 = vrot.lane.b32.xlu0 %v1104, 109
      %v4051 = vpop.permute.xlu0 %4050
      %4052 = vrot.lane.b32.xlu0 %v1110, 109
      %v4053 = vpop.permute.xlu0 %4052
      %4054 = vrot.lane.b32.xlu0 %v1116, 109
      %v4055 = vpop.permute.xlu0 %4054
      %4056 = vrot.lane.b32.xlu0 %v1122, 109
      %v4057 = vpop.permute.xlu0 %4056
      %4058 = vrot.lane.b32.xlu0 %v1128, 109
      %v4059 = vpop.permute.xlu0 %4058
      %4060 = vrot.lane.b32.xlu0 %v1134, 109
      %v4061 = vpop.permute.xlu0 %4060
      %4062 = vrot.lane.b32.xlu0 %v1140, 109
      %v4063 = vpop.permute.xlu0 %4062
      %4064 = vrot.lane.b32.xlu0 %v1051, 109
      %v4065 = vpop.permute.xlu0 %4064
      %4066 = vrot.lane.b32.xlu0 %v1057, 109
      %v4067 = vpop.permute.xlu0 %4066
      %4068 = vrot.lane.b32.xlu0 %v1063, 109
      %v4069 = vpop.permute.xlu0 %4068
      %4070 = vrot.lane.b32.xlu0 %v1069, 109
      %v4071 = vpop.permute.xlu0 %4070
      %4072 = vrot.lane.b32.xlu0 %v1075, 109
      %v4073 = vpop.permute.xlu0 %4072
      %4074 = vrot.lane.b32.xlu0 %v1081, 109
      %v4075 = vpop.permute.xlu0 %4074
      %4076 = vrot.lane.b32.xlu0 %v1087, 109
      %v4077 = vpop.permute.xlu0 %4076
      %4078 = vrot.lane.b32.xlu0 %v1093, 109
      %v4079 = vpop.permute.xlu0 %4078
      %4080 = vrot.lane.b32.xlu0 %v1099, 109
      %v4081 = vpop.permute.xlu0 %4080
      %4082 = vrot.lane.b32.xlu0 %v1105, 109
      %v4083 = vpop.permute.xlu0 %4082
      %4084 = vrot.lane.b32.xlu0 %v1111, 109
      %v4085 = vpop.permute.xlu0 %4084
      %4086 = vrot.lane.b32.xlu0 %v1117, 109
      %v4087 = vpop.permute.xlu0 %4086
      %4088 = vrot.lane.b32.xlu0 %v1123, 109
      %v4089 = vpop.permute.xlu0 %4088
      %4090 = vrot.lane.b32.xlu0 %v1129, 109
      %v4091 = vpop.permute.xlu0 %4090
      %4092 = vrot.lane.b32.xlu0 %v1135, 109
      %v4093 = vpop.permute.xlu0 %4092
      %4094 = vrot.lane.b32.xlu0 %v1141, 109
      %v4095 = vpop.permute.xlu0 %4094
      %4096 = vrot.lane.b32.xlu0 %v1052, 109
      %v4097 = vpop.permute.xlu0 %4096
      %4098 = vrot.lane.b32.xlu0 %v1058, 109
      %v4099 = vpop.permute.xlu0 %4098
      %4100 = vrot.lane.b32.xlu0 %v1064, 109
      %v4101 = vpop.permute.xlu0 %4100
      %4102 = vrot.lane.b32.xlu0 %v1070, 109
      %v4103 = vpop.permute.xlu0 %4102
      %4104 = vrot.lane.b32.xlu0 %v1076, 109
      %v4105 = vpop.permute.xlu0 %4104
      %4106 = vrot.lane.b32.xlu0 %v1082, 109
      %v4107 = vpop.permute.xlu0 %4106
      %4108 = vrot.lane.b32.xlu0 %v1088, 109
      %v4109 = vpop.permute.xlu0 %4108
      %4110 = vrot.lane.b32.xlu0 %v1094, 109
      %v4111 = vpop.permute.xlu0 %4110
      %4112 = vrot.lane.b32.xlu0 %v1100, 109
      %v4113 = vpop.permute.xlu0 %4112
      %4114 = vrot.lane.b32.xlu0 %v1106, 109
      %v4115 = vpop.permute.xlu0 %4114
      %4116 = vrot.lane.b32.xlu0 %v1112, 109
      %v4117 = vpop.permute.xlu0 %4116
      %4118 = vrot.lane.b32.xlu0 %v1118, 109
      %v4119 = vpop.permute.xlu0 %4118
      %4120 = vrot.lane.b32.xlu0 %v1124, 109
      %v4121 = vpop.permute.xlu0 %4120
      %4122 = vrot.lane.b32.xlu0 %v1130, 109
      %v4123 = vpop.permute.xlu0 %4122
      %4124 = vrot.lane.b32.xlu0 %v1136, 109
      %v4125 = vpop.permute.xlu0 %4124
      %4126 = vrot.lane.b32.xlu0 %v1142, 109
      %v4127 = vpop.permute.xlu0 %4126
      %vm4128 = vcmp.lt.s32.totalorder %v1336, 109
      %v4129 = vsel %vm4128, %v4065, %v4097
      %v4130 = vsel %vm4128, %v4067, %v4099
      %v4131 = vsel %vm4128, %v4069, %v4101
      %v4132 = vsel %vm4128, %v4071, %v4103
      %v4133 = vsel %vm4128, %v4073, %v4105
      %v4134 = vsel %vm4128, %v4075, %v4107
      %v4135 = vsel %vm4128, %v4077, %v4109
      %v4136 = vsel %vm4128, %v4079, %v4111
      %v4137 = vsel %vm4128, %v4081, %v4113
      %v4138 = vsel %vm4128, %v4083, %v4115
      %v4139 = vsel %vm4128, %v4085, %v4117
      %v4140 = vsel %vm4128, %v4087, %v4119
      %v4141 = vsel %vm4128, %v4089, %v4121
      %v4142 = vsel %vm4128, %v4091, %v4123
      %v4143 = vsel %vm4128, %v4093, %v4125
      %v4144 = vsel %vm4128, %v4095, %v4127
      %v4145 = vsel %vm4128, %v4033, %v4065
      %v4146 = vsel %vm4128, %v4035, %v4067
      %v4147 = vsel %vm4128, %v4037, %v4069
      %v4148 = vsel %vm4128, %v4039, %v4071
      %v4149 = vsel %vm4128, %v4041, %v4073
      %v4150 = vsel %vm4128, %v4043, %v4075
      %v4151 = vsel %vm4128, %v4045, %v4077
      %v4152 = vsel %vm4128, %v4047, %v4079
      %v4153 = vsel %vm4128, %v4049, %v4081
      %v4154 = vsel %vm4128, %v4051, %v4083
      %v4155 = vsel %vm4128, %v4053, %v4085
      %v4156 = vsel %vm4128, %v4055, %v4087
      %v4157 = vsel %vm4128, %v4057, %v4089
      %v4158 = vsel %vm4128, %v4059, %v4091
      %v4159 = vsel %vm4128, %v4061, %v4093
      %v4160 = vsel %vm4128, %v4063, %v4095
      %v4161 = vsel %vm4128, %v4001, %v4033
      %v4162 = vsel %vm4128, %v4003, %v4035
      %v4163 = vsel %vm4128, %v4005, %v4037
      %v4164 = vsel %vm4128, %v4007, %v4039
      %v4165 = vsel %vm4128, %v4009, %v4041
      %v4166 = vsel %vm4128, %v4011, %v4043
      %v4167 = vsel %vm4128, %v4013, %v4045
      %v4168 = vsel %vm4128, %v4015, %v4047
      %v4169 = vsel %vm4128, %v4017, %v4049
      %v4170 = vsel %vm4128, %v4019, %v4051
      %v4171 = vsel %vm4128, %v4021, %v4053
      %v4172 = vsel %vm4128, %v4023, %v4055
      %v4173 = vsel %vm4128, %v4025, %v4057
      %v4174 = vsel %vm4128, %v4027, %v4059
      %v4175 = vsel %vm4128, %v4029, %v4061
      %v4176 = vsel %vm4128, %v4031, %v4063
      %v4177 = vsel %vm4128, %v3969, %v4001
      %v4178 = vsel %vm4128, %v3971, %v4003
      %v4179 = vsel %vm4128, %v3973, %v4005
      %v4180 = vsel %vm4128, %v3975, %v4007
      %v4181 = vsel %vm4128, %v3977, %v4009
      %v4182 = vsel %vm4128, %v3979, %v4011
      %v4183 = vsel %vm4128, %v3981, %v4013
      %v4184 = vsel %vm4128, %v3983, %v4015
      %v4185 = vsel %vm4128, %v3985, %v4017
      %v4186 = vsel %vm4128, %v3987, %v4019
      %v4187 = vsel %vm4128, %v3989, %v4021
      %v4188 = vsel %vm4128, %v3991, %v4023
      %v4189 = vsel %vm4128, %v3993, %v4025
      %v4190 = vsel %vm4128, %v3995, %v4027
      %v4191 = vsel %vm4128, %v3997, %v4029
      %v4192 = vsel %vm4128, %v3999, %v4031
      %v4193 = vsel %vm4128, %v3937, %v3969
      %v4194 = vsel %vm4128, %v3939, %v3971
      %v4195 = vsel %vm4128, %v3941, %v3973
      %v4196 = vsel %vm4128, %v3943, %v3975
      %v4197 = vsel %vm4128, %v3945, %v3977
      %v4198 = vsel %vm4128, %v3947, %v3979
      %v4199 = vsel %vm4128, %v3949, %v3981
      %v4200 = vsel %vm4128, %v3951, %v3983
      %v4201 = vsel %vm4128, %v3953, %v3985
      %v4202 = vsel %vm4128, %v3955, %v3987
      %v4203 = vsel %vm4128, %v3957, %v3989
      %v4204 = vsel %vm4128, %v3959, %v3991
      %v4205 = vsel %vm4128, %v3961, %v3993
      %v4206 = vsel %vm4128, %v3963, %v3995
      %v4207 = vsel %vm4128, %v3965, %v3997
      %v4208 = vsel %vm4128, %v3967, %v3999
      %v4209 = vsel %vm4128, %v4097, %v3937
      %v4210 = vsel %vm4128, %v4099, %v3939
      %v4211 = vsel %vm4128, %v4101, %v3941
      %v4212 = vsel %vm4128, %v4103, %v3943
      %v4213 = vsel %vm4128, %v4105, %v3945
      %v4214 = vsel %vm4128, %v4107, %v3947
      %v4215 = vsel %vm4128, %v4109, %v3949
      %v4216 = vsel %vm4128, %v4111, %v3951
      %v4217 = vsel %vm4128, %v4113, %v3953
      %v4218 = vsel %vm4128, %v4115, %v3955
      %v4219 = vsel %vm4128, %v4117, %v3957
      %v4220 = vsel %vm4128, %v4119, %v3959
      %v4221 = vsel %vm4128, %v4121, %v3961
      %v4222 = vsel %vm4128, %v4123, %v3963
      %v4223 = vsel %vm4128, %v4125, %v3965
      %v4224 = vsel %vm4128, %v4127, %v3967
      %v4225 = vpack.c.bf16 %v4194, %v4193
      %v4226 = vpack.c.bf16 %v4178, %v4177
      %v4227 = vpack.c.bf16 %v4162, %v4161
      %v4228 = vpack.c.bf16 %v4146, %v4145
      %v4229 = vpack.c.bf16 %v4130, %v4129
      %v4230 = vpack.c.bf16 %v4210, %v4209
      %v4231 = vpack.c.bf16 %v4196, %v4195
      %v4232 = vpack.c.bf16 %v4180, %v4179
      %v4233 = vpack.c.bf16 %v4164, %v4163
      %v4234 = vpack.c.bf16 %v4148, %v4147
      %v4235 = vpack.c.bf16 %v4132, %v4131
      %v4236 = vpack.c.bf16 %v4212, %v4211
      %v4237 = vpack.c.bf16 %v4198, %v4197
      %v4238 = vpack.c.bf16 %v4182, %v4181
      %v4239 = vpack.c.bf16 %v4166, %v4165
      %v4240 = vpack.c.bf16 %v4150, %v4149
      %v4241 = vpack.c.bf16 %v4134, %v4133
      %v4242 = vpack.c.bf16 %v4214, %v4213
      %v4243 = vpack.c.bf16 %v4200, %v4199
      %v4244 = vpack.c.bf16 %v4184, %v4183
      %v4245 = vpack.c.bf16 %v4168, %v4167
      %v4246 = vpack.c.bf16 %v4152, %v4151
      %v4247 = vpack.c.bf16 %v4136, %v4135
      %v4248 = vpack.c.bf16 %v4216, %v4215
      %v4249 = vpack.c.bf16 %v4202, %v4201
      %v4250 = vpack.c.bf16 %v4186, %v4185
      %v4251 = vpack.c.bf16 %v4170, %v4169
      %v4252 = vpack.c.bf16 %v4154, %v4153
      %v4253 = vpack.c.bf16 %v4138, %v4137
      %v4254 = vpack.c.bf16 %v4218, %v4217
      %v4255 = vpack.c.bf16 %v4204, %v4203
      %v4256 = vpack.c.bf16 %v4188, %v4187
      %v4257 = vpack.c.bf16 %v4172, %v4171
      %v4258 = vpack.c.bf16 %v4156, %v4155
      %v4259 = vpack.c.bf16 %v4140, %v4139
      %v4260 = vpack.c.bf16 %v4220, %v4219
      %v4261 = vpack.c.bf16 %v4206, %v4205
      %v4262 = vpack.c.bf16 %v4190, %v4189
      %v4263 = vpack.c.bf16 %v4174, %v4173
      %v4264 = vpack.c.bf16 %v4158, %v4157
      %v4265 = vpack.c.bf16 %v4142, %v4141
      %v4266 = vpack.c.bf16 %v4222, %v4221
      %v4267 = vpack.c.bf16 %v4208, %v4207
      %v4268 = vpack.c.bf16 %v4192, %v4191
      %v4269 = vpack.c.bf16 %v4176, %v4175
      %v4270 = vpack.c.bf16 %v4160, %v4159
      %v4271 = vpack.c.bf16 %v4144, %v4143
      %v4272 = vpack.c.bf16 %v4224, %v4223
      %4273 = vst [vmem:[#allocation2 + $0xc00] sm:$0xff] %v4225
      %4274 = vst [vmem:[#allocation2 + $0xc08] sm:$0xff] %v4226
      %4275 = vst [vmem:[#allocation2 + $0xc10] sm:$0xff] %v4227
      %4276 = vst [vmem:[#allocation2 + $0xc18] sm:$0xff] %v4228
      %4277 = vst [vmem:[#allocation2 + $0xc20] sm:$0xff] %v4229
      %4278 = vst [vmem:[#allocation2 + $0xc28] sm:$0xff] %v4230
      %4279 = vst [vmem:[#allocation2 + $0xc30] sm:$0xff] %v4231
      %4280 = vst [vmem:[#allocation2 + $0xc38] sm:$0xff] %v4232
      %4281 = vst [vmem:[#allocation2 + $0xc40] sm:$0xff] %v4233
      %4282 = vst [vmem:[#allocation2 + $0xc48] sm:$0xff] %v4234
      %4283 = vst [vmem:[#allocation2 + $0xc50] sm:$0xff] %v4235
      %4284 = vst [vmem:[#allocation2 + $0xc58] sm:$0xff] %v4236
      %4285 = vst [vmem:[#allocation2 + $0xc60] sm:$0xff] %v4237
      %4286 = vst [vmem:[#allocation2 + $0xc68] sm:$0xff] %v4238
      %4287 = vst [vmem:[#allocation2 + $0xc70] sm:$0xff] %v4239
      %4288 = vst [vmem:[#allocation2 + $0xc78] sm:$0xff] %v4240
      %4289 = vst [vmem:[#allocation2 + $0xc80] sm:$0xff] %v4241
      %4290 = vst [vmem:[#allocation2 + $0xc88] sm:$0xff] %v4242
      %4291 = vst [vmem:[#allocation2 + $0xc90] sm:$0xff] %v4243
      %4292 = vst [vmem:[#allocation2 + $0xc98] sm:$0xff] %v4244
      %4293 = vst [vmem:[#allocation2 + $0xca0] sm:$0xff] %v4245
      %4294 = vst [vmem:[#allocation2 + $0xca8] sm:$0xff] %v4246
      %4295 = vst [vmem:[#allocation2 + $0xcb0] sm:$0xff] %v4247
      %4296 = vst [vmem:[#allocation2 + $0xcb8] sm:$0xff] %v4248
      %4297 = vst [vmem:[#allocation2 + $0xcc0] sm:$0xff] %v4249
      %4298 = vst [vmem:[#allocation2 + $0xcc8] sm:$0xff] %v4250
      %4299 = vst [vmem:[#allocation2 + $0xcd0] sm:$0xff] %v4251
      %4300 = vst [vmem:[#allocation2 + $0xcd8] sm:$0xff] %v4252
      %4301 = vst [vmem:[#allocation2 + $0xce0] sm:$0xff] %v4253
      %4302 = vst [vmem:[#allocation2 + $0xce8] sm:$0xff] %v4254
      %4303 = vst [vmem:[#allocation2 + $0xcf0] sm:$0xff] %v4255
      %4304 = vst [vmem:[#allocation2 + $0xcf8] sm:$0xff] %v4256
      %4305 = vst [vmem:[#allocation2 + $0xd00] sm:$0xff] %v4257
      %4306 = vst [vmem:[#allocation2 + $0xd08] sm:$0xff] %v4258
      %4307 = vst [vmem:[#allocation2 + $0xd10] sm:$0xff] %v4259
      %4308 = vst [vmem:[#allocation2 + $0xd18] sm:$0xff] %v4260
      %4309 = vst [vmem:[#allocation2 + $0xd20] sm:$0xff] %v4261
      %4310 = vst [vmem:[#allocation2 + $0xd28] sm:$0xff] %v4262
      %4311 = vst [vmem:[#allocation2 + $0xd30] sm:$0xff] %v4263
      %4312 = vst [vmem:[#allocation2 + $0xd38] sm:$0xff] %v4264
      %4313 = vst [vmem:[#allocation2 + $0xd40] sm:$0xff] %v4265
      %4314 = vst [vmem:[#allocation2 + $0xd48] sm:$0xff] %v4266
      %4315 = vst [vmem:[#allocation2 + $0xd50] sm:$0xff] %v4267
      %4316 = vst [vmem:[#allocation2 + $0xd58] sm:$0xff] %v4268
      %4317 = vst [vmem:[#allocation2 + $0xd60] sm:$0xff] %v4269
      %4318 = vst [vmem:[#allocation2 + $0xd68] sm:$0xff] %v4270
      %4319 = vst [vmem:[#allocation2 + $0xd70] sm:$0xff] %v4271
      %4320 = vst [vmem:[#allocation2 + $0xd78] sm:$0xff] %v4272
      %v4321 = vld [vmem:[%s4] sm:$0xff]
      %v4322 = vld [vmem:[%s4 + $0x8] sm:$0xff]
      %v4323 = vld [vmem:[%s4 + $0x10] sm:$0xff]
      %v4324 = vld [vmem:[%s4 + $0x18] sm:$0xff]
      %v4325 = vld [vmem:[%s4 + $0x20] sm:$0xf]
      %v4326 = vld [vmem:[%s4 + $0x24] sm:$0xff]
      %v4327 = vld [vmem:[%s4 + $0x2c] sm:$0xff]
      %v4328 = vld [vmem:[%s4 + $0x34] sm:$0xff]
      %v4329 = vld [vmem:[%s4 + $0x3c] sm:$0xff]
      %v4330 = vld [vmem:[%s4 + $0x44] sm:$0xf]
      %v4331 = vld [vmem:[%s4 + $0x48] sm:$0xff]
      %v4332 = vld [vmem:[%s4 + $0x50] sm:$0xff]
      %v4333 = vld [vmem:[%s4 + $0x58] sm:$0xff]
      %v4334 = vld [vmem:[%s4 + $0x60] sm:$0xff]
      %v4335 = vld [vmem:[%s4 + $0x68] sm:$0xf]
      %v4336 = vld [vmem:[%s4 + $0x6c] sm:$0xff]
      %v4337 = vld [vmem:[%s4 + $0x74] sm:$0xff]
      %v4338 = vld [vmem:[%s4 + $0x7c] sm:$0xff]
      %v4339 = vld [vmem:[%s4 + $0x84] sm:$0xff]
      %v4340 = vld [vmem:[%s4 + $0x8c] sm:$0xf]
      %v4341 = vld [vmem:[%s4 + $0x90] sm:$0xff]
      %v4342 = vld [vmem:[%s4 + $0x98] sm:$0xff]
      %v4343 = vld [vmem:[%s4 + $0xa0] sm:$0xff]
      %v4344 = vld [vmem:[%s4 + $0xa8] sm:$0xff]
      %v4345 = vld [vmem:[%s4 + $0xb0] sm:$0xf]
      %v4346 = vld [vmem:[%s4 + $0xb4] sm:$0xff]
      %v4347 = vld [vmem:[%s4 + $0xbc] sm:$0xff]
      %v4348 = vld [vmem:[%s4 + $0xc4] sm:$0xff]
      %v4349 = vld [vmem:[%s4 + $0xcc] sm:$0xff]
      %v4350 = vld [vmem:[%s4 + $0xd4] sm:$0xf]
      %v4351 = vld [vmem:[%s4 + $0xd8] sm:$0xff]
      %v4352 = vld [vmem:[%s4 + $0xe0] sm:$0xff]
      %v4353 = vld [vmem:[%s4 + $0xe8] sm:$0xff]
      %v4354 = vld [vmem:[%s4 + $0xf0] sm:$0xff]
      %v4355 = vld [vmem:[%s4 + $0xf8] sm:$0xf]
      %v4356 = vld [vmem:[%s4 + $0xfc] sm:$0xff]
      %v4357 = vld [vmem:[%s4 + $0x104] sm:$0xff]
      %v4358 = vld [vmem:[%s4 + $0x10c] sm:$0xff]
      %v4359 = vld [vmem:[%s4 + $0x114] sm:$0xff]
      %v4360 = vld [vmem:[%s4 + $0x11c] sm:$0xf]
      %v4361 = vld [vmem:[%s4 + $0x120] sm:$0xff]
      %v4362 = vld [vmem:[%s4 + $0x128] sm:$0xff]
      %v4363 = vld [vmem:[%s4 + $0x130] sm:$0xff]
      %v4364 = vld [vmem:[%s4 + $0x138] sm:$0xff]
      %v4365 = vld [vmem:[%s4 + $0x140] sm:$0xf]
      %v4366 = vld [vmem:[%s4 + $0x144] sm:$0xff]
      %v4367 = vld [vmem:[%s4 + $0x14c] sm:$0xff]
      %v4368 = vld [vmem:[%s4 + $0x154] sm:$0xff]
      %v4369 = vld [vmem:[%s4 + $0x15c] sm:$0xff]
      %v4370 = vld [vmem:[%s4 + $0x164] sm:$0xf]
      %v4371 = vld [vmem:[%s4 + $0x168] sm:$0xff]
      %v4372 = vld [vmem:[%s4 + $0x170] sm:$0xff]
      %v4373 = vld [vmem:[%s4 + $0x178] sm:$0xff]
      %v4374 = vld [vmem:[%s4 + $0x180] sm:$0xff]
      %v4375 = vld [vmem:[%s4 + $0x188] sm:$0xf]
      %v4376 = vld [vmem:[%s4 + $0x18c] sm:$0xff]
      %v4377 = vld [vmem:[%s4 + $0x194] sm:$0xff]
      %v4378 = vld [vmem:[%s4 + $0x19c] sm:$0xff]
      %v4379 = vld [vmem:[%s4 + $0x1a4] sm:$0xff]
      %v4380 = vld [vmem:[%s4 + $0x1ac] sm:$0xf]
      %v4381 = vld [vmem:[%s4 + $0x1b0] sm:$0xff]
      %v4382 = vld [vmem:[%s4 + $0x1b8] sm:$0xff]
      %v4383 = vld [vmem:[%s4 + $0x1c0] sm:$0xff]
      %v4384 = vld [vmem:[%s4 + $0x1c8] sm:$0xff]
      %v4385 = vld [vmem:[%s4 + $0x1d0] sm:$0xf]
      %v4386 = vld [vmem:[%s4 + $0x1d4] sm:$0xff]
      %v4387 = vld [vmem:[%s4 + $0x1dc] sm:$0xff]
      %v4388 = vld [vmem:[%s4 + $0x1e4] sm:$0xff]
      %v4389 = vld [vmem:[%s4 + $0x1ec] sm:$0xff]
      %v4390 = vld [vmem:[%s4 + $0x1f4] sm:$0xf]
      %v4391 = vld [vmem:[%s4 + $0x1f8] sm:$0xff]
      %v4392 = vld [vmem:[%s4 + $0x200] sm:$0xff]
      %v4393 = vld [vmem:[%s4 + $0x208] sm:$0xff]
      %v4394 = vld [vmem:[%s4 + $0x210] sm:$0xff]
      %v4395 = vld [vmem:[%s4 + $0x218] sm:$0xf]
      %v4396 = vld [vmem:[%s4 + $0x21c] sm:$0xff]
      %v4397 = vld [vmem:[%s4 + $0x224] sm:$0xff]
      %v4398 = vld [vmem:[%s4 + $0x22c] sm:$0xff]
      %v4399 = vld [vmem:[%s4 + $0x234] sm:$0xff]
      %v4400 = vld [vmem:[%s4 + $0x23c] sm:$0xf]
      %v4401 = vld [vmem:[#allocation2] sm:$0xff]
      %v4402 = vld [vmem:[#allocation2 + $0x8] sm:$0xff]
      %v4403 = vld [vmem:[#allocation2 + $0x10] sm:$0xff]
      %v4404 = vld [vmem:[#allocation2 + $0x18] sm:$0xff]
      %v4405 = vld [vmem:[#allocation2 + $0x20] sm:$0xff]
      %v4406 = vld [vmem:[#allocation2 + $0x28] sm:$0xff]
      %v4407 = vld [vmem:[#allocation2 + $0x30] sm:$0xff]
      %v4408 = vld [vmem:[#allocation2 + $0x38] sm:$0xff]
      %v4409 = vld [vmem:[#allocation2 + $0x40] sm:$0xff]
      %v4410 = vld [vmem:[#allocation2 + $0x48] sm:$0xff]
      %v4411 = vld [vmem:[#allocation2 + $0x50] sm:$0xff]
      %v4412 = vld [vmem:[#allocation2 + $0x58] sm:$0xff]
      %v4413 = vld [vmem:[#allocation2 + $0x60] sm:$0xff]
      %v4414 = vld [vmem:[#allocation2 + $0x68] sm:$0xff]
      %v4415 = vld [vmem:[#allocation2 + $0x70] sm:$0xff]
      %v4416 = vld [vmem:[#allocation2 + $0x78] sm:$0xff]
      %v4417 = vld [vmem:[#allocation2 + $0x80] sm:$0xff]
      %v4418 = vld [vmem:[#allocation2 + $0x88] sm:$0xff]
      %v4419 = vld [vmem:[#allocation2 + $0x90] sm:$0xff]
      %v4420 = vld [vmem:[#allocation2 + $0x98] sm:$0xff]
      %v4421 = vld [vmem:[#allocation2 + $0xa0] sm:$0xff]
      %v4422 = vld [vmem:[#allocation2 + $0xa8] sm:$0xff]
      %v4423 = vld [vmem:[#allocation2 + $0xb0] sm:$0xff]
      %v4424 = vld [vmem:[#allocation2 + $0xb8] sm:$0xff]
      %v4425 = vld [vmem:[#allocation2 + $0xc0] sm:$0xff]
      %v4426 = vld [vmem:[#allocation2 + $0xc8] sm:$0xff]
      %v4427 = vld [vmem:[#allocation2 + $0xd0] sm:$0xff]
      %v4428 = vld [vmem:[#allocation2 + $0xd8] sm:$0xff]
      %v4429 = vld [vmem:[#allocation2 + $0xe0] sm:$0xff]
      %v4430 = vld [vmem:[#allocation2 + $0xe8] sm:$0xff]
      %v4431 = vld [vmem:[#allocation2 + $0xf0] sm:$0xff]
      %v4432 = vld [vmem:[#allocation2 + $0xf8] sm:$0xff]
      %v4433 = vld [vmem:[#allocation2 + $0x100] sm:$0xff]
      %v4434 = vld [vmem:[#allocation2 + $0x108] sm:$0xff]
      %v4435 = vld [vmem:[#allocation2 + $0x110] sm:$0xff]
      %v4436 = vld [vmem:[#allocation2 + $0x118] sm:$0xff]
      %v4437 = vld [vmem:[#allocation2 + $0x120] sm:$0xff]
      %v4438 = vld [vmem:[#allocation2 + $0x128] sm:$0xff]
      %v4439 = vld [vmem:[#allocation2 + $0x130] sm:$0xff]
      %v4440 = vld [vmem:[#allocation2 + $0x138] sm:$0xff]
      %v4441 = vld [vmem:[#allocation2 + $0x140] sm:$0xff]
      %v4442 = vld [vmem:[#allocation2 + $0x148] sm:$0xff]
      %v4443 = vld [vmem:[#allocation2 + $0x150] sm:$0xff]
      %v4444 = vld [vmem:[#allocation2 + $0x158] sm:$0xff]
      %v4445 = vld [vmem:[#allocation2 + $0x160] sm:$0xff]
      %v4446 = vld [vmem:[#allocation2 + $0x168] sm:$0xff]
      %v4447 = vld [vmem:[#allocation2 + $0x170] sm:$0xff]
      %v4448 = vld [vmem:[#allocation2 + $0x178] sm:$0xff]
      %v4449 = vld [vmem:[#allocation2 + $0x180] sm:$0xff]
      %v4450 = vld [vmem:[#allocation2 + $0x188] sm:$0xff]
      %v4451 = vld [vmem:[#allocation2 + $0x190] sm:$0xff]
      %v4452 = vld [vmem:[#allocation2 + $0x198] sm:$0xff]
      %v4453 = vld [vmem:[#allocation2 + $0x1a0] sm:$0xff]
      %v4454 = vld [vmem:[#allocation2 + $0x1a8] sm:$0xff]
      %v4455 = vld [vmem:[#allocation2 + $0x1b0] sm:$0xff]
      %v4456 = vld [vmem:[#allocation2 + $0x1b8] sm:$0xff]
      %v4457 = vld [vmem:[#allocation2 + $0x1c0] sm:$0xff]
      %v4458 = vld [vmem:[#allocation2 + $0x1c8] sm:$0xff]
      %v4459 = vld [vmem:[#allocation2 + $0x1d0] sm:$0xff]
      %v4460 = vld [vmem:[#allocation2 + $0x1d8] sm:$0xff]
      %v4461 = vld [vmem:[#allocation2 + $0x1e0] sm:$0xff]
      %v4462 = vld [vmem:[#allocation2 + $0x1e8] sm:$0xff]
      %v4463 = vld [vmem:[#allocation2 + $0x1f0] sm:$0xff]
      %v4464 = vld [vmem:[#allocation2 + $0x1f8] sm:$0xff]
      %v4465 = vld [vmem:[#allocation2 + $0x200] sm:$0xff]
      %v4466 = vld [vmem:[#allocation2 + $0x208] sm:$0xff]
      %v4467 = vld [vmem:[#allocation2 + $0x210] sm:$0xff]
      %v4468 = vld [vmem:[#allocation2 + $0x218] sm:$0xff]
      %v4469 = vld [vmem:[#allocation2 + $0x220] sm:$0xff]
      %v4470 = vld [vmem:[#allocation2 + $0x228] sm:$0xff]
      %v4471 = vld [vmem:[#allocation2 + $0x230] sm:$0xff]
      %v4472 = vld [vmem:[#allocation2 + $0x238] sm:$0xff]
      %v4473 = vld [vmem:[#allocation2 + $0x240] sm:$0xff]
      %v4474 = vld [vmem:[#allocation2 + $0x248] sm:$0xff]
      %v4475 = vld [vmem:[#allocation2 + $0x250] sm:$0xff]
      %v4476 = vld [vmem:[#allocation2 + $0x258] sm:$0xff]
      %v4477 = vld [vmem:[#allocation2 + $0x260] sm:$0xff]
      %v4478 = vld [vmem:[#allocation2 + $0x268] sm:$0xff]
      %v4479 = vld [vmem:[#allocation2 + $0x270] sm:$0xff]
      %v4480 = vld [vmem:[#allocation2 + $0x278] sm:$0xff]
      %v4481 = vld [vmem:[#allocation2 + $0x280] sm:$0xff]
      %v4482 = vld [vmem:[#allocation2 + $0x288] sm:$0xff]
      %v4483 = vld [vmem:[#allocation2 + $0x290] sm:$0xff]
      %v4484 = vld [vmem:[#allocation2 + $0x298] sm:$0xff]
      %v4485 = vld [vmem:[#allocation2 + $0x2a0] sm:$0xff]
      %v4486 = vld [vmem:[#allocation2 + $0x2a8] sm:$0xff]
      %v4487 = vld [vmem:[#allocation2 + $0x2b0] sm:$0xff]
      %v4488 = vld [vmem:[#allocation2 + $0x2b8] sm:$0xff]
      %v4489 = vld [vmem:[#allocation2 + $0x2c0] sm:$0xff]
      %v4490 = vld [vmem:[#allocation2 + $0x2c8] sm:$0xff]
      %v4491 = vld [vmem:[#allocation2 + $0x2d0] sm:$0xff]
      %v4492 = vld [vmem:[#allocation2 + $0x2d8] sm:$0xff]
      %v4493 = vld [vmem:[#allocation2 + $0x2e0] sm:$0xff]
      %v4494 = vld [vmem:[#allocation2 + $0x2e8] sm:$0xff]
      %v4495 = vld [vmem:[#allocation2 + $0x2f0] sm:$0xff]
      %v4496 = vld [vmem:[#allocation2 + $0x2f8] sm:$0xff]
      %v4497 = vld [vmem:[#allocation2 + $0x300] sm:$0xff]
      %v4498 = vld [vmem:[#allocation2 + $0x308] sm:$0xff]
      %v4499 = vld [vmem:[#allocation2 + $0x310] sm:$0xff]
      %v4500 = vld [vmem:[#allocation2 + $0x318] sm:$0xff]
      %v4501 = vld [vmem:[#allocation2 + $0x320] sm:$0xff]
      %v4502 = vld [vmem:[#allocation2 + $0x328] sm:$0xff]
      %v4503 = vld [vmem:[#allocation2 + $0x330] sm:$0xff]
      %v4504 = vld [vmem:[#allocation2 + $0x338] sm:$0xff]
      %v4505 = vld [vmem:[#allocation2 + $0x340] sm:$0xff]
      %v4506 = vld [vmem:[#allocation2 + $0x348] sm:$0xff]
      %v4507 = vld [vmem:[#allocation2 + $0x350] sm:$0xff]
      %v4508 = vld [vmem:[#allocation2 + $0x358] sm:$0xff]
      %v4509 = vld [vmem:[#allocation2 + $0x360] sm:$0xff]
      %v4510 = vld [vmem:[#allocation2 + $0x368] sm:$0xff]
      %v4511 = vld [vmem:[#allocation2 + $0x370] sm:$0xff]
      %v4512 = vld [vmem:[#allocation2 + $0x378] sm:$0xff]
      %v4513 = vld [vmem:[#allocation2 + $0x380] sm:$0xff]
      %v4514 = vld [vmem:[#allocation2 + $0x388] sm:$0xff]
      %v4515 = vld [vmem:[#allocation2 + $0x390] sm:$0xff]
      %v4516 = vld [vmem:[#allocation2 + $0x398] sm:$0xff]
      %v4517 = vld [vmem:[#allocation2 + $0x3a0] sm:$0xff]
      %v4518 = vld [vmem:[#allocation2 + $0x3a8] sm:$0xff]
      %v4519 = vld [vmem:[#allocation2 + $0x3b0] sm:$0xff]
      %v4520 = vld [vmem:[#allocation2 + $0x3b8] sm:$0xff]
      %v4521 = vld [vmem:[#allocation2 + $0x3c0] sm:$0xff]
      %v4522 = vld [vmem:[#allocation2 + $0x3c8] sm:$0xff]
      %v4523 = vld [vmem:[#allocation2 + $0x3d0] sm:$0xff]
      %v4524 = vld [vmem:[#allocation2 + $0x3d8] sm:$0xff]
      %v4525 = vld [vmem:[#allocation2 + $0x3e0] sm:$0xff]
      %v4526 = vld [vmem:[#allocation2 + $0x3e8] sm:$0xff]
      %v4527 = vld [vmem:[#allocation2 + $0x3f0] sm:$0xff]
      %v4528 = vld [vmem:[#allocation2 + $0x3f8] sm:$0xff]
      %v4529 = vld [vmem:[#allocation2 + $0x400] sm:$0xff]
      %v4530 = vld [vmem:[#allocation2 + $0x408] sm:$0xff]
      %v4531 = vld [vmem:[#allocation2 + $0x410] sm:$0xff]
      %v4532 = vld [vmem:[#allocation2 + $0x418] sm:$0xff]
      %v4533 = vld [vmem:[#allocation2 + $0x420] sm:$0xff]
      %v4534 = vld [vmem:[#allocation2 + $0x428] sm:$0xff]
      %v4535 = vld [vmem:[#allocation2 + $0x430] sm:$0xff]
      %v4536 = vld [vmem:[#allocation2 + $0x438] sm:$0xff]
      %v4537 = vld [vmem:[#allocation2 + $0x440] sm:$0xff]
      %v4538 = vld [vmem:[#allocation2 + $0x448] sm:$0xff]
      %v4539 = vld [vmem:[#allocation2 + $0x450] sm:$0xff]
      %v4540 = vld [vmem:[#allocation2 + $0x458] sm:$0xff]
      %v4541 = vld [vmem:[#allocation2 + $0x460] sm:$0xff]
      %v4542 = vld [vmem:[#allocation2 + $0x468] sm:$0xff]
      %v4543 = vld [vmem:[#allocation2 + $0x470] sm:$0xff]
      %v4544 = vld [vmem:[#allocation2 + $0x478] sm:$0xff]
      %v4545 = vld [vmem:[#allocation2 + $0x480] sm:$0xff]
      %v4546 = vld [vmem:[#allocation2 + $0x488] sm:$0xff]
      %v4547 = vld [vmem:[#allocation2 + $0x490] sm:$0xff]
      %v4548 = vld [vmem:[#allocation2 + $0x498] sm:$0xff]
      %v4549 = vld [vmem:[#allocation2 + $0x4a0] sm:$0xff]
      %v4550 = vld [vmem:[#allocation2 + $0x4a8] sm:$0xff]
      %v4551 = vld [vmem:[#allocation2 + $0x4b0] sm:$0xff]
      %v4552 = vld [vmem:[#allocation2 + $0x4b8] sm:$0xff]
      %v4553 = vld [vmem:[#allocation2 + $0x4c0] sm:$0xff]
      %v4554 = vld [vmem:[#allocation2 + $0x4c8] sm:$0xff]
      %v4555 = vld [vmem:[#allocation2 + $0x4d0] sm:$0xff]
      %v4556 = vld [vmem:[#allocation2 + $0x4d8] sm:$0xff]
      %v4557 = vld [vmem:[#allocation2 + $0x4e0] sm:$0xff]
      %v4558 = vld [vmem:[#allocation2 + $0x4e8] sm:$0xff]
      %v4559 = vld [vmem:[#allocation2 + $0x4f0] sm:$0xff]
      %v4560 = vld [vmem:[#allocation2 + $0x4f8] sm:$0xff]
      %v4561 = vld [vmem:[#allocation2 + $0x500] sm:$0xff]
      %v4562 = vld [vmem:[#allocation2 + $0x508] sm:$0xff]
      %v4563 = vld [vmem:[#allocation2 + $0x510] sm:$0xff]
      %v4564 = vld [vmem:[#allocation2 + $0x518] sm:$0xff]
      %v4565 = vld [vmem:[#allocation2 + $0x520] sm:$0xff]
      %v4566 = vld [vmem:[#allocation2 + $0x528] sm:$0xff]
      %v4567 = vld [vmem:[#allocation2 + $0x530] sm:$0xff]
      %v4568 = vld [vmem:[#allocation2 + $0x538] sm:$0xff]
      %v4569 = vld [vmem:[#allocation2 + $0x540] sm:$0xff]
      %v4570 = vld [vmem:[#allocation2 + $0x548] sm:$0xff]
      %v4571 = vld [vmem:[#allocation2 + $0x550] sm:$0xff]
      %v4572 = vld [vmem:[#allocation2 + $0x558] sm:$0xff]
      %v4573 = vld [vmem:[#allocation2 + $0x560] sm:$0xff]
      %v4574 = vld [vmem:[#allocation2 + $0x568] sm:$0xff]
      %v4575 = vld [vmem:[#allocation2 + $0x570] sm:$0xff]
      %v4576 = vld [vmem:[#allocation2 + $0x578] sm:$0xff]
      %v4577 = vld [vmem:[#allocation2 + $0x580] sm:$0xff]
      %v4578 = vld [vmem:[#allocation2 + $0x588] sm:$0xff]
      %v4579 = vld [vmem:[#allocation2 + $0x590] sm:$0xff]
      %v4580 = vld [vmem:[#allocation2 + $0x598] sm:$0xff]
      %v4581 = vld [vmem:[#allocation2 + $0x5a0] sm:$0xff]
      %v4582 = vld [vmem:[#allocation2 + $0x5a8] sm:$0xff]
      %v4583 = vld [vmem:[#allocation2 + $0x5b0] sm:$0xff]
      %v4584 = vld [vmem:[#allocation2 + $0x5b8] sm:$0xff]
      %v4585 = vld [vmem:[#allocation2 + $0x5c0] sm:$0xff]
      %v4586 = vld [vmem:[#allocation2 + $0x5c8] sm:$0xff]
      %v4587 = vld [vmem:[#allocation2 + $0x5d0] sm:$0xff]
      %v4588 = vld [vmem:[#allocation2 + $0x5d8] sm:$0xff]
      %v4589 = vld [vmem:[#allocation2 + $0x5e0] sm:$0xff]
      %v4590 = vld [vmem:[#allocation2 + $0x5e8] sm:$0xff]
      %v4591 = vld [vmem:[#allocation2 + $0x5f0] sm:$0xff]
      %v4592 = vld [vmem:[#allocation2 + $0x5f8] sm:$0xff]
      %v4593 = vld [vmem:[#allocation2 + $0x600] sm:$0xff]
      %v4594 = vld [vmem:[#allocation2 + $0x608] sm:$0xff]
      %v4595 = vld [vmem:[#allocation2 + $0x610] sm:$0xff]
      %v4596 = vld [vmem:[#allocation2 + $0x618] sm:$0xff]
      %v4597 = vld [vmem:[#allocation2 + $0x620] sm:$0xff]
      %v4598 = vld [vmem:[#allocation2 + $0x628] sm:$0xff]
      %v4599 = vld [vmem:[#allocation2 + $0x630] sm:$0xff]
      %v4600 = vld [vmem:[#allocation2 + $0x638] sm:$0xff]
      %v4601 = vld [vmem:[#allocation2 + $0x640] sm:$0xff]
      %v4602 = vld [vmem:[#allocation2 + $0x648] sm:$0xff]
      %v4603 = vld [vmem:[#allocation2 + $0x650] sm:$0xff]
      %v4604 = vld [vmem:[#allocation2 + $0x658] sm:$0xff]
      %v4605 = vld [vmem:[#allocation2 + $0x660] sm:$0xff]
      %v4606 = vld [vmem:[#allocation2 + $0x668] sm:$0xff]
      %v4607 = vld [vmem:[#allocation2 + $0x670] sm:$0xff]
      %v4608 = vld [vmem:[#allocation2 + $0x678] sm:$0xff]
      %v4609 = vld [vmem:[#allocation2 + $0x680] sm:$0xff]
      %v4610 = vld [vmem:[#allocation2 + $0x688] sm:$0xff]
      %v4611 = vld [vmem:[#allocation2 + $0x690] sm:$0xff]
      %v4612 = vld [vmem:[#allocation2 + $0x698] sm:$0xff]
      %v4613 = vld [vmem:[#allocation2 + $0x6a0] sm:$0xff]
      %v4614 = vld [vmem:[#allocation2 + $0x6a8] sm:$0xff]
      %v4615 = vld [vmem:[#allocation2 + $0x6b0] sm:$0xff]
      %v4616 = vld [vmem:[#allocation2 + $0x6b8] sm:$0xff]
      %v4617 = vld [vmem:[#allocation2 + $0x6c0] sm:$0xff]
      %v4618 = vld [vmem:[#allocation2 + $0x6c8] sm:$0xff]
      %v4619 = vld [vmem:[#allocation2 + $0x6d0] sm:$0xff]
      %v4620 = vld [vmem:[#allocation2 + $0x6d8] sm:$0xff]
      %v4621 = vld [vmem:[#allocation2 + $0x6e0] sm:$0xff]
      %v4622 = vld [vmem:[#allocation2 + $0x6e8] sm:$0xff]
      %v4623 = vld [vmem:[#allocation2 + $0x6f0] sm:$0xff]
      %v4624 = vld [vmem:[#allocation2 + $0x6f8] sm:$0xff]
      %v4625 = vld [vmem:[#allocation2 + $0x700] sm:$0xff]
      %v4626 = vld [vmem:[#allocation2 + $0x708] sm:$0xff]
      %v4627 = vld [vmem:[#allocation2 + $0x710] sm:$0xff]
      %v4628 = vld [vmem:[#allocation2 + $0x718] sm:$0xff]
      %v4629 = vld [vmem:[#allocation2 + $0x720] sm:$0xff]
      %v4630 = vld [vmem:[#allocation2 + $0x728] sm:$0xff]
      %v4631 = vld [vmem:[#allocation2 + $0x730] sm:$0xff]
      %v4632 = vld [vmem:[#allocation2 + $0x738] sm:$0xff]
      %v4633 = vld [vmem:[#allocation2 + $0x740] sm:$0xff]
      %v4634 = vld [vmem:[#allocation2 + $0x748] sm:$0xff]
      %v4635 = vld [vmem:[#allocation2 + $0x750] sm:$0xff]
      %v4636 = vld [vmem:[#allocation2 + $0x758] sm:$0xff]
      %v4637 = vld [vmem:[#allocation2 + $0x760] sm:$0xff]
      %v4638 = vld [vmem:[#allocation2 + $0x768] sm:$0xff]
      %v4639 = vld [vmem:[#allocation2 + $0x770] sm:$0xff]
      %v4640 = vld [vmem:[#allocation2 + $0x778] sm:$0xff]
      %v4641 = vld [vmem:[#allocation2 + $0x780] sm:$0xff]
      %v4642 = vld [vmem:[#allocation2 + $0x788] sm:$0xff]
      %v4643 = vld [vmem:[#allocation2 + $0x790] sm:$0xff]
      %v4644 = vld [vmem:[#allocation2 + $0x798] sm:$0xff]
      %v4645 = vld [vmem:[#allocation2 + $0x7a0] sm:$0xff]
      %v4646 = vld [vmem:[#allocation2 + $0x7a8] sm:$0xff]
      %v4647 = vld [vmem:[#allocation2 + $0x7b0] sm:$0xff]
      %v4648 = vld [vmem:[#allocation2 + $0x7b8] sm:$0xff]
      %v4649 = vld [vmem:[#allocation2 + $0x7c0] sm:$0xff]
      %v4650 = vld [vmem:[#allocation2 + $0x7c8] sm:$0xff]
      %v4651 = vld [vmem:[#allocation2 + $0x7d0] sm:$0xff]
      %v4652 = vld [vmem:[#allocation2 + $0x7d8] sm:$0xff]
      %v4653 = vld [vmem:[#allocation2 + $0x7e0] sm:$0xff]
      %v4654 = vld [vmem:[#allocation2 + $0x7e8] sm:$0xff]
      %v4655 = vld [vmem:[#allocation2 + $0x7f0] sm:$0xff]
      %v4656 = vld [vmem:[#allocation2 + $0x7f8] sm:$0xff]
      %v4657 = vld [vmem:[#allocation2 + $0x800] sm:$0xff]
      %v4658 = vld [vmem:[#allocation2 + $0x808] sm:$0xff]
      %v4659 = vld [vmem:[#allocation2 + $0x810] sm:$0xff]
      %v4660 = vld [vmem:[#allocation2 + $0x818] sm:$0xff]
      %v4661 = vld [vmem:[#allocation2 + $0x820] sm:$0xff]
      %v4662 = vld [vmem:[#allocation2 + $0x828] sm:$0xff]
      %v4663 = vld [vmem:[#allocation2 + $0x830] sm:$0xff]
      %v4664 = vld [vmem:[#allocation2 + $0x838] sm:$0xff]
      %v4665 = vld [vmem:[#allocation2 + $0x840] sm:$0xff]
      %v4666 = vld [vmem:[#allocation2 + $0x848] sm:$0xff]
      %v4667 = vld [vmem:[#allocation2 + $0x850] sm:$0xff]
      %v4668 = vld [vmem:[#allocation2 + $0x858] sm:$0xff]
      %v4669 = vld [vmem:[#allocation2 + $0x860] sm:$0xff]
      %v4670 = vld [vmem:[#allocation2 + $0x868] sm:$0xff]
      %v4671 = vld [vmem:[#allocation2 + $0x870] sm:$0xff]
      %v4672 = vld [vmem:[#allocation2 + $0x878] sm:$0xff]
      %v4673 = vld [vmem:[#allocation2 + $0x880] sm:$0xff]
      %v4674 = vld [vmem:[#allocation2 + $0x888] sm:$0xff]
      %v4675 = vld [vmem:[#allocation2 + $0x890] sm:$0xff]
      %v4676 = vld [vmem:[#allocation2 + $0x898] sm:$0xff]
      %v4677 = vld [vmem:[#allocation2 + $0x8a0] sm:$0xff]
      %v4678 = vld [vmem:[#allocation2 + $0x8a8] sm:$0xff]
      %v4679 = vld [vmem:[#allocation2 + $0x8b0] sm:$0xff]
      %v4680 = vld [vmem:[#allocation2 + $0x8b8] sm:$0xff]
      %v4681 = vld [vmem:[#allocation2 + $0x8c0] sm:$0xff]
      %v4682 = vld [vmem:[#allocation2 + $0x8c8] sm:$0xff]
      %v4683 = vld [vmem:[#allocation2 + $0x8d0] sm:$0xff]
      %v4684 = vld [vmem:[#allocation2 + $0x8d8] sm:$0xff]
      %v4685 = vld [vmem:[#allocation2 + $0x8e0] sm:$0xff]
      %v4686 = vld [vmem:[#allocation2 + $0x8e8] sm:$0xff]
      %v4687 = vld [vmem:[#allocation2 + $0x8f0] sm:$0xff]
      %v4688 = vld [vmem:[#allocation2 + $0x8f8] sm:$0xff]
      %v4689 = vld [vmem:[#allocation2 + $0x900] sm:$0xff]
      %v4690 = vld [vmem:[#allocation2 + $0x908] sm:$0xff]
      %v4691 = vld [vmem:[#allocation2 + $0x910] sm:$0xff]
      %v4692 = vld [vmem:[#allocation2 + $0x918] sm:$0xff]
      %v4693 = vld [vmem:[#allocation2 + $0x920] sm:$0xff]
      %v4694 = vld [vmem:[#allocation2 + $0x928] sm:$0xff]
      %v4695 = vld [vmem:[#allocation2 + $0x930] sm:$0xff]
      %v4696 = vld [vmem:[#allocation2 + $0x938] sm:$0xff]
      %v4697 = vld [vmem:[#allocation2 + $0x940] sm:$0xff]
      %v4698 = vld [vmem:[#allocation2 + $0x948] sm:$0xff]
      %v4699 = vld [vmem:[#allocation2 + $0x950] sm:$0xff]
      %v4700 = vld [vmem:[#allocation2 + $0x958] sm:$0xff]
      %v4701 = vld [vmem:[#allocation2 + $0x960] sm:$0xff]
      %v4702 = vld [vmem:[#allocation2 + $0x968] sm:$0xff]
      %v4703 = vld [vmem:[#allocation2 + $0x970] sm:$0xff]
      %v4704 = vld [vmem:[#allocation2 + $0x978] sm:$0xff]
      %v4705 = vld [vmem:[#allocation2 + $0x980] sm:$0xff]
      %v4706 = vld [vmem:[#allocation2 + $0x988] sm:$0xff]
      %v4707 = vld [vmem:[#allocation2 + $0x990] sm:$0xff]
      %v4708 = vld [vmem:[#allocation2 + $0x998] sm:$0xff]
      %v4709 = vld [vmem:[#allocation2 + $0x9a0] sm:$0xff]
      %v4710 = vld [vmem:[#allocation2 + $0x9a8] sm:$0xff]
      %v4711 = vld [vmem:[#allocation2 + $0x9b0] sm:$0xff]
      %v4712 = vld [vmem:[#allocation2 + $0x9b8] sm:$0xff]
      %v4713 = vld [vmem:[#allocation2 + $0x9c0] sm:$0xff]
      %v4714 = vld [vmem:[#allocation2 + $0x9c8] sm:$0xff]
      %v4715 = vld [vmem:[#allocation2 + $0x9d0] sm:$0xff]
      %v4716 = vld [vmem:[#allocation2 + $0x9d8] sm:$0xff]
      %v4717 = vld [vmem:[#allocation2 + $0x9e0] sm:$0xff]
      %v4718 = vld [vmem:[#allocation2 + $0x9e8] sm:$0xff]
      %v4719 = vld [vmem:[#allocation2 + $0x9f0] sm:$0xff]
      %v4720 = vld [vmem:[#allocation2 + $0x9f8] sm:$0xff]
      %v4721 = vld [vmem:[#allocation2 + $0xa00] sm:$0xff]
      %v4722 = vld [vmem:[#allocation2 + $0xa08] sm:$0xff]
      %v4723 = vld [vmem:[#allocation2 + $0xa10] sm:$0xff]
      %v4724 = vld [vmem:[#allocation2 + $0xa18] sm:$0xff]
      %v4725 = vld [vmem:[#allocation2 + $0xa20] sm:$0xff]
      %v4726 = vld [vmem:[#allocation2 + $0xa28] sm:$0xff]
      %v4727 = vld [vmem:[#allocation2 + $0xa30] sm:$0xff]
      %v4728 = vld [vmem:[#allocation2 + $0xa38] sm:$0xff]
      %v4729 = vld [vmem:[#allocation2 + $0xa40] sm:$0xff]
      %v4730 = vld [vmem:[#allocation2 + $0xa48] sm:$0xff]
      %v4731 = vld [vmem:[#allocation2 + $0xa50] sm:$0xff]
      %v4732 = vld [vmem:[#allocation2 + $0xa58] sm:$0xff]
      %v4733 = vld [vmem:[#allocation2 + $0xa60] sm:$0xff]
      %v4734 = vld [vmem:[#allocation2 + $0xa68] sm:$0xff]
      %v4735 = vld [vmem:[#allocation2 + $0xa70] sm:$0xff]
      %v4736 = vld [vmem:[#allocation2 + $0xa78] sm:$0xff]
      %v4737 = vld [vmem:[#allocation2 + $0xa80] sm:$0xff]
      %v4738 = vld [vmem:[#allocation2 + $0xa88] sm:$0xff]
      %v4739 = vld [vmem:[#allocation2 + $0xa90] sm:$0xff]
      %v4740 = vld [vmem:[#allocation2 + $0xa98] sm:$0xff]
      %v4741 = vld [vmem:[#allocation2 + $0xaa0] sm:$0xff]
      %v4742 = vld [vmem:[#allocation2 + $0xaa8] sm:$0xff]
      %v4743 = vld [vmem:[#allocation2 + $0xab0] sm:$0xff]
      %v4744 = vld [vmem:[#allocation2 + $0xab8] sm:$0xff]
      %v4745 = vld [vmem:[#allocation2 + $0xac0] sm:$0xff]
      %v4746 = vld [vmem:[#allocation2 + $0xac8] sm:$0xff]
      %v4747 = vld [vmem:[#allocation2 + $0xad0] sm:$0xff]
      %v4748 = vld [vmem:[#allocation2 + $0xad8] sm:$0xff]
      %v4749 = vld [vmem:[#allocation2 + $0xae0] sm:$0xff]
      %v4750 = vld [vmem:[#allocation2 + $0xae8] sm:$0xff]
      %v4751 = vld [vmem:[#allocation2 + $0xaf0] sm:$0xff]
      %v4752 = vld [vmem:[#allocation2 + $0xaf8] sm:$0xff]
      %v4753 = vld [vmem:[#allocation2 + $0xb00] sm:$0xff]
      %v4754 = vld [vmem:[#allocation2 + $0xb08] sm:$0xff]
      %v4755 = vld [vmem:[#allocation2 + $0xb10] sm:$0xff]
      %v4756 = vld [vmem:[#allocation2 + $0xb18] sm:$0xff]
      %v4757 = vld [vmem:[#allocation2 + $0xb20] sm:$0xff]
      %v4758 = vld [vmem:[#allocation2 + $0xb28] sm:$0xff]
      %v4759 = vld [vmem:[#allocation2 + $0xb30] sm:$0xff]
      %v4760 = vld [vmem:[#allocation2 + $0xb38] sm:$0xff]
      %v4761 = vld [vmem:[#allocation2 + $0xb40] sm:$0xff]
      %v4762 = vld [vmem:[#allocation2 + $0xb48] sm:$0xff]
      %v4763 = vld [vmem:[#allocation2 + $0xb50] sm:$0xff]
      %v4764 = vld [vmem:[#allocation2 + $0xb58] sm:$0xff]
      %v4765 = vld [vmem:[#allocation2 + $0xb60] sm:$0xff]
      %v4766 = vld [vmem:[#allocation2 + $0xb68] sm:$0xff]
      %v4767 = vld [vmem:[#allocation2 + $0xb70] sm:$0xff]
      %v4768 = vld [vmem:[#allocation2 + $0xb78] sm:$0xff]
      %v4769 = vld [vmem:[#allocation2 + $0xb80] sm:$0xff]
      %v4770 = vld [vmem:[#allocation2 + $0xb88] sm:$0xff]
      %v4771 = vld [vmem:[#allocation2 + $0xb90] sm:$0xff]
      %v4772 = vld [vmem:[#allocation2 + $0xb98] sm:$0xff]
      %v4773 = vld [vmem:[#allocation2 + $0xba0] sm:$0xff]
      %v4774 = vld [vmem:[#allocation2 + $0xba8] sm:$0xff]
      %v4775 = vld [vmem:[#allocation2 + $0xbb0] sm:$0xff]
      %v4776 = vld [vmem:[#allocation2 + $0xbb8] sm:$0xff]
      %v4777 = vld [vmem:[#allocation2 + $0xbc0] sm:$0xff]
      %v4778 = vld [vmem:[#allocation2 + $0xbc8] sm:$0xff]
      %v4779 = vld [vmem:[#allocation2 + $0xbd0] sm:$0xff]
      %v4780 = vld [vmem:[#allocation2 + $0xbd8] sm:$0xff]
      %v4781 = vld [vmem:[#allocation2 + $0xbe0] sm:$0xff]
      %v4782 = vld [vmem:[#allocation2 + $0xbe8] sm:$0xff]
      %v4783 = vld [vmem:[#allocation2 + $0xbf0] sm:$0xff]
      %v4784 = vld [vmem:[#allocation2 + $0xbf8] sm:$0xff]
      %v4785 = vld [vmem:[#allocation2 + $0xc00] sm:$0xff]
      %v4786 = vld [vmem:[#allocation2 + $0xc08] sm:$0xff]
      %v4787 = vld [vmem:[#allocation2 + $0xc10] sm:$0xff]
      %v4788 = vld [vmem:[#allocation2 + $0xc18] sm:$0xff]
      %v4789 = vld [vmem:[#allocation2 + $0xc20] sm:$0xff]
      %v4790 = vld [vmem:[#allocation2 + $0xc28] sm:$0xff]
      %v4791 = vld [vmem:[#allocation2 + $0xc30] sm:$0xff]
      %v4792 = vld [vmem:[#allocation2 + $0xc38] sm:$0xff]
      %v4793 = vld [vmem:[#allocation2 + $0xc40] sm:$0xff]
      %v4794 = vld [vmem:[#allocation2 + $0xc48] sm:$0xff]
      %v4795 = vld [vmem:[#allocation2 + $0xc50] sm:$0xff]
      %v4796 = vld [vmem:[#allocation2 + $0xc58] sm:$0xff]
      %v4797 = vld [vmem:[#allocation2 + $0xc60] sm:$0xff]
      %v4798 = vld [vmem:[#allocation2 + $0xc68] sm:$0xff]
      %v4799 = vld [vmem:[#allocation2 + $0xc70] sm:$0xff]
      %v4800 = vld [vmem:[#allocation2 + $0xc78] sm:$0xff]
      %v4801 = vld [vmem:[#allocation2 + $0xc80] sm:$0xff]
      %v4802 = vld [vmem:[#allocation2 + $0xc88] sm:$0xff]
      %v4803 = vld [vmem:[#allocation2 + $0xc90] sm:$0xff]
      %v4804 = vld [vmem:[#allocation2 + $0xc98] sm:$0xff]
      %v4805 = vld [vmem:[#allocation2 + $0xca0] sm:$0xff]
      %v4806 = vld [vmem:[#allocation2 + $0xca8] sm:$0xff]
      %v4807 = vld [vmem:[#allocation2 + $0xcb0] sm:$0xff]
      %v4808 = vld [vmem:[#allocation2 + $0xcb8] sm:$0xff]
      %v4809 = vld [vmem:[#allocation2 + $0xcc0] sm:$0xff]
      %v4810 = vld [vmem:[#allocation2 + $0xcc8] sm:$0xff]
      %v4811 = vld [vmem:[#allocation2 + $0xcd0] sm:$0xff]
      %v4812 = vld [vmem:[#allocation2 + $0xcd8] sm:$0xff]
      %v4813 = vld [vmem:[#allocation2 + $0xce0] sm:$0xff]
      %v4814 = vld [vmem:[#allocation2 + $0xce8] sm:$0xff]
      %v4815 = vld [vmem:[#allocation2 + $0xcf0] sm:$0xff]
      %v4816 = vld [vmem:[#allocation2 + $0xcf8] sm:$0xff]
      %v4817 = vld [vmem:[#allocation2 + $0xd00] sm:$0xff]
      %v4818 = vld [vmem:[#allocation2 + $0xd08] sm:$0xff]
      %v4819 = vld [vmem:[#allocation2 + $0xd10] sm:$0xff]
      %v4820 = vld [vmem:[#allocation2 + $0xd18] sm:$0xff]
      %v4821 = vld [vmem:[#allocation2 + $0xd20] sm:$0xff]
      %v4822 = vld [vmem:[#allocation2 + $0xd28] sm:$0xff]
      %v4823 = vld [vmem:[#allocation2 + $0xd30] sm:$0xff]
      %v4824 = vld [vmem:[#allocation2 + $0xd38] sm:$0xff]
      %v4825 = vld [vmem:[#allocation2 + $0xd40] sm:$0xff]
      %v4826 = vld [vmem:[#allocation2 + $0xd48] sm:$0xff]
      %v4827 = vld [vmem:[#allocation2 + $0xd50] sm:$0xff]
      %v4828 = vld [vmem:[#allocation2 + $0xd58] sm:$0xff]
      %v4829 = vld [vmem:[#allocation2 + $0xd60] sm:$0xff]
      %v4830 = vld [vmem:[#allocation2 + $0xd68] sm:$0xff]
      %v4831 = vld [vmem:[#allocation2 + $0xd70] sm:$0xff]
      %v4832 = vld [vmem:[#allocation2 + $0xd78] sm:$0xff]
      %v4833 = vld [vmem:[%s5] sm:$0xff]
      %v4834 = vld [vmem:[%s5 + $0x8] sm:$0xff]
      %v4835 = vld [vmem:[%s5 + $0x10] sm:$0xff]
      %v4836 = vld [vmem:[%s5 + $0x18] sm:$0xff]
      %v4837 = vld [vmem:[%s5 + $0x20] sm:$0xff]
      %v4838 = vld [vmem:[%s5 + $0x28] sm:$0xff]
      %v4839 = vld [vmem:[%s5 + $0x30] sm:$0xff]
      %v4840 = vld [vmem:[%s5 + $0x38] sm:$0xff]
      %v4841 = vld [vmem:[%s5 + $0x40] sm:$0xff]
      %v4842 = vld [vmem:[%s5 + $0x48] sm:$0xff]
      %v4843 = vld [vmem:[%s5 + $0x50] sm:$0xff]
      %v4844 = vld [vmem:[%s5 + $0x58] sm:$0xff]
      %v4845 = vld [vmem:[%s5 + $0x60] sm:$0xff]
      %v4846 = vld [vmem:[%s5 + $0x68] sm:$0xff]
      %v4847 = vld [vmem:[%s5 + $0x70] sm:$0xff]
      %v4848 = vld [vmem:[%s5 + $0x78] sm:$0xff]
      %4850 = vset.pattern.permute.xlu0 0
      %4851 = vperm.xlu0 %4850, %v4833
      %v4852 = vpop.permute.xlu0 %4851
      %4855 = vset.pattern.permute.xlu0 0
      %4856 = vperm.xlu0 %4855, %v4834
      %v4857 = vpop.permute.xlu0 %4856
      %4860 = vset.pattern.permute.xlu0 0
      %4861 = vperm.xlu0 %4860, %v4835
      %v4862 = vpop.permute.xlu0 %4861
      %4865 = vset.pattern.permute.xlu0 0
      %4866 = vperm.xlu0 %4865, %v4836
      %v4867 = vpop.permute.xlu0 %4866
      %4870 = vset.pattern.permute.xlu0 0
      %4871 = vperm.xlu0 %4870, %v4837
      %v4872 = vpop.permute.xlu0 %4871
      %4875 = vset.pattern.permute.xlu0 0
      %4876 = vperm.xlu0 %4875, %v4838
      %v4877 = vpop.permute.xlu0 %4876
      %4880 = vset.pattern.permute.xlu0 0
      %4881 = vperm.xlu0 %4880, %v4839
      %v4882 = vpop.permute.xlu0 %4881
      %4885 = vset.pattern.permute.xlu0 0
      %4886 = vperm.xlu0 %4885, %v4840
      %v4887 = vpop.permute.xlu0 %4886
      %4890 = vset.pattern.permute.xlu0 0
      %4891 = vperm.xlu0 %4890, %v4841
      %v4892 = vpop.permute.xlu0 %4891
      %4895 = vset.pattern.permute.xlu0 0
      %4896 = vperm.xlu0 %4895, %v4842
      %v4897 = vpop.permute.xlu0 %4896
      %4900 = vset.pattern.permute.xlu0 0
      %4901 = vperm.xlu0 %4900, %v4843
      %v4902 = vpop.permute.xlu0 %4901
      %4905 = vset.pattern.permute.xlu0 0
      %4906 = vperm.xlu0 %4905, %v4844
      %v4907 = vpop.permute.xlu0 %4906
      %4910 = vset.pattern.permute.xlu0 0
      %4911 = vperm.xlu0 %4910, %v4845
      %v4912 = vpop.permute.xlu0 %4911
      %4915 = vset.pattern.permute.xlu0 0
      %4916 = vperm.xlu0 %4915, %v4846
      %v4917 = vpop.permute.xlu0 %4916
      %4920 = vset.pattern.permute.xlu0 0
      %4921 = vperm.xlu0 %4920, %v4847
      %v4922 = vpop.permute.xlu0 %4921
      %4925 = vset.pattern.permute.xlu0 0
      %4926 = vperm.xlu0 %4925, %v4848
      %v4927 = vpop.permute.xlu0 %4926
      %v5009 = vunpack.c.l.b16 %v4321
      %v5010 = vunpack.c.h.b16 %v4321
      %v5011 = vunpack.c.l.b16 %v4322
      %v5012 = vunpack.c.h.b16 %v4322
      %v5013 = vunpack.c.l.b16 %v4323
      %v5014 = vunpack.c.h.b16 %v4323
      %v5015 = vunpack.c.l.b16 %v4324
      %v5016 = vunpack.c.h.b16 %v4324
      %v5017 = vunpack.c.l.b16 %v4325
      %v5018 = vunpack.c.l.b16 %v4326
      %v5019 = vunpack.c.h.b16 %v4326
      %v5020 = vunpack.c.l.b16 %v4327
      %v5021 = vunpack.c.h.b16 %v4327
      %v5022 = vunpack.c.l.b16 %v4328
      %v5023 = vunpack.c.h.b16 %v4328
      %v5024 = vunpack.c.l.b16 %v4329
      %v5025 = vunpack.c.h.b16 %v4329
      %v5026 = vunpack.c.l.b16 %v4330
      %v5027 = vunpack.c.l.b16 %v4331
      %v5028 = vunpack.c.h.b16 %v4331
      %v5029 = vunpack.c.l.b16 %v4332
      %v5030 = vunpack.c.h.b16 %v4332
      %v5031 = vunpack.c.l.b16 %v4333
      %v5032 = vunpack.c.h.b16 %v4333
      %v5033 = vunpack.c.l.b16 %v4334
      %v5034 = vunpack.c.h.b16 %v4334
      %v5035 = vunpack.c.l.b16 %v4335
      %v5036 = vunpack.c.l.b16 %v4336
      %v5037 = vunpack.c.h.b16 %v4336
      %v5038 = vunpack.c.l.b16 %v4337
      %v5039 = vunpack.c.h.b16 %v4337
      %v5040 = vunpack.c.l.b16 %v4338
      %v5041 = vunpack.c.h.b16 %v4338
      %v5042 = vunpack.c.l.b16 %v4339
      %v5043 = vunpack.c.h.b16 %v4339
      %v5044 = vunpack.c.l.b16 %v4340
      %v5045 = vunpack.c.l.b16 %v4341
      %v5046 = vunpack.c.h.b16 %v4341
      %v5047 = vunpack.c.l.b16 %v4342
      %v5048 = vunpack.c.h.b16 %v4342
      %v5049 = vunpack.c.l.b16 %v4343
      %v5050 = vunpack.c.h.b16 %v4343
      %v5051 = vunpack.c.l.b16 %v4344
      %v5052 = vunpack.c.h.b16 %v4344
      %v5053 = vunpack.c.l.b16 %v4345
      %v5054 = vunpack.c.l.b16 %v4346
      %v5055 = vunpack.c.h.b16 %v4346
      %v5056 = vunpack.c.l.b16 %v4347
      %v5057 = vunpack.c.h.b16 %v4347
      %v5058 = vunpack.c.l.b16 %v4348
      %v5059 = vunpack.c.h.b16 %v4348
      %v5060 = vunpack.c.l.b16 %v4349
      %v5061 = vunpack.c.h.b16 %v4349
      %v5062 = vunpack.c.l.b16 %v4350
      %v5063 = vunpack.c.l.b16 %v4351
      %v5064 = vunpack.c.h.b16 %v4351
      %v5065 = vunpack.c.l.b16 %v4352
      %v5066 = vunpack.c.h.b16 %v4352
      %v5067 = vunpack.c.l.b16 %v4353
      %v5068 = vunpack.c.h.b16 %v4353
      %v5069 = vunpack.c.l.b16 %v4354
      %v5070 = vunpack.c.h.b16 %v4354
      %v5071 = vunpack.c.l.b16 %v4355
      %v5072 = vunpack.c.l.b16 %v4356
      %v5073 = vunpack.c.h.b16 %v4356
      %v5074 = vunpack.c.l.b16 %v4357
      %v5075 = vunpack.c.h.b16 %v4357
      %v5076 = vunpack.c.l.b16 %v4358
      %v5077 = vunpack.c.h.b16 %v4358
      %v5078 = vunpack.c.l.b16 %v4359
      %v5079 = vunpack.c.h.b16 %v4359
      %v5080 = vunpack.c.l.b16 %v4360
      %v5081 = vunpack.c.l.b16 %v4361
      %v5082 = vunpack.c.h.b16 %v4361
      %v5083 = vunpack.c.l.b16 %v4362
      %v5084 = vunpack.c.h.b16 %v4362
      %v5085 = vunpack.c.l.b16 %v4363
      %v5086 = vunpack.c.h.b16 %v4363
      %v5087 = vunpack.c.l.b16 %v4364
      %v5088 = vunpack.c.h.b16 %v4364
      %v5089 = vunpack.c.l.b16 %v4365
      %v5090 = vunpack.c.l.b16 %v4366
      %v5091 = vunpack.c.h.b16 %v4366
      %v5092 = vunpack.c.l.b16 %v4367
      %v5093 = vunpack.c.h.b16 %v4367
      %v5094 = vunpack.c.l.b16 %v4368
      %v5095 = vunpack.c.h.b16 %v4368
      %v5096 = vunpack.c.l.b16 %v4369
      %v5097 = vunpack.c.h.b16 %v4369
      %v5098 = vunpack.c.l.b16 %v4370
      %v5099 = vunpack.c.l.b16 %v4371
      %v5100 = vunpack.c.h.b16 %v4371
      %v5101 = vunpack.c.l.b16 %v4372
      %v5102 = vunpack.c.h.b16 %v4372
      %v5103 = vunpack.c.l.b16 %v4373
      %v5104 = vunpack.c.h.b16 %v4373
      %v5105 = vunpack.c.l.b16 %v4374
      %v5106 = vunpack.c.h.b16 %v4374
      %v5107 = vunpack.c.l.b16 %v4375
      %v5108 = vunpack.c.l.b16 %v4376
      %v5109 = vunpack.c.h.b16 %v4376
      %v5110 = vunpack.c.l.b16 %v4377
      %v5111 = vunpack.c.h.b16 %v4377
      %v5112 = vunpack.c.l.b16 %v4378
      %v5113 = vunpack.c.h.b16 %v4378
      %v5114 = vunpack.c.l.b16 %v4379
      %v5115 = vunpack.c.h.b16 %v4379
      %v5116 = vunpack.c.l.b16 %v4380
      %v5117 = vunpack.c.l.b16 %v4381
      %v5118 = vunpack.c.h.b16 %v4381
      %v5119 = vunpack.c.l.b16 %v4382
      %v5120 = vunpack.c.h.b16 %v4382
      %v5121 = vunpack.c.l.b16 %v4383
      %v5122 = vunpack.c.h.b16 %v4383
      %v5123 = vunpack.c.l.b16 %v4384
      %v5124 = vunpack.c.h.b16 %v4384
      %v5125 = vunpack.c.l.b16 %v4385
      %v5126 = vunpack.c.l.b16 %v4386
      %v5127 = vunpack.c.h.b16 %v4386
      %v5128 = vunpack.c.l.b16 %v4387
      %v5129 = vunpack.c.h.b16 %v4387
      %v5130 = vunpack.c.l.b16 %v4388
      %v5131 = vunpack.c.h.b16 %v4388
      %v5132 = vunpack.c.l.b16 %v4389
      %v5133 = vunpack.c.h.b16 %v4389
      %v5134 = vunpack.c.l.b16 %v4390
      %v5135 = vunpack.c.l.b16 %v4391
      %v5136 = vunpack.c.h.b16 %v4391
      %v5137 = vunpack.c.l.b16 %v4392
      %v5138 = vunpack.c.h.b16 %v4392
      %v5139 = vunpack.c.l.b16 %v4393
      %v5140 = vunpack.c.h.b16 %v4393
      %v5141 = vunpack.c.l.b16 %v4394
      %v5142 = vunpack.c.h.b16 %v4394
      %v5143 = vunpack.c.l.b16 %v4395
      %v5144 = vunpack.c.l.b16 %v4396
      %v5145 = vunpack.c.h.b16 %v4396
      %v5146 = vunpack.c.l.b16 %v4397
      %v5147 = vunpack.c.h.b16 %v4397
      %v5148 = vunpack.c.l.b16 %v4398
      %v5149 = vunpack.c.h.b16 %v4398
      %v5150 = vunpack.c.l.b16 %v4399
      %v5151 = vunpack.c.h.b16 %v4399
      %v5152 = vunpack.c.l.b16 %v4400
      %v5153 = vpack.c.b16 %v5018, %v5009
      %v5154 = vpack.c.b16 %v5019, %v5010
      %v5155 = vpack.c.b16 %v5020, %v5011
      %v5156 = vpack.c.b16 %v5021, %v5012
      %v5157 = vpack.c.b16 %v5022, %v5013
      %v5158 = vpack.c.b16 %v5023, %v5014
      %v5159 = vpack.c.b16 %v5024, %v5015
      %v5160 = vpack.c.b16 %v5025, %v5016
      %v5161 = vpack.c.b16 %v5026, %v5017
      %v5162 = vpack.c.b16 %v5036, %v5027
      %v5163 = vpack.c.b16 %v5037, %v5028
      %v5164 = vpack.c.b16 %v5038, %v5029
      %v5165 = vpack.c.b16 %v5039, %v5030
      %v5166 = vpack.c.b16 %v5040, %v5031
      %v5167 = vpack.c.b16 %v5041, %v5032
      %v5168 = vpack.c.b16 %v5042, %v5033
      %v5169 = vpack.c.b16 %v5043, %v5034
      %v5170 = vpack.c.b16 %v5044, %v5035
      %v5171 = vpack.c.b16 %v5054, %v5045
      %v5172 = vpack.c.b16 %v5055, %v5046
      %v5173 = vpack.c.b16 %v5056, %v5047
      %v5174 = vpack.c.b16 %v5057, %v5048
      %v5175 = vpack.c.b16 %v5058, %v5049
      %v5176 = vpack.c.b16 %v5059, %v5050
      %v5177 = vpack.c.b16 %v5060, %v5051
      %v5178 = vpack.c.b16 %v5061, %v5052
      %v5179 = vpack.c.b16 %v5062, %v5053
      %v5180 = vpack.c.b16 %v5072, %v5063
      %v5181 = vpack.c.b16 %v5073, %v5064
      %v5182 = vpack.c.b16 %v5074, %v5065
      %v5183 = vpack.c.b16 %v5075, %v5066
      %v5184 = vpack.c.b16 %v5076, %v5067
      %v5185 = vpack.c.b16 %v5077, %v5068
      %v5186 = vpack.c.b16 %v5078, %v5069
      %v5187 = vpack.c.b16 %v5079, %v5070
      %v5188 = vpack.c.b16 %v5080, %v5071
      %v5189 = vpack.c.b16 %v5090, %v5081
      %v5190 = vpack.c.b16 %v5091, %v5082
      %v5191 = vpack.c.b16 %v5092, %v5083
      %v5192 = vpack.c.b16 %v5093, %v5084
      %v5193 = vpack.c.b16 %v5094, %v5085
      %v5194 = vpack.c.b16 %v5095, %v5086
      %v5195 = vpack.c.b16 %v5096, %v5087
      %v5196 = vpack.c.b16 %v5097, %v5088
      %v5197 = vpack.c.b16 %v5098, %v5089
      %v5198 = vpack.c.b16 %v5108, %v5099
      %v5199 = vpack.c.b16 %v5109, %v5100
      %v5200 = vpack.c.b16 %v5110, %v5101
      %v5201 = vpack.c.b16 %v5111, %v5102
      %v5202 = vpack.c.b16 %v5112, %v5103
      %v5203 = vpack.c.b16 %v5113, %v5104
      %v5204 = vpack.c.b16 %v5114, %v5105
      %v5205 = vpack.c.b16 %v5115, %v5106
      %v5206 = vpack.c.b16 %v5116, %v5107
      %v5207 = vpack.c.b16 %v5126, %v5117
      %v5208 = vpack.c.b16 %v5127, %v5118
      %v5209 = vpack.c.b16 %v5128, %v5119
      %v5210 = vpack.c.b16 %v5129, %v5120
      %v5211 = vpack.c.b16 %v5130, %v5121
      %v5212 = vpack.c.b16 %v5131, %v5122
      %v5213 = vpack.c.b16 %v5132, %v5123
      %v5214 = vpack.c.b16 %v5133, %v5124
      %v5215 = vpack.c.b16 %v5134, %v5125
      %v5216 = vpack.c.b16 %v5144, %v5135
      %v5217 = vpack.c.b16 %v5145, %v5136
      %v5218 = vpack.c.b16 %v5146, %v5137
      %v5219 = vpack.c.b16 %v5147, %v5138
      %v5220 = vpack.c.b16 %v5148, %v5139
      %v5221 = vpack.c.b16 %v5149, %v5140
      %v5222 = vpack.c.b16 %v5150, %v5141
      %v5223 = vpack.c.b16 %v5151, %v5142
      %v5224 = vpack.c.b16 %v5152, %v5143
      %5297 = vmatprep.subr.bf16.mxu0 %v4402
      %5298 = vmatpush1.bf16.msra.mxu0 %v4401
      %5299 = vmatprep.subr.bf16.mxu0 %v4408
      %5300 = vmatpush1.bf16.msra.mxu0 %v4407
      %5301 = vmatprep.subr.bf16.mxu0 %v4414
      %5302 = vmatpush1.bf16.msra.mxu0 %v4413
      %5303 = vmatprep.subr.bf16.mxu0 %v4420
      %5304 = vmatpush1.bf16.msra.mxu0 %v4419
      %5305 = vmatprep.subr.bf16.mxu0 %v4426
      %5306 = vmatpush1.bf16.msra.mxu0 %v4425
      %5307 = vmatprep.subr.bf16.mxu0 %v4432
      %5308 = vmatpush1.bf16.msra.mxu0 %v4431
      %5309 = vmatprep.subr.bf16.mxu0 %v4438
      %5310 = vmatpush1.bf16.msra.mxu0 %v4437
      %5311 = vmatprep.subr.bf16.mxu0 %v4444
      %5312 = vmatpush1.bf16.msra.mxu0 %v4443
      %5313 = vmatprep.subr.bf16.mxu0 %v4450
      %5314 = vmatpush1.bf16.msra.mxu0 %v4449
      %5315 = vmatprep.subr.bf16.mxu0 %v4456
      %5316 = vmatpush1.bf16.msra.mxu0 %v4455
      %5317 = vmatprep.subr.bf16.mxu0 %v4462
      %5318 = vmatpush1.bf16.msra.mxu0 %v4461
      %5319 = vmatprep.subr.bf16.mxu0 %v4468
      %5320 = vmatpush1.bf16.msra.mxu0 %v4467
      %5321 = vmatprep.subr.bf16.mxu0 %v4474
      %5322 = vmatpush1.bf16.msra.mxu0 %v4473
      %5323 = vmatprep.subr.bf16.mxu0 %v4480
      %5324 = vmatpush1.bf16.msra.mxu0 %v4479
      %5325 = vmatprep.subr.bf16.mxu0 %v4486
      %5326 = vmatpush1.bf16.msra.mxu0 %v4485
      %5327 = vmatprep.subr.bf16.mxu0 %v4492
      %5328 = vmatpush1.bf16.msra.mxu0 %v4491
      %5329 = vmatprep.mubr.bf16.mxu0 %v5154
      %5330 = vmatmul.mubr.bf16.gmra.mrb[0].mxu0 %v5153
      %v5331 = vpop.f32.mrb[0].mxu0
      %v5332 = vadd.f32 %v4852, %v5331
      %v5333 = vpop.f32.mrb[0].mxu0
      %v5334 = vadd.f32 %v4852, %v5333
      %v5335 = vpop.f32.mrb[0].mxu0
      %v5336 = vadd.f32 %v4857, %v5335
      %v5337 = vpop.f32.mrb[0].mxu0
      %v5338 = vadd.f32 %v4857, %v5337
      %5339 = vmatprep.mubr.bf16.mxu0 %v5163
      %5340 = vmatmul.mubr.bf16.gmra.mrb[0].mxu0 %v5162
      %v5341 = vpop.f32.mrb[0].mxu0
      %v5342 = vadd.f32 %v4862, %v5341
      %v5343 = vpop.f32.mrb[0].mxu0
      %v5344 = vadd.f32 %v4862, %v5343
      %v5345 = vpop.f32.mrb[0].mxu0
      %v5346 = vadd.f32 %v4867, %v5345
      %v5347 = vpop.f32.mrb[0].mxu0
      %v5348 = vadd.f32 %v4867, %v5347
      %5349 = vmatprep.mubr.bf16.mxu0 %v5172
      %5350 = vmatmul.mubr.bf16.gmra.mrb[0].mxu0 %v5171
      %v5351 = vpop.f32.mrb[0].mxu0
      %v5352 = vadd.f32 %v4872, %v5351
      %v5353 = vpop.f32.mrb[0].mxu0
      %v5354 = vadd.f32 %v4872, %v5353
      %v5355 = vpop.f32.mrb[0].mxu0
      %v5356 = vadd.f32 %v4877, %v5355
      %v5357 = vpop.f32.mrb[0].mxu0
      %v5358 = vadd.f32 %v4877, %v5357
      %5359 = vmatprep.mubr.bf16.mxu0 %v5181
      %5360 = vmatmul.mubr.bf16.gmra.mrb[0].mxu0 %v5180
      %v5361 = vpop.f32.mrb[0].mxu0
      %v5362 = vadd.f32 %v4882, %v5361
      %v5363 = vpop.f32.mrb[0].mxu0
      %v5364 = vadd.f32 %v4882, %v5363
      %v5365 = vpop.f32.mrb[0].mxu0
      %v5366 = vadd.f32 %v4887, %v5365
      %v5367 = vpop.f32.mrb[0].mxu0
      %v5368 = vadd.f32 %v4887, %v5367
      %5369 = vmatprep.mubr.bf16.mxu0 %v5190
      %5370 = vmatmul.mubr.bf16.gmra.mrb[0].mxu0 %v5189
      %v5371 = vpop.f32.mrb[0].mxu0
      %v5372 = vadd.f32 %v4892, %v5371
      %v5373 = vpop.f32.mrb[0].mxu0
      %v5374 = vadd.f32 %v4892, %v5373
      %v5375 = vpop.f32.mrb[0].mxu0
      %v5376 = vadd.f32 %v4897, %v5375
      %v5377 = vpop.f32.mrb[0].mxu0
      %v5378 = vadd.f32 %v4897, %v5377
      %5379 = vmatprep.mubr.bf16.mxu0 %v5199
      %5380 = vmatmul.mubr.bf16.gmra.mrb[0].mxu0 %v5198
      %v5381 = vpop.f32.mrb[0].mxu0
      %v5382 = vadd.f32 %v4902, %v5381
      %v5383 = vpop.f32.mrb[0].mxu0
      %v5384 = vadd.f32 %v4902, %v5383
      %v5385 = vpop.f32.mrb[0].mxu0
      %v5386 = vadd.f32 %v4907, %v5385
      %v5387 = vpop.f32.mrb[0].mxu0
      %v5388 = vadd.f32 %v4907, %v5387
      %5389 = vmatprep.mubr.bf16.mxu0 %v5208
      %5390 = vmatmul.mubr.bf16.gmra.mrb[0].mxu0 %v5207
      %v5391 = vpop.f32.mrb[0].mxu0
      %v5392 = vadd.f32 %v4912, %v5391
      %v5393 = vpop.f32.mrb[0].mxu0
      %v5394 = vadd.f32 %v4912, %v5393
      %v5395 = vpop.f32.mrb[0].mxu0
      %v5396 = vadd.f32 %v4917, %v5395
      %v5397 = vpop.f32.mrb[0].mxu0
      %v5398 = vadd.f32 %v4917, %v5397
      %5399 = vmatprep.mubr.bf16.mxu0 %v5217
      %5400 = vmatmul.mubr.bf16.gmra.mrb[0].mxu0 %v5216
      %v5401 = vpop.f32.mrb[0].mxu0
      %v5402 = vadd.f32 %v4922, %v5401
      %v5403 = vpop.f32.mrb[0].mxu0
      %v5404 = vadd.f32 %v4922, %v5403
      %v5405 = vpop.f32.mrb[0].mxu0
      %v5406 = vadd.f32 %v4927, %v5405
      %v5407 = vpop.f32.mrb[0].mxu0
      %v5408 = vadd.f32 %v4927, %v5407
      %5409 = vdwg.mxu0
      %5410 = vmatprep.subr.bf16.mxu0 %v4498
      %5411 = vmatpush1.bf16.msra.mxu0 %v4497
      %5412 = vmatprep.subr.bf16.mxu0 %v4504
      %5413 = vmatpush1.bf16.msra.mxu0 %v4503
      %5414 = vmatprep.subr.bf16.mxu0 %v4510
      %5415 = vmatpush1.bf16.msra.mxu0 %v4509
      %5416 = vmatprep.subr.bf16.mxu0 %v4516
      %5417 = vmatpush1.bf16.msra.mxu0 %v4515
      %5418 = vmatprep.subr.bf16.mxu0 %v4522
      %5419 = vmatpush1.bf16.msra.mxu0 %v4521
      %5420 = vmatprep.subr.bf16.mxu0 %v4528
      %5421 = vmatpush1.bf16.msra.mxu0 %v4527
      %5422 = vmatprep.subr.bf16.mxu0 %v4534
      %5423 = vmatpush1.bf16.msra.mxu0 %v4533
      %5424 = vmatprep.subr.bf16.mxu0 %v4540
      %5425 = vmatpush1.bf16.msra.mxu0 %v4539
      %5426 = vmatprep.subr.bf16.mxu0 %v4546
      %5427 = vmatpush1.bf16.msra.mxu0 %v4545
      %5428 = vmatprep.subr.bf16.mxu0 %v4552
      %5429 = vmatpush1.bf16.msra.mxu0 %v4551
      %5430 = vmatprep.subr.bf16.mxu0 %v4558
      %5431 = vmatpush1.bf16.msra.mxu0 %v4557
      %5432 = vmatprep.subr.bf16.mxu0 %v4564
      %5433 = vmatpush1.bf16.msra.mxu0 %v4563
      %5434 = vmatprep.subr.bf16.mxu0 %v4570
      %5435 = vmatpush1.bf16.msra.mxu0 %v4569
      %5436 = vmatprep.subr.bf16.mxu0 %v4576
      %5437 = vmatpush1.bf16.msra.mxu0 %v4575
      %5438 = vmatprep.subr.bf16.mxu0 %v4582
      %5439 = vmatpush1.bf16.msra.mxu0 %v4581
      %5440 = vmatprep.subr.bf16.mxu0 %v4588
      %5441 = vmatpush1.bf16.msra.mxu0 %v4587
      %5442 = vmatprep.mubr.bf16.mxu0 %v5156
      %5443 = vmatmul.mubr.bf16.gmra.mrb[0].mxu0 %v5155
      %v5444 = vpop.f32.mrb[0].mxu0
      %v5445 = vadd.f32 %v5332, %v5444
      %v5446 = vpop.f32.mrb[0].mxu0
      %v5447 = vadd.f32 %v5334, %v5446
      %v5448 = vpop.f32.mrb[0].mxu0
      %v5449 = vadd.f32 %v5336, %v5448
      %v5450 = vpop.f32.mrb[0].mxu0
      %v5451 = vadd.f32 %v5338, %v5450
      %5452 = vmatprep.mubr.bf16.mxu0 %v5165
      %5453 = vmatmul.mubr.bf16.gmra.mrb[0].mxu0 %v5164
      %v5454 = vpop.f32.mrb[0].mxu0
      %v5455 = vadd.f32 %v5342, %v5454
      %v5456 = vpop.f32.mrb[0].mxu0
      %v5457 = vadd.f32 %v5344, %v5456
      %v5458 = vpop.f32.mrb[0].mxu0
      %v5459 = vadd.f32 %v5346, %v5458
      %v5460 = vpop.f32.mrb[0].mxu0
      %v5461 = vadd.f32 %v5348, %v5460
      %5462 = vmatprep.mubr.bf16.mxu0 %v5174
      %5463 = vmatmul.mubr.bf16.gmra.mrb[0].mxu0 %v5173
      %v5464 = vpop.f32.mrb[0].mxu0
      %v5465 = vadd.f32 %v5352, %v5464
      %v5466 = vpop.f32.mrb[0].mxu0
      %v5467 = vadd.f32 %v5354, %v5466
      %v5468 = vpop.f32.mrb[0].mxu0
      %v5469 = vadd.f32 %v5356, %v5468
      %v5470 = vpop.f32.mrb[0].mxu0
      %v5471 = vadd.f32 %v5358, %v5470
      %5472 = vmatprep.mubr.bf16.mxu0 %v5183
      %5473 = vmatmul.mubr.bf16.gmra.mrb[0].mxu0 %v5182
      %v5474 = vpop.f32.mrb[0].mxu0
      %v5475 = vadd.f32 %v5362, %v5474
      %v5476 = vpop.f32.mrb[0].mxu0
      %v5477 = vadd.f32 %v5364, %v5476
      %v5478 = vpop.f32.mrb[0].mxu0
      %v5479 = vadd.f32 %v5366, %v5478
      %v5480 = vpop.f32.mrb[0].mxu0
      %v5481 = vadd.f32 %v5368, %v5480
      %5482 = vmatprep.mubr.bf16.mxu0 %v5192
      %5483 = vmatmul.mubr.bf16.gmra.mrb[0].mxu0 %v5191
      %v5484 = vpop.f32.mrb[0].mxu0
      %v5485 = vadd.f32 %v5372, %v5484
      %v5486 = vpop.f32.mrb[0].mxu0
      %v5487 = vadd.f32 %v5374, %v5486
      %v5488 = vpop.f32.mrb[0].mxu0
      %v5489 = vadd.f32 %v5376, %v5488
      %v5490 = vpop.f32.mrb[0].mxu0
      %v5491 = vadd.f32 %v5378, %v5490
      %5492 = vmatprep.mubr.bf16.mxu0 %v5201
      %5493 = vmatmul.mubr.bf16.gmra.mrb[0].mxu0 %v5200
      %v5494 = vpop.f32.mrb[0].mxu0
      %v5495 = vadd.f32 %v5382, %v5494
      %v5496 = vpop.f32.mrb[0].mxu0
      %v5497 = vadd.f32 %v5384, %v5496
      %v5498 = vpop.f32.mrb[0].mxu0
      %v5499 = vadd.f32 %v5386, %v5498
      %v5500 = vpop.f32.mrb[0].mxu0
      %v5501 = vadd.f32 %v5388, %v5500
      %5502 = vmatprep.mubr.bf16.mxu0 %v5210
      %5503 = vmatmul.mubr.bf16.gmra.mrb[0].mxu0 %v5209
      %v5504 = vpop.f32.mrb[0].mxu0
      %v5505 = vadd.f32 %v5392, %v5504
      %v5506 = vpop.f32.mrb[0].mxu0
      %v5507 = vadd.f32 %v5394, %v5506
      %v5508 = vpop.f32.mrb[0].mxu0
      %v5509 = vadd.f32 %v5396, %v5508
      %v5510 = vpop.f32.mrb[0].mxu0
      %v5511 = vadd.f32 %v5398, %v5510
      %5512 = vmatprep.mubr.bf16.mxu0 %v5219
      %5513 = vmatmul.mubr.bf16.gmra.mrb[0].mxu0 %v5218
      %v5514 = vpop.f32.mrb[0].mxu0
      %v5515 = vadd.f32 %v5402, %v5514
      %v5516 = vpop.f32.mrb[0].mxu0
      %v5517 = vadd.f32 %v5404, %v5516
      %v5518 = vpop.f32.mrb[0].mxu0
      %v5519 = vadd.f32 %v5406, %v5518
      %v5520 = vpop.f32.mrb[0].mxu0
      %v5521 = vadd.f32 %v5408, %v5520
      %5522 = vdwg.mxu0
      %5523 = vmatprep.subr.bf16.mxu0 %v4594
      %5524 = vmatpush1.bf16.msra.mxu0 %v4593
      %5525 = vmatprep.subr.bf16.mxu0 %v4600
      %5526 = vmatpush1.bf16.msra.mxu0 %v4599
      %5527 = vmatprep.subr.bf16.mxu0 %v4606
      %5528 = vmatpush1.bf16.msra.mxu0 %v4605
      %5529 = vmatprep.subr.bf16.mxu0 %v4612
      %5530 = vmatpush1.bf16.msra.mxu0 %v4611
      %5531 = vmatprep.subr.bf16.mxu0 %v4618
      %5532 = vmatpush1.bf16.msra.mxu0 %v4617
      %5533 = vmatprep.subr.bf16.mxu0 %v4624
      %5534 = vmatpush1.bf16.msra.mxu0 %v4623
      %5535 = vmatprep.subr.bf16.mxu0 %v4630
      %5536 = vmatpush1.bf16.msra.mxu0 %v4629
      %5537 = vmatprep.subr.bf16.mxu0 %v4636
      %5538 = vmatpush1.bf16.msra.mxu0 %v4635
      %5539 = vmatprep.subr.bf16.mxu0 %v4642
      %5540 = vmatpush1.bf16.msra.mxu0 %v4641
      %5541 = vmatprep.subr.bf16.mxu0 %v4648
      %5542 = vmatpush1.bf16.msra.mxu0 %v4647
      %5543 = vmatprep.subr.bf16.mxu0 %v4654
      %5544 = vmatpush1.bf16.msra.mxu0 %v4653
      %5545 = vmatprep.subr.bf16.mxu0 %v4660
      %5546 = vmatpush1.bf16.msra.mxu0 %v4659
      %5547 = vmatprep.subr.bf16.mxu0 %v4666
      %5548 = vmatpush1.bf16.msra.mxu0 %v4665
      %5549 = vmatprep.subr.bf16.mxu0 %v4672
      %5550 = vmatpush1.bf16.msra.mxu0 %v4671
      %5551 = vmatprep.subr.bf16.mxu0 %v4678
      %5552 = vmatpush1.bf16.msra.mxu0 %v4677
      %5553 = vmatprep.subr.bf16.mxu0 %v4684
      %5554 = vmatpush1.bf16.msra.mxu0 %v4683
      %5555 = vmatprep.mubr.bf16.mxu0 %v5158
      %5556 = vmatmul.mubr.bf16.gmra.mrb[0].mxu0 %v5157
      %v5557 = vpop.f32.mrb[0].mxu0
      %v5558 = vadd.f32 %v5445, %v5557
      %v5559 = vpop.f32.mrb[0].mxu0
      %v5560 = vadd.f32 %v5447, %v5559
      %v5561 = vpop.f32.mrb[0].mxu0
      %v5562 = vadd.f32 %v5449, %v5561
      %v5563 = vpop.f32.mrb[0].mxu0
      %v5564 = vadd.f32 %v5451, %v5563
      %5565 = vmatprep.mubr.bf16.mxu0 %v5167
      %5566 = vmatmul.mubr.bf16.gmra.mrb[0].mxu0 %v5166
      %v5567 = vpop.f32.mrb[0].mxu0
      %v5568 = vadd.f32 %v5455, %v5567
      %v5569 = vpop.f32.mrb[0].mxu0
      %v5570 = vadd.f32 %v5457, %v5569
      %v5571 = vpop.f32.mrb[0].mxu0
      %v5572 = vadd.f32 %v5459, %v5571
      %v5573 = vpop.f32.mrb[0].mxu0
      %v5574 = vadd.f32 %v5461, %v5573
      %5575 = vmatprep.mubr.bf16.mxu0 %v5176
      %5576 = vmatmul.mubr.bf16.gmra.mrb[0].mxu0 %v5175
      %v5577 = vpop.f32.mrb[0].mxu0
      %v5578 = vadd.f32 %v5465, %v5577
      %v5579 = vpop.f32.mrb[0].mxu0
      %v5580 = vadd.f32 %v5467, %v5579
      %v5581 = vpop.f32.mrb[0].mxu0
      %v5582 = vadd.f32 %v5469, %v5581
      %v5583 = vpop.f32.mrb[0].mxu0
      %v5584 = vadd.f32 %v5471, %v5583
      %5585 = vmatprep.mubr.bf16.mxu0 %v5185
      %5586 = vmatmul.mubr.bf16.gmra.mrb[0].mxu0 %v5184
      %v5587 = vpop.f32.mrb[0].mxu0
      %v5588 = vadd.f32 %v5475, %v5587
      %v5589 = vpop.f32.mrb[0].mxu0
      %v5590 = vadd.f32 %v5477, %v5589
      %v5591 = vpop.f32.mrb[0].mxu0
      %v5592 = vadd.f32 %v5479, %v5591
      %v5593 = vpop.f32.mrb[0].mxu0
      %v5594 = vadd.f32 %v5481, %v5593
      %5595 = vmatprep.mubr.bf16.mxu0 %v5194
      %5596 = vmatmul.mubr.bf16.gmra.mrb[0].mxu0 %v5193
      %v5597 = vpop.f32.mrb[0].mxu0
      %v5598 = vadd.f32 %v5485, %v5597
      %v5599 = vpop.f32.mrb[0].mxu0
      %v5600 = vadd.f32 %v5487, %v5599
      %v5601 = vpop.f32.mrb[0].mxu0
      %v5602 = vadd.f32 %v5489, %v5601
      %v5603 = vpop.f32.mrb[0].mxu0
      %v5604 = vadd.f32 %v5491, %v5603
      %5605 = vmatprep.mubr.bf16.mxu0 %v5203
      %5606 = vmatmul.mubr.bf16.gmra.mrb[0].mxu0 %v5202
      %v5607 = vpop.f32.mrb[0].mxu0
      %v5608 = vadd.f32 %v5495, %v5607
      %v5609 = vpop.f32.mrb[0].mxu0
      %v5610 = vadd.f32 %v5497, %v5609
      %v5611 = vpop.f32.mrb[0].mxu0
      %v5612 = vadd.f32 %v5499, %v5611
      %v5613 = vpop.f32.mrb[0].mxu0
      %v5614 = vadd.f32 %v5501, %v5613
      %5615 = vmatprep.mubr.bf16.mxu0 %v5212
      %5616 = vmatmul.mubr.bf16.gmra.mrb[0].mxu0 %v5211
      %v5617 = vpop.f32.mrb[0].mxu0
      %v5618 = vadd.f32 %v5505, %v5617
      %v5619 = vpop.f32.mrb[0].mxu0
      %v5620 = vadd.f32 %v5507, %v5619
      %v5621 = vpop.f32.mrb[0].mxu0
      %v5622 = vadd.f32 %v5509, %v5621
      %v5623 = vpop.f32.mrb[0].mxu0
      %v5624 = vadd.f32 %v5511, %v5623
      %5625 = vmatprep.mubr.bf16.mxu0 %v5221
      %5626 = vmatmul.mubr.bf16.gmra.mrb[0].mxu0 %v5220
      %v5627 = vpop.f32.mrb[0].mxu0
      %v5628 = vadd.f32 %v5515, %v5627
      %v5629 = vpop.f32.mrb[0].mxu0
      %v5630 = vadd.f32 %v5517, %v5629
      %v5631 = vpop.f32.mrb[0].mxu0
      %v5632 = vadd.f32 %v5519, %v5631
      %v5633 = vpop.f32.mrb[0].mxu0
      %v5634 = vadd.f32 %v5521, %v5633
      %5635 = vdwg.mxu0
      %5636 = vmatprep.subr.bf16.mxu0 %v4690
      %5637 = vmatpush1.bf16.msra.mxu0 %v4689
      %5638 = vmatprep.subr.bf16.mxu0 %v4696
      %5639 = vmatpush1.bf16.msra.mxu0 %v4695
      %5640 = vmatprep.subr.bf16.mxu0 %v4702
      %5641 = vmatpush1.bf16.msra.mxu0 %v4701
      %5642 = vmatprep.subr.bf16.mxu0 %v4708
      %5643 = vmatpush1.bf16.msra.mxu0 %v4707
      %5644 = vmatprep.subr.bf16.mxu0 %v4714
      %5645 = vmatpush1.bf16.msra.mxu0 %v4713
      %5646 = vmatprep.subr.bf16.mxu0 %v4720
      %5647 = vmatpush1.bf16.msra.mxu0 %v4719
      %5648 = vmatprep.subr.bf16.mxu0 %v4726
      %5649 = vmatpush1.bf16.msra.mxu0 %v4725
      %5650 = vmatprep.subr.bf16.mxu0 %v4732
      %5651 = vmatpush1.bf16.msra.mxu0 %v4731
      %5652 = vmatprep.subr.bf16.mxu0 %v4738
      %5653 = vmatpush1.bf16.msra.mxu0 %v4737
      %5654 = vmatprep.subr.bf16.mxu0 %v4744
      %5655 = vmatpush1.bf16.msra.mxu0 %v4743
      %5656 = vmatprep.subr.bf16.mxu0 %v4750
      %5657 = vmatpush1.bf16.msra.mxu0 %v4749
      %5658 = vmatprep.subr.bf16.mxu0 %v4756
      %5659 = vmatpush1.bf16.msra.mxu0 %v4755
      %5660 = vmatprep.subr.bf16.mxu0 %v4762
      %5661 = vmatpush1.bf16.msra.mxu0 %v4761
      %5662 = vmatprep.subr.bf16.mxu0 %v4768
      %5663 = vmatpush1.bf16.msra.mxu0 %v4767
      %5664 = vmatprep.subr.bf16.mxu0 %v4774
      %5665 = vmatpush1.bf16.msra.mxu0 %v4773
      %5666 = vmatprep.subr.bf16.mxu0 %v4780
      %5667 = vmatpush1.bf16.msra.mxu0 %v4779
      %5668 = vmatprep.mubr.bf16.mxu0 %v5160
      %5669 = vmatmul.mubr.bf16.gmra.mrb[0].mxu0 %v5159
      %v5670 = vpop.f32.mrb[0].mxu0
      %v5671 = vadd.f32 %v5558, %v5670
      %v5672 = vpop.f32.mrb[0].mxu0
      %v5673 = vadd.f32 %v5560, %v5672
      %v5674 = vpop.f32.mrb[0].mxu0
      %v5675 = vadd.f32 %v5562, %v5674
      %v5676 = vpop.f32.mrb[0].mxu0
      %v5677 = vadd.f32 %v5564, %v5676
      %5678 = vmatprep.mubr.bf16.mxu0 %v5169
      %5679 = vmatmul.mubr.bf16.gmra.mrb[0].mxu0 %v5168
      %v5680 = vpop.f32.mrb[0].mxu0
      %v5681 = vadd.f32 %v5568, %v5680
      %v5682 = vpop.f32.mrb[0].mxu0
      %v5683 = vadd.f32 %v5570, %v5682
      %v5684 = vpop.f32.mrb[0].mxu0
      %v5685 = vadd.f32 %v5572, %v5684
      %v5686 = vpop.f32.mrb[0].mxu0
      %v5687 = vadd.f32 %v5574, %v5686
      %5688 = vmatprep.mubr.bf16.mxu0 %v5178
      %5689 = vmatmul.mubr.bf16.gmra.mrb[0].mxu0 %v5177
      %v5690 = vpop.f32.mrb[0].mxu0
      %v5691 = vadd.f32 %v5578, %v5690
      %v5692 = vpop.f32.mrb[0].mxu0
      %v5693 = vadd.f32 %v5580, %v5692
      %v5694 = vpop.f32.mrb[0].mxu0
      %v5695 = vadd.f32 %v5582, %v5694
      %v5696 = vpop.f32.mrb[0].mxu0
      %v5697 = vadd.f32 %v5584, %v5696
      %5698 = vmatprep.mubr.bf16.mxu0 %v5187
      %5699 = vmatmul.mubr.bf16.gmra.mrb[0].mxu0 %v5186
      %v5700 = vpop.f32.mrb[0].mxu0
      %v5701 = vadd.f32 %v5588, %v5700
      %v5702 = vpop.f32.mrb[0].mxu0
      %v5703 = vadd.f32 %v5590, %v5702
      %v5704 = vpop.f32.mrb[0].mxu0
      %v5705 = vadd.f32 %v5592, %v5704
      %v5706 = vpop.f32.mrb[0].mxu0
      %v5707 = vadd.f32 %v5594, %v5706
      %5708 = vmatprep.mubr.bf16.mxu0 %v5196
      %5709 = vmatmul.mubr.bf16.gmra.mrb[0].mxu0 %v5195
      %v5710 = vpop.f32.mrb[0].mxu0
      %v5711 = vadd.f32 %v5598, %v5710
      %v5712 = vpop.f32.mrb[0].mxu0
      %v5713 = vadd.f32 %v5600, %v5712
      %v5714 = vpop.f32.mrb[0].mxu0
      %v5715 = vadd.f32 %v5602, %v5714
      %v5716 = vpop.f32.mrb[0].mxu0
      %v5717 = vadd.f32 %v5604, %v5716
      %5718 = vmatprep.mubr.bf16.mxu0 %v5205
      %5719 = vmatmul.mubr.bf16.gmra.mrb[0].mxu0 %v5204
      %v5720 = vpop.f32.mrb[0].mxu0
      %v5721 = vadd.f32 %v5608, %v5720
      %v5722 = vpop.f32.mrb[0].mxu0
      %v5723 = vadd.f32 %v5610, %v5722
      %v5724 = vpop.f32.mrb[0].mxu0
      %v5725 = vadd.f32 %v5612, %v5724
      %v5726 = vpop.f32.mrb[0].mxu0
      %v5727 = vadd.f32 %v5614, %v5726
      %5728 = vmatprep.mubr.bf16.mxu0 %v5214
      %5729 = vmatmul.mubr.bf16.gmra.mrb[0].mxu0 %v5213
      %v5730 = vpop.f32.mrb[0].mxu0
      %v5731 = vadd.f32 %v5618, %v5730
      %v5732 = vpop.f32.mrb[0].mxu0
      %v5733 = vadd.f32 %v5620, %v5732
      %v5734 = vpop.f32.mrb[0].mxu0
      %v5735 = vadd.f32 %v5622, %v5734
      %v5736 = vpop.f32.mrb[0].mxu0
      %v5737 = vadd.f32 %v5624, %v5736
      %5738 = vmatprep.mubr.bf16.mxu0 %v5223
      %5739 = vmatmul.mubr.bf16.gmra.mrb[0].mxu0 %v5222
      %v5740 = vpop.f32.mrb[0].mxu0
      %v5741 = vadd.f32 %v5628, %v5740
      %v5742 = vpop.f32.mrb[0].mxu0
      %v5743 = vadd.f32 %v5630, %v5742
      %v5744 = vpop.f32.mrb[0].mxu0
      %v5745 = vadd.f32 %v5632, %v5744
      %v5746 = vpop.f32.mrb[0].mxu0
      %v5747 = vadd.f32 %v5634, %v5746
      %5748 = vdwg.mxu0
      %5749 = vmatprep.subr.bf16.mxu0 %v4786
      %5750 = vmatpush1.bf16.msra.mxu0 %v4785
      %5751 = vmatprep.subr.bf16.mxu0 %v4792
      %5752 = vmatpush1.bf16.msra.mxu0 %v4791
      %5753 = vmatprep.subr.bf16.mxu0 %v4798
      %5754 = vmatpush1.bf16.msra.mxu0 %v4797
      %5755 = vmatprep.subr.bf16.mxu0 %v4804
      %5756 = vmatpush1.bf16.msra.mxu0 %v4803
      %5757 = vmatprep.subr.bf16.mxu0 %v4810
      %5758 = vmatpush1.bf16.msra.mxu0 %v4809
      %5759 = vmatprep.subr.bf16.mxu0 %v4816
      %5760 = vmatpush1.bf16.msra.mxu0 %v4815
      %5761 = vmatprep.subr.bf16.mxu0 %v4822
      %5762 = vmatpush1.bf16.msra.mxu0 %v4821
      %5763 = vmatprep.subr.bf16.mxu0 %v4828
      %5764 = vmatpush1.bf16.msra.mxu0 %v4827
      %5765 = vmatprep.subr.bf16.mxu0 0
      %5766 = vmatpush1.bf16.msra.mxu0 0
      %5767 = vmatprep.subr.bf16.mxu0 0
      %5768 = vmatpush1.bf16.msra.mxu0 0
      %5769 = vmatprep.subr.bf16.mxu0 0
      %5770 = vmatpush1.bf16.msra.mxu0 0
      %5771 = vmatprep.subr.bf16.mxu0 0
      %5772 = vmatpush1.bf16.msra.mxu0 0
      %5773 = vmatprep.subr.bf16.mxu0 0
      %5774 = vmatpush1.bf16.msra.mxu0 0
      %5775 = vmatprep.subr.bf16.mxu0 0
      %5776 = vmatpush1.bf16.msra.mxu0 0
      %5777 = vmatprep.subr.bf16.mxu0 0
      %5778 = vmatpush1.bf16.msra.mxu0 0
      %5779 = vmatprep.subr.bf16.mxu0 0
      %5780 = vmatpush1.bf16.msra.mxu0 0
      %5781 = vmatprep.mubr.bf16.mxu0 0
      %5782 = vmatmul.mubr.bf16.gmra.mrb[0].mxu0 %v5161
      %v5783 = vpop.f32.mrb[0].mxu0
      %v5784 = vadd.f32 %v5671, %v5783
      %v5785 = vpop.f32.mrb[0].mxu0
      %v5786 = vadd.f32 %v5673, %v5785
      %v5787 = vpop.f32.mrb[0].mxu0
      %v5788 = vadd.f32 %v5675, %v5787
      %v5789 = vpop.f32.mrb[0].mxu0
      %v5790 = vadd.f32 %v5677, %v5789
      %5791 = vmatprep.mubr.bf16.mxu0 0
      %5792 = vmatmul.mubr.bf16.gmra.mrb[0].mxu0 %v5170
      %v5793 = vpop.f32.mrb[0].mxu0
      %v5794 = vadd.f32 %v5681, %v5793
      %v5795 = vpop.f32.mrb[0].mxu0
      %v5796 = vadd.f32 %v5683, %v5795
      %v5797 = vpop.f32.mrb[0].mxu0
      %v5798 = vadd.f32 %v5685, %v5797
      %v5799 = vpop.f32.mrb[0].mxu0
      %v5800 = vadd.f32 %v5687, %v5799
      %5801 = vmatprep.mubr.bf16.mxu0 0
      %5802 = vmatmul.mubr.bf16.gmra.mrb[0].mxu0 %v5179
      %v5803 = vpop.f32.mrb[0].mxu0
      %v5804 = vadd.f32 %v5691, %v5803
      %v5805 = vpop.f32.mrb[0].mxu0
      %v5806 = vadd.f32 %v5693, %v5805
      %v5807 = vpop.f32.mrb[0].mxu0
      %v5808 = vadd.f32 %v5695, %v5807
      %v5809 = vpop.f32.mrb[0].mxu0
      %v5810 = vadd.f32 %v5697, %v5809
      %5811 = vmatprep.mubr.bf16.mxu0 0
      %5812 = vmatmul.mubr.bf16.gmra.mrb[0].mxu0 %v5188
      %v5813 = vpop.f32.mrb[0].mxu0
      %v5814 = vadd.f32 %v5701, %v5813
      %v5815 = vpop.f32.mrb[0].mxu0
      %v5816 = vadd.f32 %v5703, %v5815
      %v5817 = vpop.f32.mrb[0].mxu0
      %v5818 = vadd.f32 %v5705, %v5817
      %v5819 = vpop.f32.mrb[0].mxu0
      %v5820 = vadd.f32 %v5707, %v5819
      %5821 = vmatprep.mubr.bf16.mxu0 0
      %5822 = vmatmul.mubr.bf16.gmra.mrb[0].mxu0 %v5197
      %v5823 = vpop.f32.mrb[0].mxu0
      %v5824 = vadd.f32 %v5711, %v5823
      %v5825 = vpop.f32.mrb[0].mxu0
      %v5826 = vadd.f32 %v5713, %v5825
      %v5827 = vpop.f32.mrb[0].mxu0
      %v5828 = vadd.f32 %v5715, %v5827
      %v5829 = vpop.f32.mrb[0].mxu0
      %v5830 = vadd.f32 %v5717, %v5829
      %5831 = vmatprep.mubr.bf16.mxu0 0
      %5832 = vmatmul.mubr.bf16.gmra.mrb[0].mxu0 %v5206
      %v5833 = vpop.f32.mrb[0].mxu0
      %v5834 = vadd.f32 %v5721, %v5833
      %v5835 = vpop.f32.mrb[0].mxu0
      %v5836 = vadd.f32 %v5723, %v5835
      %v5837 = vpop.f32.mrb[0].mxu0
      %v5838 = vadd.f32 %v5725, %v5837
      %v5839 = vpop.f32.mrb[0].mxu0
      %v5840 = vadd.f32 %v5727, %v5839
      %5841 = vmatprep.mubr.bf16.mxu0 0
      %5842 = vmatmul.mubr.bf16.gmra.mrb[0].mxu0 %v5215
      %v5843 = vpop.f32.mrb[0].mxu0
      %v5844 = vadd.f32 %v5731, %v5843
      %v5845 = vpop.f32.mrb[0].mxu0
      %v5846 = vadd.f32 %v5733, %v5845
      %v5847 = vpop.f32.mrb[0].mxu0
      %v5848 = vadd.f32 %v5735, %v5847
      %v5849 = vpop.f32.mrb[0].mxu0
      %v5850 = vadd.f32 %v5737, %v5849
      %5851 = vmatprep.mubr.bf16.mxu0 0
      %5852 = vmatmul.mubr.bf16.gmra.mrb[0].mxu0 %v5224
      %v5853 = vpop.f32.mrb[0].mxu0
      %v5854 = vadd.f32 %v5741, %v5853
      %v5855 = vpop.f32.mrb[0].mxu0
      %v5856 = vadd.f32 %v5743, %v5855
      %v5857 = vpop.f32.mrb[0].mxu0
      %v5858 = vadd.f32 %v5745, %v5857
      %v5859 = vpop.f32.mrb[0].mxu0
      %v5860 = vadd.f32 %v5747, %v5859
      %5861 = vdwg.mxu0
      %5862 = vmatprep.subr.bf16.mxu0 %v4404
      %5863 = vmatpush1.bf16.msra.mxu0 %v4403
      %5864 = vmatprep.subr.bf16.mxu0 %v4410
      %5865 = vmatpush1.bf16.msra.mxu0 %v4409
      %5866 = vmatprep.subr.bf16.mxu0 %v4416
      %5867 = vmatpush1.bf16.msra.mxu0 %v4415
      %5868 = vmatprep.subr.bf16.mxu0 %v4422
      %5869 = vmatpush1.bf16.msra.mxu0 %v4421
      %5870 = vmatprep.subr.bf16.mxu0 %v4428
      %5871 = vmatpush1.bf16.msra.mxu0 %v4427
      %5872 = vmatprep.subr.bf16.mxu0 %v4434
      %5873 = vmatpush1.bf16.msra.mxu0 %v4433
      %5874 = vmatprep.subr.bf16.mxu0 %v4440
      %5875 = vmatpush1.bf16.msra.mxu0 %v4439
      %5876 = vmatprep.subr.bf16.mxu0 %v4446
      %5877 = vmatpush1.bf16.msra.mxu0 %v4445
      %5878 = vmatprep.subr.bf16.mxu0 %v4452
      %5879 = vmatpush1.bf16.msra.mxu0 %v4451
      %5880 = vmatprep.subr.bf16.mxu0 %v4458
      %5881 = vmatpush1.bf16.msra.mxu0 %v4457
      %5882 = vmatprep.subr.bf16.mxu0 %v4464
      %5883 = vmatpush1.bf16.msra.mxu0 %v4463
      %5884 = vmatprep.subr.bf16.mxu0 %v4470
      %5885 = vmatpush1.bf16.msra.mxu0 %v4469
      %5886 = vmatprep.subr.bf16.mxu0 %v4476
      %5887 = vmatpush1.bf16.msra.mxu0 %v4475
      %5888 = vmatprep.subr.bf16.mxu0 %v4482
      %5889 = vmatpush1.bf16.msra.mxu0 %v4481
      %5890 = vmatprep.subr.bf16.mxu0 %v4488
      %5891 = vmatpush1.bf16.msra.mxu0 %v4487
      %5892 = vmatprep.subr.bf16.mxu0 %v4494
      %5893 = vmatpush1.bf16.msra.mxu0 %v4493
      %5894 = vmatprep.mubr.bf16.mxu0 %v5154
      %5895 = vmatmul.mubr.bf16.gmra.mrb[0].mxu0 %v5153
      %v5896 = vpop.f32.mrb[0].mxu0
      %v5897 = vadd.f32 %v4852, %v5896
      %v5898 = vpop.f32.mrb[0].mxu0
      %v5899 = vadd.f32 %v4852, %v5898
      %v5900 = vpop.f32.mrb[0].mxu0
      %v5901 = vadd.f32 %v4857, %v5900
      %v5902 = vpop.f32.mrb[0].mxu0
      %v5903 = vadd.f32 %v4857, %v5902
      %5904 = vmatprep.mubr.bf16.mxu0 %v5163
      %5905 = vmatmul.mubr.bf16.gmra.mrb[0].mxu0 %v5162
      %v5906 = vpop.f32.mrb[0].mxu0
      %v5907 = vadd.f32 %v4862, %v5906
      %v5908 = vpop.f32.mrb[0].mxu0
      %v5909 = vadd.f32 %v4862, %v5908
      %v5910 = vpop.f32.mrb[0].mxu0
      %v5911 = vadd.f32 %v4867, %v5910
      %v5912 = vpop.f32.mrb[0].mxu0
      %v5913 = vadd.f32 %v4867, %v5912
      %5914 = vmatprep.mubr.bf16.mxu0 %v5172
      %5915 = vmatmul.mubr.bf16.gmra.mrb[0].mxu0 %v5171
      %v5916 = vpop.f32.mrb[0].mxu0
      %v5917 = vadd.f32 %v4872, %v5916
      %v5918 = vpop.f32.mrb[0].mxu0
      %v5919 = vadd.f32 %v4872, %v5918
      %v5920 = vpop.f32.mrb[0].mxu0
      %v5921 = vadd.f32 %v4877, %v5920
      %v5922 = vpop.f32.mrb[0].mxu0
      %v5923 = vadd.f32 %v4877, %v5922
      %5924 = vmatprep.mubr.bf16.mxu0 %v5181
      %5925 = vmatmul.mubr.bf16.gmra.mrb[0].mxu0 %v5180
      %v5926 = vpop.f32.mrb[0].mxu0
      %v5927 = vadd.f32 %v4882, %v5926
      %v5928 = vpop.f32.mrb[0].mxu0
      %v5929 = vadd.f32 %v4882, %v5928
      %v5930 = vpop.f32.mrb[0].mxu0
      %v5931 = vadd.f32 %v4887, %v5930
      %v5932 = vpop.f32.mrb[0].mxu0
      %v5933 = vadd.f32 %v4887, %v5932
      %5934 = vmatprep.mubr.bf16.mxu0 %v5190
      %5935 = vmatmul.mubr.bf16.gmra.mrb[0].mxu0 %v5189
      %v5936 = vpop.f32.mrb[0].mxu0
      %v5937 = vadd.f32 %v4892, %v5936
      %v5938 = vpop.f32.mrb[0].mxu0
      %v5939 = vadd.f32 %v4892, %v5938
      %v5940 = vpop.f32.mrb[0].mxu0
      %v5941 = vadd.f32 %v4897, %v5940
      %v5942 = vpop.f32.mrb[0].mxu0
      %v5943 = vadd.f32 %v4897, %v5942
      %5944 = vmatprep.mubr.bf16.mxu0 %v5199
      %5945 = vmatmul.mubr.bf16.gmra.mrb[0].mxu0 %v5198
      %v5946 = vpop.f32.mrb[0].mxu0
      %v5947 = vadd.f32 %v4902, %v5946
      %v5948 = vpop.f32.mrb[0].mxu0
      %v5949 = vadd.f32 %v4902, %v5948
      %v5950 = vpop.f32.mrb[0].mxu0
      %v5951 = vadd.f32 %v4907, %v5950
      %v5952 = vpop.f32.mrb[0].mxu0
      %v5953 = vadd.f32 %v4907, %v5952
      %5954 = vmatprep.mubr.bf16.mxu0 %v5208
      %5955 = vmatmul.mubr.bf16.gmra.mrb[0].mxu0 %v5207
      %v5956 = vpop.f32.mrb[0].mxu0
      %v5957 = vadd.f32 %v4912, %v5956
      %v5958 = vpop.f32.mrb[0].mxu0
      %v5959 = vadd.f32 %v4912, %v5958
      %v5960 = vpop.f32.mrb[0].mxu0
      %v5961 = vadd.f32 %v4917, %v5960
      %v5962 = vpop.f32.mrb[0].mxu0
      %v5963 = vadd.f32 %v4917, %v5962
      %5964 = vmatprep.mubr.bf16.mxu0 %v5217
      %5965 = vmatmul.mubr.bf16.gmra.mrb[0].mxu0 %v5216
      %v5966 = vpop.f32.mrb[0].mxu0
      %v5967 = vadd.f32 %v4922, %v5966
      %v5968 = vpop.f32.mrb[0].mxu0
      %v5969 = vadd.f32 %v4922, %v5968
      %v5970 = vpop.f32.mrb[0].mxu0
      %v5971 = vadd.f32 %v4927, %v5970
      %v5972 = vpop.f32.mrb[0].mxu0
      %v5973 = vadd.f32 %v4927, %v5972
      %5974 = vdwg.mxu0
      %5975 = vmatprep.subr.bf16.mxu0 %v4500
      %5976 = vmatpush1.bf16.msra.mxu0 %v4499
      %5977 = vmatprep.subr.bf16.mxu0 %v4506
      %5978 = vmatpush1.bf16.msra.mxu0 %v4505
      %5979 = vmatprep.subr.bf16.mxu0 %v4512
      %5980 = vmatpush1.bf16.msra.mxu0 %v4511
      %5981 = vmatprep.subr.bf16.mxu0 %v4518
      %5982 = vmatpush1.bf16.msra.mxu0 %v4517
      %5983 = vmatprep.subr.bf16.mxu0 %v4524
      %5984 = vmatpush1.bf16.msra.mxu0 %v4523
      %5985 = vmatprep.subr.bf16.mxu0 %v4530
      %5986 = vmatpush1.bf16.msra.mxu0 %v4529
      %5987 = vmatprep.subr.bf16.mxu0 %v4536
      %5988 = vmatpush1.bf16.msra.mxu0 %v4535
      %5989 = vmatprep.subr.bf16.mxu0 %v4542
      %5990 = vmatpush1.bf16.msra.mxu0 %v4541
      %5991 = vmatprep.subr.bf16.mxu0 %v4548
      %5992 = vmatpush1.bf16.msra.mxu0 %v4547
      %5993 = vmatprep.subr.bf16.mxu0 %v4554
      %5994 = vmatpush1.bf16.msra.mxu0 %v4553
      %5995 = vmatprep.subr.bf16.mxu0 %v4560
      %5996 = vmatpush1.bf16.msra.mxu0 %v4559
      %5997 = vmatprep.subr.bf16.mxu0 %v4566
      %5998 = vmatpush1.bf16.msra.mxu0 %v4565
      %5999 = vmatprep.subr.bf16.mxu0 %v4572
      %6000 = vmatpush1.bf16.msra.mxu0 %v4571
      %6001 = vmatprep.subr.bf16.mxu0 %v4578
      %6002 = vmatpush1.bf16.msra.mxu0 %v4577
      %6003 = vmatprep.subr.bf16.mxu0 %v4584
      %6004 = vmatpush1.bf16.msra.mxu0 %v4583
      %6005 = vmatprep.subr.bf16.mxu0 %v4590
      %6006 = vmatpush1.bf16.msra.mxu0 %v4589
      %6007 = vmatprep.mubr.bf16.mxu0 %v5156
      %6008 = vmatmul.mubr.bf16.gmra.mrb[0].mxu0 %v5155
      %v6009 = vpop.f32.mrb[0].mxu0
      %v6010 = vadd.f32 %v5897, %v6009
      %v6011 = vpop.f32.mrb[0].mxu0
      %v6012 = vadd.f32 %v5899, %v6011
      %v6013 = vpop.f32.mrb[0].mxu0
      %v6014 = vadd.f32 %v5901, %v6013
      %v6015 = vpop.f32.mrb[0].mxu0
      %v6016 = vadd.f32 %v5903, %v6015
      %6017 = vmatprep.mubr.bf16.mxu0 %v5165
      %6018 = vmatmul.mubr.bf16.gmra.mrb[0].mxu0 %v5164
      %v6019 = vpop.f32.mrb[0].mxu0
      %v6020 = vadd.f32 %v5907, %v6019
      %v6021 = vpop.f32.mrb[0].mxu0
      %v6022 = vadd.f32 %v5909, %v6021
      %v6023 = vpop.f32.mrb[0].mxu0
      %v6024 = vadd.f32 %v5911, %v6023
      %v6025 = vpop.f32.mrb[0].mxu0
      %v6026 = vadd.f32 %v5913, %v6025
      %6027 = vmatprep.mubr.bf16.mxu0 %v5174
      %6028 = vmatmul.mubr.bf16.gmra.mrb[0].mxu0 %v5173
      %v6029 = vpop.f32.mrb[0].mxu0
      %v6030 = vadd.f32 %v5917, %v6029
      %v6031 = vpop.f32.mrb[0].mxu0
      %v6032 = vadd.f32 %v5919, %v6031
      %v6033 = vpop.f32.mrb[0].mxu0
      %v6034 = vadd.f32 %v5921, %v6033
      %v6035 = vpop.f32.mrb[0].mxu0
      %v6036 = vadd.f32 %v5923, %v6035
      %6037 = vmatprep.mubr.bf16.mxu0 %v5183
      %6038 = vmatmul.mubr.bf16.gmra.mrb[0].mxu0 %v5182
      %v6039 = vpop.f32.mrb[0].mxu0
      %v6040 = vadd.f32 %v5927, %v6039
      %v6041 = vpop.f32.mrb[0].mxu0
      %v6042 = vadd.f32 %v5929, %v6041
      %v6043 = vpop.f32.mrb[0].mxu0
      %v6044 = vadd.f32 %v5931, %v6043
      %v6045 = vpop.f32.mrb[0].mxu0
      %v6046 = vadd.f32 %v5933, %v6045
      %6047 = vmatprep.mubr.bf16.mxu0 %v5192
      %6048 = vmatmul.mubr.bf16.gmra.mrb[0].mxu0 %v5191
      %v6049 = vpop.f32.mrb[0].mxu0
      %v6050 = vadd.f32 %v5937, %v6049
      %v6051 = vpop.f32.mrb[0].mxu0
      %v6052 = vadd.f32 %v5939, %v6051
      %v6053 = vpop.f32.mrb[0].mxu0
      %v6054 = vadd.f32 %v5941, %v6053
      %v6055 = vpop.f32.mrb[0].mxu0
      %v6056 = vadd.f32 %v5943, %v6055
      %6057 = vmatprep.mubr.bf16.mxu0 %v5201
      %6058 = vmatmul.mubr.bf16.gmra.mrb[0].mxu0 %v5200
      %v6059 = vpop.f32.mrb[0].mxu0
      %v6060 = vadd.f32 %v5947, %v6059
      %v6061 = vpop.f32.mrb[0].mxu0
      %v6062 = vadd.f32 %v5949, %v6061
      %v6063 = vpop.f32.mrb[0].mxu0
      %v6064 = vadd.f32 %v5951, %v6063
      %v6065 = vpop.f32.mrb[0].mxu0
      %v6066 = vadd.f32 %v5953, %v6065
      %6067 = vmatprep.mubr.bf16.mxu0 %v5210
      %6068 = vmatmul.mubr.bf16.gmra.mrb[0].mxu0 %v5209
      %v6069 = vpop.f32.mrb[0].mxu0
      %v6070 = vadd.f32 %v5957, %v6069
      %v6071 = vpop.f32.mrb[0].mxu0
      %v6072 = vadd.f32 %v5959, %v6071
      %v6073 = vpop.f32.mrb[0].mxu0
      %v6074 = vadd.f32 %v5961, %v6073
      %v6075 = vpop.f32.mrb[0].mxu0
      %v6076 = vadd.f32 %v5963, %v6075
      %6077 = vmatprep.mubr.bf16.mxu0 %v5219
      %6078 = vmatmul.mubr.bf16.gmra.mrb[0].mxu0 %v5218
      %v6079 = vpop.f32.mrb[0].mxu0
      %v6080 = vadd.f32 %v5967, %v6079
      %v6081 = vpop.f32.mrb[0].mxu0
      %v6082 = vadd.f32 %v5969, %v6081
      %v6083 = vpop.f32.mrb[0].mxu0
      %v6084 = vadd.f32 %v5971, %v6083
      %v6085 = vpop.f32.mrb[0].mxu0
      %v6086 = vadd.f32 %v5973, %v6085
      %6087 = vdwg.mxu0
      %6088 = vmatprep.subr.bf16.mxu0 %v4596
      %6089 = vmatpush1.bf16.msra.mxu0 %v4595
      %6090 = vmatprep.subr.bf16.mxu0 %v4602
      %6091 = vmatpush1.bf16.msra.mxu0 %v4601
      %6092 = vmatprep.subr.bf16.mxu0 %v4608
      %6093 = vmatpush1.bf16.msra.mxu0 %v4607
      %6094 = vmatprep.subr.bf16.mxu0 %v4614
      %6095 = vmatpush1.bf16.msra.mxu0 %v4613
      %6096 = vmatprep.subr.bf16.mxu0 %v4620
      %6097 = vmatpush1.bf16.msra.mxu0 %v4619
      %6098 = vmatprep.subr.bf16.mxu0 %v4626
      %6099 = vmatpush1.bf16.msra.mxu0 %v4625
      %6100 = vmatprep.subr.bf16.mxu0 %v4632
      %6101 = vmatpush1.bf16.msra.mxu0 %v4631
      %6102 = vmatprep.subr.bf16.mxu0 %v4638
      %6103 = vmatpush1.bf16.msra.mxu0 %v4637
      %6104 = vmatprep.subr.bf16.mxu0 %v4644
      %6105 = vmatpush1.bf16.msra.mxu0 %v4643
      %6106 = vmatprep.subr.bf16.mxu0 %v4650
      %6107 = vmatpush1.bf16.msra.mxu0 %v4649
      %6108 = vmatprep.subr.bf16.mxu0 %v4656
      %6109 = vmatpush1.bf16.msra.mxu0 %v4655
      %6110 = vmatprep.subr.bf16.mxu0 %v4662
      %6111 = vmatpush1.bf16.msra.mxu0 %v4661
      %6112 = vmatprep.subr.bf16.mxu0 %v4668
      %6113 = vmatpush1.bf16.msra.mxu0 %v4667
      %6114 = vmatprep.subr.bf16.mxu0 %v4674
      %6115 = vmatpush1.bf16.msra.mxu0 %v4673
      %6116 = vmatprep.subr.bf16.mxu0 %v4680
      %6117 = vmatpush1.bf16.msra.mxu0 %v4679
      %6118 = vmatprep.subr.bf16.mxu0 %v4686
      %6119 = vmatpush1.bf16.msra.mxu0 %v4685
      %6120 = vmatprep.mubr.bf16.mxu0 %v5158
      %6121 = vmatmul.mubr.bf16.gmra.mrb[0].mxu0 %v5157
      %v6122 = vpop.f32.mrb[0].mxu0
      %v6123 = vadd.f32 %v6010, %v6122
      %v6124 = vpop.f32.mrb[0].mxu0
      %v6125 = vadd.f32 %v6012, %v6124
      %v6126 = vpop.f32.mrb[0].mxu0
      %v6127 = vadd.f32 %v6014, %v6126
      %v6128 = vpop.f32.mrb[0].mxu0
      %v6129 = vadd.f32 %v6016, %v6128
      %6130 = vmatprep.mubr.bf16.mxu0 %v5167
      %6131 = vmatmul.mubr.bf16.gmra.mrb[0].mxu0 %v5166
      %v6132 = vpop.f32.mrb[0].mxu0
      %v6133 = vadd.f32 %v6020, %v6132
      %v6134 = vpop.f32.mrb[0].mxu0
      %v6135 = vadd.f32 %v6022, %v6134
      %v6136 = vpop.f32.mrb[0].mxu0
      %v6137 = vadd.f32 %v6024, %v6136
      %v6138 = vpop.f32.mrb[0].mxu0
      %v6139 = vadd.f32 %v6026, %v6138
      %6140 = vmatprep.mubr.bf16.mxu0 %v5176
      %6141 = vmatmul.mubr.bf16.gmra.mrb[0].mxu0 %v5175
      %v6142 = vpop.f32.mrb[0].mxu0
      %v6143 = vadd.f32 %v6030, %v6142
      %v6144 = vpop.f32.mrb[0].mxu0
      %v6145 = vadd.f32 %v6032, %v6144
      %v6146 = vpop.f32.mrb[0].mxu0
      %v6147 = vadd.f32 %v6034, %v6146
      %v6148 = vpop.f32.mrb[0].mxu0
      %v6149 = vadd.f32 %v6036, %v6148
      %6150 = vmatprep.mubr.bf16.mxu0 %v5185
      %6151 = vmatmul.mubr.bf16.gmra.mrb[0].mxu0 %v5184
      %v6152 = vpop.f32.mrb[0].mxu0
      %v6153 = vadd.f32 %v6040, %v6152
      %v6154 = vpop.f32.mrb[0].mxu0
      %v6155 = vadd.f32 %v6042, %v6154
      %v6156 = vpop.f32.mrb[0].mxu0
      %v6157 = vadd.f32 %v6044, %v6156
      %v6158 = vpop.f32.mrb[0].mxu0
      %v6159 = vadd.f32 %v6046, %v6158
      %6160 = vmatprep.mubr.bf16.mxu0 %v5194
      %6161 = vmatmul.mubr.bf16.gmra.mrb[0].mxu0 %v5193
      %v6162 = vpop.f32.mrb[0].mxu0
      %v6163 = vadd.f32 %v6050, %v6162
      %v6164 = vpop.f32.mrb[0].mxu0
      %v6165 = vadd.f32 %v6052, %v6164
      %v6166 = vpop.f32.mrb[0].mxu0
      %v6167 = vadd.f32 %v6054, %v6166
      %v6168 = vpop.f32.mrb[0].mxu0
      %v6169 = vadd.f32 %v6056, %v6168
      %6170 = vmatprep.mubr.bf16.mxu0 %v5203
      %6171 = vmatmul.mubr.bf16.gmra.mrb[0].mxu0 %v5202
      %v6172 = vpop.f32.mrb[0].mxu0
      %v6173 = vadd.f32 %v6060, %v6172
      %v6174 = vpop.f32.mrb[0].mxu0
      %v6175 = vadd.f32 %v6062, %v6174
      %v6176 = vpop.f32.mrb[0].mxu0
      %v6177 = vadd.f32 %v6064, %v6176
      %v6178 = vpop.f32.mrb[0].mxu0
      %v6179 = vadd.f32 %v6066, %v6178
      %6180 = vmatprep.mubr.bf16.mxu0 %v5212
      %6181 = vmatmul.mubr.bf16.gmra.mrb[0].mxu0 %v5211
      %v6182 = vpop.f32.mrb[0].mxu0
      %v6183 = vadd.f32 %v6070, %v6182
      %v6184 = vpop.f32.mrb[0].mxu0
      %v6185 = vadd.f32 %v6072, %v6184
      %v6186 = vpop.f32.mrb[0].mxu0
      %v6187 = vadd.f32 %v6074, %v6186
      %v6188 = vpop.f32.mrb[0].mxu0
      %v6189 = vadd.f32 %v6076, %v6188
      %6190 = vmatprep.mubr.bf16.mxu0 %v5221
      %6191 = vmatmul.mubr.bf16.gmra.mrb[0].mxu0 %v5220
      %v6192 = vpop.f32.mrb[0].mxu0
      %v6193 = vadd.f32 %v6080, %v6192
      %v6194 = vpop.f32.mrb[0].mxu0
      %v6195 = vadd.f32 %v6082, %v6194
      %v6196 = vpop.f32.mrb[0].mxu0
      %v6197 = vadd.f32 %v6084, %v6196
      %v6198 = vpop.f32.mrb[0].mxu0
      %v6199 = vadd.f32 %v6086, %v6198
      %6200 = vdwg.mxu0
      %6201 = vmatprep.subr.bf16.mxu0 %v4692
      %6202 = vmatpush1.bf16.msra.mxu0 %v4691
      %6203 = vmatprep.subr.bf16.mxu0 %v4698
      %6204 = vmatpush1.bf16.msra.mxu0 %v4697
      %6205 = vmatprep.subr.bf16.mxu0 %v4704
      %6206 = vmatpush1.bf16.msra.mxu0 %v4703
      %6207 = vmatprep.subr.bf16.mxu0 %v4710
      %6208 = vmatpush1.bf16.msra.mxu0 %v4709
      %6209 = vmatprep.subr.bf16.mxu0 %v4716
      %6210 = vmatpush1.bf16.msra.mxu0 %v4715
      %6211 = vmatprep.subr.bf16.mxu0 %v4722
      %6212 = vmatpush1.bf16.msra.mxu0 %v4721
      %6213 = vmatprep.subr.bf16.mxu0 %v4728
      %6214 = vmatpush1.bf16.msra.mxu0 %v4727
      %6215 = vmatprep.subr.bf16.mxu0 %v4734
      %6216 = vmatpush1.bf16.msra.mxu0 %v4733
      %6217 = vmatprep.subr.bf16.mxu0 %v4740
      %6218 = vmatpush1.bf16.msra.mxu0 %v4739
      %6219 = vmatprep.subr.bf16.mxu0 %v4746
      %6220 = vmatpush1.bf16.msra.mxu0 %v4745
      %6221 = vmatprep.subr.bf16.mxu0 %v4752
      %6222 = vmatpush1.bf16.msra.mxu0 %v4751
      %6223 = vmatprep.subr.bf16.mxu0 %v4758
      %6224 = vmatpush1.bf16.msra.mxu0 %v4757
      %6225 = vmatprep.subr.bf16.mxu0 %v4764
      %6226 = vmatpush1.bf16.msra.mxu0 %v4763
      %6227 = vmatprep.subr.bf16.mxu0 %v4770
      %6228 = vmatpush1.bf16.msra.mxu0 %v4769
      %6229 = vmatprep.subr.bf16.mxu0 %v4776
      %6230 = vmatpush1.bf16.msra.mxu0 %v4775
      %6231 = vmatprep.subr.bf16.mxu0 %v4782
      %6232 = vmatpush1.bf16.msra.mxu0 %v4781
      %6233 = vmatprep.mubr.bf16.mxu0 %v5160
      %6234 = vmatmul.mubr.bf16.gmra.mrb[0].mxu0 %v5159
      %v6235 = vpop.f32.mrb[0].mxu0
      %v6236 = vadd.f32 %v6123, %v6235
      %v6237 = vpop.f32.mrb[0].mxu0
      %v6238 = vadd.f32 %v6125, %v6237
      %v6239 = vpop.f32.mrb[0].mxu0
      %v6240 = vadd.f32 %v6127, %v6239
      %v6241 = vpop.f32.mrb[0].mxu0
      %v6242 = vadd.f32 %v6129, %v6241
      %6243 = vmatprep.mubr.bf16.mxu0 %v5169
      %6244 = vmatmul.mubr.bf16.gmra.mrb[0].mxu0 %v5168
      %v6245 = vpop.f32.mrb[0].mxu0
      %v6246 = vadd.f32 %v6133, %v6245
      %v6247 = vpop.f32.mrb[0].mxu0
      %v6248 = vadd.f32 %v6135, %v6247
      %v6249 = vpop.f32.mrb[0].mxu0
      %v6250 = vadd.f32 %v6137, %v6249
      %v6251 = vpop.f32.mrb[0].mxu0
      %v6252 = vadd.f32 %v6139, %v6251
      %6253 = vmatprep.mubr.bf16.mxu0 %v5178
      %6254 = vmatmul.mubr.bf16.gmra.mrb[0].mxu0 %v5177
      %v6255 = vpop.f32.mrb[0].mxu0
      %v6256 = vadd.f32 %v6143, %v6255
      %v6257 = vpop.f32.mrb[0].mxu0
      %v6258 = vadd.f32 %v6145, %v6257
      %v6259 = vpop.f32.mrb[0].mxu0
      %v6260 = vadd.f32 %v6147, %v6259
      %v6261 = vpop.f32.mrb[0].mxu0
      %v6262 = vadd.f32 %v6149, %v6261
      %6263 = vmatprep.mubr.bf16.mxu0 %v5187
      %6264 = vmatmul.mubr.bf16.gmra.mrb[0].mxu0 %v5186
      %v6265 = vpop.f32.mrb[0].mxu0
      %v6266 = vadd.f32 %v6153, %v6265
      %v6267 = vpop.f32.mrb[0].mxu0
      %v6268 = vadd.f32 %v6155, %v6267
      %v6269 = vpop.f32.mrb[0].mxu0
      %v6270 = vadd.f32 %v6157, %v6269
      %v6271 = vpop.f32.mrb[0].mxu0
      %v6272 = vadd.f32 %v6159, %v6271
      %6273 = vmatprep.mubr.bf16.mxu0 %v5196
      %6274 = vmatmul.mubr.bf16.gmra.mrb[0].mxu0 %v5195
      %v6275 = vpop.f32.mrb[0].mxu0
      %v6276 = vadd.f32 %v6163, %v6275
      %v6277 = vpop.f32.mrb[0].mxu0
      %v6278 = vadd.f32 %v6165, %v6277
      %v6279 = vpop.f32.mrb[0].mxu0
      %v6280 = vadd.f32 %v6167, %v6279
      %v6281 = vpop.f32.mrb[0].mxu0
      %v6282 = vadd.f32 %v6169, %v6281
      %6283 = vmatprep.mubr.bf16.mxu0 %v5205
      %6284 = vmatmul.mubr.bf16.gmra.mrb[0].mxu0 %v5204
      %v6285 = vpop.f32.mrb[0].mxu0
      %v6286 = vadd.f32 %v6173, %v6285
      %v6287 = vpop.f32.mrb[0].mxu0
      %v6288 = vadd.f32 %v6175, %v6287
      %v6289 = vpop.f32.mrb[0].mxu0
      %v6290 = vadd.f32 %v6177, %v6289
      %v6291 = vpop.f32.mrb[0].mxu0
      %v6292 = vadd.f32 %v6179, %v6291
      %6293 = vmatprep.mubr.bf16.mxu0 %v5214
      %6294 = vmatmul.mubr.bf16.gmra.mrb[0].mxu0 %v5213
      %v6295 = vpop.f32.mrb[0].mxu0
      %v6296 = vadd.f32 %v6183, %v6295
      %v6297 = vpop.f32.mrb[0].mxu0
      %v6298 = vadd.f32 %v6185, %v6297
      %v6299 = vpop.f32.mrb[0].mxu0
      %v6300 = vadd.f32 %v6187, %v6299
      %v6301 = vpop.f32.mrb[0].mxu0
      %v6302 = vadd.f32 %v6189, %v6301
      %6303 = vmatprep.mubr.bf16.mxu0 %v5223
      %6304 = vmatmul.mubr.bf16.gmra.mrb[0].mxu0 %v5222
      %v6305 = vpop.f32.mrb[0].mxu0
      %v6306 = vadd.f32 %v6193, %v6305
      %v6307 = vpop.f32.mrb[0].mxu0
      %v6308 = vadd.f32 %v6195, %v6307
      %v6309 = vpop.f32.mrb[0].mxu0
      %v6310 = vadd.f32 %v6197, %v6309
      %v6311 = vpop.f32.mrb[0].mxu0
      %v6312 = vadd.f32 %v6199, %v6311
      %6313 = vdwg.mxu0
      %6314 = vmatprep.subr.bf16.mxu0 %v4788
      %6315 = vmatpush1.bf16.msra.mxu0 %v4787
      %6316 = vmatprep.subr.bf16.mxu0 %v4794
      %6317 = vmatpush1.bf16.msra.mxu0 %v4793
      %6318 = vmatprep.subr.bf16.mxu0 %v4800
      %6319 = vmatpush1.bf16.msra.mxu0 %v4799
      %6320 = vmatprep.subr.bf16.mxu0 %v4806
      %6321 = vmatpush1.bf16.msra.mxu0 %v4805
      %6322 = vmatprep.subr.bf16.mxu0 %v4812
      %6323 = vmatpush1.bf16.msra.mxu0 %v4811
      %6324 = vmatprep.subr.bf16.mxu0 %v4818
      %6325 = vmatpush1.bf16.msra.mxu0 %v4817
      %6326 = vmatprep.subr.bf16.mxu0 %v4824
      %6327 = vmatpush1.bf16.msra.mxu0 %v4823
      %6328 = vmatprep.subr.bf16.mxu0 %v4830
      %6329 = vmatpush1.bf16.msra.mxu0 %v4829
      %6330 = vmatprep.subr.bf16.mxu0 0
      %6331 = vmatpush1.bf16.msra.mxu0 0
      %6332 = vmatprep.subr.bf16.mxu0 0
      %6333 = vmatpush1.bf16.msra.mxu0 0
      %6334 = vmatprep.subr.bf16.mxu0 0
      %6335 = vmatpush1.bf16.msra.mxu0 0
      %6336 = vmatprep.subr.bf16.mxu0 0
      %6337 = vmatpush1.bf16.msra.mxu0 0
      %6338 = vmatprep.subr.bf16.mxu0 0
      %6339 = vmatpush1.bf16.msra.mxu0 0
      %6340 = vmatprep.subr.bf16.mxu0 0
      %6341 = vmatpush1.bf16.msra.mxu0 0
      %6342 = vmatprep.subr.bf16.mxu0 0
      %6343 = vmatpush1.bf16.msra.mxu0 0
      %6344 = vmatprep.subr.bf16.mxu0 0
      %6345 = vmatpush1.bf16.msra.mxu0 0
      %6346 = vmatprep.mubr.bf16.mxu0 0
      %6347 = vmatmul.mubr.bf16.gmra.mrb[0].mxu0 %v5161
      %v6348 = vpop.f32.mrb[0].mxu0
      %v6349 = vadd.f32 %v6236, %v6348
      %v6350 = vpop.f32.mrb[0].mxu0
      %v6351 = vadd.f32 %v6238, %v6350
      %v6352 = vpop.f32.mrb[0].mxu0
      %v6353 = vadd.f32 %v6240, %v6352
      %v6354 = vpop.f32.mrb[0].mxu0
      %v6355 = vadd.f32 %v6242, %v6354
      %6356 = vmatprep.mubr.bf16.mxu0 0
      %6357 = vmatmul.mubr.bf16.gmra.mrb[0].mxu0 %v5170
      %v6358 = vpop.f32.mrb[0].mxu0
      %v6359 = vadd.f32 %v6246, %v6358
      %v6360 = vpop.f32.mrb[0].mxu0
      %v6361 = vadd.f32 %v6248, %v6360
      %v6362 = vpop.f32.mrb[0].mxu0
      %v6363 = vadd.f32 %v6250, %v6362
      %v6364 = vpop.f32.mrb[0].mxu0
      %v6365 = vadd.f32 %v6252, %v6364
      %6366 = vmatprep.mubr.bf16.mxu0 0
      %6367 = vmatmul.mubr.bf16.gmra.mrb[0].mxu0 %v5179
      %v6368 = vpop.f32.mrb[0].mxu0
      %v6369 = vadd.f32 %v6256, %v6368
      %v6370 = vpop.f32.mrb[0].mxu0
      %v6371 = vadd.f32 %v6258, %v6370
      %v6372 = vpop.f32.mrb[0].mxu0
      %v6373 = vadd.f32 %v6260, %v6372
      %v6374 = vpop.f32.mrb[0].mxu0
      %v6375 = vadd.f32 %v6262, %v6374
      %6376 = vmatprep.mubr.bf16.mxu0 0
      %6377 = vmatmul.mubr.bf16.gmra.mrb[0].mxu0 %v5188
      %v6378 = vpop.f32.mrb[0].mxu0
      %v6379 = vadd.f32 %v6266, %v6378
      %v6380 = vpop.f32.mrb[0].mxu0
      %v6381 = vadd.f32 %v6268, %v6380
      %v6382 = vpop.f32.mrb[0].mxu0
      %v6383 = vadd.f32 %v6270, %v6382
      %v6384 = vpop.f32.mrb[0].mxu0
      %v6385 = vadd.f32 %v6272, %v6384
      %6386 = vmatprep.mubr.bf16.mxu0 0
      %6387 = vmatmul.mubr.bf16.gmra.mrb[0].mxu0 %v5197
      %v6388 = vpop.f32.mrb[0].mxu0
      %v6389 = vadd.f32 %v6276, %v6388
      %v6390 = vpop.f32.mrb[0].mxu0
      %v6391 = vadd.f32 %v6278, %v6390
      %v6392 = vpop.f32.mrb[0].mxu0
      %v6393 = vadd.f32 %v6280, %v6392
      %v6394 = vpop.f32.mrb[0].mxu0
      %v6395 = vadd.f32 %v6282, %v6394
      %6396 = vmatprep.mubr.bf16.mxu0 0
      %6397 = vmatmul.mubr.bf16.gmra.mrb[0].mxu0 %v5206
      %v6398 = vpop.f32.mrb[0].mxu0
      %v6399 = vadd.f32 %v6286, %v6398
      %v6400 = vpop.f32.mrb[0].mxu0
      %v6401 = vadd.f32 %v6288, %v6400
      %v6402 = vpop.f32.mrb[0].mxu0
      %v6403 = vadd.f32 %v6290, %v6402
      %v6404 = vpop.f32.mrb[0].mxu0
      %v6405 = vadd.f32 %v6292, %v6404
      %6406 = vmatprep.mubr.bf16.mxu0 0
      %6407 = vmatmul.mubr.bf16.gmra.mrb[0].mxu0 %v5215
      %v6408 = vpop.f32.mrb[0].mxu0
      %v6409 = vadd.f32 %v6296, %v6408
      %v6410 = vpop.f32.mrb[0].mxu0
      %v6411 = vadd.f32 %v6298, %v6410
      %v6412 = vpop.f32.mrb[0].mxu0
      %v6413 = vadd.f32 %v6300, %v6412
      %v6414 = vpop.f32.mrb[0].mxu0
      %v6415 = vadd.f32 %v6302, %v6414
      %6416 = vmatprep.mubr.bf16.mxu0 0
      %6417 = vmatmul.mubr.bf16.gmra.mrb[0].mxu0 %v5224
      %v6418 = vpop.f32.mrb[0].mxu0
      %v6419 = vadd.f32 %v6306, %v6418
      %v6420 = vpop.f32.mrb[0].mxu0
      %v6421 = vadd.f32 %v6308, %v6420
      %v6422 = vpop.f32.mrb[0].mxu0
      %v6423 = vadd.f32 %v6310, %v6422
      %v6424 = vpop.f32.mrb[0].mxu0
      %v6425 = vadd.f32 %v6312, %v6424
      %6426 = vdwg.mxu0
      %6427 = vmatprep.subr.bf16.mxu0 %v4406
      %6428 = vmatpush1.bf16.msra.mxu0 %v4405
      %6429 = vmatprep.subr.bf16.mxu0 %v4412
      %6430 = vmatpush1.bf16.msra.mxu0 %v4411
      %6431 = vmatprep.subr.bf16.mxu0 %v4418
      %6432 = vmatpush1.bf16.msra.mxu0 %v4417
      %6433 = vmatprep.subr.bf16.mxu0 %v4424
      %6434 = vmatpush1.bf16.msra.mxu0 %v4423
      %6435 = vmatprep.subr.bf16.mxu0 %v4430
      %6436 = vmatpush1.bf16.msra.mxu0 %v4429
      %6437 = vmatprep.subr.bf16.mxu0 %v4436
      %6438 = vmatpush1.bf16.msra.mxu0 %v4435
      %6439 = vmatprep.subr.bf16.mxu0 %v4442
      %6440 = vmatpush1.bf16.msra.mxu0 %v4441
      %6441 = vmatprep.subr.bf16.mxu0 %v4448
      %6442 = vmatpush1.bf16.msra.mxu0 %v4447
      %6443 = vmatprep.subr.bf16.mxu0 %v4454
      %6444 = vmatpush1.bf16.msra.mxu0 %v4453
      %6445 = vmatprep.subr.bf16.mxu0 %v4460
      %6446 = vmatpush1.bf16.msra.mxu0 %v4459
      %6447 = vmatprep.subr.bf16.mxu0 %v4466
      %6448 = vmatpush1.bf16.msra.mxu0 %v4465
      %6449 = vmatprep.subr.bf16.mxu0 %v4472
      %6450 = vmatpush1.bf16.msra.mxu0 %v4471
      %6451 = vmatprep.subr.bf16.mxu0 %v4478
      %6452 = vmatpush1.bf16.msra.mxu0 %v4477
      %6453 = vmatprep.subr.bf16.mxu0 %v4484
      %6454 = vmatpush1.bf16.msra.mxu0 %v4483
      %6455 = vmatprep.subr.bf16.mxu0 %v4490
      %6456 = vmatpush1.bf16.msra.mxu0 %v4489
      %6457 = vmatprep.subr.bf16.mxu0 %v4496
      %6458 = vmatpush1.bf16.msra.mxu0 %v4495
      %6459 = vmatprep.mubr.bf16.mxu0 %v5154
      %6460 = vmatmul.mubr.bf16.gmra.mrb[0].mxu0 %v5153
      %v6461 = vpop.f32.mrb[0].mxu0
      %v6462 = vadd.f32 %v4852, %v6461
      %v6463 = vpop.f32.mrb[0].mxu0
      %v6464 = vadd.f32 %v4852, %v6463
      %v6465 = vpop.f32.mrb[0].mxu0
      %v6466 = vadd.f32 %v4857, %v6465
      %v6467 = vpop.f32.mrb[0].mxu0
      %v6468 = vadd.f32 %v4857, %v6467
      %6469 = vmatprep.mubr.bf16.mxu0 %v5163
      %6470 = vmatmul.mubr.bf16.gmra.mrb[0].mxu0 %v5162
      %v6471 = vpop.f32.mrb[0].mxu0
      %v6472 = vadd.f32 %v4862, %v6471
      %v6473 = vpop.f32.mrb[0].mxu0
      %v6474 = vadd.f32 %v4862, %v6473
      %v6475 = vpop.f32.mrb[0].mxu0
      %v6476 = vadd.f32 %v4867, %v6475
      %v6477 = vpop.f32.mrb[0].mxu0
      %v6478 = vadd.f32 %v4867, %v6477
      %6479 = vmatprep.mubr.bf16.mxu0 %v5172
      %6480 = vmatmul.mubr.bf16.gmra.mrb[0].mxu0 %v5171
      %v6481 = vpop.f32.mrb[0].mxu0
      %v6482 = vadd.f32 %v4872, %v6481
      %v6483 = vpop.f32.mrb[0].mxu0
      %v6484 = vadd.f32 %v4872, %v6483
      %v6485 = vpop.f32.mrb[0].mxu0
      %v6486 = vadd.f32 %v4877, %v6485
      %v6487 = vpop.f32.mrb[0].mxu0
      %v6488 = vadd.f32 %v4877, %v6487
      %6489 = vmatprep.mubr.bf16.mxu0 %v5181
      %6490 = vmatmul.mubr.bf16.gmra.mrb[0].mxu0 %v5180
      %v6491 = vpop.f32.mrb[0].mxu0
      %v6492 = vadd.f32 %v4882, %v6491
      %v6493 = vpop.f32.mrb[0].mxu0
      %v6494 = vadd.f32 %v4882, %v6493
      %v6495 = vpop.f32.mrb[0].mxu0
      %v6496 = vadd.f32 %v4887, %v6495
      %v6497 = vpop.f32.mrb[0].mxu0
      %v6498 = vadd.f32 %v4887, %v6497
      %6499 = vmatprep.mubr.bf16.mxu0 %v5190
      %6500 = vmatmul.mubr.bf16.gmra.mrb[0].mxu0 %v5189
      %v6501 = vpop.f32.mrb[0].mxu0
      %v6502 = vadd.f32 %v4892, %v6501
      %v6503 = vpop.f32.mrb[0].mxu0
      %v6504 = vadd.f32 %v4892, %v6503
      %v6505 = vpop.f32.mrb[0].mxu0
      %v6506 = vadd.f32 %v4897, %v6505
      %v6507 = vpop.f32.mrb[0].mxu0
      %v6508 = vadd.f32 %v4897, %v6507
      %6509 = vmatprep.mubr.bf16.mxu0 %v5199
      %6510 = vmatmul.mubr.bf16.gmra.mrb[0].mxu0 %v5198
      %v6511 = vpop.f32.mrb[0].mxu0
      %v6512 = vadd.f32 %v4902, %v6511
      %v6513 = vpop.f32.mrb[0].mxu0
      %v6514 = vadd.f32 %v4902, %v6513
      %v6515 = vpop.f32.mrb[0].mxu0
      %v6516 = vadd.f32 %v4907, %v6515
      %v6517 = vpop.f32.mrb[0].mxu0
      %v6518 = vadd.f32 %v4907, %v6517
      %6519 = vmatprep.mubr.bf16.mxu0 %v5208
      %6520 = vmatmul.mubr.bf16.gmra.mrb[0].mxu0 %v5207
      %v6521 = vpop.f32.mrb[0].mxu0
      %v6522 = vadd.f32 %v4912, %v6521
      %v6523 = vpop.f32.mrb[0].mxu0
      %v6524 = vadd.f32 %v4912, %v6523
      %v6525 = vpop.f32.mrb[0].mxu0
      %v6526 = vadd.f32 %v4917, %v6525
      %v6527 = vpop.f32.mrb[0].mxu0
      %v6528 = vadd.f32 %v4917, %v6527
      %6529 = vmatprep.mubr.bf16.mxu0 %v5217
      %6530 = vmatmul.mubr.bf16.gmra.mrb[0].mxu0 %v5216
      %v6531 = vpop.f32.mrb[0].mxu0
      %v6532 = vadd.f32 %v4922, %v6531
      %v6533 = vpop.f32.mrb[0].mxu0
      %v6534 = vadd.f32 %v4922, %v6533
      %v6535 = vpop.f32.mrb[0].mxu0
      %v6536 = vadd.f32 %v4927, %v6535
      %v6537 = vpop.f32.mrb[0].mxu0
      %v6538 = vadd.f32 %v4927, %v6537
      %6539 = vdwg.mxu0
      %6540 = vmatprep.subr.bf16.mxu0 %v4502
      %6541 = vmatpush1.bf16.msra.mxu0 %v4501
      %6542 = vmatprep.subr.bf16.mxu0 %v4508
      %6543 = vmatpush1.bf16.msra.mxu0 %v4507
      %6544 = vmatprep.subr.bf16.mxu0 %v4514
      %6545 = vmatpush1.bf16.msra.mxu0 %v4513
      %6546 = vmatprep.subr.bf16.mxu0 %v4520
      %6547 = vmatpush1.bf16.msra.mxu0 %v4519
      %6548 = vmatprep.subr.bf16.mxu0 %v4526
      %6549 = vmatpush1.bf16.msra.mxu0 %v4525
      %6550 = vmatprep.subr.bf16.mxu0 %v4532
      %6551 = vmatpush1.bf16.msra.mxu0 %v4531
      %6552 = vmatprep.subr.bf16.mxu0 %v4538
      %6553 = vmatpush1.bf16.msra.mxu0 %v4537
      %6554 = vmatprep.subr.bf16.mxu0 %v4544
      %6555 = vmatpush1.bf16.msra.mxu0 %v4543
      %6556 = vmatprep.subr.bf16.mxu0 %v4550
      %6557 = vmatpush1.bf16.msra.mxu0 %v4549
      %6558 = vmatprep.subr.bf16.mxu0 %v4556
      %6559 = vmatpush1.bf16.msra.mxu0 %v4555
      %6560 = vmatprep.subr.bf16.mxu0 %v4562
      %6561 = vmatpush1.bf16.msra.mxu0 %v4561
      %6562 = vmatprep.subr.bf16.mxu0 %v4568
      %6563 = vmatpush1.bf16.msra.mxu0 %v4567
      %6564 = vmatprep.subr.bf16.mxu0 %v4574
      %6565 = vmatpush1.bf16.msra.mxu0 %v4573
      %6566 = vmatprep.subr.bf16.mxu0 %v4580
      %6567 = vmatpush1.bf16.msra.mxu0 %v4579
      %6568 = vmatprep.subr.bf16.mxu0 %v4586
      %6569 = vmatpush1.bf16.msra.mxu0 %v4585
      %6570 = vmatprep.subr.bf16.mxu0 %v4592
      %6571 = vmatpush1.bf16.msra.mxu0 %v4591
      %6572 = vmatprep.mubr.bf16.mxu0 %v5156
      %6573 = vmatmul.mubr.bf16.gmra.mrb[0].mxu0 %v5155
      %v6574 = vpop.f32.mrb[0].mxu0
      %v6575 = vadd.f32 %v6462, %v6574
      %v6576 = vpop.f32.mrb[0].mxu0
      %v6577 = vadd.f32 %v6464, %v6576
      %v6578 = vpop.f32.mrb[0].mxu0
      %v6579 = vadd.f32 %v6466, %v6578
      %v6580 = vpop.f32.mrb[0].mxu0
      %v6581 = vadd.f32 %v6468, %v6580
      %6582 = vmatprep.mubr.bf16.mxu0 %v5165
      %6583 = vmatmul.mubr.bf16.gmra.mrb[0].mxu0 %v5164
      %v6584 = vpop.f32.mrb[0].mxu0
      %v6585 = vadd.f32 %v6472, %v6584
      %v6586 = vpop.f32.mrb[0].mxu0
      %v6587 = vadd.f32 %v6474, %v6586
      %v6588 = vpop.f32.mrb[0].mxu0
      %v6589 = vadd.f32 %v6476, %v6588
      %v6590 = vpop.f32.mrb[0].mxu0
      %v6591 = vadd.f32 %v6478, %v6590
      %6592 = vmatprep.mubr.bf16.mxu0 %v5174
      %6593 = vmatmul.mubr.bf16.gmra.mrb[0].mxu0 %v5173
      %v6594 = vpop.f32.mrb[0].mxu0
      %v6595 = vadd.f32 %v6482, %v6594
      %v6596 = vpop.f32.mrb[0].mxu0
      %v6597 = vadd.f32 %v6484, %v6596
      %v6598 = vpop.f32.mrb[0].mxu0
      %v6599 = vadd.f32 %v6486, %v6598
      %v6600 = vpop.f32.mrb[0].mxu0
      %v6601 = vadd.f32 %v6488, %v6600
      %6602 = vmatprep.mubr.bf16.mxu0 %v5183
      %6603 = vmatmul.mubr.bf16.gmra.mrb[0].mxu0 %v5182
      %v6604 = vpop.f32.mrb[0].mxu0
      %v6605 = vadd.f32 %v6492, %v6604
      %v6606 = vpop.f32.mrb[0].mxu0
      %v6607 = vadd.f32 %v6494, %v6606
      %v6608 = vpop.f32.mrb[0].mxu0
      %v6609 = vadd.f32 %v6496, %v6608
      %v6610 = vpop.f32.mrb[0].mxu0
      %v6611 = vadd.f32 %v6498, %v6610
      %6612 = vmatprep.mubr.bf16.mxu0 %v5192
      %6613 = vmatmul.mubr.bf16.gmra.mrb[0].mxu0 %v5191
      %v6614 = vpop.f32.mrb[0].mxu0
      %v6615 = vadd.f32 %v6502, %v6614
      %v6616 = vpop.f32.mrb[0].mxu0
      %v6617 = vadd.f32 %v6504, %v6616
      %v6618 = vpop.f32.mrb[0].mxu0
      %v6619 = vadd.f32 %v6506, %v6618
      %v6620 = vpop.f32.mrb[0].mxu0
      %v6621 = vadd.f32 %v6508, %v6620
      %6622 = vmatprep.mubr.bf16.mxu0 %v5201
      %6623 = vmatmul.mubr.bf16.gmra.mrb[0].mxu0 %v5200
      %v6624 = vpop.f32.mrb[0].mxu0
      %v6625 = vadd.f32 %v6512, %v6624
      %v6626 = vpop.f32.mrb[0].mxu0
      %v6627 = vadd.f32 %v6514, %v6626
      %v6628 = vpop.f32.mrb[0].mxu0
      %v6629 = vadd.f32 %v6516, %v6628
      %v6630 = vpop.f32.mrb[0].mxu0
      %v6631 = vadd.f32 %v6518, %v6630
      %6632 = vmatprep.mubr.bf16.mxu0 %v5210
      %6633 = vmatmul.mubr.bf16.gmra.mrb[0].mxu0 %v5209
      %v6634 = vpop.f32.mrb[0].mxu0
      %v6635 = vadd.f32 %v6522, %v6634
      %v6636 = vpop.f32.mrb[0].mxu0
      %v6637 = vadd.f32 %v6524, %v6636
      %v6638 = vpop.f32.mrb[0].mxu0
      %v6639 = vadd.f32 %v6526, %v6638
      %v6640 = vpop.f32.mrb[0].mxu0
      %v6641 = vadd.f32 %v6528, %v6640
      %6642 = vmatprep.mubr.bf16.mxu0 %v5219
      %6643 = vmatmul.mubr.bf16.gmra.mrb[0].mxu0 %v5218
      %v6644 = vpop.f32.mrb[0].mxu0
      %v6645 = vadd.f32 %v6532, %v6644
      %v6646 = vpop.f32.mrb[0].mxu0
      %v6647 = vadd.f32 %v6534, %v6646
      %v6648 = vpop.f32.mrb[0].mxu0
      %v6649 = vadd.f32 %v6536, %v6648
      %v6650 = vpop.f32.mrb[0].mxu0
      %v6651 = vadd.f32 %v6538, %v6650
      %6652 = vdwg.mxu0
      %6653 = vmatprep.subr.bf16.mxu0 %v4598
      %6654 = vmatpush1.bf16.msra.mxu0 %v4597
      %6655 = vmatprep.subr.bf16.mxu0 %v4604
      %6656 = vmatpush1.bf16.msra.mxu0 %v4603
      %6657 = vmatprep.subr.bf16.mxu0 %v4610
      %6658 = vmatpush1.bf16.msra.mxu0 %v4609
      %6659 = vmatprep.subr.bf16.mxu0 %v4616
      %6660 = vmatpush1.bf16.msra.mxu0 %v4615
      %6661 = vmatprep.subr.bf16.mxu0 %v4622
      %6662 = vmatpush1.bf16.msra.mxu0 %v4621
      %6663 = vmatprep.subr.bf16.mxu0 %v4628
      %6664 = vmatpush1.bf16.msra.mxu0 %v4627
      %6665 = vmatprep.subr.bf16.mxu0 %v4634
      %6666 = vmatpush1.bf16.msra.mxu0 %v4633
      %6667 = vmatprep.subr.bf16.mxu0 %v4640
      %6668 = vmatpush1.bf16.msra.mxu0 %v4639
      %6669 = vmatprep.subr.bf16.mxu0 %v4646
      %6670 = vmatpush1.bf16.msra.mxu0 %v4645
      %6671 = vmatprep.subr.bf16.mxu0 %v4652
      %6672 = vmatpush1.bf16.msra.mxu0 %v4651
      %6673 = vmatprep.subr.bf16.mxu0 %v4658
      %6674 = vmatpush1.bf16.msra.mxu0 %v4657
      %6675 = vmatprep.subr.bf16.mxu0 %v4664
      %6676 = vmatpush1.bf16.msra.mxu0 %v4663
      %6677 = vmatprep.subr.bf16.mxu0 %v4670
      %6678 = vmatpush1.bf16.msra.mxu0 %v4669
      %6679 = vmatprep.subr.bf16.mxu0 %v4676
      %6680 = vmatpush1.bf16.msra.mxu0 %v4675
      %6681 = vmatprep.subr.bf16.mxu0 %v4682
      %6682 = vmatpush1.bf16.msra.mxu0 %v4681
      %6683 = vmatprep.subr.bf16.mxu0 %v4688
      %6684 = vmatpush1.bf16.msra.mxu0 %v4687
      %6685 = vmatprep.mubr.bf16.mxu0 %v5158
      %6686 = vmatmul.mubr.bf16.gmra.mrb[0].mxu0 %v5157
      %v6687 = vpop.f32.mrb[0].mxu0
      %v6688 = vadd.f32 %v6575, %v6687
      %v6689 = vpop.f32.mrb[0].mxu0
      %v6690 = vadd.f32 %v6577, %v6689
      %v6691 = vpop.f32.mrb[0].mxu0
      %v6692 = vadd.f32 %v6579, %v6691
      %v6693 = vpop.f32.mrb[0].mxu0
      %v6694 = vadd.f32 %v6581, %v6693
      %6695 = vmatprep.mubr.bf16.mxu0 %v5167
      %6696 = vmatmul.mubr.bf16.gmra.mrb[0].mxu0 %v5166
      %v6697 = vpop.f32.mrb[0].mxu0
      %v6698 = vadd.f32 %v6585, %v6697
      %v6699 = vpop.f32.mrb[0].mxu0
      %v6700 = vadd.f32 %v6587, %v6699
      %v6701 = vpop.f32.mrb[0].mxu0
      %v6702 = vadd.f32 %v6589, %v6701
      %v6703 = vpop.f32.mrb[0].mxu0
      %v6704 = vadd.f32 %v6591, %v6703
      %6705 = vmatprep.mubr.bf16.mxu0 %v5176
      %6706 = vmatmul.mubr.bf16.gmra.mrb[0].mxu0 %v5175
      %v6707 = vpop.f32.mrb[0].mxu0
      %v6708 = vadd.f32 %v6595, %v6707
      %v6709 = vpop.f32.mrb[0].mxu0
      %v6710 = vadd.f32 %v6597, %v6709
      %v6711 = vpop.f32.mrb[0].mxu0
      %v6712 = vadd.f32 %v6599, %v6711
      %v6713 = vpop.f32.mrb[0].mxu0
      %v6714 = vadd.f32 %v6601, %v6713
      %6715 = vmatprep.mubr.bf16.mxu0 %v5185
      %6716 = vmatmul.mubr.bf16.gmra.mrb[0].mxu0 %v5184
      %v6717 = vpop.f32.mrb[0].mxu0
      %v6718 = vadd.f32 %v6605, %v6717
      %v6719 = vpop.f32.mrb[0].mxu0
      %v6720 = vadd.f32 %v6607, %v6719
      %v6721 = vpop.f32.mrb[0].mxu0
      %v6722 = vadd.f32 %v6609, %v6721
      %v6723 = vpop.f32.mrb[0].mxu0
      %v6724 = vadd.f32 %v6611, %v6723
      %6725 = vmatprep.mubr.bf16.mxu0 %v5194
      %6726 = vmatmul.mubr.bf16.gmra.mrb[0].mxu0 %v5193
      %v6727 = vpop.f32.mrb[0].mxu0
      %v6728 = vadd.f32 %v6615, %v6727
      %v6729 = vpop.f32.mrb[0].mxu0
      %v6730 = vadd.f32 %v6617, %v6729
      %v6731 = vpop.f32.mrb[0].mxu0
      %v6732 = vadd.f32 %v6619, %v6731
      %v6733 = vpop.f32.mrb[0].mxu0
      %v6734 = vadd.f32 %v6621, %v6733
      %6735 = vmatprep.mubr.bf16.mxu0 %v5203
      %6736 = vmatmul.mubr.bf16.gmra.mrb[0].mxu0 %v5202
      %v6737 = vpop.f32.mrb[0].mxu0
      %v6738 = vadd.f32 %v6625, %v6737
      %v6739 = vpop.f32.mrb[0].mxu0
      %v6740 = vadd.f32 %v6627, %v6739
      %v6741 = vpop.f32.mrb[0].mxu0
      %v6742 = vadd.f32 %v6629, %v6741
      %v6743 = vpop.f32.mrb[0].mxu0
      %v6744 = vadd.f32 %v6631, %v6743
      %6745 = vmatprep.mubr.bf16.mxu0 %v5212
      %6746 = vmatmul.mubr.bf16.gmra.mrb[0].mxu0 %v5211
      %v6747 = vpop.f32.mrb[0].mxu0
      %v6748 = vadd.f32 %v6635, %v6747
      %v6749 = vpop.f32.mrb[0].mxu0
      %v6750 = vadd.f32 %v6637, %v6749
      %v6751 = vpop.f32.mrb[0].mxu0
      %v6752 = vadd.f32 %v6639, %v6751
      %v6753 = vpop.f32.mrb[0].mxu0
      %v6754 = vadd.f32 %v6641, %v6753
      %6755 = vmatprep.mubr.bf16.mxu0 %v5221
      %6756 = vmatmul.mubr.bf16.gmra.mrb[0].mxu0 %v5220
      %v6757 = vpop.f32.mrb[0].mxu0
      %v6758 = vadd.f32 %v6645, %v6757
      %v6759 = vpop.f32.mrb[0].mxu0
      %v6760 = vadd.f32 %v6647, %v6759
      %v6761 = vpop.f32.mrb[0].mxu0
      %v6762 = vadd.f32 %v6649, %v6761
      %v6763 = vpop.f32.mrb[0].mxu0
      %v6764 = vadd.f32 %v6651, %v6763
      %6765 = vdwg.mxu0
      %6766 = vmatprep.subr.bf16.mxu0 %v4694
      %6767 = vmatpush1.bf16.msra.mxu0 %v4693
      %6768 = vmatprep.subr.bf16.mxu0 %v4700
      %6769 = vmatpush1.bf16.msra.mxu0 %v4699
      %6770 = vmatprep.subr.bf16.mxu0 %v4706
      %6771 = vmatpush1.bf16.msra.mxu0 %v4705
      %6772 = vmatprep.subr.bf16.mxu0 %v4712
      %6773 = vmatpush1.bf16.msra.mxu0 %v4711
      %6774 = vmatprep.subr.bf16.mxu0 %v4718
      %6775 = vmatpush1.bf16.msra.mxu0 %v4717
      %6776 = vmatprep.subr.bf16.mxu0 %v4724
      %6777 = vmatpush1.bf16.msra.mxu0 %v4723
      %6778 = vmatprep.subr.bf16.mxu0 %v4730
      %6779 = vmatpush1.bf16.msra.mxu0 %v4729
      %6780 = vmatprep.subr.bf16.mxu0 %v4736
      %6781 = vmatpush1.bf16.msra.mxu0 %v4735
      %6782 = vmatprep.subr.bf16.mxu0 %v4742
      %6783 = vmatpush1.bf16.msra.mxu0 %v4741
      %6784 = vmatprep.subr.bf16.mxu0 %v4748
      %6785 = vmatpush1.bf16.msra.mxu0 %v4747
      %6786 = vmatprep.subr.bf16.mxu0 %v4754
      %6787 = vmatpush1.bf16.msra.mxu0 %v4753
      %6788 = vmatprep.subr.bf16.mxu0 %v4760
      %6789 = vmatpush1.bf16.msra.mxu0 %v4759
      %6790 = vmatprep.subr.bf16.mxu0 %v4766
      %6791 = vmatpush1.bf16.msra.mxu0 %v4765
      %6792 = vmatprep.subr.bf16.mxu0 %v4772
      %6793 = vmatpush1.bf16.msra.mxu0 %v4771
      %6794 = vmatprep.subr.bf16.mxu0 %v4778
      %6795 = vmatpush1.bf16.msra.mxu0 %v4777
      %6796 = vmatprep.subr.bf16.mxu0 %v4784
      %6797 = vmatpush1.bf16.msra.mxu0 %v4783
      %6798 = vmatprep.mubr.bf16.mxu0 %v5160
      %6799 = vmatmul.mubr.bf16.gmra.mrb[0].mxu0 %v5159
      %v6800 = vpop.f32.mrb[0].mxu0
      %v6801 = vadd.f32 %v6688, %v6800
      %v6802 = vpop.f32.mrb[0].mxu0
      %v6803 = vadd.f32 %v6690, %v6802
      %v6804 = vpop.f32.mrb[0].mxu0
      %v6805 = vadd.f32 %v6692, %v6804
      %v6806 = vpop.f32.mrb[0].mxu0
      %v6807 = vadd.f32 %v6694, %v6806
      %6808 = vmatprep.mubr.bf16.mxu0 %v5169
      %6809 = vmatmul.mubr.bf16.gmra.mrb[0].mxu0 %v5168
      %v6810 = vpop.f32.mrb[0].mxu0
      %v6811 = vadd.f32 %v6698, %v6810
      %v6812 = vpop.f32.mrb[0].mxu0
      %v6813 = vadd.f32 %v6700, %v6812
      %v6814 = vpop.f32.mrb[0].mxu0
      %v6815 = vadd.f32 %v6702, %v6814
      %v6816 = vpop.f32.mrb[0].mxu0
      %v6817 = vadd.f32 %v6704, %v6816
      %6818 = vmatprep.mubr.bf16.mxu0 %v5178
      %6819 = vmatmul.mubr.bf16.gmra.mrb[0].mxu0 %v5177
      %v6820 = vpop.f32.mrb[0].mxu0
      %v6821 = vadd.f32 %v6708, %v6820
      %v6822 = vpop.f32.mrb[0].mxu0
      %v6823 = vadd.f32 %v6710, %v6822
      %v6824 = vpop.f32.mrb[0].mxu0
      %v6825 = vadd.f32 %v6712, %v6824
      %v6826 = vpop.f32.mrb[0].mxu0
      %v6827 = vadd.f32 %v6714, %v6826
      %6828 = vmatprep.mubr.bf16.mxu0 %v5187
      %6829 = vmatmul.mubr.bf16.gmra.mrb[0].mxu0 %v5186
      %v6830 = vpop.f32.mrb[0].mxu0
      %v6831 = vadd.f32 %v6718, %v6830
      %v6832 = vpop.f32.mrb[0].mxu0
      %v6833 = vadd.f32 %v6720, %v6832
      %v6834 = vpop.f32.mrb[0].mxu0
      %v6835 = vadd.f32 %v6722, %v6834
      %v6836 = vpop.f32.mrb[0].mxu0
      %v6837 = vadd.f32 %v6724, %v6836
      %6838 = vmatprep.mubr.bf16.mxu0 %v5196
      %6839 = vmatmul.mubr.bf16.gmra.mrb[0].mxu0 %v5195
      %v6840 = vpop.f32.mrb[0].mxu0
      %v6841 = vadd.f32 %v6728, %v6840
      %v6842 = vpop.f32.mrb[0].mxu0
      %v6843 = vadd.f32 %v6730, %v6842
      %v6844 = vpop.f32.mrb[0].mxu0
      %v6845 = vadd.f32 %v6732, %v6844
      %v6846 = vpop.f32.mrb[0].mxu0
      %v6847 = vadd.f32 %v6734, %v6846
      %6848 = vmatprep.mubr.bf16.mxu0 %v5205
      %6849 = vmatmul.mubr.bf16.gmra.mrb[0].mxu0 %v5204
      %v6850 = vpop.f32.mrb[0].mxu0
      %v6851 = vadd.f32 %v6738, %v6850
      %v6852 = vpop.f32.mrb[0].mxu0
      %v6853 = vadd.f32 %v6740, %v6852
      %v6854 = vpop.f32.mrb[0].mxu0
      %v6855 = vadd.f32 %v6742, %v6854
      %v6856 = vpop.f32.mrb[0].mxu0
      %v6857 = vadd.f32 %v6744, %v6856
      %6858 = vmatprep.mubr.bf16.mxu0 %v5214
      %6859 = vmatmul.mubr.bf16.gmra.mrb[0].mxu0 %v5213
      %v6860 = vpop.f32.mrb[0].mxu0
      %v6861 = vadd.f32 %v6748, %v6860
      %v6862 = vpop.f32.mrb[0].mxu0
      %v6863 = vadd.f32 %v6750, %v6862
      %v6864 = vpop.f32.mrb[0].mxu0
      %v6865 = vadd.f32 %v6752, %v6864
      %v6866 = vpop.f32.mrb[0].mxu0
      %v6867 = vadd.f32 %v6754, %v6866
      %6868 = vmatprep.mubr.bf16.mxu0 %v5223
      %6869 = vmatmul.mubr.bf16.gmra.mrb[0].mxu0 %v5222
      %v6870 = vpop.f32.mrb[0].mxu0
      %v6871 = vadd.f32 %v6758, %v6870
      %v6872 = vpop.f32.mrb[0].mxu0
      %v6873 = vadd.f32 %v6760, %v6872
      %v6874 = vpop.f32.mrb[0].mxu0
      %v6875 = vadd.f32 %v6762, %v6874
      %v6876 = vpop.f32.mrb[0].mxu0
      %v6877 = vadd.f32 %v6764, %v6876
      %6878 = vdwg.mxu0
      %6879 = vmatprep.subr.bf16.mxu0 %v4790
      %6880 = vmatpush1.bf16.msra.mxu0 %v4789
      %6881 = vmatprep.subr.bf16.mxu0 %v4796
      %6882 = vmatpush1.bf16.msra.mxu0 %v4795
      %6883 = vmatprep.subr.bf16.mxu0 %v4802
      %6884 = vmatpush1.bf16.msra.mxu0 %v4801
      %6885 = vmatprep.subr.bf16.mxu0 %v4808
      %6886 = vmatpush1.bf16.msra.mxu0 %v4807
      %6887 = vmatprep.subr.bf16.mxu0 %v4814
      %6888 = vmatpush1.bf16.msra.mxu0 %v4813
      %6889 = vmatprep.subr.bf16.mxu0 %v4820
      %6890 = vmatpush1.bf16.msra.mxu0 %v4819
      %6891 = vmatprep.subr.bf16.mxu0 %v4826
      %6892 = vmatpush1.bf16.msra.mxu0 %v4825
      %6893 = vmatprep.subr.bf16.mxu0 %v4832
      %6894 = vmatpush1.bf16.msra.mxu0 %v4831
      %6895 = vmatprep.subr.bf16.mxu0 0
      %6896 = vmatpush1.bf16.msra.mxu0 0
      %6897 = vmatprep.subr.bf16.mxu0 0
      %6898 = vmatpush1.bf16.msra.mxu0 0
      %6899 = vmatprep.subr.bf16.mxu0 0
      %6900 = vmatpush1.bf16.msra.mxu0 0
      %6901 = vmatprep.subr.bf16.mxu0 0
      %6902 = vmatpush1.bf16.msra.mxu0 0
      %6903 = vmatprep.subr.bf16.mxu0 0
      %6904 = vmatpush1.bf16.msra.mxu0 0
      %6905 = vmatprep.subr.bf16.mxu0 0
      %6906 = vmatpush1.bf16.msra.mxu0 0
      %6907 = vmatprep.subr.bf16.mxu0 0
      %6908 = vmatpush1.bf16.msra.mxu0 0
      %6909 = vmatprep.subr.bf16.mxu0 0
      %6910 = vmatpush1.bf16.msra.mxu0 0
      %6911 = vmatprep.mubr.bf16.mxu0 0
      %6912 = vmatmul.mubr.bf16.gmra.mrb[0].mxu0 %v5161
      %v6913 = vpop.f32.mrb[0].mxu0
      %v6914 = vadd.f32 %v6801, %v6913
      %v6915 = vpop.f32.mrb[0].mxu0
      %v6916 = vadd.f32 %v6803, %v6915
      %v6917 = vpop.f32.mrb[0].mxu0
      %v6918 = vadd.f32 %v6805, %v6917
      %v6919 = vpop.f32.mrb[0].mxu0
      %v6920 = vadd.f32 %v6807, %v6919
      %6921 = vmatprep.mubr.bf16.mxu0 0
      %6922 = vmatmul.mubr.bf16.gmra.mrb[0].mxu0 %v5170
      %v6923 = vpop.f32.mrb[0].mxu0
      %v6924 = vadd.f32 %v6811, %v6923
      %v6925 = vpop.f32.mrb[0].mxu0
      %v6926 = vadd.f32 %v6813, %v6925
      %v6927 = vpop.f32.mrb[0].mxu0
      %v6928 = vadd.f32 %v6815, %v6927
      %v6929 = vpop.f32.mrb[0].mxu0
      %v6930 = vadd.f32 %v6817, %v6929
      %6931 = vmatprep.mubr.bf16.mxu0 0
      %6932 = vmatmul.mubr.bf16.gmra.mrb[0].mxu0 %v5179
      %v6933 = vpop.f32.mrb[0].mxu0
      %v6934 = vadd.f32 %v6821, %v6933
      %v6935 = vpop.f32.mrb[0].mxu0
      %v6936 = vadd.f32 %v6823, %v6935
      %v6937 = vpop.f32.mrb[0].mxu0
      %v6938 = vadd.f32 %v6825, %v6937
      %v6939 = vpop.f32.mrb[0].mxu0
      %v6940 = vadd.f32 %v6827, %v6939
      %6941 = vmatprep.mubr.bf16.mxu0 0
      %6942 = vmatmul.mubr.bf16.gmra.mrb[0].mxu0 %v5188
      %v6943 = vpop.f32.mrb[0].mxu0
      %v6944 = vadd.f32 %v6831, %v6943
      %v6945 = vpop.f32.mrb[0].mxu0
      %v6946 = vadd.f32 %v6833, %v6945
      %v6947 = vpop.f32.mrb[0].mxu0
      %v6948 = vadd.f32 %v6835, %v6947
      %v6949 = vpop.f32.mrb[0].mxu0
      %v6950 = vadd.f32 %v6837, %v6949
      %6951 = vmatprep.mubr.bf16.mxu0 0
      %6952 = vmatmul.mubr.bf16.gmra.mrb[0].mxu0 %v5197
      %v6953 = vpop.f32.mrb[0].mxu0
      %v6954 = vadd.f32 %v6841, %v6953
      %v6955 = vpop.f32.mrb[0].mxu0
      %v6956 = vadd.f32 %v6843, %v6955
      %v6957 = vpop.f32.mrb[0].mxu0
      %v6958 = vadd.f32 %v6845, %v6957
      %v6959 = vpop.f32.mrb[0].mxu0
      %v6960 = vadd.f32 %v6847, %v6959
      %6961 = vmatprep.mubr.bf16.mxu0 0
      %6962 = vmatmul.mubr.bf16.gmra.mrb[0].mxu0 %v5206
      %v6963 = vpop.f32.mrb[0].mxu0
      %v6964 = vadd.f32 %v6851, %v6963
      %v6965 = vpop.f32.mrb[0].mxu0
      %v6966 = vadd.f32 %v6853, %v6965
      %v6967 = vpop.f32.mrb[0].mxu0
      %v6968 = vadd.f32 %v6855, %v6967
      %v6969 = vpop.f32.mrb[0].mxu0
      %v6970 = vadd.f32 %v6857, %v6969
      %6971 = vmatprep.mubr.bf16.mxu0 0
      %6972 = vmatmul.mubr.bf16.gmra.mrb[0].mxu0 %v5215
      %v6973 = vpop.f32.mrb[0].mxu0
      %v6974 = vadd.f32 %v6861, %v6973
      %v6975 = vpop.f32.mrb[0].mxu0
      %v6976 = vadd.f32 %v6863, %v6975
      %v6977 = vpop.f32.mrb[0].mxu0
      %v6978 = vadd.f32 %v6865, %v6977
      %v6979 = vpop.f32.mrb[0].mxu0
      %v6980 = vadd.f32 %v6867, %v6979
      %6981 = vmatprep.mubr.bf16.mxu0 0
      %6982 = vmatmul.mubr.bf16.gmra.mrb[0].mxu0 %v5224
      %v6983 = vpop.f32.mrb[0].mxu0
      %v6984 = vadd.f32 %v6871, %v6983
      %v6985 = vpop.f32.mrb[0].mxu0
      %v6986 = vadd.f32 %v6873, %v6985
      %v6987 = vpop.f32.mrb[0].mxu0
      %v6988 = vadd.f32 %v6875, %v6987
      %v6989 = vpop.f32.mrb[0].mxu0
      %v6990 = vadd.f32 %v6877, %v6989
      %6991 = vdwg.mxu0
      %v6992 = vmax.f32 %v5784, 0.0
      %v6993 = vmax.f32 %v5786, 0.0
      %v6994 = vmax.f32 %v6349, 0.0
      %v6995 = vmax.f32 %v6351, 0.0
      %v6996 = vmax.f32 %v6914, 0.0
      %v6997 = vmax.f32 %v6916, 0.0
      %v6998 = vmax.f32 %v5788, 0.0
      %v6999 = vmax.f32 %v5790, 0.0
      %v7000 = vmax.f32 %v6353, 0.0
      %v7001 = vmax.f32 %v6355, 0.0
      %v7002 = vmax.f32 %v6918, 0.0
      %v7003 = vmax.f32 %v6920, 0.0
      %v7004 = vmax.f32 %v5794, 0.0
      %v7005 = vmax.f32 %v5796, 0.0
      %v7006 = vmax.f32 %v6359, 0.0
      %v7007 = vmax.f32 %v6361, 0.0
      %v7008 = vmax.f32 %v6924, 0.0
      %v7009 = vmax.f32 %v6926, 0.0
      %v7010 = vmax.f32 %v5798, 0.0
      %v7011 = vmax.f32 %v5800, 0.0
      %v7012 = vmax.f32 %v6363, 0.0
      %v7013 = vmax.f32 %v6365, 0.0
      %v7014 = vmax.f32 %v6928, 0.0
      %v7015 = vmax.f32 %v6930, 0.0
      %v7016 = vmax.f32 %v5804, 0.0
      %v7017 = vmax.f32 %v5806, 0.0
      %v7018 = vmax.f32 %v6369, 0.0
      %v7019 = vmax.f32 %v6371, 0.0
      %v7020 = vmax.f32 %v6934, 0.0
      %v7021 = vmax.f32 %v6936, 0.0
      %v7022 = vmax.f32 %v5808, 0.0
      %v7023 = vmax.f32 %v5810, 0.0
      %v7024 = vmax.f32 %v6373, 0.0
      %v7025 = vmax.f32 %v6375, 0.0
      %v7026 = vmax.f32 %v6938, 0.0
      %v7027 = vmax.f32 %v6940, 0.0
      %v7028 = vmax.f32 %v5814, 0.0
      %v7029 = vmax.f32 %v5816, 0.0
      %v7030 = vmax.f32 %v6379, 0.0
      %v7031 = vmax.f32 %v6381, 0.0
      %v7032 = vmax.f32 %v6944, 0.0
      %v7033 = vmax.f32 %v6946, 0.0
      %v7034 = vmax.f32 %v5818, 0.0
      %v7035 = vmax.f32 %v5820, 0.0
      %v7036 = vmax.f32 %v6383, 0.0
      %v7037 = vmax.f32 %v6385, 0.0
      %v7038 = vmax.f32 %v6948, 0.0
      %v7039 = vmax.f32 %v6950, 0.0
      %v7040 = vmax.f32 %v5824, 0.0
      %v7041 = vmax.f32 %v5826, 0.0
      %v7042 = vmax.f32 %v6389, 0.0
      %v7043 = vmax.f32 %v6391, 0.0
      %v7044 = vmax.f32 %v6954, 0.0
      %v7045 = vmax.f32 %v6956, 0.0
      %v7046 = vmax.f32 %v5828, 0.0
      %v7047 = vmax.f32 %v5830, 0.0
      %v7048 = vmax.f32 %v6393, 0.0
      %v7049 = vmax.f32 %v6395, 0.0
      %v7050 = vmax.f32 %v6958, 0.0
      %v7051 = vmax.f32 %v6960, 0.0
      %v7052 = vmax.f32 %v5834, 0.0
      %v7053 = vmax.f32 %v5836, 0.0
      %v7054 = vmax.f32 %v6399, 0.0
      %v7055 = vmax.f32 %v6401, 0.0
      %v7056 = vmax.f32 %v6964, 0.0
      %v7057 = vmax.f32 %v6966, 0.0
      %v7058 = vmax.f32 %v5838, 0.0
      %v7059 = vmax.f32 %v5840, 0.0
      %v7060 = vmax.f32 %v6403, 0.0
      %v7061 = vmax.f32 %v6405, 0.0
      %v7062 = vmax.f32 %v6968, 0.0
      %v7063 = vmax.f32 %v6970, 0.0
      %v7064 = vmax.f32 %v5844, 0.0
      %v7065 = vmax.f32 %v5846, 0.0
      %v7066 = vmax.f32 %v6409, 0.0
      %v7067 = vmax.f32 %v6411, 0.0
      %v7068 = vmax.f32 %v6974, 0.0
      %v7069 = vmax.f32 %v6976, 0.0
      %v7070 = vmax.f32 %v5848, 0.0
      %v7071 = vmax.f32 %v5850, 0.0
      %v7072 = vmax.f32 %v6413, 0.0
      %v7073 = vmax.f32 %v6415, 0.0
      %v7074 = vmax.f32 %v6978, 0.0
      %v7075 = vmax.f32 %v6980, 0.0
      %v7076 = vmax.f32 %v5854, 0.0
      %v7077 = vmax.f32 %v5856, 0.0
      %v7078 = vmax.f32 %v6419, 0.0
      %v7079 = vmax.f32 %v6421, 0.0
      %v7080 = vmax.f32 %v6984, 0.0
      %v7081 = vmax.f32 %v6986, 0.0
      %v7082 = vmax.f32 %v5858, 0.0
      %v7083 = vmax.f32 %v5860, 0.0
      %v7084 = vmax.f32 %v6423, 0.0
      %v7085 = vmax.f32 %v6425, 0.0
      %v7086 = vmax.f32 %v6988, 0.0
      %v7087 = vmax.f32 %v6990, 0.0
      %v7088 = vsub.f32 %v6992, %v6995
      %v7089 = vsub.f32 %v6993, %v6996
      %v7090 = vsub.f32 %v6994, %v6997
      %v7091 = vsub.f32 %v6998, %v7001
      %v7092 = vsub.f32 %v6999, %v7002
      %v7093 = vsub.f32 %v7000, %v7003
      %v7094 = vsub.f32 %v7004, %v7007
      %v7095 = vsub.f32 %v7005, %v7008
      %v7096 = vsub.f32 %v7006, %v7009
      %v7097 = vsub.f32 %v7010, %v7013
      %v7098 = vsub.f32 %v7011, %v7014
      %v7099 = vsub.f32 %v7012, %v7015
      %v7100 = vsub.f32 %v7016, %v7019
      %v7101 = vsub.f32 %v7017, %v7020
      %v7102 = vsub.f32 %v7018, %v7021
      %v7103 = vsub.f32 %v7022, %v7025
      %v7104 = vsub.f32 %v7023, %v7026
      %v7105 = vsub.f32 %v7024, %v7027
      %v7106 = vsub.f32 %v7028, %v7031
      %v7107 = vsub.f32 %v7029, %v7032
      %v7108 = vsub.f32 %v7030, %v7033
      %v7109 = vsub.f32 %v7034, %v7037
      %v7110 = vsub.f32 %v7035, %v7038
      %v7111 = vsub.f32 %v7036, %v7039
      %v7112 = vsub.f32 %v7040, %v7043
      %v7113 = vsub.f32 %v7041, %v7044
      %v7114 = vsub.f32 %v7042, %v7045
      %v7115 = vsub.f32 %v7046, %v7049
      %v7116 = vsub.f32 %v7047, %v7050
      %v7117 = vsub.f32 %v7048, %v7051
      %v7118 = vsub.f32 %v7052, %v7055
      %v7119 = vsub.f32 %v7053, %v7056
      %v7120 = vsub.f32 %v7054, %v7057
      %v7121 = vsub.f32 %v7058, %v7061
      %v7122 = vsub.f32 %v7059, %v7062
      %v7123 = vsub.f32 %v7060, %v7063
      %v7124 = vsub.f32 %v7064, %v7067
      %v7125 = vsub.f32 %v7065, %v7068
      %v7126 = vsub.f32 %v7066, %v7069
      %v7127 = vsub.f32 %v7070, %v7073
      %v7128 = vsub.f32 %v7071, %v7074
      %v7129 = vsub.f32 %v7072, %v7075
      %v7130 = vsub.f32 %v7076, %v7079
      %v7131 = vsub.f32 %v7077, %v7080
      %v7132 = vsub.f32 %v7078, %v7081
      %v7133 = vsub.f32 %v7082, %v7085
      %v7134 = vsub.f32 %v7083, %v7086
      %v7135 = vsub.f32 %v7084, %v7087
      %v7136 = vand.u32 2147483647, %v7088
      %v7137 = vand.u32 2147483647, %v7089
      %v7138 = vand.u32 2147483647, %v7090
      %v7139 = vand.u32 2147483647, %v7091
      %v7140 = vand.u32 2147483647, %v7092
      %v7141 = vand.u32 2147483647, %v7093
      %v7142 = vand.u32 2147483647, %v7094
      %v7143 = vand.u32 2147483647, %v7095
      %v7144 = vand.u32 2147483647, %v7096
      %v7145 = vand.u32 2147483647, %v7097
      %v7146 = vand.u32 2147483647, %v7098
      %v7147 = vand.u32 2147483647, %v7099
      %v7148 = vand.u32 2147483647, %v7100
      %v7149 = vand.u32 2147483647, %v7101
      %v7150 = vand.u32 2147483647, %v7102
      %v7151 = vand.u32 2147483647, %v7103
      %v7152 = vand.u32 2147483647, %v7104
      %v7153 = vand.u32 2147483647, %v7105
      %v7154 = vand.u32 2147483647, %v7106
      %v7155 = vand.u32 2147483647, %v7107
      %v7156 = vand.u32 2147483647, %v7108
      %v7157 = vand.u32 2147483647, %v7109
      %v7158 = vand.u32 2147483647, %v7110
      %v7159 = vand.u32 2147483647, %v7111
      %v7160 = vand.u32 2147483647, %v7112
      %v7161 = vand.u32 2147483647, %v7113
      %v7162 = vand.u32 2147483647, %v7114
      %v7163 = vand.u32 2147483647, %v7115
      %v7164 = vand.u32 2147483647, %v7116
      %v7165 = vand.u32 2147483647, %v7117
      %v7166 = vand.u32 2147483647, %v7118
      %v7167 = vand.u32 2147483647, %v7119
      %v7168 = vand.u32 2147483647, %v7120
      %v7169 = vand.u32 2147483647, %v7121
      %v7170 = vand.u32 2147483647, %v7122
      %v7171 = vand.u32 2147483647, %v7123
      %v7172 = vand.u32 2147483647, %v7124
      %v7173 = vand.u32 2147483647, %v7125
      %v7174 = vand.u32 2147483647, %v7126
      %v7175 = vand.u32 2147483647, %v7127
      %v7176 = vand.u32 2147483647, %v7128
      %v7177 = vand.u32 2147483647, %v7129
      %v7178 = vand.u32 2147483647, %v7130
      %v7179 = vand.u32 2147483647, %v7131
      %v7180 = vand.u32 2147483647, %v7132
      %v7181 = vand.u32 2147483647, %v7133
      %v7182 = vand.u32 2147483647, %v7134
      %v7183 = vand.u32 2147483647, %v7135
      %v7184 = vmul.f32 %v7136, %v1020
      %v7185 = vmul.f32 %v7137, %v1024
      %v7186 = vmul.f32 %v7138, %v1028
      %v7187 = vmul.f32 %v7139, %v1020
      %v7188 = vmul.f32 %v7140, %v1024
      %v7189 = vmul.f32 %v7141, %v1028
      %v7190 = vmul.f32 %v7142, %v1020
      %v7191 = vmul.f32 %v7143, %v1024
      %v7192 = vmul.f32 %v7144, %v1028
      %v7193 = vmul.f32 %v7145, %v1020
      %v7194 = vmul.f32 %v7146, %v1024
      %v7195 = vmul.f32 %v7147, %v1028
      %v7196 = vmul.f32 %v7148, %v1020
      %v7197 = vmul.f32 %v7149, %v1024
      %v7198 = vmul.f32 %v7150, %v1028
      %v7199 = vmul.f32 %v7151, %v1020
      %v7200 = vmul.f32 %v7152, %v1024
      %v7201 = vmul.f32 %v7153, %v1028
      %v7202 = vmul.f32 %v7154, %v1020
      %v7203 = vmul.f32 %v7155, %v1024
      %v7204 = vmul.f32 %v7156, %v1028
      %v7205 = vmul.f32 %v7157, %v1020
      %v7206 = vmul.f32 %v7158, %v1024
      %v7207 = vmul.f32 %v7159, %v1028
      %v7208 = vmul.f32 %v7160, %v1020
      %v7209 = vmul.f32 %v7161, %v1024
      %v7210 = vmul.f32 %v7162, %v1028
      %v7211 = vmul.f32 %v7163, %v1020
      %v7212 = vmul.f32 %v7164, %v1024
      %v7213 = vmul.f32 %v7165, %v1028
      %v7214 = vmul.f32 %v7166, %v1020
      %v7215 = vmul.f32 %v7167, %v1024
      %v7216 = vmul.f32 %v7168, %v1028
      %v7217 = vmul.f32 %v7169, %v1020
      %v7218 = vmul.f32 %v7170, %v1024
      %v7219 = vmul.f32 %v7171, %v1028
      %v7220 = vmul.f32 %v7172, %v1020
      %v7221 = vmul.f32 %v7173, %v1024
      %v7222 = vmul.f32 %v7174, %v1028
      %v7223 = vmul.f32 %v7175, %v1020
      %v7224 = vmul.f32 %v7176, %v1024
      %v7225 = vmul.f32 %v7177, %v1028
      %v7226 = vmul.f32 %v7178, %v1020
      %v7227 = vmul.f32 %v7179, %v1024
      %v7228 = vmul.f32 %v7180, %v1028
      %v7229 = vmul.f32 %v7181, %v1020
      %v7230 = vmul.f32 %v7182, %v1024
      %v7231 = vmul.f32 %v7183, %v1028
      %v7232 = vadd.f32 %v7184, %v7185
      %v7233 = vadd.f32 %v7187, %v7188
      %v7234 = vadd.f32 %v7190, %v7191
      %v7235 = vadd.f32 %v7193, %v7194
      %v7236 = vadd.f32 %v7196, %v7197
      %v7237 = vadd.f32 %v7199, %v7200
      %v7238 = vadd.f32 %v7202, %v7203
      %v7239 = vadd.f32 %v7205, %v7206
      %v7240 = vadd.f32 %v7208, %v7209
      %v7241 = vadd.f32 %v7211, %v7212
      %v7242 = vadd.f32 %v7214, %v7215
      %v7243 = vadd.f32 %v7217, %v7218
      %v7244 = vadd.f32 %v7220, %v7221
      %v7245 = vadd.f32 %v7223, %v7224
      %v7246 = vadd.f32 %v7226, %v7227
      %v7247 = vadd.f32 %v7229, %v7230
      %v7248 = vadd.f32 %v7232, %v7186
      %v7249 = vadd.f32 %v7233, %v7189
      %v7250 = vadd.f32 %v7234, %v7192
      %v7251 = vadd.f32 %v7235, %v7195
      %v7252 = vadd.f32 %v7236, %v7198
      %v7253 = vadd.f32 %v7237, %v7201
      %v7254 = vadd.f32 %v7238, %v7204
      %v7255 = vadd.f32 %v7239, %v7207
      %v7256 = vadd.f32 %v7240, %v7210
      %v7257 = vadd.f32 %v7241, %v7213
      %v7258 = vadd.f32 %v7242, %v7216
      %v7259 = vadd.f32 %v7243, %v7219
      %v7260 = vadd.f32 %v7244, %v7222
      %v7261 = vadd.f32 %v7245, %v7225
      %v7262 = vadd.f32 %v7246, %v7228
      %v7263 = vadd.f32 %v7247, %v7231
      %v7264 = vadd.f32 %v7248, %v7249
      %v7265 = vadd.f32 %v7264, %v7250
      %v7266 = vadd.f32 %v7265, %v7251
      %v7267 = vadd.f32 %v7266, %v7252
      %v7268 = vadd.f32 %v7267, %v7253
      %v7269 = vadd.f32 %v7268, %v7254
      %v7270 = vadd.f32 %v7269, %v7255
      %v7271 = vadd.f32 %v7270, %v7256
      %v7272 = vadd.f32 %v7271, %v7257
      %v7273 = vadd.f32 %v7272, %v7258
      %v7274 = vadd.f32 %v7273, %v7259
      %v7275 = vadd.f32 %v7274, %v7260
      %v7276 = vadd.f32 %v7275, %v7261
      %v7277 = vadd.f32 %v7276, %v7262
      %v7278 = vadd.f32 %v7277, %v7263
      %7279 = vst [vmem:[%s249] sm:$0xff] %v7278
      %p7280 = scmp.lt.s32.totalorder %s17, 1
      %s7281 = scalar_select %p7280, %s17, 1
      %s7282 = smul.addr %s7281, 8
      %s7283 = scalar_lea.vmem %s6, %s7282
      // Predicated region
      $region45: #{content_loss.1} parent=43 // pred_check
        %p7284 = pneg %p166
      $region46: #{content_loss.1} parent=43 // pred_check_branch
        %7286 = sbr.rel (%p7284) target = $region48
      $region47: #{content_loss.1} parent=43 // pred_region
        _
      $region48: #{content_loss.1} parent=43 // pred_fallthru
        _
    $region44: #{content_loss.1} parent=5 // pred_fallthru
      _
    %p7287 = scmp.le.s32.totalorder 2, %s12
    // Predicated region
    $region49: #{content_loss.1} parent=5 // pred_check
      %p7288 = pneg %p7287
    $region50: #{content_loss.1} parent=5 // pred_check_branch
      %7290 = sbr.rel (%p7288) target = $region52
    $region51: #{content_loss.1} parent=5 // pred_region
      %s7291 = ssub.s32 %s12, 2
      // Predicated region
      $region53: #{content_loss.1} parent=51 // pred_check
        %p7292 = pneg %p172
      $region54: #{content_loss.1} parent=51 // pred_check_branch
        %7294 = sbr.rel (%p7292) target = $region56
      $region55: #{content_loss.1} parent=51 // pred_region
        %p7295 = scmp.lt.s32.totalorder %s18, 1
        %s7296 = scalar_select %p7295, %s18, 1
        %s7297 = smul.addr %s7296, 8
        %s7298 = scalar_lea.vmem %s6, %s7297
      $region56: #{content_loss.1} parent=51 // pred_fallthru
        _
    $region52: #{content_loss.1} parent=5 // pred_fallthru
      _
  $region6: #{content_loss.1} parent=0 // loop_footer
    %s16 = sadd.s32 1, %s12
  $region7: #{content_loss.1} parent=0 // loop_footer_branch
    %11 = sbr.rel target = $region3
  $region8: #{content_loss.1} parent=0 // loop_exit
    _

</llo_original>
